<compile_context>
chip_gen: v7x
topology: tpu7x:2x2x1
jax: 0.10.0
libtpu: 0.0.40
codegen_flags: <defaults>
</compile_context>

<pallas_src>
import jax
import jax.numpy as jnp
from jax.experimental import pallas as pl
from jax.experimental.pallas import tpu as pltpu

P_RAW, P_PAD = 225, 232   # pooled positions (15*15), padded to a sublane multiple
K_RAW, K_PAD = 27, 32     # im2col patch length (3*3*3), padded
C_OUT = 10                # conv1 out channels == fc in channels
N_CLS = 10                # fc out features


# ------------------------------ Pallas kernel -------------------------------

def seanet_fused_kernel(p_ref, w_ref, cb_ref, fw_ref, fb_ref, o_ref):
    # p_ref : (4*B*P_PAD, K_PAD) bf16    im2col patches, rows = [phase, image, pos]
    # w_ref : (K_PAD, C_OUT)     bf16    conv1 weight (K zero-padded)
    # cb_ref: (1, C_OUT)         f32     conv1 bias
    # fw_ref: (N_CLS, P_PAD, C_OUT) f32  fc weight, [out, pos, chan], zero at pos>=225
    # fb_ref: (1, N_CLS)         f32     fc bias
    # o_ref : (B, N_CLS)         f32     logits
    B = o_ref.shape[0]
    chunk = B * P_PAD

    # conv1 for all 4 pool phases and the whole batch in a single MXU matmul.
    r = jnp.dot(p_ref[...], w_ref[...],
                preferred_element_type=jnp.float32)            # (4*chunk, C_OUT)

    # 2x2 max-pool == max over the 4 aligned phase chunks (VPU, leading-axis max).
    m = jnp.max(r.reshape(4, chunk, C_OUT), axis=0)            # (chunk, C_OUT)

    # Per-channel bias commutes with the max; then ReLU.
    pooled = jnp.maximum(m + cb_ref[...], 0.0)                 # (chunk, C_OUT)
    pooled = pooled.reshape(B, P_PAD, C_OUT)                   # aligned leading split

    # Fused fc: out[b,o] = sum_{pos,chan} pooled[b,pos,chan] * fw[o,pos,chan] + fb[o]
    prod = pooled[:, None, :, :] * fw_ref[...][None, :, :, :]  # (B, N_CLS, P_PAD, C_OUT)
    out = jnp.sum(jnp.sum(prod, axis=3), axis=2)               # (B, N_CLS)
    o_ref[...] = out + fb_ref[...]


# --------------------------------- glue --------------------------------------

def _im2col_phase_major(x):
    """x: (B,3,32,32) f32 -> (4*B*P_PAD, K_PAD) bf16 patch matrix.

    Row order [di*2+dj, b, i*15+j]; column order [(ky*3+kx)*3+ci]; zero padded.
    Built from strided slices + stacks only (no big transpose of the expansion).
    """
    B = x.shape[0]
    xh = jnp.transpose(x, (0, 2, 3, 1))                       # (B,32,32,3) NHWC
    phases = []
    for di in range(2):
        for dj in range(2):
            taps = [xh[:, di + ky:di + ky + 29:2, dj + kx:dj + kx + 29:2, :]
                    for ky in range(3) for kx in range(3)]    # 9 x (B,15,15,3)
            phases.append(jnp.stack(taps, axis=3))            # (B,15,15,9,3)
    p = jnp.stack(phases, axis=0)                             # (4,B,15,15,9,3)
    p = p.reshape(4, B, P_RAW, K_RAW)
    p = jnp.pad(p, ((0, 0), (0, 0), (0, P_PAD - P_RAW), (0, K_PAD - K_RAW)))
    return p.reshape(4 * B * P_PAD, K_PAD).astype(jnp.bfloat16)


def prepare_params(conv_w, conv_b, fc_w, fc_b):
    """One-time weight packing (done outside the traced forward)."""
    # conv1 weight -> (K_PAD, C_OUT), K order (ky, kx, ci) to match the patches.
    wmat = conv_w.transpose(2, 3, 1, 0).reshape(K_RAW, C_OUT)
    wmat = jnp.pad(wmat, ((0, K_PAD - K_RAW), (0, 0))).astype(jnp.bfloat16)
    cb = conv_b.reshape(1, C_OUT).astype(jnp.float32)
    # fc weight (10, 10*225) -> (N_CLS, P_PAD, C_OUT): fwr[o,p,c] = fc_w[o, c*225+p]
    fwr = fc_w.reshape(N_CLS, C_OUT, P_RAW).transpose(0, 2, 1)
    fwr = jnp.pad(fwr, ((0, 0), (0, P_PAD - P_RAW), (0, 0))).astype(jnp.float32)
    fb = fc_b.reshape(1, N_CLS).astype(jnp.float32)
    return wmat, cb, fwr, fb


@jax.jit
def seanet_forward(x, wmat, cb, fwr, fb):
    B = x.shape[0]
    patches = _im2col_phase_major(x)                          # (4*B*P_PAD, K_PAD) bf16
    return pl.pallas_call(
        seanet_fused_kernel,
        out_shape=jax.ShapeDtypeStruct((B, N_CLS), jnp.float32),
        grid=(1,),                                            # whole batch per step
        in_specs=[
            pl.BlockSpec((4 * B * P_PAD, K_PAD), lambda i: (0, 0)),
            pl.BlockSpec((K_PAD, C_OUT), lambda i: (0, 0)),
            pl.BlockSpec((1, C_OUT), lambda i: (0, 0)),
            pl.BlockSpec((N_CLS, P_PAD, C_OUT), lambda i: (0, 0, 0)),
            pl.BlockSpec((1, N_CLS), lambda i: (0, 0)),
        ],
        out_specs=pl.BlockSpec((B, N_CLS), lambda i: (0, 0)),
        compiler_params=pltpu.CompilerParams(dimension_semantics=("arbitrary",)),
    )(patches, wmat, cb, fwr, fb)


# --------------------------- pure-JAX reference ------------------------------

def reference_forward(x, conv_w, conv_b, fc_w, fc_b):
    B = x.shape[0]
    cols = [x[:, :, ky:ky + 30, kx:kx + 30] for ky in range(3) for kx in range(3)]
    p = jnp.stack(cols, axis=2)                               # (B,3,9,30,30)
    conv = jnp.einsum(
        "bckrs,ock->bors", p, conv_w.reshape(10, 3, 9),
        precision=jax.lax.Precision.HIGHEST,
    ) + conv_b[None, :, None, None]
    pooled = conv.reshape(B, 10, 15, 2, 15, 2).max(axis=(3, 5))
    act = jnp.maximum(pooled, 0.0)
    flat = act.reshape(B, -1)
    return jnp.dot(flat, fc_w.T, precision=jax.lax.Precision.HIGHEST) + fc_b


# --------------------------------- main --------------------------------------

if __name__ == "__main__":
    key = jax.random.PRNGKey(0)
    kx, k1, k2, k3, k4, k5, k6 = jax.random.split(key, 7)
    x = jax.random.normal(kx, (2, 3, 32, 32), jnp.float32)
    conv1_w = 0.1 * jax.random.normal(k1, (10, 3, 3, 3), jnp.float32)
    conv1_b = 0.1 * jax.random.normal(k2, (10,), jnp.float32)
    fc_w = 0.01 * jax.random.normal(k3, (10, 10 * 15 * 15), jnp.float32)
    fc_b = 0.1 * jax.random.normal(k4, (10,), jnp.float32)
    # conv2 exists in the PyTorch __init__ but is never used in forward() (dead params).
    _conv2_w = 0.1 * jax.random.normal(k5, (20, 10, 3, 3), jnp.float32)  # unused
    _conv2_b = 0.1 * jax.random.normal(k6, (20,), jnp.float32)           # unused

    params = prepare_params(conv1_w, conv1_b, fc_w, fc_b)     # one-time weight packing
    out = jax.block_until_ready(seanet_forward(x, *params))

    ref = reference_forward(x, conv1_w, conv1_b, fc_w, fc_b)
    err = float(jnp.max(jnp.abs(out - ref)))
    assert out.shape == (2, 10), out.shape
    assert err < 1e-2, f"mismatch vs reference: max abs err = {err}"
    print("KERNEL_OK")
</pallas_src>

<mosaic_0001>
module attributes {stable_mosaic.version = 11 : i64} {
  func.func @seanet_fused_kernel(%arg0: i32, %arg1: memref<1856x32xbf16, #tpu.memory_space<vmem>>, %arg2: memref<32x10xbf16, #tpu.memory_space<vmem>>, %arg3: memref<1x10xf32, #tpu.memory_space<vmem>>, %arg4: memref<10x232x10xf32, #tpu.memory_space<vmem>>, %arg5: memref<1x10xf32, #tpu.memory_space<vmem>>, %arg6: memref<2x10xf32, #tpu.memory_space<vmem>>) attributes {dimension_semantics = [#tpu.dimension_semantics<arbitrary>], iteration_bounds = array<i64: 1>, scalar_prefetch = 0 : i64, scratch_operands = 0 : i64, tpu.core_type = #tpu.core_type<tc>, window_params = [{pipeline_mode = #tpu.pipeline_mode<synchronous>, transform_indices = @transform_0, window_bounds = array<i64: 1856, 32>}, {pipeline_mode = #tpu.pipeline_mode<synchronous>, transform_indices = @transform_1, window_bounds = array<i64: 32, 10>}, {pipeline_mode = #tpu.pipeline_mode<synchronous>, transform_indices = @transform_2, window_bounds = array<i64: 1, 10>}, {pipeline_mode = #tpu.pipeline_mode<synchronous>, transform_indices = @transform_3, window_bounds = array<i64: 10, 232, 10>}, {pipeline_mode = #tpu.pipeline_mode<synchronous>, transform_indices = @transform_4, window_bounds = array<i64: 1, 10>}, {pipeline_mode = #tpu.pipeline_mode<synchronous>, transform_indices = @transform_5, window_bounds = array<i64: 2, 10>}]} {
    %c0 = arith.constant 0 : index
    %c0_0 = arith.constant 0 : index
    %0 = vector.load %arg1[%c0, %c0_0] : memref<1856x32xbf16, #tpu.memory_space<vmem>>, vector<1856x32xbf16>
    %c0_1 = arith.constant 0 : index
    %c0_2 = arith.constant 0 : index
    %1 = vector.load %arg2[%c0_1, %c0_2] : memref<32x10xbf16, #tpu.memory_space<vmem>>, vector<32x10xbf16>
    %cst = arith.constant dense<0.000000e+00> : vector<1856x10xf32>
    %2 = tpu.matmul %0, %1, %cst {dimension_numbers = #tpu.dot_dimension_numbers<[1], [0], [0], [1], [0, 0, 1, 1], [], []>} : vector<1856x32xbf16>, vector<32x10xbf16>, vector<1856x10xf32> -> vector<1856x10xf32>
    %3 = vector.shape_cast %2 : vector<1856x10xf32> to vector<4x464x10xf32>
    %cst_3 = arith.constant dense<0xFF800000> : vector<464x10xf32>
    %4 = vector.multi_reduction <maximumf>, %3, %cst_3 [0] : vector<4x464x10xf32> to vector<464x10xf32>
    %c0_4 = arith.constant 0 : index
    %c0_5 = arith.constant 0 : index
    %5 = vector.load %arg3[%c0_4, %c0_5] : memref<1x10xf32, #tpu.memory_space<vmem>>, vector<1x10xf32>
    %6 = vector.broadcast %5 : vector<1x10xf32> to vector<464x10xf32>
    %7 = arith.addf %4, %6 : vector<464x10xf32>
    %cst_6 = arith.constant 0.000000e+00 : f32
    %8 = vector.broadcast %cst_6 : f32 to vector<464x10xf32>
    %9 = arith.maximumf %7, %8 : vector<464x10xf32>
    %10 = vector.shape_cast %9 : vector<464x10xf32> to vector<2x232x10xf32>
    %11 = vector.shape_cast %10 : vector<2x232x10xf32> to vector<2x1x232x10xf32>
    %c0_7 = arith.constant 0 : index
    %c0_8 = arith.constant 0 : index
    %c0_9 = arith.constant 0 : index
    %12 = vector.load %arg4[%c0_7, %c0_8, %c0_9] : memref<10x232x10xf32, #tpu.memory_space<vmem>>, vector<10x232x10xf32>
    %13 = vector.shape_cast %12 : vector<10x232x10xf32> to vector<1x10x232x10xf32>
    %14 = vector.broadcast %11 : vector<2x1x232x10xf32> to vector<2x10x232x10xf32>
    %15 = vector.broadcast %13 : vector<1x10x232x10xf32> to vector<2x10x232x10xf32>
    %16 = arith.mulf %14, %15 : vector<2x10x232x10xf32>
    %cst_10 = arith.constant dense<0.000000e+00> : vector<2x10x232xf32>
    %17 = vector.multi_reduction <add>, %16, %cst_10 [3] : vector<2x10x232x10xf32> to vector<2x10x232xf32>
    %cst_11 = arith.constant dense<0.000000e+00> : vector<2x10xf32>
    %18 = vector.multi_reduction <add>, %17, %cst_11 [2] : vector<2x10x232xf32> to vector<2x10xf32>
    %c0_12 = arith.constant 0 : index
    %c0_13 = arith.constant 0 : index
    %19 = vector.load %arg5[%c0_12, %c0_13] : memref<1x10xf32, #tpu.memory_space<vmem>>, vector<1x10xf32>
    %20 = vector.broadcast %19 : vector<1x10xf32> to vector<2x10xf32>
    %21 = arith.addf %18, %20 : vector<2x10xf32>
    %c0_14 = arith.constant 0 : index
    %c0_15 = arith.constant 0 : index
    %22 = vector.load %arg6[%c0_14, %c0_15] : memref<2x10xf32, #tpu.memory_space<vmem>>, vector<2x10xf32>
    tpu.vector_store %arg6[%c0_14, %c0_15], %21 {strides = array<i32>} : memref<2x10xf32, #tpu.memory_space<vmem>>, vector<2x10xf32>,
    return
  }
  func.func @transform_0(%arg0: i32) -> (i32, i32) {
    %c0_i32 = arith.constant 0 : i32
    %c0_i32_0 = arith.constant 0 : i32
    %c0_i32_1 = arith.constant 0 : i32
    return %c0_i32, %c0_i32_0 : i32, i32
  }
  func.func @transform_1(%arg0: i32) -> (i32, i32) {
    %c0_i32 = arith.constant 0 : i32
    %c0_i32_0 = arith.constant 0 : i32
    %c0_i32_1 = arith.constant 0 : i32
    return %c0_i32, %c0_i32_0 : i32, i32
  }
  func.func @transform_2(%arg0: i32) -> (i32, i32) {
    %c0_i32 = arith.constant 0 : i32
    %c0_i32_0 = arith.constant 0 : i32
    %c0_i32_1 = arith.constant 0 : i32
    return %c0_i32, %c0_i32_0 : i32, i32
  }
  func.func @transform_3(%arg0: i32) -> (i32, i32, i32) {
    %c0_i32 = arith.constant 0 : i32
    %c0_i32_0 = arith.constant 0 : i32
    %c0_i32_1 = arith.constant 0 : i32
    %c0_i32_2 = arith.constant 0 : i32
    return %c0_i32, %c0_i32_0, %c0_i32_1 : i32, i32, i32
  }
  func.func @transform_4(%arg0: i32) -> (i32, i32) {
    %c0_i32 = arith.constant 0 : i32
    %c0_i32_0 = arith.constant 0 : i32
    %c0_i32_1 = arith.constant 0 : i32
    return %c0_i32, %c0_i32_0 : i32, i32
  }
  func.func @transform_5(%arg0: i32) -> (i32, i32) {
    %c0_i32 = arith.constant 0 : i32
    %c0_i32_0 = arith.constant 0 : i32
    %c0_i32_1 = arith.constant 0 : i32
    return %c0_i32, %c0_i32_0 : i32, i32
  }
}

</mosaic_0001>

<llo_original>
// kernel: seanet_forward.1
$region0: #{seanet_forward.1}
  #allocation0 [shape = 'u32[]', space=smem, size = 0x4, offset = 0x4, fixed_abs, tag = 'smem constant byte address 0x4 - core index']
  #allocation1 [shape = 'u32[144,128]{1,0:T(1,128)}', space=vmem, size = 0x12000, scoped, tag = 'internal scratch']
  %s0 = inlined_call_operand.vmem [shape: bf16[1856,32], index: 0, kind: input, shape index: {}]
  %s1 = inlined_call_operand.vmem [shape: bf16[32,10], index: 1, kind: input, shape index: {}]
  %s2 = inlined_call_operand.vmem [shape: f32[1,10], index: 2, kind: input, shape index: {}]
  %s3 = inlined_call_operand.vmem [shape: f32[10,232,10], index: 3, kind: input, shape index: {}]
  %s4 = inlined_call_operand.vmem [shape: f32[1,10], index: 4, kind: input, shape index: {}]
  %s5 = inlined_call_operand.hbm [shape: f32[2,10], index: 5, kind: output, shape index: {}]
  %s6 = sld [smem:[#allocation0]]
  $region30: #{seanet_forward.1} parent=0
    _
  %s8 = ssub.s32 1, %s6
  %s9 = scalar_select 0, %s8, %s6
  $region1: #{seanet_forward.1} parent=0
    #allocation2 [shape = 'u8[1024]{0}', space=vmem, size = 0x400, scoped, tag = 'output window, operand 0, single buffered']
    #allocation3 [shape = 's32[1]{0}', space=sflag, size = 0x4, scoped, tag = 'scoped memory for seanet_forward.1']
    %10 = vsyncpa [#allocation3], 0
    // Predicated region
    $region2: #{seanet_forward.1} parent=1 // pred_check
      _
    $region3: #{seanet_forward.1} parent=1 // pred_check_branch
      %12 = sbr.rel (0) target = $region5
    $region4: #{seanet_forward.1} parent=1 // pred_region
      _
    $region5: #{seanet_forward.1} parent=1 // pred_fallthru
      _
    // Predicated region
    $region6: #{seanet_forward.1} parent=1 // pred_check
      _
    $region7: #{seanet_forward.1} parent=1 // pred_check_branch
      %14 = sbr.rel (0) target = $region9
    $region8: #{seanet_forward.1} parent=1 // pred_region
      _
    $region9: #{seanet_forward.1} parent=1 // pred_fallthru
      _
    // Predicated region
    $region10: #{seanet_forward.1} parent=1 // pred_check
      _
    $region11: #{seanet_forward.1} parent=1 // pred_check_branch
      %16 = sbr.rel (0) target = $region13
    $region12: #{seanet_forward.1} parent=1 // pred_region
      _
    $region13: #{seanet_forward.1} parent=1 // pred_fallthru
      _
    // Predicated region
    $region14: #{seanet_forward.1} parent=1 // pred_check
      _
    $region15: #{seanet_forward.1} parent=1 // pred_check_branch
      %18 = sbr.rel (0) target = $region17
    $region16: #{seanet_forward.1} parent=1 // pred_region
      _
    $region17: #{seanet_forward.1} parent=1 // pred_fallthru
      _
    // Predicated region
    $region18: #{seanet_forward.1} parent=1 // pred_check
      _
    $region19: #{seanet_forward.1} parent=1 // pred_check_branch
      %20 = sbr.rel (0) target = $region21
    $region20: #{seanet_forward.1} parent=1 // pred_region
      _
    $region21: #{seanet_forward.1} parent=1 // pred_fallthru
      _
    %v22 = vld [vmem:[%s0] sm:$0xf]
    %v23 = vld [vmem:[%s0 + $0x4] sm:$0xf]
    %v24 = vld [vmem:[%s0 + $0x8] sm:$0xf]
    %v25 = vld [vmem:[%s0 + $0xc] sm:$0xf]
    %v26 = vld [vmem:[%s0 + $0x10] sm:$0xf]
    %v27 = vld [vmem:[%s0 + $0x14] sm:$0xf]
    %v28 = vld [vmem:[%s0 + $0x18] sm:$0xf]
    %v29 = vld [vmem:[%s0 + $0x1c] sm:$0xf]
    %v30 = vld [vmem:[%s0 + $0x20] sm:$0xf]
    %v31 = vld [vmem:[%s0 + $0x24] sm:$0xf]
    %v32 = vld [vmem:[%s0 + $0x28] sm:$0xf]
    %v33 = vld [vmem:[%s0 + $0x2c] sm:$0xf]
    %v34 = vld [vmem:[%s0 + $0x30] sm:$0xf]
    %v35 = vld [vmem:[%s0 + $0x34] sm:$0xf]
    %v36 = vld [vmem:[%s0 + $0x38] sm:$0xf]
    %v37 = vld [vmem:[%s0 + $0x3c] sm:$0xf]
    %v38 = vld [vmem:[%s0 + $0x40] sm:$0xf]
    %v39 = vld [vmem:[%s0 + $0x44] sm:$0xf]
    %v40 = vld [vmem:[%s0 + $0x48] sm:$0xf]
    %v41 = vld [vmem:[%s0 + $0x4c] sm:$0xf]
    %v42 = vld [vmem:[%s0 + $0x50] sm:$0xf]
    %v43 = vld [vmem:[%s0 + $0x54] sm:$0xf]
    %v44 = vld [vmem:[%s0 + $0x58] sm:$0xf]
    %v45 = vld [vmem:[%s0 + $0x5c] sm:$0xf]
    %v46 = vld [vmem:[%s0 + $0x60] sm:$0xf]
    %v47 = vld [vmem:[%s0 + $0x64] sm:$0xf]
    %v48 = vld [vmem:[%s0 + $0x68] sm:$0xf]
    %v49 = vld [vmem:[%s0 + $0x6c] sm:$0xf]
    %v50 = vld [vmem:[%s0 + $0x70] sm:$0xf]
    %v51 = vld [vmem:[%s0 + $0x74] sm:$0xf]
    %v52 = vld [vmem:[%s0 + $0x78] sm:$0xf]
    %v53 = vld [vmem:[%s0 + $0x7c] sm:$0xf]
    %v54 = vld [vmem:[%s0 + $0x80] sm:$0xf]
    %v55 = vld [vmem:[%s0 + $0x84] sm:$0xf]
    %v56 = vld [vmem:[%s0 + $0x88] sm:$0xf]
    %v57 = vld [vmem:[%s0 + $0x8c] sm:$0xf]
    %v58 = vld [vmem:[%s0 + $0x90] sm:$0xf]
    %v59 = vld [vmem:[%s0 + $0x94] sm:$0xf]
    %v60 = vld [vmem:[%s0 + $0x98] sm:$0xf]
    %v61 = vld [vmem:[%s0 + $0x9c] sm:$0xf]
    %v62 = vld [vmem:[%s0 + $0xa0] sm:$0xf]
    %v63 = vld [vmem:[%s0 + $0xa4] sm:$0xf]
    %v64 = vld [vmem:[%s0 + $0xa8] sm:$0xf]
    %v65 = vld [vmem:[%s0 + $0xac] sm:$0xf]
    %v66 = vld [vmem:[%s0 + $0xb0] sm:$0xf]
    %v67 = vld [vmem:[%s0 + $0xb4] sm:$0xf]
    %v68 = vld [vmem:[%s0 + $0xb8] sm:$0xf]
    %v69 = vld [vmem:[%s0 + $0xbc] sm:$0xf]
    %v70 = vld [vmem:[%s0 + $0xc0] sm:$0xf]
    %v71 = vld [vmem:[%s0 + $0xc4] sm:$0xf]
    %v72 = vld [vmem:[%s0 + $0xc8] sm:$0xf]
    %v73 = vld [vmem:[%s0 + $0xcc] sm:$0xf]
    %v74 = vld [vmem:[%s0 + $0xd0] sm:$0xf]
    %v75 = vld [vmem:[%s0 + $0xd4] sm:$0xf]
    %v76 = vld [vmem:[%s0 + $0xd8] sm:$0xf]
    %v77 = vld [vmem:[%s0 + $0xdc] sm:$0xf]
    %v78 = vld [vmem:[%s0 + $0xe0] sm:$0xf]
    %v79 = vld [vmem:[%s0 + $0xe4] sm:$0xf]
    %v80 = vld [vmem:[%s0 + $0xe8] sm:$0xf]
    %v81 = vld [vmem:[%s0 + $0xec] sm:$0xf]
    %v82 = vld [vmem:[%s0 + $0xf0] sm:$0xf]
    %v83 = vld [vmem:[%s0 + $0xf4] sm:$0xf]
    %v84 = vld [vmem:[%s0 + $0xf8] sm:$0xf]
    %v85 = vld [vmem:[%s0 + $0xfc] sm:$0xf]
    %v86 = vld [vmem:[%s0 + $0x100] sm:$0xf]
    %v87 = vld [vmem:[%s0 + $0x104] sm:$0xf]
    %v88 = vld [vmem:[%s0 + $0x108] sm:$0xf]
    %v89 = vld [vmem:[%s0 + $0x10c] sm:$0xf]
    %v90 = vld [vmem:[%s0 + $0x110] sm:$0xf]
    %v91 = vld [vmem:[%s0 + $0x114] sm:$0xf]
    %v92 = vld [vmem:[%s0 + $0x118] sm:$0xf]
    %v93 = vld [vmem:[%s0 + $0x11c] sm:$0xf]
    %v94 = vld [vmem:[%s0 + $0x120] sm:$0xf]
    %v95 = vld [vmem:[%s0 + $0x124] sm:$0xf]
    %v96 = vld [vmem:[%s0 + $0x128] sm:$0xf]
    %v97 = vld [vmem:[%s0 + $0x12c] sm:$0xf]
    %v98 = vld [vmem:[%s0 + $0x130] sm:$0xf]
    %v99 = vld [vmem:[%s0 + $0x134] sm:$0xf]
    %v100 = vld [vmem:[%s0 + $0x138] sm:$0xf]
    %v101 = vld [vmem:[%s0 + $0x13c] sm:$0xf]
    %v102 = vld [vmem:[%s0 + $0x140] sm:$0xf]
    %v103 = vld [vmem:[%s0 + $0x144] sm:$0xf]
    %v104 = vld [vmem:[%s0 + $0x148] sm:$0xf]
    %v105 = vld [vmem:[%s0 + $0x14c] sm:$0xf]
    %v106 = vld [vmem:[%s0 + $0x150] sm:$0xf]
    %v107 = vld [vmem:[%s0 + $0x154] sm:$0xf]
    %v108 = vld [vmem:[%s0 + $0x158] sm:$0xf]
    %v109 = vld [vmem:[%s0 + $0x15c] sm:$0xf]
    %v110 = vld [vmem:[%s0 + $0x160] sm:$0xf]
    %v111 = vld [vmem:[%s0 + $0x164] sm:$0xf]
    %v112 = vld [vmem:[%s0 + $0x168] sm:$0xf]
    %v113 = vld [vmem:[%s0 + $0x16c] sm:$0xf]
    %v114 = vld [vmem:[%s0 + $0x170] sm:$0xf]
    %v115 = vld [vmem:[%s0 + $0x174] sm:$0xf]
    %v116 = vld [vmem:[%s0 + $0x178] sm:$0xf]
    %v117 = vld [vmem:[%s0 + $0x17c] sm:$0xf]
    %v118 = vld [vmem:[%s0 + $0x180] sm:$0xf]
    %v119 = vld [vmem:[%s0 + $0x184] sm:$0xf]
    %v120 = vld [vmem:[%s0 + $0x188] sm:$0xf]
    %v121 = vld [vmem:[%s0 + $0x18c] sm:$0xf]
    %v122 = vld [vmem:[%s0 + $0x190] sm:$0xf]
    %v123 = vld [vmem:[%s0 + $0x194] sm:$0xf]
    %v124 = vld [vmem:[%s0 + $0x198] sm:$0xf]
    %v125 = vld [vmem:[%s0 + $0x19c] sm:$0xf]
    %v126 = vld [vmem:[%s0 + $0x1a0] sm:$0xf]
    %v127 = vld [vmem:[%s0 + $0x1a4] sm:$0xf]
    %v128 = vld [vmem:[%s0 + $0x1a8] sm:$0xf]
    %v129 = vld [vmem:[%s0 + $0x1ac] sm:$0xf]
    %v130 = vld [vmem:[%s0 + $0x1b0] sm:$0xf]
    %v131 = vld [vmem:[%s0 + $0x1b4] sm:$0xf]
    %v132 = vld [vmem:[%s0 + $0x1b8] sm:$0xf]
    %v133 = vld [vmem:[%s0 + $0x1bc] sm:$0xf]
    %v134 = vld [vmem:[%s0 + $0x1c0] sm:$0xf]
    %v135 = vld [vmem:[%s0 + $0x1c4] sm:$0xf]
    %v136 = vld [vmem:[%s0 + $0x1c8] sm:$0xf]
    %v137 = vld [vmem:[%s0 + $0x1cc] sm:$0xf]
    %v138 = vld [vmem:[%s0 + $0x1d0] sm:$0xf]
    %v139 = vld [vmem:[%s0 + $0x1d4] sm:$0xf]
    %v140 = vld [vmem:[%s0 + $0x1d8] sm:$0xf]
    %v141 = vld [vmem:[%s0 + $0x1dc] sm:$0xf]
    %v142 = vld [vmem:[%s0 + $0x1e0] sm:$0xf]
    %v143 = vld [vmem:[%s0 + $0x1e4] sm:$0xf]
    %v144 = vld [vmem:[%s0 + $0x1e8] sm:$0xf]
    %v145 = vld [vmem:[%s0 + $0x1ec] sm:$0xf]
    %v146 = vld [vmem:[%s0 + $0x1f0] sm:$0xf]
    %v147 = vld [vmem:[%s0 + $0x1f4] sm:$0xf]
    %v148 = vld [vmem:[%s0 + $0x1f8] sm:$0xf]
    %v149 = vld [vmem:[%s0 + $0x1fc] sm:$0xf]
    %v150 = vld [vmem:[%s0 + $0x200] sm:$0xf]
    %v151 = vld [vmem:[%s0 + $0x204] sm:$0xf]
    %v152 = vld [vmem:[%s0 + $0x208] sm:$0xf]
    %v153 = vld [vmem:[%s0 + $0x20c] sm:$0xf]
    %v154 = vld [vmem:[%s0 + $0x210] sm:$0xf]
    %v155 = vld [vmem:[%s0 + $0x214] sm:$0xf]
    %v156 = vld [vmem:[%s0 + $0x218] sm:$0xf]
    %v157 = vld [vmem:[%s0 + $0x21c] sm:$0xf]
    %v158 = vld [vmem:[%s0 + $0x220] sm:$0xf]
    %v159 = vld [vmem:[%s0 + $0x224] sm:$0xf]
    %v160 = vld [vmem:[%s0 + $0x228] sm:$0xf]
    %v161 = vld [vmem:[%s0 + $0x22c] sm:$0xf]
    %v162 = vld [vmem:[%s0 + $0x230] sm:$0xf]
    %v163 = vld [vmem:[%s0 + $0x234] sm:$0xf]
    %v164 = vld [vmem:[%s0 + $0x238] sm:$0xf]
    %v165 = vld [vmem:[%s0 + $0x23c] sm:$0xf]
    %v166 = vld [vmem:[%s0 + $0x240] sm:$0xf]
    %v167 = vld [vmem:[%s0 + $0x244] sm:$0xf]
    %v168 = vld [vmem:[%s0 + $0x248] sm:$0xf]
    %v169 = vld [vmem:[%s0 + $0x24c] sm:$0xf]
    %v170 = vld [vmem:[%s0 + $0x250] sm:$0xf]
    %v171 = vld [vmem:[%s0 + $0x254] sm:$0xf]
    %v172 = vld [vmem:[%s0 + $0x258] sm:$0xf]
    %v173 = vld [vmem:[%s0 + $0x25c] sm:$0xf]
    %v174 = vld [vmem:[%s0 + $0x260] sm:$0xf]
    %v175 = vld [vmem:[%s0 + $0x264] sm:$0xf]
    %v176 = vld [vmem:[%s0 + $0x268] sm:$0xf]
    %v177 = vld [vmem:[%s0 + $0x26c] sm:$0xf]
    %v178 = vld [vmem:[%s0 + $0x270] sm:$0xf]
    %v179 = vld [vmem:[%s0 + $0x274] sm:$0xf]
    %v180 = vld [vmem:[%s0 + $0x278] sm:$0xf]
    %v181 = vld [vmem:[%s0 + $0x27c] sm:$0xf]
    %v182 = vld [vmem:[%s0 + $0x280] sm:$0xf]
    %v183 = vld [vmem:[%s0 + $0x284] sm:$0xf]
    %v184 = vld [vmem:[%s0 + $0x288] sm:$0xf]
    %v185 = vld [vmem:[%s0 + $0x28c] sm:$0xf]
    %v186 = vld [vmem:[%s0 + $0x290] sm:$0xf]
    %v187 = vld [vmem:[%s0 + $0x294] sm:$0xf]
    %v188 = vld [vmem:[%s0 + $0x298] sm:$0xf]
    %v189 = vld [vmem:[%s0 + $0x29c] sm:$0xf]
    %v190 = vld [vmem:[%s0 + $0x2a0] sm:$0xf]
    %v191 = vld [vmem:[%s0 + $0x2a4] sm:$0xf]
    %v192 = vld [vmem:[%s0 + $0x2a8] sm:$0xf]
    %v193 = vld [vmem:[%s0 + $0x2ac] sm:$0xf]
    %v194 = vld [vmem:[%s0 + $0x2b0] sm:$0xf]
    %v195 = vld [vmem:[%s0 + $0x2b4] sm:$0xf]
    %v196 = vld [vmem:[%s0 + $0x2b8] sm:$0xf]
    %v197 = vld [vmem:[%s0 + $0x2bc] sm:$0xf]
    %v198 = vld [vmem:[%s0 + $0x2c0] sm:$0xf]
    %v199 = vld [vmem:[%s0 + $0x2c4] sm:$0xf]
    %v200 = vld [vmem:[%s0 + $0x2c8] sm:$0xf]
    %v201 = vld [vmem:[%s0 + $0x2cc] sm:$0xf]
    %v202 = vld [vmem:[%s0 + $0x2d0] sm:$0xf]
    %v203 = vld [vmem:[%s0 + $0x2d4] sm:$0xf]
    %v204 = vld [vmem:[%s0 + $0x2d8] sm:$0xf]
    %v205 = vld [vmem:[%s0 + $0x2dc] sm:$0xf]
    %v206 = vld [vmem:[%s0 + $0x2e0] sm:$0xf]
    %v207 = vld [vmem:[%s0 + $0x2e4] sm:$0xf]
    %v208 = vld [vmem:[%s0 + $0x2e8] sm:$0xf]
    %v209 = vld [vmem:[%s0 + $0x2ec] sm:$0xf]
    %v210 = vld [vmem:[%s0 + $0x2f0] sm:$0xf]
    %v211 = vld [vmem:[%s0 + $0x2f4] sm:$0xf]
    %v212 = vld [vmem:[%s0 + $0x2f8] sm:$0xf]
    %v213 = vld [vmem:[%s0 + $0x2fc] sm:$0xf]
    %v214 = vld [vmem:[%s0 + $0x300] sm:$0xf]
    %v215 = vld [vmem:[%s0 + $0x304] sm:$0xf]
    %v216 = vld [vmem:[%s0 + $0x308] sm:$0xf]
    %v217 = vld [vmem:[%s0 + $0x30c] sm:$0xf]
    %v218 = vld [vmem:[%s0 + $0x310] sm:$0xf]
    %v219 = vld [vmem:[%s0 + $0x314] sm:$0xf]
    %v220 = vld [vmem:[%s0 + $0x318] sm:$0xf]
    %v221 = vld [vmem:[%s0 + $0x31c] sm:$0xf]
    %v222 = vld [vmem:[%s0 + $0x320] sm:$0xf]
    %v223 = vld [vmem:[%s0 + $0x324] sm:$0xf]
    %v224 = vld [vmem:[%s0 + $0x328] sm:$0xf]
    %v225 = vld [vmem:[%s0 + $0x32c] sm:$0xf]
    %v226 = vld [vmem:[%s0 + $0x330] sm:$0xf]
    %v227 = vld [vmem:[%s0 + $0x334] sm:$0xf]
    %v228 = vld [vmem:[%s0 + $0x338] sm:$0xf]
    %v229 = vld [vmem:[%s0 + $0x33c] sm:$0xf]
    %v230 = vld [vmem:[%s0 + $0x340] sm:$0xf]
    %v231 = vld [vmem:[%s0 + $0x344] sm:$0xf]
    %v232 = vld [vmem:[%s0 + $0x348] sm:$0xf]
    %v233 = vld [vmem:[%s0 + $0x34c] sm:$0xf]
    %v234 = vld [vmem:[%s0 + $0x350] sm:$0xf]
    %v235 = vld [vmem:[%s0 + $0x354] sm:$0xf]
    %v236 = vld [vmem:[%s0 + $0x358] sm:$0xf]
    %v237 = vld [vmem:[%s0 + $0x35c] sm:$0xf]
    %v238 = vld [vmem:[%s0 + $0x360] sm:$0xf]
    %v239 = vld [vmem:[%s0 + $0x364] sm:$0xf]
    %v240 = vld [vmem:[%s0 + $0x368] sm:$0xf]
    %v241 = vld [vmem:[%s0 + $0x36c] sm:$0xf]
    %v242 = vld [vmem:[%s0 + $0x370] sm:$0xf]
    %v243 = vld [vmem:[%s0 + $0x374] sm:$0xf]
    %v244 = vld [vmem:[%s0 + $0x378] sm:$0xf]
    %v245 = vld [vmem:[%s0 + $0x37c] sm:$0xf]
    %v246 = vld [vmem:[%s0 + $0x380] sm:$0xf]
    %v247 = vld [vmem:[%s0 + $0x384] sm:$0xf]
    %v248 = vld [vmem:[%s0 + $0x388] sm:$0xf]
    %v249 = vld [vmem:[%s0 + $0x38c] sm:$0xf]
    %v250 = vld [vmem:[%s0 + $0x390] sm:$0xf]
    %v251 = vld [vmem:[%s0 + $0x394] sm:$0xf]
    %v252 = vld [vmem:[%s0 + $0x398] sm:$0xf]
    %v253 = vld [vmem:[%s0 + $0x39c] sm:$0xf]
    %v254 = vld [vmem:[%s1] sm:$0xf]
    %v255 = vld [vmem:[%s1 + $0x4] sm:$0xf]
    %v256 = vld [vmem:[%s1 + $0x8] sm:$0xf]
    %v257 = vld [vmem:[%s1 + $0xc] sm:$0xf]
    %v490 = vunpack.c.l.b16 %v22
    %v491 = vunpack.c.l.b16 %v23
    %v492 = vunpack.c.l.b16 %v24
    %v493 = vunpack.c.l.b16 %v25
    %v494 = vunpack.c.l.b16 %v26
    %v495 = vunpack.c.l.b16 %v27
    %v496 = vunpack.c.l.b16 %v28
    %v497 = vunpack.c.l.b16 %v29
    %v498 = vunpack.c.l.b16 %v30
    %v499 = vunpack.c.l.b16 %v31
    %v500 = vunpack.c.l.b16 %v32
    %v501 = vunpack.c.l.b16 %v33
    %v502 = vunpack.c.l.b16 %v34
    %v503 = vunpack.c.l.b16 %v35
    %v504 = vunpack.c.l.b16 %v36
    %v505 = vunpack.c.l.b16 %v37
    %v506 = vunpack.c.l.b16 %v38
    %v507 = vunpack.c.l.b16 %v39
    %v508 = vunpack.c.l.b16 %v40
    %v509 = vunpack.c.l.b16 %v41
    %v510 = vunpack.c.l.b16 %v42
    %v511 = vunpack.c.l.b16 %v43
    %v512 = vunpack.c.l.b16 %v44
    %v513 = vunpack.c.l.b16 %v45
    %v514 = vunpack.c.l.b16 %v46
    %v515 = vunpack.c.l.b16 %v47
    %v516 = vunpack.c.l.b16 %v48
    %v517 = vunpack.c.l.b16 %v49
    %v518 = vunpack.c.l.b16 %v50
    %v519 = vunpack.c.l.b16 %v51
    %v520 = vunpack.c.l.b16 %v52
    %v521 = vunpack.c.l.b16 %v53
    %v522 = vunpack.c.l.b16 %v54
    %v523 = vunpack.c.l.b16 %v55
    %v524 = vunpack.c.l.b16 %v56
    %v525 = vunpack.c.l.b16 %v57
    %v526 = vunpack.c.l.b16 %v58
    %v527 = vunpack.c.l.b16 %v59
    %v528 = vunpack.c.l.b16 %v60
    %v529 = vunpack.c.l.b16 %v61
    %v530 = vunpack.c.l.b16 %v62
    %v531 = vunpack.c.l.b16 %v63
    %v532 = vunpack.c.l.b16 %v64
    %v533 = vunpack.c.l.b16 %v65
    %v534 = vunpack.c.l.b16 %v66
    %v535 = vunpack.c.l.b16 %v67
    %v536 = vunpack.c.l.b16 %v68
    %v537 = vunpack.c.l.b16 %v69
    %v538 = vunpack.c.l.b16 %v70
    %v539 = vunpack.c.l.b16 %v71
    %v540 = vunpack.c.l.b16 %v72
    %v541 = vunpack.c.l.b16 %v73
    %v542 = vunpack.c.l.b16 %v74
    %v543 = vunpack.c.l.b16 %v75
    %v544 = vunpack.c.l.b16 %v76
    %v545 = vunpack.c.l.b16 %v77
    %v546 = vunpack.c.l.b16 %v78
    %v547 = vunpack.c.l.b16 %v79
    %v548 = vunpack.c.l.b16 %v80
    %v549 = vunpack.c.l.b16 %v81
    %v550 = vunpack.c.l.b16 %v82
    %v551 = vunpack.c.l.b16 %v83
    %v552 = vunpack.c.l.b16 %v84
    %v553 = vunpack.c.l.b16 %v85
    %v554 = vunpack.c.l.b16 %v86
    %v555 = vunpack.c.l.b16 %v87
    %v556 = vunpack.c.l.b16 %v88
    %v557 = vunpack.c.l.b16 %v89
    %v558 = vunpack.c.l.b16 %v90
    %v559 = vunpack.c.l.b16 %v91
    %v560 = vunpack.c.l.b16 %v92
    %v561 = vunpack.c.l.b16 %v93
    %v562 = vunpack.c.l.b16 %v94
    %v563 = vunpack.c.l.b16 %v95
    %v564 = vunpack.c.l.b16 %v96
    %v565 = vunpack.c.l.b16 %v97
    %v566 = vunpack.c.l.b16 %v98
    %v567 = vunpack.c.l.b16 %v99
    %v568 = vunpack.c.l.b16 %v100
    %v569 = vunpack.c.l.b16 %v101
    %v570 = vunpack.c.l.b16 %v102
    %v571 = vunpack.c.l.b16 %v103
    %v572 = vunpack.c.l.b16 %v104
    %v573 = vunpack.c.l.b16 %v105
    %v574 = vunpack.c.l.b16 %v106
    %v575 = vunpack.c.l.b16 %v107
    %v576 = vunpack.c.l.b16 %v108
    %v577 = vunpack.c.l.b16 %v109
    %v578 = vunpack.c.l.b16 %v110
    %v579 = vunpack.c.l.b16 %v111
    %v580 = vunpack.c.l.b16 %v112
    %v581 = vunpack.c.l.b16 %v113
    %v582 = vunpack.c.l.b16 %v114
    %v583 = vunpack.c.l.b16 %v115
    %v584 = vunpack.c.l.b16 %v116
    %v585 = vunpack.c.l.b16 %v117
    %v586 = vunpack.c.l.b16 %v118
    %v587 = vunpack.c.l.b16 %v119
    %v588 = vunpack.c.l.b16 %v120
    %v589 = vunpack.c.l.b16 %v121
    %v590 = vunpack.c.l.b16 %v122
    %v591 = vunpack.c.l.b16 %v123
    %v592 = vunpack.c.l.b16 %v124
    %v593 = vunpack.c.l.b16 %v125
    %v594 = vunpack.c.l.b16 %v126
    %v595 = vunpack.c.l.b16 %v127
    %v596 = vunpack.c.l.b16 %v128
    %v597 = vunpack.c.l.b16 %v129
    %v598 = vunpack.c.l.b16 %v130
    %v599 = vunpack.c.l.b16 %v131
    %v600 = vunpack.c.l.b16 %v132
    %v601 = vunpack.c.l.b16 %v133
    %v602 = vunpack.c.l.b16 %v134
    %v603 = vunpack.c.l.b16 %v135
    %v604 = vunpack.c.l.b16 %v136
    %v605 = vunpack.c.l.b16 %v137
    %v606 = vunpack.c.l.b16 %v138
    %v607 = vunpack.c.l.b16 %v139
    %v608 = vunpack.c.l.b16 %v140
    %v609 = vunpack.c.l.b16 %v141
    %v610 = vunpack.c.l.b16 %v142
    %v611 = vunpack.c.l.b16 %v143
    %v612 = vunpack.c.l.b16 %v144
    %v613 = vunpack.c.l.b16 %v145
    %v614 = vunpack.c.l.b16 %v146
    %v615 = vunpack.c.l.b16 %v147
    %v616 = vunpack.c.l.b16 %v148
    %v617 = vunpack.c.l.b16 %v149
    %v618 = vunpack.c.l.b16 %v150
    %v619 = vunpack.c.l.b16 %v151
    %v620 = vunpack.c.l.b16 %v152
    %v621 = vunpack.c.l.b16 %v153
    %v622 = vunpack.c.l.b16 %v154
    %v623 = vunpack.c.l.b16 %v155
    %v624 = vunpack.c.l.b16 %v156
    %v625 = vunpack.c.l.b16 %v157
    %v626 = vunpack.c.l.b16 %v158
    %v627 = vunpack.c.l.b16 %v159
    %v628 = vunpack.c.l.b16 %v160
    %v629 = vunpack.c.l.b16 %v161
    %v630 = vunpack.c.l.b16 %v162
    %v631 = vunpack.c.l.b16 %v163
    %v632 = vunpack.c.l.b16 %v164
    %v633 = vunpack.c.l.b16 %v165
    %v634 = vunpack.c.l.b16 %v166
    %v635 = vunpack.c.l.b16 %v167
    %v636 = vunpack.c.l.b16 %v168
    %v637 = vunpack.c.l.b16 %v169
    %v638 = vunpack.c.l.b16 %v170
    %v639 = vunpack.c.l.b16 %v171
    %v640 = vunpack.c.l.b16 %v172
    %v641 = vunpack.c.l.b16 %v173
    %v642 = vunpack.c.l.b16 %v174
    %v643 = vunpack.c.l.b16 %v175
    %v644 = vunpack.c.l.b16 %v176
    %v645 = vunpack.c.l.b16 %v177
    %v646 = vunpack.c.l.b16 %v178
    %v647 = vunpack.c.l.b16 %v179
    %v648 = vunpack.c.l.b16 %v180
    %v649 = vunpack.c.l.b16 %v181
    %v650 = vunpack.c.l.b16 %v182
    %v651 = vunpack.c.l.b16 %v183
    %v652 = vunpack.c.l.b16 %v184
    %v653 = vunpack.c.l.b16 %v185
    %v654 = vunpack.c.l.b16 %v186
    %v655 = vunpack.c.l.b16 %v187
    %v656 = vunpack.c.l.b16 %v188
    %v657 = vunpack.c.l.b16 %v189
    %v658 = vunpack.c.l.b16 %v190
    %v659 = vunpack.c.l.b16 %v191
    %v660 = vunpack.c.l.b16 %v192
    %v661 = vunpack.c.l.b16 %v193
    %v662 = vunpack.c.l.b16 %v194
    %v663 = vunpack.c.l.b16 %v195
    %v664 = vunpack.c.l.b16 %v196
    %v665 = vunpack.c.l.b16 %v197
    %v666 = vunpack.c.l.b16 %v198
    %v667 = vunpack.c.l.b16 %v199
    %v668 = vunpack.c.l.b16 %v200
    %v669 = vunpack.c.l.b16 %v201
    %v670 = vunpack.c.l.b16 %v202
    %v671 = vunpack.c.l.b16 %v203
    %v672 = vunpack.c.l.b16 %v204
    %v673 = vunpack.c.l.b16 %v205
    %v674 = vunpack.c.l.b16 %v206
    %v675 = vunpack.c.l.b16 %v207
    %v676 = vunpack.c.l.b16 %v208
    %v677 = vunpack.c.l.b16 %v209
    %v678 = vunpack.c.l.b16 %v210
    %v679 = vunpack.c.l.b16 %v211
    %v680 = vunpack.c.l.b16 %v212
    %v681 = vunpack.c.l.b16 %v213
    %v682 = vunpack.c.l.b16 %v214
    %v683 = vunpack.c.l.b16 %v215
    %v684 = vunpack.c.l.b16 %v216
    %v685 = vunpack.c.l.b16 %v217
    %v686 = vunpack.c.l.b16 %v218
    %v687 = vunpack.c.l.b16 %v219
    %v688 = vunpack.c.l.b16 %v220
    %v689 = vunpack.c.l.b16 %v221
    %v690 = vunpack.c.l.b16 %v222
    %v691 = vunpack.c.l.b16 %v223
    %v692 = vunpack.c.l.b16 %v224
    %v693 = vunpack.c.l.b16 %v225
    %v694 = vunpack.c.l.b16 %v226
    %v695 = vunpack.c.l.b16 %v227
    %v696 = vunpack.c.l.b16 %v228
    %v697 = vunpack.c.l.b16 %v229
    %v698 = vunpack.c.l.b16 %v230
    %v699 = vunpack.c.l.b16 %v231
    %v700 = vunpack.c.l.b16 %v232
    %v701 = vunpack.c.l.b16 %v233
    %v702 = vunpack.c.l.b16 %v234
    %v703 = vunpack.c.l.b16 %v235
    %v704 = vunpack.c.l.b16 %v236
    %v705 = vunpack.c.l.b16 %v237
    %v706 = vunpack.c.l.b16 %v238
    %v707 = vunpack.c.l.b16 %v239
    %v708 = vunpack.c.l.b16 %v240
    %v709 = vunpack.c.l.b16 %v241
    %v710 = vunpack.c.l.b16 %v242
    %v711 = vunpack.c.l.b16 %v243
    %v712 = vunpack.c.l.b16 %v244
    %v713 = vunpack.c.l.b16 %v245
    %v714 = vunpack.c.l.b16 %v246
    %v715 = vunpack.c.l.b16 %v247
    %v716 = vunpack.c.l.b16 %v248
    %v717 = vunpack.c.l.b16 %v249
    %v718 = vunpack.c.l.b16 %v250
    %v719 = vunpack.c.l.b16 %v251
    %v720 = vunpack.c.l.b16 %v252
    %v721 = vunpack.c.l.b16 %v253
    %v722 = vpack.c.b16 %v491, %v490
    %v723 = vpack.c.b16 %v493, %v492
    %v724 = vpack.c.b16 %v495, %v494
    %v725 = vpack.c.b16 %v497, %v496
    %v726 = vpack.c.b16 %v499, %v498
    %v727 = vpack.c.b16 %v501, %v500
    %v728 = vpack.c.b16 %v503, %v502
    %v729 = vpack.c.b16 %v505, %v504
    %v730 = vpack.c.b16 %v507, %v506
    %v731 = vpack.c.b16 %v509, %v508
    %v732 = vpack.c.b16 %v511, %v510
    %v733 = vpack.c.b16 %v513, %v512
    %v734 = vpack.c.b16 %v515, %v514
    %v735 = vpack.c.b16 %v517, %v516
    %v736 = vpack.c.b16 %v519, %v518
    %v737 = vpack.c.b16 %v521, %v520
    %v738 = vpack.c.b16 %v523, %v522
    %v739 = vpack.c.b16 %v525, %v524
    %v740 = vpack.c.b16 %v527, %v526
    %v741 = vpack.c.b16 %v529, %v528
    %v742 = vpack.c.b16 %v531, %v530
    %v743 = vpack.c.b16 %v533, %v532
    %v744 = vpack.c.b16 %v535, %v534
    %v745 = vpack.c.b16 %v537, %v536
    %v746 = vpack.c.b16 %v539, %v538
    %v747 = vpack.c.b16 %v541, %v540
    %v748 = vpack.c.b16 %v543, %v542
    %v749 = vpack.c.b16 %v545, %v544
    %v750 = vpack.c.b16 %v547, %v546
    %v751 = vpack.c.b16 %v549, %v548
    %v752 = vpack.c.b16 %v551, %v550
    %v753 = vpack.c.b16 %v553, %v552
    %v754 = vpack.c.b16 %v555, %v554
    %v755 = vpack.c.b16 %v557, %v556
    %v756 = vpack.c.b16 %v559, %v558
    %v757 = vpack.c.b16 %v561, %v560
    %v758 = vpack.c.b16 %v563, %v562
    %v759 = vpack.c.b16 %v565, %v564
    %v760 = vpack.c.b16 %v567, %v566
    %v761 = vpack.c.b16 %v569, %v568
    %v762 = vpack.c.b16 %v571, %v570
    %v763 = vpack.c.b16 %v573, %v572
    %v764 = vpack.c.b16 %v575, %v574
    %v765 = vpack.c.b16 %v577, %v576
    %v766 = vpack.c.b16 %v579, %v578
    %v767 = vpack.c.b16 %v581, %v580
    %v768 = vpack.c.b16 %v583, %v582
    %v769 = vpack.c.b16 %v585, %v584
    %v770 = vpack.c.b16 %v587, %v586
    %v771 = vpack.c.b16 %v589, %v588
    %v772 = vpack.c.b16 %v591, %v590
    %v773 = vpack.c.b16 %v593, %v592
    %v774 = vpack.c.b16 %v595, %v594
    %v775 = vpack.c.b16 %v597, %v596
    %v776 = vpack.c.b16 %v599, %v598
    %v777 = vpack.c.b16 %v601, %v600
    %v778 = vpack.c.b16 %v603, %v602
    %v779 = vpack.c.b16 %v605, %v604
    %v780 = vpack.c.b16 %v607, %v606
    %v781 = vpack.c.b16 %v609, %v608
    %v782 = vpack.c.b16 %v611, %v610
    %v783 = vpack.c.b16 %v613, %v612
    %v784 = vpack.c.b16 %v615, %v614
    %v785 = vpack.c.b16 %v617, %v616
    %v786 = vpack.c.b16 %v619, %v618
    %v787 = vpack.c.b16 %v621, %v620
    %v788 = vpack.c.b16 %v623, %v622
    %v789 = vpack.c.b16 %v625, %v624
    %v790 = vpack.c.b16 %v627, %v626
    %v791 = vpack.c.b16 %v629, %v628
    %v792 = vpack.c.b16 %v631, %v630
    %v793 = vpack.c.b16 %v633, %v632
    %v794 = vpack.c.b16 %v635, %v634
    %v795 = vpack.c.b16 %v637, %v636
    %v796 = vpack.c.b16 %v639, %v638
    %v797 = vpack.c.b16 %v641, %v640
    %v798 = vpack.c.b16 %v643, %v642
    %v799 = vpack.c.b16 %v645, %v644
    %v800 = vpack.c.b16 %v647, %v646
    %v801 = vpack.c.b16 %v649, %v648
    %v802 = vpack.c.b16 %v651, %v650
    %v803 = vpack.c.b16 %v653, %v652
    %v804 = vpack.c.b16 %v655, %v654
    %v805 = vpack.c.b16 %v657, %v656
    %v806 = vpack.c.b16 %v659, %v658
    %v807 = vpack.c.b16 %v661, %v660
    %v808 = vpack.c.b16 %v663, %v662
    %v809 = vpack.c.b16 %v665, %v664
    %v810 = vpack.c.b16 %v667, %v666
    %v811 = vpack.c.b16 %v669, %v668
    %v812 = vpack.c.b16 %v671, %v670
    %v813 = vpack.c.b16 %v673, %v672
    %v814 = vpack.c.b16 %v675, %v674
    %v815 = vpack.c.b16 %v677, %v676
    %v816 = vpack.c.b16 %v679, %v678
    %v817 = vpack.c.b16 %v681, %v680
    %v818 = vpack.c.b16 %v683, %v682
    %v819 = vpack.c.b16 %v685, %v684
    %v820 = vpack.c.b16 %v687, %v686
    %v821 = vpack.c.b16 %v689, %v688
    %v822 = vpack.c.b16 %v691, %v690
    %v823 = vpack.c.b16 %v693, %v692
    %v824 = vpack.c.b16 %v695, %v694
    %v825 = vpack.c.b16 %v697, %v696
    %v826 = vpack.c.b16 %v699, %v698
    %v827 = vpack.c.b16 %v701, %v700
    %v828 = vpack.c.b16 %v703, %v702
    %v829 = vpack.c.b16 %v705, %v704
    %v830 = vpack.c.b16 %v707, %v706
    %v831 = vpack.c.b16 %v709, %v708
    %v832 = vpack.c.b16 %v711, %v710
    %v833 = vpack.c.b16 %v713, %v712
    %v834 = vpack.c.b16 %v715, %v714
    %v835 = vpack.c.b16 %v717, %v716
    %v836 = vpack.c.b16 %v719, %v718
    %v837 = vpack.c.b16 %v721, %v720
    %v842 = vunpack.c.l.b16 %v254
    %v843 = vunpack.c.l.b16 %v255
    %v844 = vunpack.c.l.b16 %v256
    %v845 = vunpack.c.l.b16 %v257
    %v846 = vpack.c.b16 %v843, %v842
    %v847 = vpack.c.b16 %v845, %v844
    %vm850 = vcmask 261120
    %v852 = vsel %vm850, %v722, 0
    %v855 = vsel %vm850, %v723, 0
    %v858 = vsel %vm850, %v724, 0
    %v861 = vsel %vm850, %v725, 0
    %v864 = vsel %vm850, %v726, 0
    %v867 = vsel %vm850, %v727, 0
    %v870 = vsel %vm850, %v728, 0
    %v873 = vsel %vm850, %v729, 0
    %v876 = vsel %vm850, %v730, 0
    %v879 = vsel %vm850, %v731, 0
    %v882 = vsel %vm850, %v732, 0
    %v885 = vsel %vm850, %v733, 0
    %v888 = vsel %vm850, %v734, 0
    %v891 = vsel %vm850, %v735, 0
    %v894 = vsel %vm850, %v736, 0
    %v897 = vsel %vm850, %v737, 0
    %v900 = vsel %vm850, %v738, 0
    %v903 = vsel %vm850, %v739, 0
    %v906 = vsel %vm850, %v740, 0
    %v909 = vsel %vm850, %v741, 0
    %v912 = vsel %vm850, %v742, 0
    %v915 = vsel %vm850, %v743, 0
    %v918 = vsel %vm850, %v744, 0
    %v921 = vsel %vm850, %v745, 0
    %v924 = vsel %vm850, %v746, 0
    %v927 = vsel %vm850, %v747, 0
    %v930 = vsel %vm850, %v748, 0
    %v933 = vsel %vm850, %v749, 0
    %v936 = vsel %vm850, %v750, 0
    %v939 = vsel %vm850, %v751, 0
    %v942 = vsel %vm850, %v752, 0
    %v945 = vsel %vm850, %v753, 0
    %v948 = vsel %vm850, %v754, 0
    %v951 = vsel %vm850, %v755, 0
    %v954 = vsel %vm850, %v756, 0
    %v957 = vsel %vm850, %v757, 0
    %v960 = vsel %vm850, %v758, 0
    %v963 = vsel %vm850, %v759, 0
    %v966 = vsel %vm850, %v760, 0
    %v969 = vsel %vm850, %v761, 0
    %v972 = vsel %vm850, %v762, 0
    %v975 = vsel %vm850, %v763, 0
    %v978 = vsel %vm850, %v764, 0
    %v981 = vsel %vm850, %v765, 0
    %v984 = vsel %vm850, %v766, 0
    %v987 = vsel %vm850, %v767, 0
    %v990 = vsel %vm850, %v768, 0
    %v993 = vsel %vm850, %v769, 0
    %v996 = vsel %vm850, %v770, 0
    %v999 = vsel %vm850, %v771, 0
    %v1002 = vsel %vm850, %v772, 0
    %v1005 = vsel %vm850, %v773, 0
    %v1008 = vsel %vm850, %v774, 0
    %v1011 = vsel %vm850, %v775, 0
    %v1014 = vsel %vm850, %v776, 0
    %v1017 = vsel %vm850, %v777, 0
    %v1020 = vsel %vm850, %v778, 0
    %v1023 = vsel %vm850, %v779, 0
    %v1026 = vsel %vm850, %v780, 0
    %v1029 = vsel %vm850, %v781, 0
    %v1032 = vsel %vm850, %v782, 0
    %v1035 = vsel %vm850, %v783, 0
    %v1038 = vsel %vm850, %v784, 0
    %v1041 = vsel %vm850, %v785, 0
    %v1044 = vsel %vm850, %v786, 0
    %v1047 = vsel %vm850, %v787, 0
    %v1050 = vsel %vm850, %v788, 0
    %v1053 = vsel %vm850, %v789, 0
    %v1056 = vsel %vm850, %v790, 0
    %v1059 = vsel %vm850, %v791, 0
    %v1062 = vsel %vm850, %v792, 0
    %v1065 = vsel %vm850, %v793, 0
    %v1068 = vsel %vm850, %v794, 0
    %v1071 = vsel %vm850, %v795, 0
    %v1074 = vsel %vm850, %v796, 0
    %v1077 = vsel %vm850, %v797, 0
    %v1080 = vsel %vm850, %v798, 0
    %v1083 = vsel %vm850, %v799, 0
    %v1086 = vsel %vm850, %v800, 0
    %v1089 = vsel %vm850, %v801, 0
    %v1092 = vsel %vm850, %v802, 0
    %v1095 = vsel %vm850, %v803, 0
    %v1098 = vsel %vm850, %v804, 0
    %v1101 = vsel %vm850, %v805, 0
    %v1104 = vsel %vm850, %v806, 0
    %v1107 = vsel %vm850, %v807, 0
    %v1110 = vsel %vm850, %v808, 0
    %v1113 = vsel %vm850, %v809, 0
    %v1116 = vsel %vm850, %v810, 0
    %v1119 = vsel %vm850, %v811, 0
    %v1122 = vsel %vm850, %v812, 0
    %v1125 = vsel %vm850, %v813, 0
    %v1128 = vsel %vm850, %v814, 0
    %v1131 = vsel %vm850, %v815, 0
    %v1134 = vsel %vm850, %v816, 0
    %v1137 = vsel %vm850, %v817, 0
    %v1140 = vsel %vm850, %v818, 0
    %v1143 = vsel %vm850, %v819, 0
    %v1146 = vsel %vm850, %v820, 0
    %v1149 = vsel %vm850, %v821, 0
    %v1152 = vsel %vm850, %v822, 0
    %v1155 = vsel %vm850, %v823, 0
    %v1158 = vsel %vm850, %v824, 0
    %v1161 = vsel %vm850, %v825, 0
    %v1164 = vsel %vm850, %v826, 0
    %v1167 = vsel %vm850, %v827, 0
    %v1170 = vsel %vm850, %v828, 0
    %v1173 = vsel %vm850, %v829, 0
    %v1176 = vsel %vm850, %v830, 0
    %v1179 = vsel %vm850, %v831, 0
    %v1182 = vsel %vm850, %v832, 0
    %v1185 = vsel %vm850, %v833, 0
    %v1188 = vsel %vm850, %v834, 0
    %v1191 = vsel %vm850, %v835, 0
    %v1194 = vsel %vm850, %v836, 0
    %v1197 = vsel %vm850, %v837, 0
    %1199 = vmatprep.subr.bf16.mxu0 0
    %1200 = vmatpush1.bf16.msra.mxu0 %v846
    %1201 = vmatprep.subr.bf16.mxu0 0
    %1202 = vmatpush1.bf16.msra.mxu0 %v847
    %1203 = vmatprep.subr.bf16.mxu0 0
    %1204 = vmatpush1.bf16.msra.mxu0 0
    %1205 = vmatprep.subr.bf16.mxu0 0
    %1206 = vmatpush1.bf16.msra.mxu0 0
    %1207 = vmatprep.subr.bf16.mxu0 0
    %1208 = vmatpush1.bf16.msra.mxu0 0
    %1209 = vmatprep.subr.bf16.mxu0 0
    %1210 = vmatpush1.bf16.msra.mxu0 0
    %1211 = vmatprep.subr.bf16.mxu0 0
    %1212 = vmatpush1.bf16.msra.mxu0 0
    %1213 = vmatprep.subr.bf16.mxu0 0
    %1214 = vmatpush1.bf16.msra.mxu0 0
    %1215 = vmatprep.subr.bf16.mxu0 0
    %1216 = vmatpush1.bf16.msra.mxu0 0
    %1217 = vmatprep.subr.bf16.mxu0 0
    %1218 = vmatpush1.bf16.msra.mxu0 0
    %1219 = vmatprep.subr.bf16.mxu0 0
    %1220 = vmatpush1.bf16.msra.mxu0 0
    %1221 = vmatprep.subr.bf16.mxu0 0
    %1222 = vmatpush1.bf16.msra.mxu0 0
    %1223 = vmatprep.subr.bf16.mxu0 0
    %1224 = vmatpush1.bf16.msra.mxu0 0
    %1225 = vmatprep.subr.bf16.mxu0 0
    %1226 = vmatpush1.bf16.msra.mxu0 0
    %1227 = vmatprep.subr.bf16.mxu0 0
    %1228 = vmatpush1.bf16.msra.mxu0 0
    %1229 = vmatprep.subr.bf16.mxu0 0
    %1230 = vmatpush1.bf16.msra.mxu0 0
    %1231 = vmatprep.mubr.bf16.mxu0 0
    %1232 = vmatmul.mubr.bf16.gmra.mrb[0].mxu0 %v852
    %v1233 = vpop.f32.mrb[0].mxu0
    %v1234 = vadd.f32 0.0, %v1233
    %v1235 = vpop.f32.mrb[0].mxu0
    %v1236 = vpop.f32.mrb[0].mxu0
    %v1237 = vadd.f32 0.0, %v1236
    %v1238 = vpop.f32.mrb[0].mxu0
    %1239 = vmatprep.mubr.bf16.mxu0 0
    %1240 = vmatmul.mubr.bf16.gmra.mrb[0].mxu0 %v855
    %v1241 = vpop.f32.mrb[0].mxu0
    %v1242 = vadd.f32 0.0, %v1241
    %v1243 = vpop.f32.mrb[0].mxu0
    %v1244 = vpop.f32.mrb[0].mxu0
    %v1245 = vadd.f32 0.0, %v1244
    %v1246 = vpop.f32.mrb[0].mxu0
    %1247 = vmatprep.mubr.bf16.mxu0 0
    %1248 = vmatmul.mubr.bf16.gmra.mrb[0].mxu0 %v858
    %v1249 = vpop.f32.mrb[0].mxu0
    %v1250 = vadd.f32 0.0, %v1249
    %v1251 = vpop.f32.mrb[0].mxu0
    %v1252 = vpop.f32.mrb[0].mxu0
    %v1253 = vadd.f32 0.0, %v1252
    %v1254 = vpop.f32.mrb[0].mxu0
    %1255 = vmatprep.mubr.bf16.mxu0 0
    %1256 = vmatmul.mubr.bf16.gmra.mrb[0].mxu0 %v861
    %v1257 = vpop.f32.mrb[0].mxu0
    %v1258 = vadd.f32 0.0, %v1257
    %v1259 = vpop.f32.mrb[0].mxu0
    %v1260 = vpop.f32.mrb[0].mxu0
    %v1261 = vadd.f32 0.0, %v1260
    %v1262 = vpop.f32.mrb[0].mxu0
    %1263 = vmatprep.mubr.bf16.mxu0 0
    %1264 = vmatmul.mubr.bf16.gmra.mrb[0].mxu0 %v864
    %v1265 = vpop.f32.mrb[0].mxu0
    %v1266 = vadd.f32 0.0, %v1265
    %v1267 = vpop.f32.mrb[0].mxu0
    %v1268 = vpop.f32.mrb[0].mxu0
    %v1269 = vadd.f32 0.0, %v1268
    %v1270 = vpop.f32.mrb[0].mxu0
    %1271 = vmatprep.mubr.bf16.mxu0 0
    %1272 = vmatmul.mubr.bf16.gmra.mrb[0].mxu0 %v867
    %v1273 = vpop.f32.mrb[0].mxu0
    %v1274 = vadd.f32 0.0, %v1273
    %v1275 = vpop.f32.mrb[0].mxu0
    %v1276 = vpop.f32.mrb[0].mxu0
    %v1277 = vadd.f32 0.0, %v1276
    %v1278 = vpop.f32.mrb[0].mxu0
    %1279 = vmatprep.mubr.bf16.mxu0 0
    %1280 = vmatmul.mubr.bf16.gmra.mrb[0].mxu0 %v870
    %v1281 = vpop.f32.mrb[0].mxu0
    %v1282 = vadd.f32 0.0, %v1281
    %v1283 = vpop.f32.mrb[0].mxu0
    %v1284 = vpop.f32.mrb[0].mxu0
    %v1285 = vadd.f32 0.0, %v1284
    %v1286 = vpop.f32.mrb[0].mxu0
    %1287 = vmatprep.mubr.bf16.mxu0 0
    %1288 = vmatmul.mubr.bf16.gmra.mrb[0].mxu0 %v873
    %v1289 = vpop.f32.mrb[0].mxu0
    %v1290 = vadd.f32 0.0, %v1289
    %v1291 = vpop.f32.mrb[0].mxu0
    %v1292 = vpop.f32.mrb[0].mxu0
    %v1293 = vadd.f32 0.0, %v1292
    %v1294 = vpop.f32.mrb[0].mxu0
    %1295 = vmatprep.mubr.bf16.mxu0 0
    %1296 = vmatmul.mubr.bf16.gmra.mrb[0].mxu0 %v876
    %v1297 = vpop.f32.mrb[0].mxu0
    %v1298 = vadd.f32 0.0, %v1297
    %v1299 = vpop.f32.mrb[0].mxu0
    %v1300 = vpop.f32.mrb[0].mxu0
    %v1301 = vadd.f32 0.0, %v1300
    %v1302 = vpop.f32.mrb[0].mxu0
    %1303 = vmatprep.mubr.bf16.mxu0 0
    %1304 = vmatmul.mubr.bf16.gmra.mrb[0].mxu0 %v879
    %v1305 = vpop.f32.mrb[0].mxu0
    %v1306 = vadd.f32 0.0, %v1305
    %v1307 = vpop.f32.mrb[0].mxu0
    %v1308 = vpop.f32.mrb[0].mxu0
    %v1309 = vadd.f32 0.0, %v1308
    %v1310 = vpop.f32.mrb[0].mxu0
    %1311 = vmatprep.mubr.bf16.mxu0 0
    %1312 = vmatmul.mubr.bf16.gmra.mrb[0].mxu0 %v882
    %v1313 = vpop.f32.mrb[0].mxu0
    %v1314 = vadd.f32 0.0, %v1313
    %v1315 = vpop.f32.mrb[0].mxu0
    %v1316 = vpop.f32.mrb[0].mxu0
    %v1317 = vadd.f32 0.0, %v1316
    %v1318 = vpop.f32.mrb[0].mxu0
    %1319 = vmatprep.mubr.bf16.mxu0 0
    %1320 = vmatmul.mubr.bf16.gmra.mrb[0].mxu0 %v885
    %v1321 = vpop.f32.mrb[0].mxu0
    %v1322 = vadd.f32 0.0, %v1321
    %v1323 = vpop.f32.mrb[0].mxu0
    %v1324 = vpop.f32.mrb[0].mxu0
    %v1325 = vadd.f32 0.0, %v1324
    %v1326 = vpop.f32.mrb[0].mxu0
    %1327 = vmatprep.mubr.bf16.mxu0 0
    %1328 = vmatmul.mubr.bf16.gmra.mrb[0].mxu0 %v888
    %v1329 = vpop.f32.mrb[0].mxu0
    %v1330 = vadd.f32 0.0, %v1329
    %v1331 = vpop.f32.mrb[0].mxu0
    %v1332 = vpop.f32.mrb[0].mxu0
    %v1333 = vadd.f32 0.0, %v1332
    %v1334 = vpop.f32.mrb[0].mxu0
    %1335 = vmatprep.mubr.bf16.mxu0 0
    %1336 = vmatmul.mubr.bf16.gmra.mrb[0].mxu0 %v891
    %v1337 = vpop.f32.mrb[0].mxu0
    %v1338 = vadd.f32 0.0, %v1337
    %v1339 = vpop.f32.mrb[0].mxu0
    %v1340 = vpop.f32.mrb[0].mxu0
    %v1341 = vadd.f32 0.0, %v1340
    %v1342 = vpop.f32.mrb[0].mxu0
    %1343 = vmatprep.mubr.bf16.mxu0 0
    %1344 = vmatmul.mubr.bf16.gmra.mrb[0].mxu0 %v894
    %v1345 = vpop.f32.mrb[0].mxu0
    %v1346 = vadd.f32 0.0, %v1345
    %v1347 = vpop.f32.mrb[0].mxu0
    %v1348 = vpop.f32.mrb[0].mxu0
    %v1349 = vadd.f32 0.0, %v1348
    %v1350 = vpop.f32.mrb[0].mxu0
    %1351 = vmatprep.mubr.bf16.mxu0 0
    %1352 = vmatmul.mubr.bf16.gmra.mrb[0].mxu0 %v897
    %v1353 = vpop.f32.mrb[0].mxu0
    %v1354 = vadd.f32 0.0, %v1353
    %v1355 = vpop.f32.mrb[0].mxu0
    %v1356 = vpop.f32.mrb[0].mxu0
    %v1357 = vadd.f32 0.0, %v1356
    %v1358 = vpop.f32.mrb[0].mxu0
    %1359 = vmatprep.mubr.bf16.mxu0 0
    %1360 = vmatmul.mubr.bf16.gmra.mrb[0].mxu0 %v900
    %v1361 = vpop.f32.mrb[0].mxu0
    %v1362 = vadd.f32 0.0, %v1361
    %v1363 = vpop.f32.mrb[0].mxu0
    %v1364 = vpop.f32.mrb[0].mxu0
    %v1365 = vadd.f32 0.0, %v1364
    %v1366 = vpop.f32.mrb[0].mxu0
    %1367 = vmatprep.mubr.bf16.mxu0 0
    %1368 = vmatmul.mubr.bf16.gmra.mrb[0].mxu0 %v903
    %v1369 = vpop.f32.mrb[0].mxu0
    %v1370 = vadd.f32 0.0, %v1369
    %v1371 = vpop.f32.mrb[0].mxu0
    %v1372 = vpop.f32.mrb[0].mxu0
    %v1373 = vadd.f32 0.0, %v1372
    %v1374 = vpop.f32.mrb[0].mxu0
    %1375 = vmatprep.mubr.bf16.mxu0 0
    %1376 = vmatmul.mubr.bf16.gmra.mrb[0].mxu0 %v906
    %v1377 = vpop.f32.mrb[0].mxu0
    %v1378 = vadd.f32 0.0, %v1377
    %v1379 = vpop.f32.mrb[0].mxu0
    %v1380 = vpop.f32.mrb[0].mxu0
    %v1381 = vadd.f32 0.0, %v1380
    %v1382 = vpop.f32.mrb[0].mxu0
    %1383 = vmatprep.mubr.bf16.mxu0 0
    %1384 = vmatmul.mubr.bf16.gmra.mrb[0].mxu0 %v909
    %v1385 = vpop.f32.mrb[0].mxu0
    %v1386 = vadd.f32 0.0, %v1385
    %v1387 = vpop.f32.mrb[0].mxu0
    %v1388 = vpop.f32.mrb[0].mxu0
    %v1389 = vadd.f32 0.0, %v1388
    %v1390 = vpop.f32.mrb[0].mxu0
    %1391 = vmatprep.mubr.bf16.mxu0 0
    %1392 = vmatmul.mubr.bf16.gmra.mrb[0].mxu0 %v912
    %v1393 = vpop.f32.mrb[0].mxu0
    %v1394 = vadd.f32 0.0, %v1393
    %v1395 = vpop.f32.mrb[0].mxu0
    %v1396 = vpop.f32.mrb[0].mxu0
    %v1397 = vadd.f32 0.0, %v1396
    %v1398 = vpop.f32.mrb[0].mxu0
    %1399 = vmatprep.mubr.bf16.mxu0 0
    %1400 = vmatmul.mubr.bf16.gmra.mrb[0].mxu0 %v915
    %v1401 = vpop.f32.mrb[0].mxu0
    %v1402 = vadd.f32 0.0, %v1401
    %v1403 = vpop.f32.mrb[0].mxu0
    %v1404 = vpop.f32.mrb[0].mxu0
    %v1405 = vadd.f32 0.0, %v1404
    %v1406 = vpop.f32.mrb[0].mxu0
    %1407 = vmatprep.mubr.bf16.mxu0 0
    %1408 = vmatmul.mubr.bf16.gmra.mrb[0].mxu0 %v918
    %v1409 = vpop.f32.mrb[0].mxu0
    %v1410 = vadd.f32 0.0, %v1409
    %v1411 = vpop.f32.mrb[0].mxu0
    %v1412 = vpop.f32.mrb[0].mxu0
    %v1413 = vadd.f32 0.0, %v1412
    %v1414 = vpop.f32.mrb[0].mxu0
    %1415 = vmatprep.mubr.bf16.mxu0 0
    %1416 = vmatmul.mubr.bf16.gmra.mrb[0].mxu0 %v921
    %v1417 = vpop.f32.mrb[0].mxu0
    %v1418 = vadd.f32 0.0, %v1417
    %v1419 = vpop.f32.mrb[0].mxu0
    %v1420 = vpop.f32.mrb[0].mxu0
    %v1421 = vadd.f32 0.0, %v1420
    %v1422 = vpop.f32.mrb[0].mxu0
    %1423 = vmatprep.mubr.bf16.mxu0 0
    %1424 = vmatmul.mubr.bf16.gmra.mrb[0].mxu0 %v924
    %v1425 = vpop.f32.mrb[0].mxu0
    %v1426 = vadd.f32 0.0, %v1425
    %v1427 = vpop.f32.mrb[0].mxu0
    %v1428 = vpop.f32.mrb[0].mxu0
    %v1429 = vadd.f32 0.0, %v1428
    %v1430 = vpop.f32.mrb[0].mxu0
    %1431 = vmatprep.mubr.bf16.mxu0 0
    %1432 = vmatmul.mubr.bf16.gmra.mrb[0].mxu0 %v927
    %v1433 = vpop.f32.mrb[0].mxu0
    %v1434 = vadd.f32 0.0, %v1433
    %v1435 = vpop.f32.mrb[0].mxu0
    %v1436 = vpop.f32.mrb[0].mxu0
    %v1437 = vadd.f32 0.0, %v1436
    %v1438 = vpop.f32.mrb[0].mxu0
    %1439 = vmatprep.mubr.bf16.mxu0 0
    %1440 = vmatmul.mubr.bf16.gmra.mrb[0].mxu0 %v930
    %v1441 = vpop.f32.mrb[0].mxu0
    %v1442 = vadd.f32 0.0, %v1441
    %v1443 = vpop.f32.mrb[0].mxu0
    %v1444 = vpop.f32.mrb[0].mxu0
    %v1445 = vadd.f32 0.0, %v1444
    %v1446 = vpop.f32.mrb[0].mxu0
    %1447 = vmatprep.mubr.bf16.mxu0 0
    %1448 = vmatmul.mubr.bf16.gmra.mrb[0].mxu0 %v933
    %v1449 = vpop.f32.mrb[0].mxu0
    %v1450 = vadd.f32 0.0, %v1449
    %v1451 = vpop.f32.mrb[0].mxu0
    %v1452 = vpop.f32.mrb[0].mxu0
    %v1453 = vadd.f32 0.0, %v1452
    %v1454 = vpop.f32.mrb[0].mxu0
    %1455 = vmatprep.mubr.bf16.mxu0 0
    %1456 = vmatmul.mubr.bf16.gmra.mrb[0].mxu0 %v936
    %v1457 = vpop.f32.mrb[0].mxu0
    %v1458 = vadd.f32 0.0, %v1457
    %v1459 = vpop.f32.mrb[0].mxu0
    %v1460 = vpop.f32.mrb[0].mxu0
    %v1461 = vadd.f32 0.0, %v1460
    %v1462 = vpop.f32.mrb[0].mxu0
    %1463 = vmatprep.mubr.bf16.mxu0 0
    %1464 = vmatmul.mubr.bf16.gmra.mrb[0].mxu0 %v939
    %v1465 = vpop.f32.mrb[0].mxu0
    %v1466 = vadd.f32 0.0, %v1465
    %v1467 = vpop.f32.mrb[0].mxu0
    %v1468 = vpop.f32.mrb[0].mxu0
    %v1469 = vadd.f32 0.0, %v1468
    %v1470 = vpop.f32.mrb[0].mxu0
    %1471 = vmatprep.mubr.bf16.mxu0 0
    %1472 = vmatmul.mubr.bf16.gmra.mrb[0].mxu0 %v942
    %v1473 = vpop.f32.mrb[0].mxu0
    %v1474 = vadd.f32 0.0, %v1473
    %v1475 = vpop.f32.mrb[0].mxu0
    %v1476 = vpop.f32.mrb[0].mxu0
    %v1477 = vadd.f32 0.0, %v1476
    %v1478 = vpop.f32.mrb[0].mxu0
    %1479 = vmatprep.mubr.bf16.mxu0 0
    %1480 = vmatmul.mubr.bf16.gmra.mrb[0].mxu0 %v945
    %v1481 = vpop.f32.mrb[0].mxu0
    %v1482 = vadd.f32 0.0, %v1481
    %v1483 = vpop.f32.mrb[0].mxu0
    %v1484 = vpop.f32.mrb[0].mxu0
    %v1485 = vadd.f32 0.0, %v1484
    %v1486 = vpop.f32.mrb[0].mxu0
    %1487 = vmatprep.mubr.bf16.mxu0 0
    %1488 = vmatmul.mubr.bf16.gmra.mrb[0].mxu0 %v948
    %v1489 = vpop.f32.mrb[0].mxu0
    %v1490 = vadd.f32 0.0, %v1489
    %v1491 = vpop.f32.mrb[0].mxu0
    %v1492 = vpop.f32.mrb[0].mxu0
    %v1493 = vadd.f32 0.0, %v1492
    %v1494 = vpop.f32.mrb[0].mxu0
    %1495 = vmatprep.mubr.bf16.mxu0 0
    %1496 = vmatmul.mubr.bf16.gmra.mrb[0].mxu0 %v951
    %v1497 = vpop.f32.mrb[0].mxu0
    %v1498 = vadd.f32 0.0, %v1497
    %v1499 = vpop.f32.mrb[0].mxu0
    %v1500 = vpop.f32.mrb[0].mxu0
    %v1501 = vadd.f32 0.0, %v1500
    %v1502 = vpop.f32.mrb[0].mxu0
    %1503 = vmatprep.mubr.bf16.mxu0 0
    %1504 = vmatmul.mubr.bf16.gmra.mrb[0].mxu0 %v954
    %v1505 = vpop.f32.mrb[0].mxu0
    %v1506 = vadd.f32 0.0, %v1505
    %v1507 = vpop.f32.mrb[0].mxu0
    %v1508 = vpop.f32.mrb[0].mxu0
    %v1509 = vadd.f32 0.0, %v1508
    %v1510 = vpop.f32.mrb[0].mxu0
    %1511 = vmatprep.mubr.bf16.mxu0 0
    %1512 = vmatmul.mubr.bf16.gmra.mrb[0].mxu0 %v957
    %v1513 = vpop.f32.mrb[0].mxu0
    %v1514 = vadd.f32 0.0, %v1513
    %v1515 = vpop.f32.mrb[0].mxu0
    %v1516 = vpop.f32.mrb[0].mxu0
    %v1517 = vadd.f32 0.0, %v1516
    %v1518 = vpop.f32.mrb[0].mxu0
    %1519 = vmatprep.mubr.bf16.mxu0 0
    %1520 = vmatmul.mubr.bf16.gmra.mrb[0].mxu0 %v960
    %v1521 = vpop.f32.mrb[0].mxu0
    %v1522 = vadd.f32 0.0, %v1521
    %v1523 = vpop.f32.mrb[0].mxu0
    %v1524 = vpop.f32.mrb[0].mxu0
    %v1525 = vadd.f32 0.0, %v1524
    %v1526 = vpop.f32.mrb[0].mxu0
    %1527 = vmatprep.mubr.bf16.mxu0 0
    %1528 = vmatmul.mubr.bf16.gmra.mrb[0].mxu0 %v963
    %v1529 = vpop.f32.mrb[0].mxu0
    %v1530 = vadd.f32 0.0, %v1529
    %v1531 = vpop.f32.mrb[0].mxu0
    %v1532 = vpop.f32.mrb[0].mxu0
    %v1533 = vadd.f32 0.0, %v1532
    %v1534 = vpop.f32.mrb[0].mxu0
    %1535 = vmatprep.mubr.bf16.mxu0 0
    %1536 = vmatmul.mubr.bf16.gmra.mrb[0].mxu0 %v966
    %v1537 = vpop.f32.mrb[0].mxu0
    %v1538 = vadd.f32 0.0, %v1537
    %v1539 = vpop.f32.mrb[0].mxu0
    %v1540 = vpop.f32.mrb[0].mxu0
    %v1541 = vadd.f32 0.0, %v1540
    %v1542 = vpop.f32.mrb[0].mxu0
    %1543 = vmatprep.mubr.bf16.mxu0 0
    %1544 = vmatmul.mubr.bf16.gmra.mrb[0].mxu0 %v969
    %v1545 = vpop.f32.mrb[0].mxu0
    %v1546 = vadd.f32 0.0, %v1545
    %v1547 = vpop.f32.mrb[0].mxu0
    %v1548 = vpop.f32.mrb[0].mxu0
    %v1549 = vadd.f32 0.0, %v1548
    %v1550 = vpop.f32.mrb[0].mxu0
    %1551 = vmatprep.mubr.bf16.mxu0 0
    %1552 = vmatmul.mubr.bf16.gmra.mrb[0].mxu0 %v972
    %v1553 = vpop.f32.mrb[0].mxu0
    %v1554 = vadd.f32 0.0, %v1553
    %v1555 = vpop.f32.mrb[0].mxu0
    %v1556 = vpop.f32.mrb[0].mxu0
    %v1557 = vadd.f32 0.0, %v1556
    %v1558 = vpop.f32.mrb[0].mxu0
    %1559 = vmatprep.mubr.bf16.mxu0 0
    %1560 = vmatmul.mubr.bf16.gmra.mrb[0].mxu0 %v975
    %v1561 = vpop.f32.mrb[0].mxu0
    %v1562 = vadd.f32 0.0, %v1561
    %v1563 = vpop.f32.mrb[0].mxu0
    %v1564 = vpop.f32.mrb[0].mxu0
    %v1565 = vadd.f32 0.0, %v1564
    %v1566 = vpop.f32.mrb[0].mxu0
    %1567 = vmatprep.mubr.bf16.mxu0 0
    %1568 = vmatmul.mubr.bf16.gmra.mrb[0].mxu0 %v978
    %v1569 = vpop.f32.mrb[0].mxu0
    %v1570 = vadd.f32 0.0, %v1569
    %v1571 = vpop.f32.mrb[0].mxu0
    %v1572 = vpop.f32.mrb[0].mxu0
    %v1573 = vadd.f32 0.0, %v1572
    %v1574 = vpop.f32.mrb[0].mxu0
    %1575 = vmatprep.mubr.bf16.mxu0 0
    %1576 = vmatmul.mubr.bf16.gmra.mrb[0].mxu0 %v981
    %v1577 = vpop.f32.mrb[0].mxu0
    %v1578 = vadd.f32 0.0, %v1577
    %v1579 = vpop.f32.mrb[0].mxu0
    %v1580 = vpop.f32.mrb[0].mxu0
    %v1581 = vadd.f32 0.0, %v1580
    %v1582 = vpop.f32.mrb[0].mxu0
    %1583 = vmatprep.mubr.bf16.mxu0 0
    %1584 = vmatmul.mubr.bf16.gmra.mrb[0].mxu0 %v984
    %v1585 = vpop.f32.mrb[0].mxu0
    %v1586 = vadd.f32 0.0, %v1585
    %v1587 = vpop.f32.mrb[0].mxu0
    %v1588 = vpop.f32.mrb[0].mxu0
    %v1589 = vadd.f32 0.0, %v1588
    %v1590 = vpop.f32.mrb[0].mxu0
    %1591 = vmatprep.mubr.bf16.mxu0 0
    %1592 = vmatmul.mubr.bf16.gmra.mrb[0].mxu0 %v987
    %v1593 = vpop.f32.mrb[0].mxu0
    %v1594 = vadd.f32 0.0, %v1593
    %v1595 = vpop.f32.mrb[0].mxu0
    %v1596 = vpop.f32.mrb[0].mxu0
    %v1597 = vadd.f32 0.0, %v1596
    %v1598 = vpop.f32.mrb[0].mxu0
    %1599 = vmatprep.mubr.bf16.mxu0 0
    %1600 = vmatmul.mubr.bf16.gmra.mrb[0].mxu0 %v990
    %v1601 = vpop.f32.mrb[0].mxu0
    %v1602 = vadd.f32 0.0, %v1601
    %v1603 = vpop.f32.mrb[0].mxu0
    %v1604 = vpop.f32.mrb[0].mxu0
    %v1605 = vadd.f32 0.0, %v1604
    %v1606 = vpop.f32.mrb[0].mxu0
    %1607 = vmatprep.mubr.bf16.mxu0 0
    %1608 = vmatmul.mubr.bf16.gmra.mrb[0].mxu0 %v993
    %v1609 = vpop.f32.mrb[0].mxu0
    %v1610 = vadd.f32 0.0, %v1609
    %v1611 = vpop.f32.mrb[0].mxu0
    %v1612 = vpop.f32.mrb[0].mxu0
    %v1613 = vadd.f32 0.0, %v1612
    %v1614 = vpop.f32.mrb[0].mxu0
    %1615 = vmatprep.mubr.bf16.mxu0 0
    %1616 = vmatmul.mubr.bf16.gmra.mrb[0].mxu0 %v996
    %v1617 = vpop.f32.mrb[0].mxu0
    %v1618 = vadd.f32 0.0, %v1617
    %v1619 = vpop.f32.mrb[0].mxu0
    %v1620 = vpop.f32.mrb[0].mxu0
    %v1621 = vadd.f32 0.0, %v1620
    %v1622 = vpop.f32.mrb[0].mxu0
    %1623 = vmatprep.mubr.bf16.mxu0 0
    %1624 = vmatmul.mubr.bf16.gmra.mrb[0].mxu0 %v999
    %v1625 = vpop.f32.mrb[0].mxu0
    %v1626 = vadd.f32 0.0, %v1625
    %v1627 = vpop.f32.mrb[0].mxu0
    %v1628 = vpop.f32.mrb[0].mxu0
    %v1629 = vadd.f32 0.0, %v1628
    %v1630 = vpop.f32.mrb[0].mxu0
    %1631 = vmatprep.mubr.bf16.mxu0 0
    %1632 = vmatmul.mubr.bf16.gmra.mrb[0].mxu0 %v1002
    %v1633 = vpop.f32.mrb[0].mxu0
    %v1634 = vadd.f32 0.0, %v1633
    %v1635 = vpop.f32.mrb[0].mxu0
    %v1636 = vpop.f32.mrb[0].mxu0
    %v1637 = vadd.f32 0.0, %v1636
    %v1638 = vpop.f32.mrb[0].mxu0
    %1639 = vmatprep.mubr.bf16.mxu0 0
    %1640 = vmatmul.mubr.bf16.gmra.mrb[0].mxu0 %v1005
    %v1641 = vpop.f32.mrb[0].mxu0
    %v1642 = vadd.f32 0.0, %v1641
    %v1643 = vpop.f32.mrb[0].mxu0
    %v1644 = vpop.f32.mrb[0].mxu0
    %v1645 = vadd.f32 0.0, %v1644
    %v1646 = vpop.f32.mrb[0].mxu0
    %1647 = vmatprep.mubr.bf16.mxu0 0
    %1648 = vmatmul.mubr.bf16.gmra.mrb[0].mxu0 %v1008
    %v1649 = vpop.f32.mrb[0].mxu0
    %v1650 = vadd.f32 0.0, %v1649
    %v1651 = vpop.f32.mrb[0].mxu0
    %v1652 = vpop.f32.mrb[0].mxu0
    %v1653 = vadd.f32 0.0, %v1652
    %v1654 = vpop.f32.mrb[0].mxu0
    %1655 = vmatprep.mubr.bf16.mxu0 0
    %1656 = vmatmul.mubr.bf16.gmra.mrb[0].mxu0 %v1011
    %v1657 = vpop.f32.mrb[0].mxu0
    %v1658 = vadd.f32 0.0, %v1657
    %v1659 = vpop.f32.mrb[0].mxu0
    %v1660 = vpop.f32.mrb[0].mxu0
    %v1661 = vadd.f32 0.0, %v1660
    %v1662 = vpop.f32.mrb[0].mxu0
    %1663 = vmatprep.mubr.bf16.mxu0 0
    %1664 = vmatmul.mubr.bf16.gmra.mrb[0].mxu0 %v1014
    %v1665 = vpop.f32.mrb[0].mxu0
    %v1666 = vadd.f32 0.0, %v1665
    %v1667 = vpop.f32.mrb[0].mxu0
    %v1668 = vpop.f32.mrb[0].mxu0
    %v1669 = vadd.f32 0.0, %v1668
    %v1670 = vpop.f32.mrb[0].mxu0
    %1671 = vmatprep.mubr.bf16.mxu0 0
    %1672 = vmatmul.mubr.bf16.gmra.mrb[0].mxu0 %v1017
    %v1673 = vpop.f32.mrb[0].mxu0
    %v1674 = vadd.f32 0.0, %v1673
    %v1675 = vpop.f32.mrb[0].mxu0
    %v1676 = vpop.f32.mrb[0].mxu0
    %v1677 = vadd.f32 0.0, %v1676
    %v1678 = vpop.f32.mrb[0].mxu0
    %1679 = vmatprep.mubr.bf16.mxu0 0
    %1680 = vmatmul.mubr.bf16.gmra.mrb[0].mxu0 %v1020
    %v1681 = vpop.f32.mrb[0].mxu0
    %v1682 = vadd.f32 0.0, %v1681
    %v1683 = vpop.f32.mrb[0].mxu0
    %v1684 = vpop.f32.mrb[0].mxu0
    %v1685 = vadd.f32 0.0, %v1684
    %v1686 = vpop.f32.mrb[0].mxu0
    %1687 = vmatprep.mubr.bf16.mxu0 0
    %1688 = vmatmul.mubr.bf16.gmra.mrb[0].mxu0 %v1023
    %v1689 = vpop.f32.mrb[0].mxu0
    %v1690 = vadd.f32 0.0, %v1689
    %v1691 = vpop.f32.mrb[0].mxu0
    %v1692 = vpop.f32.mrb[0].mxu0
    %v1693 = vadd.f32 0.0, %v1692
    %v1694 = vpop.f32.mrb[0].mxu0
    %1695 = vmatprep.mubr.bf16.mxu0 0
    %1696 = vmatmul.mubr.bf16.gmra.mrb[0].mxu0 %v1026
    %v1697 = vpop.f32.mrb[0].mxu0
    %v1698 = vadd.f32 0.0, %v1697
    %v1699 = vpop.f32.mrb[0].mxu0
    %v1700 = vpop.f32.mrb[0].mxu0
    %v1701 = vadd.f32 0.0, %v1700
    %v1702 = vpop.f32.mrb[0].mxu0
    %1703 = vmatprep.mubr.bf16.mxu0 0
    %1704 = vmatmul.mubr.bf16.gmra.mrb[0].mxu0 %v1029
    %v1705 = vpop.f32.mrb[0].mxu0
    %v1706 = vadd.f32 0.0, %v1705
    %v1707 = vpop.f32.mrb[0].mxu0
    %v1708 = vpop.f32.mrb[0].mxu0
    %v1709 = vadd.f32 0.0, %v1708
    %v1710 = vpop.f32.mrb[0].mxu0
    %1711 = vmatprep.mubr.bf16.mxu0 0
    %1712 = vmatmul.mubr.bf16.gmra.mrb[0].mxu0 %v1032
    %v1713 = vpop.f32.mrb[0].mxu0
    %v1714 = vadd.f32 0.0, %v1713
    %v1715 = vpop.f32.mrb[0].mxu0
    %v1716 = vpop.f32.mrb[0].mxu0
    %v1717 = vadd.f32 0.0, %v1716
    %v1718 = vpop.f32.mrb[0].mxu0
    %1719 = vmatprep.mubr.bf16.mxu0 0
    %1720 = vmatmul.mubr.bf16.gmra.mrb[0].mxu0 %v1035
    %v1721 = vpop.f32.mrb[0].mxu0
    %v1722 = vadd.f32 0.0, %v1721
    %v1723 = vpop.f32.mrb[0].mxu0
    %v1724 = vpop.f32.mrb[0].mxu0
    %v1725 = vadd.f32 0.0, %v1724
    %v1726 = vpop.f32.mrb[0].mxu0
    %1727 = vmatprep.mubr.bf16.mxu0 0
    %1728 = vmatmul.mubr.bf16.gmra.mrb[0].mxu0 %v1038
    %v1729 = vpop.f32.mrb[0].mxu0
    %v1730 = vadd.f32 0.0, %v1729
    %v1731 = vpop.f32.mrb[0].mxu0
    %v1732 = vpop.f32.mrb[0].mxu0
    %v1733 = vadd.f32 0.0, %v1732
    %v1734 = vpop.f32.mrb[0].mxu0
    %1735 = vmatprep.mubr.bf16.mxu0 0
    %1736 = vmatmul.mubr.bf16.gmra.mrb[0].mxu0 %v1041
    %v1737 = vpop.f32.mrb[0].mxu0
    %v1738 = vadd.f32 0.0, %v1737
    %v1739 = vpop.f32.mrb[0].mxu0
    %v1740 = vpop.f32.mrb[0].mxu0
    %v1741 = vadd.f32 0.0, %v1740
    %v1742 = vpop.f32.mrb[0].mxu0
    %1743 = vmatprep.mubr.bf16.mxu0 0
    %1744 = vmatmul.mubr.bf16.gmra.mrb[0].mxu0 %v1044
    %v1745 = vpop.f32.mrb[0].mxu0
    %v1746 = vadd.f32 0.0, %v1745
    %v1747 = vpop.f32.mrb[0].mxu0
    %v1748 = vpop.f32.mrb[0].mxu0
    %v1749 = vadd.f32 0.0, %v1748
    %v1750 = vpop.f32.mrb[0].mxu0
    %1751 = vmatprep.mubr.bf16.mxu0 0
    %1752 = vmatmul.mubr.bf16.gmra.mrb[0].mxu0 %v1047
    %v1753 = vpop.f32.mrb[0].mxu0
    %v1754 = vadd.f32 0.0, %v1753
    %v1755 = vpop.f32.mrb[0].mxu0
    %v1756 = vpop.f32.mrb[0].mxu0
    %v1757 = vadd.f32 0.0, %v1756
    %v1758 = vpop.f32.mrb[0].mxu0
    %1759 = vmatprep.mubr.bf16.mxu0 0
    %1760 = vmatmul.mubr.bf16.gmra.mrb[0].mxu0 %v1050
    %v1761 = vpop.f32.mrb[0].mxu0
    %v1762 = vadd.f32 0.0, %v1761
    %v1763 = vpop.f32.mrb[0].mxu0
    %v1764 = vpop.f32.mrb[0].mxu0
    %v1765 = vadd.f32 0.0, %v1764
    %v1766 = vpop.f32.mrb[0].mxu0
    %1767 = vmatprep.mubr.bf16.mxu0 0
    %1768 = vmatmul.mubr.bf16.gmra.mrb[0].mxu0 %v1053
    %v1769 = vpop.f32.mrb[0].mxu0
    %v1770 = vadd.f32 0.0, %v1769
    %v1771 = vpop.f32.mrb[0].mxu0
    %v1772 = vpop.f32.mrb[0].mxu0
    %v1773 = vadd.f32 0.0, %v1772
    %v1774 = vpop.f32.mrb[0].mxu0
    %1775 = vmatprep.mubr.bf16.mxu0 0
    %1776 = vmatmul.mubr.bf16.gmra.mrb[0].mxu0 %v1056
    %v1777 = vpop.f32.mrb[0].mxu0
    %v1778 = vadd.f32 0.0, %v1777
    %v1779 = vpop.f32.mrb[0].mxu0
    %v1780 = vpop.f32.mrb[0].mxu0
    %v1781 = vadd.f32 0.0, %v1780
    %v1782 = vpop.f32.mrb[0].mxu0
    %1783 = vmatprep.mubr.bf16.mxu0 0
    %1784 = vmatmul.mubr.bf16.gmra.mrb[0].mxu0 %v1059
    %v1785 = vpop.f32.mrb[0].mxu0
    %v1786 = vadd.f32 0.0, %v1785
    %v1787 = vpop.f32.mrb[0].mxu0
    %v1788 = vpop.f32.mrb[0].mxu0
    %v1789 = vadd.f32 0.0, %v1788
    %v1790 = vpop.f32.mrb[0].mxu0
    %1791 = vmatprep.mubr.bf16.mxu0 0
    %1792 = vmatmul.mubr.bf16.gmra.mrb[0].mxu0 %v1062
    %v1793 = vpop.f32.mrb[0].mxu0
    %v1794 = vadd.f32 0.0, %v1793
    %v1795 = vpop.f32.mrb[0].mxu0
    %v1796 = vpop.f32.mrb[0].mxu0
    %v1797 = vadd.f32 0.0, %v1796
    %v1798 = vpop.f32.mrb[0].mxu0
    %1799 = vmatprep.mubr.bf16.mxu0 0
    %1800 = vmatmul.mubr.bf16.gmra.mrb[0].mxu0 %v1065
    %v1801 = vpop.f32.mrb[0].mxu0
    %v1802 = vadd.f32 0.0, %v1801
    %v1803 = vpop.f32.mrb[0].mxu0
    %v1804 = vpop.f32.mrb[0].mxu0
    %v1805 = vadd.f32 0.0, %v1804
    %v1806 = vpop.f32.mrb[0].mxu0
    %1807 = vmatprep.mubr.bf16.mxu0 0
    %1808 = vmatmul.mubr.bf16.gmra.mrb[0].mxu0 %v1068
    %v1809 = vpop.f32.mrb[0].mxu0
    %v1810 = vadd.f32 0.0, %v1809
    %v1811 = vpop.f32.mrb[0].mxu0
    %v1812 = vpop.f32.mrb[0].mxu0
    %v1813 = vadd.f32 0.0, %v1812
    %v1814 = vpop.f32.mrb[0].mxu0
    %1815 = vmatprep.mubr.bf16.mxu0 0
    %1816 = vmatmul.mubr.bf16.gmra.mrb[0].mxu0 %v1071
    %v1817 = vpop.f32.mrb[0].mxu0
    %v1818 = vadd.f32 0.0, %v1817
    %v1819 = vpop.f32.mrb[0].mxu0
    %v1820 = vpop.f32.mrb[0].mxu0
    %v1821 = vadd.f32 0.0, %v1820
    %v1822 = vpop.f32.mrb[0].mxu0
    %1823 = vmatprep.mubr.bf16.mxu0 0
    %1824 = vmatmul.mubr.bf16.gmra.mrb[0].mxu0 %v1074
    %v1825 = vpop.f32.mrb[0].mxu0
    %v1826 = vadd.f32 0.0, %v1825
    %v1827 = vpop.f32.mrb[0].mxu0
    %v1828 = vpop.f32.mrb[0].mxu0
    %v1829 = vadd.f32 0.0, %v1828
    %v1830 = vpop.f32.mrb[0].mxu0
    %1831 = vmatprep.mubr.bf16.mxu0 0
    %1832 = vmatmul.mubr.bf16.gmra.mrb[0].mxu0 %v1077
    %v1833 = vpop.f32.mrb[0].mxu0
    %v1834 = vadd.f32 0.0, %v1833
    %v1835 = vpop.f32.mrb[0].mxu0
    %v1836 = vpop.f32.mrb[0].mxu0
    %v1837 = vadd.f32 0.0, %v1836
    %v1838 = vpop.f32.mrb[0].mxu0
    %1839 = vmatprep.mubr.bf16.mxu0 0
    %1840 = vmatmul.mubr.bf16.gmra.mrb[0].mxu0 %v1080
    %v1841 = vpop.f32.mrb[0].mxu0
    %v1842 = vadd.f32 0.0, %v1841
    %v1843 = vpop.f32.mrb[0].mxu0
    %v1844 = vpop.f32.mrb[0].mxu0
    %v1845 = vadd.f32 0.0, %v1844
    %v1846 = vpop.f32.mrb[0].mxu0
    %1847 = vmatprep.mubr.bf16.mxu0 0
    %1848 = vmatmul.mubr.bf16.gmra.mrb[0].mxu0 %v1083
    %v1849 = vpop.f32.mrb[0].mxu0
    %v1850 = vadd.f32 0.0, %v1849
    %v1851 = vpop.f32.mrb[0].mxu0
    %v1852 = vpop.f32.mrb[0].mxu0
    %v1853 = vadd.f32 0.0, %v1852
    %v1854 = vpop.f32.mrb[0].mxu0
    %1855 = vmatprep.mubr.bf16.mxu0 0
    %1856 = vmatmul.mubr.bf16.gmra.mrb[0].mxu0 %v1086
    %v1857 = vpop.f32.mrb[0].mxu0
    %v1858 = vadd.f32 0.0, %v1857
    %v1859 = vpop.f32.mrb[0].mxu0
    %v1860 = vpop.f32.mrb[0].mxu0
    %v1861 = vadd.f32 0.0, %v1860
    %v1862 = vpop.f32.mrb[0].mxu0
    %1863 = vmatprep.mubr.bf16.mxu0 0
    %1864 = vmatmul.mubr.bf16.gmra.mrb[0].mxu0 %v1089
    %v1865 = vpop.f32.mrb[0].mxu0
    %v1866 = vadd.f32 0.0, %v1865
    %v1867 = vpop.f32.mrb[0].mxu0
    %v1868 = vpop.f32.mrb[0].mxu0
    %v1869 = vadd.f32 0.0, %v1868
    %v1870 = vpop.f32.mrb[0].mxu0
    %1871 = vmatprep.mubr.bf16.mxu0 0
    %1872 = vmatmul.mubr.bf16.gmra.mrb[0].mxu0 %v1092
    %v1873 = vpop.f32.mrb[0].mxu0
    %v1874 = vadd.f32 0.0, %v1873
    %v1875 = vpop.f32.mrb[0].mxu0
    %v1876 = vpop.f32.mrb[0].mxu0
    %v1877 = vadd.f32 0.0, %v1876
    %v1878 = vpop.f32.mrb[0].mxu0
    %1879 = vmatprep.mubr.bf16.mxu0 0
    %1880 = vmatmul.mubr.bf16.gmra.mrb[0].mxu0 %v1095
    %v1881 = vpop.f32.mrb[0].mxu0
    %v1882 = vadd.f32 0.0, %v1881
    %v1883 = vpop.f32.mrb[0].mxu0
    %v1884 = vpop.f32.mrb[0].mxu0
    %v1885 = vadd.f32 0.0, %v1884
    %v1886 = vpop.f32.mrb[0].mxu0
    %1887 = vmatprep.mubr.bf16.mxu0 0
    %1888 = vmatmul.mubr.bf16.gmra.mrb[0].mxu0 %v1098
    %v1889 = vpop.f32.mrb[0].mxu0
    %v1890 = vadd.f32 0.0, %v1889
    %v1891 = vpop.f32.mrb[0].mxu0
    %v1892 = vpop.f32.mrb[0].mxu0
    %v1893 = vadd.f32 0.0, %v1892
    %v1894 = vpop.f32.mrb[0].mxu0
    %1895 = vmatprep.mubr.bf16.mxu0 0
    %1896 = vmatmul.mubr.bf16.gmra.mrb[0].mxu0 %v1101
    %v1897 = vpop.f32.mrb[0].mxu0
    %v1898 = vadd.f32 0.0, %v1897
    %v1899 = vpop.f32.mrb[0].mxu0
    %v1900 = vpop.f32.mrb[0].mxu0
    %v1901 = vadd.f32 0.0, %v1900
    %v1902 = vpop.f32.mrb[0].mxu0
    %1903 = vmatprep.mubr.bf16.mxu0 0
    %1904 = vmatmul.mubr.bf16.gmra.mrb[0].mxu0 %v1104
    %v1905 = vpop.f32.mrb[0].mxu0
    %v1906 = vadd.f32 0.0, %v1905
    %v1907 = vpop.f32.mrb[0].mxu0
    %v1908 = vpop.f32.mrb[0].mxu0
    %v1909 = vadd.f32 0.0, %v1908
    %v1910 = vpop.f32.mrb[0].mxu0
    %1911 = vmatprep.mubr.bf16.mxu0 0
    %1912 = vmatmul.mubr.bf16.gmra.mrb[0].mxu0 %v1107
    %v1913 = vpop.f32.mrb[0].mxu0
    %v1914 = vadd.f32 0.0, %v1913
    %v1915 = vpop.f32.mrb[0].mxu0
    %v1916 = vpop.f32.mrb[0].mxu0
    %v1917 = vadd.f32 0.0, %v1916
    %v1918 = vpop.f32.mrb[0].mxu0
    %1919 = vmatprep.mubr.bf16.mxu0 0
    %1920 = vmatmul.mubr.bf16.gmra.mrb[0].mxu0 %v1110
    %v1921 = vpop.f32.mrb[0].mxu0
    %v1922 = vadd.f32 0.0, %v1921
    %v1923 = vpop.f32.mrb[0].mxu0
    %v1924 = vpop.f32.mrb[0].mxu0
    %v1925 = vadd.f32 0.0, %v1924
    %v1926 = vpop.f32.mrb[0].mxu0
    %1927 = vmatprep.mubr.bf16.mxu0 0
    %1928 = vmatmul.mubr.bf16.gmra.mrb[0].mxu0 %v1113
    %v1929 = vpop.f32.mrb[0].mxu0
    %v1930 = vadd.f32 0.0, %v1929
    %v1931 = vpop.f32.mrb[0].mxu0
    %v1932 = vpop.f32.mrb[0].mxu0
    %v1933 = vadd.f32 0.0, %v1932
    %v1934 = vpop.f32.mrb[0].mxu0
    %1935 = vmatprep.mubr.bf16.mxu0 0
    %1936 = vmatmul.mubr.bf16.gmra.mrb[0].mxu0 %v1116
    %v1937 = vpop.f32.mrb[0].mxu0
    %v1938 = vadd.f32 0.0, %v1937
    %v1939 = vpop.f32.mrb[0].mxu0
    %v1940 = vpop.f32.mrb[0].mxu0
    %v1941 = vadd.f32 0.0, %v1940
    %v1942 = vpop.f32.mrb[0].mxu0
    %1943 = vmatprep.mubr.bf16.mxu0 0
    %1944 = vmatmul.mubr.bf16.gmra.mrb[0].mxu0 %v1119
    %v1945 = vpop.f32.mrb[0].mxu0
    %v1946 = vadd.f32 0.0, %v1945
    %v1947 = vpop.f32.mrb[0].mxu0
    %v1948 = vpop.f32.mrb[0].mxu0
    %v1949 = vadd.f32 0.0, %v1948
    %v1950 = vpop.f32.mrb[0].mxu0
    %1951 = vmatprep.mubr.bf16.mxu0 0
    %1952 = vmatmul.mubr.bf16.gmra.mrb[0].mxu0 %v1122
    %v1953 = vpop.f32.mrb[0].mxu0
    %v1954 = vadd.f32 0.0, %v1953
    %v1955 = vpop.f32.mrb[0].mxu0
    %v1956 = vpop.f32.mrb[0].mxu0
    %v1957 = vadd.f32 0.0, %v1956
    %v1958 = vpop.f32.mrb[0].mxu0
    %1959 = vmatprep.mubr.bf16.mxu0 0
    %1960 = vmatmul.mubr.bf16.gmra.mrb[0].mxu0 %v1125
    %v1961 = vpop.f32.mrb[0].mxu0
    %v1962 = vadd.f32 0.0, %v1961
    %v1963 = vpop.f32.mrb[0].mxu0
    %v1964 = vpop.f32.mrb[0].mxu0
    %v1965 = vadd.f32 0.0, %v1964
    %v1966 = vpop.f32.mrb[0].mxu0
    %1967 = vmatprep.mubr.bf16.mxu0 0
    %1968 = vmatmul.mubr.bf16.gmra.mrb[0].mxu0 %v1128
    %v1969 = vpop.f32.mrb[0].mxu0
    %v1970 = vadd.f32 0.0, %v1969
    %v1971 = vpop.f32.mrb[0].mxu0
    %v1972 = vpop.f32.mrb[0].mxu0
    %v1973 = vadd.f32 0.0, %v1972
    %v1974 = vpop.f32.mrb[0].mxu0
    %1975 = vmatprep.mubr.bf16.mxu0 0
    %1976 = vmatmul.mubr.bf16.gmra.mrb[0].mxu0 %v1131
    %v1977 = vpop.f32.mrb[0].mxu0
    %v1978 = vadd.f32 0.0, %v1977
    %v1979 = vpop.f32.mrb[0].mxu0
    %v1980 = vpop.f32.mrb[0].mxu0
    %v1981 = vadd.f32 0.0, %v1980
    %v1982 = vpop.f32.mrb[0].mxu0
    %1983 = vmatprep.mubr.bf16.mxu0 0
    %1984 = vmatmul.mubr.bf16.gmra.mrb[0].mxu0 %v1134
    %v1985 = vpop.f32.mrb[0].mxu0
    %v1986 = vadd.f32 0.0, %v1985
    %v1987 = vpop.f32.mrb[0].mxu0
    %v1988 = vpop.f32.mrb[0].mxu0
    %v1989 = vadd.f32 0.0, %v1988
    %v1990 = vpop.f32.mrb[0].mxu0
    %1991 = vmatprep.mubr.bf16.mxu0 0
    %1992 = vmatmul.mubr.bf16.gmra.mrb[0].mxu0 %v1137
    %v1993 = vpop.f32.mrb[0].mxu0
    %v1994 = vadd.f32 0.0, %v1993
    %v1995 = vpop.f32.mrb[0].mxu0
    %v1996 = vpop.f32.mrb[0].mxu0
    %v1997 = vadd.f32 0.0, %v1996
    %v1998 = vpop.f32.mrb[0].mxu0
    %1999 = vmatprep.mubr.bf16.mxu0 0
    %2000 = vmatmul.mubr.bf16.gmra.mrb[0].mxu0 %v1140
    %v2001 = vpop.f32.mrb[0].mxu0
    %v2002 = vadd.f32 0.0, %v2001
    %v2003 = vpop.f32.mrb[0].mxu0
    %v2004 = vpop.f32.mrb[0].mxu0
    %v2005 = vadd.f32 0.0, %v2004
    %v2006 = vpop.f32.mrb[0].mxu0
    %2007 = vmatprep.mubr.bf16.mxu0 0
    %2008 = vmatmul.mubr.bf16.gmra.mrb[0].mxu0 %v1143
    %v2009 = vpop.f32.mrb[0].mxu0
    %v2010 = vadd.f32 0.0, %v2009
    %v2011 = vpop.f32.mrb[0].mxu0
    %v2012 = vpop.f32.mrb[0].mxu0
    %v2013 = vadd.f32 0.0, %v2012
    %v2014 = vpop.f32.mrb[0].mxu0
    %2015 = vmatprep.mubr.bf16.mxu0 0
    %2016 = vmatmul.mubr.bf16.gmra.mrb[0].mxu0 %v1146
    %v2017 = vpop.f32.mrb[0].mxu0
    %v2018 = vadd.f32 0.0, %v2017
    %v2019 = vpop.f32.mrb[0].mxu0
    %v2020 = vpop.f32.mrb[0].mxu0
    %v2021 = vadd.f32 0.0, %v2020
    %v2022 = vpop.f32.mrb[0].mxu0
    %2023 = vmatprep.mubr.bf16.mxu0 0
    %2024 = vmatmul.mubr.bf16.gmra.mrb[0].mxu0 %v1149
    %v2025 = vpop.f32.mrb[0].mxu0
    %v2026 = vadd.f32 0.0, %v2025
    %v2027 = vpop.f32.mrb[0].mxu0
    %v2028 = vpop.f32.mrb[0].mxu0
    %v2029 = vadd.f32 0.0, %v2028
    %v2030 = vpop.f32.mrb[0].mxu0
    %2031 = vmatprep.mubr.bf16.mxu0 0
    %2032 = vmatmul.mubr.bf16.gmra.mrb[0].mxu0 %v1152
    %v2033 = vpop.f32.mrb[0].mxu0
    %v2034 = vadd.f32 0.0, %v2033
    %v2035 = vpop.f32.mrb[0].mxu0
    %v2036 = vpop.f32.mrb[0].mxu0
    %v2037 = vadd.f32 0.0, %v2036
    %v2038 = vpop.f32.mrb[0].mxu0
    %2039 = vmatprep.mubr.bf16.mxu0 0
    %2040 = vmatmul.mubr.bf16.gmra.mrb[0].mxu0 %v1155
    %v2041 = vpop.f32.mrb[0].mxu0
    %v2042 = vadd.f32 0.0, %v2041
    %v2043 = vpop.f32.mrb[0].mxu0
    %v2044 = vpop.f32.mrb[0].mxu0
    %v2045 = vadd.f32 0.0, %v2044
    %v2046 = vpop.f32.mrb[0].mxu0
    %2047 = vmatprep.mubr.bf16.mxu0 0
    %2048 = vmatmul.mubr.bf16.gmra.mrb[0].mxu0 %v1158
    %v2049 = vpop.f32.mrb[0].mxu0
    %v2050 = vadd.f32 0.0, %v2049
    %v2051 = vpop.f32.mrb[0].mxu0
    %v2052 = vpop.f32.mrb[0].mxu0
    %v2053 = vadd.f32 0.0, %v2052
    %v2054 = vpop.f32.mrb[0].mxu0
    %2055 = vmatprep.mubr.bf16.mxu0 0
    %2056 = vmatmul.mubr.bf16.gmra.mrb[0].mxu0 %v1161
    %v2057 = vpop.f32.mrb[0].mxu0
    %v2058 = vadd.f32 0.0, %v2057
    %v2059 = vpop.f32.mrb[0].mxu0
    %v2060 = vpop.f32.mrb[0].mxu0
    %v2061 = vadd.f32 0.0, %v2060
    %v2062 = vpop.f32.mrb[0].mxu0
    %2063 = vmatprep.mubr.bf16.mxu0 0
    %2064 = vmatmul.mubr.bf16.gmra.mrb[0].mxu0 %v1164
    %v2065 = vpop.f32.mrb[0].mxu0
    %v2066 = vadd.f32 0.0, %v2065
    %v2067 = vpop.f32.mrb[0].mxu0
    %v2068 = vpop.f32.mrb[0].mxu0
    %v2069 = vadd.f32 0.0, %v2068
    %v2070 = vpop.f32.mrb[0].mxu0
    %2071 = vmatprep.mubr.bf16.mxu0 0
    %2072 = vmatmul.mubr.bf16.gmra.mrb[0].mxu0 %v1167
    %v2073 = vpop.f32.mrb[0].mxu0
    %v2074 = vadd.f32 0.0, %v2073
    %v2075 = vpop.f32.mrb[0].mxu0
    %v2076 = vpop.f32.mrb[0].mxu0
    %v2077 = vadd.f32 0.0, %v2076
    %v2078 = vpop.f32.mrb[0].mxu0
    %2079 = vmatprep.mubr.bf16.mxu0 0
    %2080 = vmatmul.mubr.bf16.gmra.mrb[0].mxu0 %v1170
    %v2081 = vpop.f32.mrb[0].mxu0
    %v2082 = vadd.f32 0.0, %v2081
    %v2083 = vpop.f32.mrb[0].mxu0
    %v2084 = vpop.f32.mrb[0].mxu0
    %v2085 = vadd.f32 0.0, %v2084
    %v2086 = vpop.f32.mrb[0].mxu0
    %2087 = vmatprep.mubr.bf16.mxu0 0
    %2088 = vmatmul.mubr.bf16.gmra.mrb[0].mxu0 %v1173
    %v2089 = vpop.f32.mrb[0].mxu0
    %v2090 = vadd.f32 0.0, %v2089
    %v2091 = vpop.f32.mrb[0].mxu0
    %v2092 = vpop.f32.mrb[0].mxu0
    %v2093 = vadd.f32 0.0, %v2092
    %v2094 = vpop.f32.mrb[0].mxu0
    %2095 = vmatprep.mubr.bf16.mxu0 0
    %2096 = vmatmul.mubr.bf16.gmra.mrb[0].mxu0 %v1176
    %v2097 = vpop.f32.mrb[0].mxu0
    %v2098 = vadd.f32 0.0, %v2097
    %v2099 = vpop.f32.mrb[0].mxu0
    %v2100 = vpop.f32.mrb[0].mxu0
    %v2101 = vadd.f32 0.0, %v2100
    %v2102 = vpop.f32.mrb[0].mxu0
    %2103 = vmatprep.mubr.bf16.mxu0 0
    %2104 = vmatmul.mubr.bf16.gmra.mrb[0].mxu0 %v1179
    %v2105 = vpop.f32.mrb[0].mxu0
    %v2106 = vadd.f32 0.0, %v2105
    %v2107 = vpop.f32.mrb[0].mxu0
    %v2108 = vpop.f32.mrb[0].mxu0
    %v2109 = vadd.f32 0.0, %v2108
    %v2110 = vpop.f32.mrb[0].mxu0
    %2111 = vmatprep.mubr.bf16.mxu0 0
    %2112 = vmatmul.mubr.bf16.gmra.mrb[0].mxu0 %v1182
    %v2113 = vpop.f32.mrb[0].mxu0
    %v2114 = vadd.f32 0.0, %v2113
    %v2115 = vpop.f32.mrb[0].mxu0
    %v2116 = vpop.f32.mrb[0].mxu0
    %v2117 = vadd.f32 0.0, %v2116
    %v2118 = vpop.f32.mrb[0].mxu0
    %2119 = vmatprep.mubr.bf16.mxu0 0
    %2120 = vmatmul.mubr.bf16.gmra.mrb[0].mxu0 %v1185
    %v2121 = vpop.f32.mrb[0].mxu0
    %v2122 = vadd.f32 0.0, %v2121
    %v2123 = vpop.f32.mrb[0].mxu0
    %v2124 = vpop.f32.mrb[0].mxu0
    %v2125 = vadd.f32 0.0, %v2124
    %v2126 = vpop.f32.mrb[0].mxu0
    %2127 = vmatprep.mubr.bf16.mxu0 0
    %2128 = vmatmul.mubr.bf16.gmra.mrb[0].mxu0 %v1188
    %v2129 = vpop.f32.mrb[0].mxu0
    %v2130 = vadd.f32 0.0, %v2129
    %v2131 = vpop.f32.mrb[0].mxu0
    %v2132 = vpop.f32.mrb[0].mxu0
    %v2133 = vadd.f32 0.0, %v2132
    %v2134 = vpop.f32.mrb[0].mxu0
    %2135 = vmatprep.mubr.bf16.mxu0 0
    %2136 = vmatmul.mubr.bf16.gmra.mrb[0].mxu0 %v1191
    %v2137 = vpop.f32.mrb[0].mxu0
    %v2138 = vadd.f32 0.0, %v2137
    %v2139 = vpop.f32.mrb[0].mxu0
    %v2140 = vpop.f32.mrb[0].mxu0
    %v2141 = vadd.f32 0.0, %v2140
    %v2142 = vpop.f32.mrb[0].mxu0
    %2143 = vmatprep.mubr.bf16.mxu0 0
    %2144 = vmatmul.mubr.bf16.gmra.mrb[0].mxu0 %v1194
    %v2145 = vpop.f32.mrb[0].mxu0
    %v2146 = vadd.f32 0.0, %v2145
    %v2147 = vpop.f32.mrb[0].mxu0
    %v2148 = vpop.f32.mrb[0].mxu0
    %v2149 = vadd.f32 0.0, %v2148
    %v2150 = vpop.f32.mrb[0].mxu0
    %2151 = vmatprep.mubr.bf16.mxu0 0
    %2152 = vmatmul.mubr.bf16.gmra.mrb[0].mxu0 %v1197
    %v2153 = vpop.f32.mrb[0].mxu0
    %v2154 = vadd.f32 0.0, %v2153
    %v2155 = vpop.f32.mrb[0].mxu0
    %v2156 = vpop.f32.mrb[0].mxu0
    %v2157 = vadd.f32 0.0, %v2156
    %v2158 = vpop.f32.mrb[0].mxu0
    %2159 = vdwg.mxu0
    %vm2160 = vcmask 80896
    %v2161 = vsel %vm2160, %v1234, -inf
    %v2162 = vsel %vm2160, %v1466, -inf
    %v2163 = vmax.f32 %v2161, %v2162
    %v2164 = vsel %vm2160, %v1698, -inf
    %v2165 = vmax.f32 %v2163, %v2164
    %v2166 = vsel %vm2160, %v1930, -inf
    %v2167 = vmax.f32 %v2165, %v2166
    %v2168 = vsel %vm2160, %v1237, -inf
    %v2169 = vsel %vm2160, %v1469, -inf
    %v2170 = vmax.f32 %v2168, %v2169
    %v2171 = vsel %vm2160, %v1701, -inf
    %v2172 = vmax.f32 %v2170, %v2171
    %v2173 = vsel %vm2160, %v1933, -inf
    %v2174 = vmax.f32 %v2172, %v2173
    %v2175 = vsel %vm2160, %v1242, -inf
    %v2176 = vsel %vm2160, %v1474, -inf
    %v2177 = vmax.f32 %v2175, %v2176
    %v2178 = vsel %vm2160, %v1706, -inf
    %v2179 = vmax.f32 %v2177, %v2178
    %v2180 = vsel %vm2160, %v1938, -inf
    %v2181 = vmax.f32 %v2179, %v2180
    %v2182 = vsel %vm2160, %v1245, -inf
    %v2183 = vsel %vm2160, %v1477, -inf
    %v2184 = vmax.f32 %v2182, %v2183
    %v2185 = vsel %vm2160, %v1709, -inf
    %v2186 = vmax.f32 %v2184, %v2185
    %v2187 = vsel %vm2160, %v1941, -inf
    %v2188 = vmax.f32 %v2186, %v2187
    %v2189 = vsel %vm2160, %v1250, -inf
    %v2190 = vsel %vm2160, %v1482, -inf
    %v2191 = vmax.f32 %v2189, %v2190
    %v2192 = vsel %vm2160, %v1714, -inf
    %v2193 = vmax.f32 %v2191, %v2192
    %v2194 = vsel %vm2160, %v1946, -inf
    %v2195 = vmax.f32 %v2193, %v2194
    %v2196 = vsel %vm2160, %v1253, -inf
    %v2197 = vsel %vm2160, %v1485, -inf
    %v2198 = vmax.f32 %v2196, %v2197
    %v2199 = vsel %vm2160, %v1717, -inf
    %v2200 = vmax.f32 %v2198, %v2199
    %v2201 = vsel %vm2160, %v1949, -inf
    %v2202 = vmax.f32 %v2200, %v2201
    %v2203 = vsel %vm2160, %v1258, -inf
    %v2204 = vsel %vm2160, %v1490, -inf
    %v2205 = vmax.f32 %v2203, %v2204
    %v2206 = vsel %vm2160, %v1722, -inf
    %v2207 = vmax.f32 %v2205, %v2206
    %v2208 = vsel %vm2160, %v1954, -inf
    %v2209 = vmax.f32 %v2207, %v2208
    %v2210 = vsel %vm2160, %v1261, -inf
    %v2211 = vsel %vm2160, %v1493, -inf
    %v2212 = vmax.f32 %v2210, %v2211
    %v2213 = vsel %vm2160, %v1725, -inf
    %v2214 = vmax.f32 %v2212, %v2213
    %v2215 = vsel %vm2160, %v1957, -inf
    %v2216 = vmax.f32 %v2214, %v2215
    %v2217 = vsel %vm2160, %v1266, -inf
    %v2218 = vsel %vm2160, %v1498, -inf
    %v2219 = vmax.f32 %v2217, %v2218
    %v2220 = vsel %vm2160, %v1730, -inf
    %v2221 = vmax.f32 %v2219, %v2220
    %v2222 = vsel %vm2160, %v1962, -inf
    %v2223 = vmax.f32 %v2221, %v2222
    %v2224 = vsel %vm2160, %v1269, -inf
    %v2225 = vsel %vm2160, %v1501, -inf
    %v2226 = vmax.f32 %v2224, %v2225
    %v2227 = vsel %vm2160, %v1733, -inf
    %v2228 = vmax.f32 %v2226, %v2227
    %v2229 = vsel %vm2160, %v1965, -inf
    %v2230 = vmax.f32 %v2228, %v2229
    %v2231 = vsel %vm2160, %v1274, -inf
    %v2232 = vsel %vm2160, %v1506, -inf
    %v2233 = vmax.f32 %v2231, %v2232
    %v2234 = vsel %vm2160, %v1738, -inf
    %v2235 = vmax.f32 %v2233, %v2234
    %v2236 = vsel %vm2160, %v1970, -inf
    %v2237 = vmax.f32 %v2235, %v2236
    %v2238 = vsel %vm2160, %v1277, -inf
    %v2239 = vsel %vm2160, %v1509, -inf
    %v2240 = vmax.f32 %v2238, %v2239
    %v2241 = vsel %vm2160, %v1741, -inf
    %v2242 = vmax.f32 %v2240, %v2241
    %v2243 = vsel %vm2160, %v1973, -inf
    %v2244 = vmax.f32 %v2242, %v2243
    %v2245 = vsel %vm2160, %v1282, -inf
    %v2246 = vsel %vm2160, %v1514, -inf
    %v2247 = vmax.f32 %v2245, %v2246
    %v2248 = vsel %vm2160, %v1746, -inf
    %v2249 = vmax.f32 %v2247, %v2248
    %v2250 = vsel %vm2160, %v1978, -inf
    %v2251 = vmax.f32 %v2249, %v2250
    %v2252 = vsel %vm2160, %v1285, -inf
    %v2253 = vsel %vm2160, %v1517, -inf
    %v2254 = vmax.f32 %v2252, %v2253
    %v2255 = vsel %vm2160, %v1749, -inf
    %v2256 = vmax.f32 %v2254, %v2255
    %v2257 = vsel %vm2160, %v1981, -inf
    %v2258 = vmax.f32 %v2256, %v2257
    %v2259 = vsel %vm2160, %v1290, -inf
    %v2260 = vsel %vm2160, %v1522, -inf
    %v2261 = vmax.f32 %v2259, %v2260
    %v2262 = vsel %vm2160, %v1754, -inf
    %v2263 = vmax.f32 %v2261, %v2262
    %v2264 = vsel %vm2160, %v1986, -inf
    %v2265 = vmax.f32 %v2263, %v2264
    %v2266 = vsel %vm2160, %v1293, -inf
    %v2267 = vsel %vm2160, %v1525, -inf
    %v2268 = vmax.f32 %v2266, %v2267
    %v2269 = vsel %vm2160, %v1757, -inf
    %v2270 = vmax.f32 %v2268, %v2269
    %v2271 = vsel %vm2160, %v1989, -inf
    %v2272 = vmax.f32 %v2270, %v2271
    %v2273 = vsel %vm2160, %v1298, -inf
    %v2274 = vsel %vm2160, %v1530, -inf
    %v2275 = vmax.f32 %v2273, %v2274
    %v2276 = vsel %vm2160, %v1762, -inf
    %v2277 = vmax.f32 %v2275, %v2276
    %v2278 = vsel %vm2160, %v1994, -inf
    %v2279 = vmax.f32 %v2277, %v2278
    %v2280 = vsel %vm2160, %v1301, -inf
    %v2281 = vsel %vm2160, %v1533, -inf
    %v2282 = vmax.f32 %v2280, %v2281
    %v2283 = vsel %vm2160, %v1765, -inf
    %v2284 = vmax.f32 %v2282, %v2283
    %v2285 = vsel %vm2160, %v1997, -inf
    %v2286 = vmax.f32 %v2284, %v2285
    %v2287 = vsel %vm2160, %v1306, -inf
    %v2288 = vsel %vm2160, %v1538, -inf
    %v2289 = vmax.f32 %v2287, %v2288
    %v2290 = vsel %vm2160, %v1770, -inf
    %v2291 = vmax.f32 %v2289, %v2290
    %v2292 = vsel %vm2160, %v2002, -inf
    %v2293 = vmax.f32 %v2291, %v2292
    %v2294 = vsel %vm2160, %v1309, -inf
    %v2295 = vsel %vm2160, %v1541, -inf
    %v2296 = vmax.f32 %v2294, %v2295
    %v2297 = vsel %vm2160, %v1773, -inf
    %v2298 = vmax.f32 %v2296, %v2297
    %v2299 = vsel %vm2160, %v2005, -inf
    %v2300 = vmax.f32 %v2298, %v2299
    %v2301 = vsel %vm2160, %v1314, -inf
    %v2302 = vsel %vm2160, %v1546, -inf
    %v2303 = vmax.f32 %v2301, %v2302
    %v2304 = vsel %vm2160, %v1778, -inf
    %v2305 = vmax.f32 %v2303, %v2304
    %v2306 = vsel %vm2160, %v2010, -inf
    %v2307 = vmax.f32 %v2305, %v2306
    %v2308 = vsel %vm2160, %v1317, -inf
    %v2309 = vsel %vm2160, %v1549, -inf
    %v2310 = vmax.f32 %v2308, %v2309
    %v2311 = vsel %vm2160, %v1781, -inf
    %v2312 = vmax.f32 %v2310, %v2311
    %v2313 = vsel %vm2160, %v2013, -inf
    %v2314 = vmax.f32 %v2312, %v2313
    %v2315 = vsel %vm2160, %v1322, -inf
    %v2316 = vsel %vm2160, %v1554, -inf
    %v2317 = vmax.f32 %v2315, %v2316
    %v2318 = vsel %vm2160, %v1786, -inf
    %v2319 = vmax.f32 %v2317, %v2318
    %v2320 = vsel %vm2160, %v2018, -inf
    %v2321 = vmax.f32 %v2319, %v2320
    %v2322 = vsel %vm2160, %v1325, -inf
    %v2323 = vsel %vm2160, %v1557, -inf
    %v2324 = vmax.f32 %v2322, %v2323
    %v2325 = vsel %vm2160, %v1789, -inf
    %v2326 = vmax.f32 %v2324, %v2325
    %v2327 = vsel %vm2160, %v2021, -inf
    %v2328 = vmax.f32 %v2326, %v2327
    %v2329 = vsel %vm2160, %v1330, -inf
    %v2330 = vsel %vm2160, %v1562, -inf
    %v2331 = vmax.f32 %v2329, %v2330
    %v2332 = vsel %vm2160, %v1794, -inf
    %v2333 = vmax.f32 %v2331, %v2332
    %v2334 = vsel %vm2160, %v2026, -inf
    %v2335 = vmax.f32 %v2333, %v2334
    %v2336 = vsel %vm2160, %v1333, -inf
    %v2337 = vsel %vm2160, %v1565, -inf
    %v2338 = vmax.f32 %v2336, %v2337
    %v2339 = vsel %vm2160, %v1797, -inf
    %v2340 = vmax.f32 %v2338, %v2339
    %v2341 = vsel %vm2160, %v2029, -inf
    %v2342 = vmax.f32 %v2340, %v2341
    %v2343 = vsel %vm2160, %v1338, -inf
    %v2344 = vsel %vm2160, %v1570, -inf
    %v2345 = vmax.f32 %v2343, %v2344
    %v2346 = vsel %vm2160, %v1802, -inf
    %v2347 = vmax.f32 %v2345, %v2346
    %v2348 = vsel %vm2160, %v2034, -inf
    %v2349 = vmax.f32 %v2347, %v2348
    %v2350 = vsel %vm2160, %v1341, -inf
    %v2351 = vsel %vm2160, %v1573, -inf
    %v2352 = vmax.f32 %v2350, %v2351
    %v2353 = vsel %vm2160, %v1805, -inf
    %v2354 = vmax.f32 %v2352, %v2353
    %v2355 = vsel %vm2160, %v2037, -inf
    %v2356 = vmax.f32 %v2354, %v2355
    %v2357 = vsel %vm2160, %v1346, -inf
    %v2358 = vsel %vm2160, %v1578, -inf
    %v2359 = vmax.f32 %v2357, %v2358
    %v2360 = vsel %vm2160, %v1810, -inf
    %v2361 = vmax.f32 %v2359, %v2360
    %v2362 = vsel %vm2160, %v2042, -inf
    %v2363 = vmax.f32 %v2361, %v2362
    %v2364 = vsel %vm2160, %v1349, -inf
    %v2365 = vsel %vm2160, %v1581, -inf
    %v2366 = vmax.f32 %v2364, %v2365
    %v2367 = vsel %vm2160, %v1813, -inf
    %v2368 = vmax.f32 %v2366, %v2367
    %v2369 = vsel %vm2160, %v2045, -inf
    %v2370 = vmax.f32 %v2368, %v2369
    %v2371 = vsel %vm2160, %v1354, -inf
    %v2372 = vsel %vm2160, %v1586, -inf
    %v2373 = vmax.f32 %v2371, %v2372
    %v2374 = vsel %vm2160, %v1818, -inf
    %v2375 = vmax.f32 %v2373, %v2374
    %v2376 = vsel %vm2160, %v2050, -inf
    %v2377 = vmax.f32 %v2375, %v2376
    %v2378 = vsel %vm2160, %v1357, -inf
    %v2379 = vsel %vm2160, %v1589, -inf
    %v2380 = vmax.f32 %v2378, %v2379
    %v2381 = vsel %vm2160, %v1821, -inf
    %v2382 = vmax.f32 %v2380, %v2381
    %v2383 = vsel %vm2160, %v2053, -inf
    %v2384 = vmax.f32 %v2382, %v2383
    %v2385 = vsel %vm2160, %v1362, -inf
    %v2386 = vsel %vm2160, %v1594, -inf
    %v2387 = vmax.f32 %v2385, %v2386
    %v2388 = vsel %vm2160, %v1826, -inf
    %v2389 = vmax.f32 %v2387, %v2388
    %v2390 = vsel %vm2160, %v2058, -inf
    %v2391 = vmax.f32 %v2389, %v2390
    %v2392 = vsel %vm2160, %v1365, -inf
    %v2393 = vsel %vm2160, %v1597, -inf
    %v2394 = vmax.f32 %v2392, %v2393
    %v2395 = vsel %vm2160, %v1829, -inf
    %v2396 = vmax.f32 %v2394, %v2395
    %v2397 = vsel %vm2160, %v2061, -inf
    %v2398 = vmax.f32 %v2396, %v2397
    %v2399 = vsel %vm2160, %v1370, -inf
    %v2400 = vsel %vm2160, %v1602, -inf
    %v2401 = vmax.f32 %v2399, %v2400
    %v2402 = vsel %vm2160, %v1834, -inf
    %v2403 = vmax.f32 %v2401, %v2402
    %v2404 = vsel %vm2160, %v2066, -inf
    %v2405 = vmax.f32 %v2403, %v2404
    %v2406 = vsel %vm2160, %v1373, -inf
    %v2407 = vsel %vm2160, %v1605, -inf
    %v2408 = vmax.f32 %v2406, %v2407
    %v2409 = vsel %vm2160, %v1837, -inf
    %v2410 = vmax.f32 %v2408, %v2409
    %v2411 = vsel %vm2160, %v2069, -inf
    %v2412 = vmax.f32 %v2410, %v2411
    %v2413 = vsel %vm2160, %v1378, -inf
    %v2414 = vsel %vm2160, %v1610, -inf
    %v2415 = vmax.f32 %v2413, %v2414
    %v2416 = vsel %vm2160, %v1842, -inf
    %v2417 = vmax.f32 %v2415, %v2416
    %v2418 = vsel %vm2160, %v2074, -inf
    %v2419 = vmax.f32 %v2417, %v2418
    %v2420 = vsel %vm2160, %v1381, -inf
    %v2421 = vsel %vm2160, %v1613, -inf
    %v2422 = vmax.f32 %v2420, %v2421
    %v2423 = vsel %vm2160, %v1845, -inf
    %v2424 = vmax.f32 %v2422, %v2423
    %v2425 = vsel %vm2160, %v2077, -inf
    %v2426 = vmax.f32 %v2424, %v2425
    %v2427 = vsel %vm2160, %v1386, -inf
    %v2428 = vsel %vm2160, %v1618, -inf
    %v2429 = vmax.f32 %v2427, %v2428
    %v2430 = vsel %vm2160, %v1850, -inf
    %v2431 = vmax.f32 %v2429, %v2430
    %v2432 = vsel %vm2160, %v2082, -inf
    %v2433 = vmax.f32 %v2431, %v2432
    %v2434 = vsel %vm2160, %v1389, -inf
    %v2435 = vsel %vm2160, %v1621, -inf
    %v2436 = vmax.f32 %v2434, %v2435
    %v2437 = vsel %vm2160, %v1853, -inf
    %v2438 = vmax.f32 %v2436, %v2437
    %v2439 = vsel %vm2160, %v2085, -inf
    %v2440 = vmax.f32 %v2438, %v2439
    %v2441 = vsel %vm2160, %v1394, -inf
    %v2442 = vsel %vm2160, %v1626, -inf
    %v2443 = vmax.f32 %v2441, %v2442
    %v2444 = vsel %vm2160, %v1858, -inf
    %v2445 = vmax.f32 %v2443, %v2444
    %v2446 = vsel %vm2160, %v2090, -inf
    %v2447 = vmax.f32 %v2445, %v2446
    %v2448 = vsel %vm2160, %v1397, -inf
    %v2449 = vsel %vm2160, %v1629, -inf
    %v2450 = vmax.f32 %v2448, %v2449
    %v2451 = vsel %vm2160, %v1861, -inf
    %v2452 = vmax.f32 %v2450, %v2451
    %v2453 = vsel %vm2160, %v2093, -inf
    %v2454 = vmax.f32 %v2452, %v2453
    %v2455 = vsel %vm2160, %v1402, -inf
    %v2456 = vsel %vm2160, %v1634, -inf
    %v2457 = vmax.f32 %v2455, %v2456
    %v2458 = vsel %vm2160, %v1866, -inf
    %v2459 = vmax.f32 %v2457, %v2458
    %v2460 = vsel %vm2160, %v2098, -inf
    %v2461 = vmax.f32 %v2459, %v2460
    %v2462 = vsel %vm2160, %v1405, -inf
    %v2463 = vsel %vm2160, %v1637, -inf
    %v2464 = vmax.f32 %v2462, %v2463
    %v2465 = vsel %vm2160, %v1869, -inf
    %v2466 = vmax.f32 %v2464, %v2465
    %v2467 = vsel %vm2160, %v2101, -inf
    %v2468 = vmax.f32 %v2466, %v2467
    %v2469 = vsel %vm2160, %v1410, -inf
    %v2470 = vsel %vm2160, %v1642, -inf
    %v2471 = vmax.f32 %v2469, %v2470
    %v2472 = vsel %vm2160, %v1874, -inf
    %v2473 = vmax.f32 %v2471, %v2472
    %v2474 = vsel %vm2160, %v2106, -inf
    %v2475 = vmax.f32 %v2473, %v2474
    %v2476 = vsel %vm2160, %v1413, -inf
    %v2477 = vsel %vm2160, %v1645, -inf
    %v2478 = vmax.f32 %v2476, %v2477
    %v2479 = vsel %vm2160, %v1877, -inf
    %v2480 = vmax.f32 %v2478, %v2479
    %v2481 = vsel %vm2160, %v2109, -inf
    %v2482 = vmax.f32 %v2480, %v2481
    %v2483 = vsel %vm2160, %v1418, -inf
    %v2484 = vsel %vm2160, %v1650, -inf
    %v2485 = vmax.f32 %v2483, %v2484
    %v2486 = vsel %vm2160, %v1882, -inf
    %v2487 = vmax.f32 %v2485, %v2486
    %v2488 = vsel %vm2160, %v2114, -inf
    %v2489 = vmax.f32 %v2487, %v2488
    %v2490 = vsel %vm2160, %v1421, -inf
    %v2491 = vsel %vm2160, %v1653, -inf
    %v2492 = vmax.f32 %v2490, %v2491
    %v2493 = vsel %vm2160, %v1885, -inf
    %v2494 = vmax.f32 %v2492, %v2493
    %v2495 = vsel %vm2160, %v2117, -inf
    %v2496 = vmax.f32 %v2494, %v2495
    %v2497 = vsel %vm2160, %v1426, -inf
    %v2498 = vsel %vm2160, %v1658, -inf
    %v2499 = vmax.f32 %v2497, %v2498
    %v2500 = vsel %vm2160, %v1890, -inf
    %v2501 = vmax.f32 %v2499, %v2500
    %v2502 = vsel %vm2160, %v2122, -inf
    %v2503 = vmax.f32 %v2501, %v2502
    %v2504 = vsel %vm2160, %v1429, -inf
    %v2505 = vsel %vm2160, %v1661, -inf
    %v2506 = vmax.f32 %v2504, %v2505
    %v2507 = vsel %vm2160, %v1893, -inf
    %v2508 = vmax.f32 %v2506, %v2507
    %v2509 = vsel %vm2160, %v2125, -inf
    %v2510 = vmax.f32 %v2508, %v2509
    %v2511 = vsel %vm2160, %v1434, -inf
    %v2512 = vsel %vm2160, %v1666, -inf
    %v2513 = vmax.f32 %v2511, %v2512
    %v2514 = vsel %vm2160, %v1898, -inf
    %v2515 = vmax.f32 %v2513, %v2514
    %v2516 = vsel %vm2160, %v2130, -inf
    %v2517 = vmax.f32 %v2515, %v2516
    %v2518 = vsel %vm2160, %v1437, -inf
    %v2519 = vsel %vm2160, %v1669, -inf
    %v2520 = vmax.f32 %v2518, %v2519
    %v2521 = vsel %vm2160, %v1901, -inf
    %v2522 = vmax.f32 %v2520, %v2521
    %v2523 = vsel %vm2160, %v2133, -inf
    %v2524 = vmax.f32 %v2522, %v2523
    %v2525 = vsel %vm2160, %v1442, -inf
    %v2526 = vsel %vm2160, %v1674, -inf
    %v2527 = vmax.f32 %v2525, %v2526
    %v2528 = vsel %vm2160, %v1906, -inf
    %v2529 = vmax.f32 %v2527, %v2528
    %v2530 = vsel %vm2160, %v2138, -inf
    %v2531 = vmax.f32 %v2529, %v2530
    %v2532 = vsel %vm2160, %v1445, -inf
    %v2533 = vsel %vm2160, %v1677, -inf
    %v2534 = vmax.f32 %v2532, %v2533
    %v2535 = vsel %vm2160, %v1909, -inf
    %v2536 = vmax.f32 %v2534, %v2535
    %v2537 = vsel %vm2160, %v2141, -inf
    %v2538 = vmax.f32 %v2536, %v2537
    %v2539 = vsel %vm2160, %v1450, -inf
    %v2540 = vsel %vm2160, %v1682, -inf
    %v2541 = vmax.f32 %v2539, %v2540
    %v2542 = vsel %vm2160, %v1914, -inf
    %v2543 = vmax.f32 %v2541, %v2542
    %v2544 = vsel %vm2160, %v2146, -inf
    %v2545 = vmax.f32 %v2543, %v2544
    %v2546 = vsel %vm2160, %v1453, -inf
    %v2547 = vsel %vm2160, %v1685, -inf
    %v2548 = vmax.f32 %v2546, %v2547
    %v2549 = vsel %vm2160, %v1917, -inf
    %v2550 = vmax.f32 %v2548, %v2549
    %v2551 = vsel %vm2160, %v2149, -inf
    %v2552 = vmax.f32 %v2550, %v2551
    %v2553 = vsel %vm2160, %v1458, -inf
    %v2554 = vsel %vm2160, %v1690, -inf
    %v2555 = vmax.f32 %v2553, %v2554
    %v2556 = vsel %vm2160, %v1922, -inf
    %v2557 = vmax.f32 %v2555, %v2556
    %v2558 = vsel %vm2160, %v2154, -inf
    %v2559 = vmax.f32 %v2557, %v2558
    %v2560 = vsel %vm2160, %v1461, -inf
    %v2561 = vsel %vm2160, %v1693, -inf
    %v2562 = vmax.f32 %v2560, %v2561
    %v2563 = vsel %vm2160, %v1925, -inf
    %v2564 = vmax.f32 %v2562, %v2563
    %v2565 = vsel %vm2160, %v2157, -inf
    %v2566 = vmax.f32 %v2564, %v2565
    %v2567 = vld [vmem:[%s2] sm:$0x1]
    %v2569 = vlaneseq
    %v2570 = vshrl.u32 %v2569, 7
    %v2571 = vsub.s32 0, %v2570
    %v2572 = vrot.slane %v2567, %v2571
    %v2574 = vadd.f32 %v2167, %v2572
    %v2575 = vadd.f32 %v2174, %v2572
    %v2576 = vadd.f32 %v2181, %v2572
    %v2577 = vadd.f32 %v2188, %v2572
    %v2578 = vadd.f32 %v2195, %v2572
    %v2579 = vadd.f32 %v2202, %v2572
    %v2580 = vadd.f32 %v2209, %v2572
    %v2581 = vadd.f32 %v2216, %v2572
    %v2582 = vadd.f32 %v2223, %v2572
    %v2583 = vadd.f32 %v2230, %v2572
    %v2584 = vadd.f32 %v2237, %v2572
    %v2585 = vadd.f32 %v2244, %v2572
    %v2586 = vadd.f32 %v2251, %v2572
    %v2587 = vadd.f32 %v2258, %v2572
    %v2588 = vadd.f32 %v2265, %v2572
    %v2589 = vadd.f32 %v2272, %v2572
    %v2590 = vadd.f32 %v2279, %v2572
    %v2591 = vadd.f32 %v2286, %v2572
    %v2592 = vadd.f32 %v2293, %v2572
    %v2593 = vadd.f32 %v2300, %v2572
    %v2594 = vadd.f32 %v2307, %v2572
    %v2595 = vadd.f32 %v2314, %v2572
    %v2596 = vadd.f32 %v2321, %v2572
    %v2597 = vadd.f32 %v2328, %v2572
    %v2598 = vadd.f32 %v2335, %v2572
    %v2599 = vadd.f32 %v2342, %v2572
    %v2600 = vadd.f32 %v2349, %v2572
    %v2601 = vadd.f32 %v2356, %v2572
    %v2602 = vadd.f32 %v2363, %v2572
    %v2603 = vadd.f32 %v2370, %v2572
    %v2604 = vadd.f32 %v2377, %v2572
    %v2605 = vadd.f32 %v2384, %v2572
    %v2606 = vadd.f32 %v2391, %v2572
    %v2607 = vadd.f32 %v2398, %v2572
    %v2608 = vadd.f32 %v2405, %v2572
    %v2609 = vadd.f32 %v2412, %v2572
    %v2610 = vadd.f32 %v2419, %v2572
    %v2611 = vadd.f32 %v2426, %v2572
    %v2612 = vadd.f32 %v2433, %v2572
    %v2613 = vadd.f32 %v2440, %v2572
    %v2614 = vadd.f32 %v2447, %v2572
    %v2615 = vadd.f32 %v2454, %v2572
    %v2616 = vadd.f32 %v2461, %v2572
    %v2617 = vadd.f32 %v2468, %v2572
    %v2618 = vadd.f32 %v2475, %v2572
    %v2619 = vadd.f32 %v2482, %v2572
    %v2620 = vadd.f32 %v2489, %v2572
    %v2621 = vadd.f32 %v2496, %v2572
    %v2622 = vadd.f32 %v2503, %v2572
    %v2623 = vadd.f32 %v2510, %v2572
    %v2624 = vadd.f32 %v2517, %v2572
    %v2625 = vadd.f32 %v2524, %v2572
    %v2626 = vadd.f32 %v2531, %v2572
    %v2627 = vadd.f32 %v2538, %v2572
    %v2628 = vadd.f32 %v2545, %v2572
    %v2629 = vadd.f32 %v2552, %v2572
    %v2630 = vadd.f32 %v2559, %v2572
    %v2631 = vadd.f32 %v2566, %v2572
    %v2632 = vmax.f32 %v2574, 0.0
    %v2633 = vmax.f32 %v2575, 0.0
    %v2634 = vmax.f32 %v2576, 0.0
    %v2635 = vmax.f32 %v2577, 0.0
    %v2636 = vmax.f32 %v2578, 0.0
    %v2637 = vmax.f32 %v2579, 0.0
    %v2638 = vmax.f32 %v2580, 0.0
    %v2639 = vmax.f32 %v2581, 0.0
    %v2640 = vmax.f32 %v2582, 0.0
    %v2641 = vmax.f32 %v2583, 0.0
    %v2642 = vmax.f32 %v2584, 0.0
    %v2643 = vmax.f32 %v2585, 0.0
    %v2644 = vmax.f32 %v2586, 0.0
    %v2645 = vmax.f32 %v2587, 0.0
    %v2646 = vmax.f32 %v2588, 0.0
    %v2647 = vmax.f32 %v2589, 0.0
    %v2648 = vmax.f32 %v2590, 0.0
    %v2649 = vmax.f32 %v2591, 0.0
    %v2650 = vmax.f32 %v2592, 0.0
    %v2651 = vmax.f32 %v2593, 0.0
    %v2652 = vmax.f32 %v2594, 0.0
    %v2653 = vmax.f32 %v2595, 0.0
    %v2654 = vmax.f32 %v2596, 0.0
    %v2655 = vmax.f32 %v2597, 0.0
    %v2656 = vmax.f32 %v2598, 0.0
    %v2657 = vmax.f32 %v2599, 0.0
    %v2658 = vmax.f32 %v2600, 0.0
    %v2659 = vmax.f32 %v2601, 0.0
    %v2660 = vmax.f32 %v2602, 0.0
    %v2661 = vmax.f32 %v2603, 0.0
    %v2662 = vmax.f32 %v2604, 0.0
    %v2663 = vmax.f32 %v2605, 0.0
    %v2664 = vmax.f32 %v2606, 0.0
    %v2665 = vmax.f32 %v2607, 0.0
    %v2666 = vmax.f32 %v2608, 0.0
    %v2667 = vmax.f32 %v2609, 0.0
    %v2668 = vmax.f32 %v2610, 0.0
    %v2669 = vmax.f32 %v2611, 0.0
    %v2670 = vmax.f32 %v2612, 0.0
    %v2671 = vmax.f32 %v2613, 0.0
    %v2672 = vmax.f32 %v2614, 0.0
    %v2673 = vmax.f32 %v2615, 0.0
    %v2674 = vmax.f32 %v2616, 0.0
    %v2675 = vmax.f32 %v2617, 0.0
    %v2676 = vmax.f32 %v2618, 0.0
    %v2677 = vmax.f32 %v2619, 0.0
    %v2678 = vmax.f32 %v2620, 0.0
    %v2679 = vmax.f32 %v2621, 0.0
    %v2680 = vmax.f32 %v2622, 0.0
    %v2681 = vmax.f32 %v2623, 0.0
    %v2682 = vmax.f32 %v2624, 0.0
    %v2683 = vmax.f32 %v2625, 0.0
    %v2684 = vmax.f32 %v2626, 0.0
    %v2685 = vmax.f32 %v2627, 0.0
    %v2686 = vmax.f32 %v2628, 0.0
    %v2687 = vmax.f32 %v2629, 0.0
    %v2688 = vmax.f32 %v2630, 0.0
    %v2689 = vmax.f32 %v2631, 0.0
    %v2690 = vld [vmem:[%s3] sm:$0xff]
    %v2691 = vld [vmem:[%s3 + $0x8] sm:$0xff]
    %v2692 = vld [vmem:[%s3 + $0x10] sm:$0xff]
    %v2693 = vld [vmem:[%s3 + $0x18] sm:$0xff]
    %v2694 = vld [vmem:[%s3 + $0x20] sm:$0xff]
    %v2695 = vld [vmem:[%s3 + $0x28] sm:$0xff]
    %v2696 = vld [vmem:[%s3 + $0x30] sm:$0xff]
    %v2697 = vld [vmem:[%s3 + $0x38] sm:$0xff]
    %v2698 = vld [vmem:[%s3 + $0x40] sm:$0xff]
    %v2699 = vld [vmem:[%s3 + $0x48] sm:$0xff]
    %v2700 = vld [vmem:[%s3 + $0x50] sm:$0xff]
    %v2701 = vld [vmem:[%s3 + $0x58] sm:$0xff]
    %v2702 = vld [vmem:[%s3 + $0x60] sm:$0xff]
    %v2703 = vld [vmem:[%s3 + $0x68] sm:$0xff]
    %v2704 = vld [vmem:[%s3 + $0x70] sm:$0xff]
    %v2705 = vld [vmem:[%s3 + $0x78] sm:$0xff]
    %v2706 = vld [vmem:[%s3 + $0x80] sm:$0xff]
    %v2707 = vld [vmem:[%s3 + $0x88] sm:$0xff]
    %v2708 = vld [vmem:[%s3 + $0x90] sm:$0xff]
    %v2709 = vld [vmem:[%s3 + $0x98] sm:$0xff]
    %v2710 = vld [vmem:[%s3 + $0xa0] sm:$0xff]
    %v2711 = vld [vmem:[%s3 + $0xa8] sm:$0xff]
    %v2712 = vld [vmem:[%s3 + $0xb0] sm:$0xff]
    %v2713 = vld [vmem:[%s3 + $0xb8] sm:$0xff]
    %v2714 = vld [vmem:[%s3 + $0xc0] sm:$0xff]
    %v2715 = vld [vmem:[%s3 + $0xc8] sm:$0xff]
    %v2716 = vld [vmem:[%s3 + $0xd0] sm:$0xff]
    %v2717 = vld [vmem:[%s3 + $0xd8] sm:$0xff]
    %v2718 = vld [vmem:[%s3 + $0xe0] sm:$0xff]
    %v2719 = vld [vmem:[%s3 + $0xe8] sm:$0xff]
    %v2720 = vld [vmem:[%s3 + $0xf0] sm:$0xff]
    %v2721 = vld [vmem:[%s3 + $0xf8] sm:$0xff]
    %v2722 = vld [vmem:[%s3 + $0x100] sm:$0xff]
    %v2723 = vld [vmem:[%s3 + $0x108] sm:$0xff]
    %v2724 = vld [vmem:[%s3 + $0x110] sm:$0xff]
    %v2725 = vld [vmem:[%s3 + $0x118] sm:$0xff]
    %v2726 = vld [vmem:[%s3 + $0x120] sm:$0xff]
    %v2727 = vld [vmem:[%s3 + $0x128] sm:$0xff]
    %v2728 = vld [vmem:[%s3 + $0x130] sm:$0xff]
    %v2729 = vld [vmem:[%s3 + $0x138] sm:$0xff]
    %v2730 = vld [vmem:[%s3 + $0x140] sm:$0xff]
    %v2731 = vld [vmem:[%s3 + $0x148] sm:$0xff]
    %v2732 = vld [vmem:[%s3 + $0x150] sm:$0xff]
    %v2733 = vld [vmem:[%s3 + $0x158] sm:$0xff]
    %v2734 = vld [vmem:[%s3 + $0x160] sm:$0xff]
    %v2735 = vld [vmem:[%s3 + $0x168] sm:$0xff]
    %v2736 = vld [vmem:[%s3 + $0x170] sm:$0xff]
    %v2737 = vld [vmem:[%s3 + $0x178] sm:$0xff]
    %v2738 = vld [vmem:[%s3 + $0x180] sm:$0xff]
    %v2739 = vld [vmem:[%s3 + $0x188] sm:$0xff]
    %v2740 = vld [vmem:[%s3 + $0x190] sm:$0xff]
    %v2741 = vld [vmem:[%s3 + $0x198] sm:$0xff]
    %v2742 = vld [vmem:[%s3 + $0x1a0] sm:$0xff]
    %v2743 = vld [vmem:[%s3 + $0x1a8] sm:$0xff]
    %v2744 = vld [vmem:[%s3 + $0x1b0] sm:$0xff]
    %v2745 = vld [vmem:[%s3 + $0x1b8] sm:$0xff]
    %v2746 = vld [vmem:[%s3 + $0x1c0] sm:$0xff]
    %v2747 = vld [vmem:[%s3 + $0x1c8] sm:$0xff]
    %v2748 = vld [vmem:[%s3 + $0x1d0] sm:$0xff]
    %v2749 = vld [vmem:[%s3 + $0x1d8] sm:$0xff]
    %v2750 = vld [vmem:[%s3 + $0x1e0] sm:$0xff]
    %v2751 = vld [vmem:[%s3 + $0x1e8] sm:$0xff]
    %v2752 = vld [vmem:[%s3 + $0x1f0] sm:$0xff]
    %v2753 = vld [vmem:[%s3 + $0x1f8] sm:$0xff]
    %v2754 = vld [vmem:[%s3 + $0x200] sm:$0xff]
    %v2755 = vld [vmem:[%s3 + $0x208] sm:$0xff]
    %v2756 = vld [vmem:[%s3 + $0x210] sm:$0xff]
    %v2757 = vld [vmem:[%s3 + $0x218] sm:$0xff]
    %v2758 = vld [vmem:[%s3 + $0x220] sm:$0xff]
    %v2759 = vld [vmem:[%s3 + $0x228] sm:$0xff]
    %v2760 = vld [vmem:[%s3 + $0x230] sm:$0xff]
    %v2761 = vld [vmem:[%s3 + $0x238] sm:$0xff]
    %v2762 = vld [vmem:[%s3 + $0x240] sm:$0xff]
    %v2763 = vld [vmem:[%s3 + $0x248] sm:$0xff]
    %v2764 = vld [vmem:[%s3 + $0x250] sm:$0xff]
    %v2765 = vld [vmem:[%s3 + $0x258] sm:$0xff]
    %v2766 = vld [vmem:[%s3 + $0x260] sm:$0xff]
    %v2767 = vld [vmem:[%s3 + $0x268] sm:$0xff]
    %v2768 = vld [vmem:[%s3 + $0x270] sm:$0xff]
    %v2769 = vld [vmem:[%s3 + $0x278] sm:$0xff]
    %v2770 = vld [vmem:[%s3 + $0x280] sm:$0xff]
    %v2771 = vld [vmem:[%s3 + $0x288] sm:$0xff]
    %v2772 = vld [vmem:[%s3 + $0x290] sm:$0xff]
    %v2773 = vld [vmem:[%s3 + $0x298] sm:$0xff]
    %v2774 = vld [vmem:[%s3 + $0x2a0] sm:$0xff]
    %v2775 = vld [vmem:[%s3 + $0x2a8] sm:$0xff]
    %v2776 = vld [vmem:[%s3 + $0x2b0] sm:$0xff]
    %v2777 = vld [vmem:[%s3 + $0x2b8] sm:$0xff]
    %v2778 = vld [vmem:[%s3 + $0x2c0] sm:$0xff]
    %v2779 = vld [vmem:[%s3 + $0x2c8] sm:$0xff]
    %v2780 = vld [vmem:[%s3 + $0x2d0] sm:$0xff]
    %v2781 = vld [vmem:[%s3 + $0x2d8] sm:$0xff]
    %v2782 = vld [vmem:[%s3 + $0x2e0] sm:$0xff]
    %v2783 = vld [vmem:[%s3 + $0x2e8] sm:$0xff]
    %v2784 = vld [vmem:[%s3 + $0x2f0] sm:$0xff]
    %v2785 = vld [vmem:[%s3 + $0x2f8] sm:$0xff]
    %v2786 = vld [vmem:[%s3 + $0x300] sm:$0xff]
    %v2787 = vld [vmem:[%s3 + $0x308] sm:$0xff]
    %v2788 = vld [vmem:[%s3 + $0x310] sm:$0xff]
    %v2789 = vld [vmem:[%s3 + $0x318] sm:$0xff]
    %v2790 = vld [vmem:[%s3 + $0x320] sm:$0xff]
    %v2791 = vld [vmem:[%s3 + $0x328] sm:$0xff]
    %v2792 = vld [vmem:[%s3 + $0x330] sm:$0xff]
    %v2793 = vld [vmem:[%s3 + $0x338] sm:$0xff]
    %v2794 = vld [vmem:[%s3 + $0x340] sm:$0xff]
    %v2795 = vld [vmem:[%s3 + $0x348] sm:$0xff]
    %v2796 = vld [vmem:[%s3 + $0x350] sm:$0xff]
    %v2797 = vld [vmem:[%s3 + $0x358] sm:$0xff]
    %v2798 = vld [vmem:[%s3 + $0x360] sm:$0xff]
    %v2799 = vld [vmem:[%s3 + $0x368] sm:$0xff]
    %v2800 = vld [vmem:[%s3 + $0x370] sm:$0xff]
    %v2801 = vld [vmem:[%s3 + $0x378] sm:$0xff]
    %v2802 = vld [vmem:[%s3 + $0x380] sm:$0xff]
    %v2803 = vld [vmem:[%s3 + $0x388] sm:$0xff]
    %v2804 = vld [vmem:[%s3 + $0x390] sm:$0xff]
    %v2805 = vld [vmem:[%s3 + $0x398] sm:$0xff]
    %v2806 = vld [vmem:[%s3 + $0x3a0] sm:$0xff]
    %v2807 = vld [vmem:[%s3 + $0x3a8] sm:$0xff]
    %v2808 = vld [vmem:[%s3 + $0x3b0] sm:$0xff]
    %v2809 = vld [vmem:[%s3 + $0x3b8] sm:$0xff]
    %v2810 = vld [vmem:[%s3 + $0x3c0] sm:$0xff]
    %v2811 = vld [vmem:[%s3 + $0x3c8] sm:$0xff]
    %v2812 = vld [vmem:[%s3 + $0x3d0] sm:$0xff]
    %v2813 = vld [vmem:[%s3 + $0x3d8] sm:$0xff]
    %v2814 = vld [vmem:[%s3 + $0x3e0] sm:$0xff]
    %v2815 = vld [vmem:[%s3 + $0x3e8] sm:$0xff]
    %v2816 = vld [vmem:[%s3 + $0x3f0] sm:$0xff]
    %v2817 = vld [vmem:[%s3 + $0x3f8] sm:$0xff]
    %v2818 = vld [vmem:[%s3 + $0x400] sm:$0xff]
    %v2819 = vld [vmem:[%s3 + $0x408] sm:$0xff]
    %v2820 = vld [vmem:[%s3 + $0x410] sm:$0xff]
    %v2821 = vld [vmem:[%s3 + $0x418] sm:$0xff]
    %v2822 = vld [vmem:[%s3 + $0x420] sm:$0xff]
    %v2823 = vld [vmem:[%s3 + $0x428] sm:$0xff]
    %v2824 = vld [vmem:[%s3 + $0x430] sm:$0xff]
    %v2825 = vld [vmem:[%s3 + $0x438] sm:$0xff]
    %v2826 = vld [vmem:[%s3 + $0x440] sm:$0xff]
    %v2827 = vld [vmem:[%s3 + $0x448] sm:$0xff]
    %v2828 = vld [vmem:[%s3 + $0x450] sm:$0xff]
    %v2829 = vld [vmem:[%s3 + $0x458] sm:$0xff]
    %v2830 = vld [vmem:[%s3 + $0x460] sm:$0xff]
    %v2831 = vld [vmem:[%s3 + $0x468] sm:$0xff]
    %v2832 = vld [vmem:[%s3 + $0x470] sm:$0xff]
    %v2833 = vld [vmem:[%s3 + $0x478] sm:$0xff]
    %v2834 = vld [vmem:[%s3 + $0x480] sm:$0xff]
    %v2835 = vld [vmem:[%s3 + $0x488] sm:$0xff]
    %v2836 = vld [vmem:[%s3 + $0x490] sm:$0xff]
    %v2837 = vld [vmem:[%s3 + $0x498] sm:$0xff]
    %v2838 = vld [vmem:[%s3 + $0x4a0] sm:$0xff]
    %v2839 = vld [vmem:[%s3 + $0x4a8] sm:$0xff]
    %v2840 = vld [vmem:[%s3 + $0x4b0] sm:$0xff]
    %v2841 = vld [vmem:[%s3 + $0x4b8] sm:$0xff]
    %v2842 = vld [vmem:[%s3 + $0x4c0] sm:$0xff]
    %v2843 = vld [vmem:[%s3 + $0x4c8] sm:$0xff]
    %v2844 = vld [vmem:[%s3 + $0x4d0] sm:$0xff]
    %v2845 = vld [vmem:[%s3 + $0x4d8] sm:$0xff]
    %v2846 = vld [vmem:[%s3 + $0x4e0] sm:$0xff]
    %v2847 = vld [vmem:[%s3 + $0x4e8] sm:$0xff]
    %v2848 = vld [vmem:[%s3 + $0x4f0] sm:$0xff]
    %v2849 = vld [vmem:[%s3 + $0x4f8] sm:$0xff]
    %v2850 = vld [vmem:[%s3 + $0x500] sm:$0xff]
    %v2851 = vld [vmem:[%s3 + $0x508] sm:$0xff]
    %v2852 = vld [vmem:[%s3 + $0x510] sm:$0xff]
    %v2853 = vld [vmem:[%s3 + $0x518] sm:$0xff]
    %v2854 = vld [vmem:[%s3 + $0x520] sm:$0xff]
    %v2855 = vld [vmem:[%s3 + $0x528] sm:$0xff]
    %v2856 = vld [vmem:[%s3 + $0x530] sm:$0xff]
    %v2857 = vld [vmem:[%s3 + $0x538] sm:$0xff]
    %v2858 = vld [vmem:[%s3 + $0x540] sm:$0xff]
    %v2859 = vld [vmem:[%s3 + $0x548] sm:$0xff]
    %v2860 = vld [vmem:[%s3 + $0x550] sm:$0xff]
    %v2861 = vld [vmem:[%s3 + $0x558] sm:$0xff]
    %v2862 = vld [vmem:[%s3 + $0x560] sm:$0xff]
    %v2863 = vld [vmem:[%s3 + $0x568] sm:$0xff]
    %v2864 = vld [vmem:[%s3 + $0x570] sm:$0xff]
    %v2865 = vld [vmem:[%s3 + $0x578] sm:$0xff]
    %v2866 = vld [vmem:[%s3 + $0x580] sm:$0xff]
    %v2867 = vld [vmem:[%s3 + $0x588] sm:$0xff]
    %v2868 = vld [vmem:[%s3 + $0x590] sm:$0xff]
    %v2869 = vld [vmem:[%s3 + $0x598] sm:$0xff]
    %v2870 = vld [vmem:[%s3 + $0x5a0] sm:$0xff]
    %v2871 = vld [vmem:[%s3 + $0x5a8] sm:$0xff]
    %v2872 = vld [vmem:[%s3 + $0x5b0] sm:$0xff]
    %v2873 = vld [vmem:[%s3 + $0x5b8] sm:$0xff]
    %v2874 = vld [vmem:[%s3 + $0x5c0] sm:$0xff]
    %v2875 = vld [vmem:[%s3 + $0x5c8] sm:$0xff]
    %v2876 = vld [vmem:[%s3 + $0x5d0] sm:$0xff]
    %v2877 = vld [vmem:[%s3 + $0x5d8] sm:$0xff]
    %v2878 = vld [vmem:[%s3 + $0x5e0] sm:$0xff]
    %v2879 = vld [vmem:[%s3 + $0x5e8] sm:$0xff]
    %v2880 = vld [vmem:[%s3 + $0x5f0] sm:$0xff]
    %v2881 = vld [vmem:[%s3 + $0x5f8] sm:$0xff]
    %v2882 = vld [vmem:[%s3 + $0x600] sm:$0xff]
    %v2883 = vld [vmem:[%s3 + $0x608] sm:$0xff]
    %v2884 = vld [vmem:[%s3 + $0x610] sm:$0xff]
    %v2885 = vld [vmem:[%s3 + $0x618] sm:$0xff]
    %v2886 = vld [vmem:[%s3 + $0x620] sm:$0xff]
    %v2887 = vld [vmem:[%s3 + $0x628] sm:$0xff]
    %v2888 = vld [vmem:[%s3 + $0x630] sm:$0xff]
    %v2889 = vld [vmem:[%s3 + $0x638] sm:$0xff]
    %v2890 = vld [vmem:[%s3 + $0x640] sm:$0xff]
    %v2891 = vld [vmem:[%s3 + $0x648] sm:$0xff]
    %v2892 = vld [vmem:[%s3 + $0x650] sm:$0xff]
    %v2893 = vld [vmem:[%s3 + $0x658] sm:$0xff]
    %v2894 = vld [vmem:[%s3 + $0x660] sm:$0xff]
    %v2895 = vld [vmem:[%s3 + $0x668] sm:$0xff]
    %v2896 = vld [vmem:[%s3 + $0x670] sm:$0xff]
    %v2897 = vld [vmem:[%s3 + $0x678] sm:$0xff]
    %v2898 = vld [vmem:[%s3 + $0x680] sm:$0xff]
    %v2899 = vld [vmem:[%s3 + $0x688] sm:$0xff]
    %v2900 = vld [vmem:[%s3 + $0x690] sm:$0xff]
    %v2901 = vld [vmem:[%s3 + $0x698] sm:$0xff]
    %v2902 = vld [vmem:[%s3 + $0x6a0] sm:$0xff]
    %v2903 = vld [vmem:[%s3 + $0x6a8] sm:$0xff]
    %v2904 = vld [vmem:[%s3 + $0x6b0] sm:$0xff]
    %v2905 = vld [vmem:[%s3 + $0x6b8] sm:$0xff]
    %v2906 = vld [vmem:[%s3 + $0x6c0] sm:$0xff]
    %v2907 = vld [vmem:[%s3 + $0x6c8] sm:$0xff]
    %v2908 = vld [vmem:[%s3 + $0x6d0] sm:$0xff]
    %v2909 = vld [vmem:[%s3 + $0x6d8] sm:$0xff]
    %v2910 = vld [vmem:[%s3 + $0x6e0] sm:$0xff]
    %v2911 = vld [vmem:[%s3 + $0x6e8] sm:$0xff]
    %v2912 = vld [vmem:[%s3 + $0x6f0] sm:$0xff]
    %v2913 = vld [vmem:[%s3 + $0x6f8] sm:$0xff]
    %v2914 = vld [vmem:[%s3 + $0x700] sm:$0xff]
    %v2915 = vld [vmem:[%s3 + $0x708] sm:$0xff]
    %v2916 = vld [vmem:[%s3 + $0x710] sm:$0xff]
    %v2917 = vld [vmem:[%s3 + $0x718] sm:$0xff]
    %v2918 = vld [vmem:[%s3 + $0x720] sm:$0xff]
    %v2919 = vld [vmem:[%s3 + $0x728] sm:$0xff]
    %v2920 = vld [vmem:[%s3 + $0x730] sm:$0xff]
    %v2921 = vld [vmem:[%s3 + $0x738] sm:$0xff]
    %v2922 = vld [vmem:[%s3 + $0x740] sm:$0xff]
    %v2923 = vld [vmem:[%s3 + $0x748] sm:$0xff]
    %v2924 = vld [vmem:[%s3 + $0x750] sm:$0xff]
    %v2925 = vld [vmem:[%s3 + $0x758] sm:$0xff]
    %v2926 = vld [vmem:[%s3 + $0x760] sm:$0xff]
    %v2927 = vld [vmem:[%s3 + $0x768] sm:$0xff]
    %v2928 = vld [vmem:[%s3 + $0x770] sm:$0xff]
    %v2929 = vld [vmem:[%s3 + $0x778] sm:$0xff]
    %v2930 = vld [vmem:[%s3 + $0x780] sm:$0xff]
    %v2931 = vld [vmem:[%s3 + $0x788] sm:$0xff]
    %v2932 = vld [vmem:[%s3 + $0x790] sm:$0xff]
    %v2933 = vld [vmem:[%s3 + $0x798] sm:$0xff]
    %v2934 = vld [vmem:[%s3 + $0x7a0] sm:$0xff]
    %v2935 = vld [vmem:[%s3 + $0x7a8] sm:$0xff]
    %v2936 = vld [vmem:[%s3 + $0x7b0] sm:$0xff]
    %v2937 = vld [vmem:[%s3 + $0x7b8] sm:$0xff]
    %v2938 = vld [vmem:[%s3 + $0x7c0] sm:$0xff]
    %v2939 = vld [vmem:[%s3 + $0x7c8] sm:$0xff]
    %v2940 = vld [vmem:[%s3 + $0x7d0] sm:$0xff]
    %v2941 = vld [vmem:[%s3 + $0x7d8] sm:$0xff]
    %v2942 = vld [vmem:[%s3 + $0x7e0] sm:$0xff]
    %v2943 = vld [vmem:[%s3 + $0x7e8] sm:$0xff]
    %v2944 = vld [vmem:[%s3 + $0x7f0] sm:$0xff]
    %v2945 = vld [vmem:[%s3 + $0x7f8] sm:$0xff]
    %v2946 = vld [vmem:[%s3 + $0x800] sm:$0xff]
    %v2947 = vld [vmem:[%s3 + $0x808] sm:$0xff]
    %v2948 = vld [vmem:[%s3 + $0x810] sm:$0xff]
    %v2949 = vld [vmem:[%s3 + $0x818] sm:$0xff]
    %v2950 = vld [vmem:[%s3 + $0x820] sm:$0xff]
    %v2951 = vld [vmem:[%s3 + $0x828] sm:$0xff]
    %v2952 = vld [vmem:[%s3 + $0x830] sm:$0xff]
    %v2953 = vld [vmem:[%s3 + $0x838] sm:$0xff]
    %v2954 = vld [vmem:[%s3 + $0x840] sm:$0xff]
    %v2955 = vld [vmem:[%s3 + $0x848] sm:$0xff]
    %v2956 = vld [vmem:[%s3 + $0x850] sm:$0xff]
    %v2957 = vld [vmem:[%s3 + $0x858] sm:$0xff]
    %v2958 = vld [vmem:[%s3 + $0x860] sm:$0xff]
    %v2959 = vld [vmem:[%s3 + $0x868] sm:$0xff]
    %v2960 = vld [vmem:[%s3 + $0x870] sm:$0xff]
    %v2961 = vld [vmem:[%s3 + $0x878] sm:$0xff]
    %v2962 = vld [vmem:[%s3 + $0x880] sm:$0xff]
    %v2963 = vld [vmem:[%s3 + $0x888] sm:$0xff]
    %v2964 = vld [vmem:[%s3 + $0x890] sm:$0xff]
    %v2965 = vld [vmem:[%s3 + $0x898] sm:$0xff]
    %v2966 = vld [vmem:[%s3 + $0x8a0] sm:$0xff]
    %v2967 = vld [vmem:[%s3 + $0x8a8] sm:$0xff]
    %v2968 = vld [vmem:[%s3 + $0x8b0] sm:$0xff]
    %v2969 = vld [vmem:[%s3 + $0x8b8] sm:$0xff]
    %v2970 = vld [vmem:[%s3 + $0x8c0] sm:$0xff]
    %v2971 = vld [vmem:[%s3 + $0x8c8] sm:$0xff]
    %v2972 = vld [vmem:[%s3 + $0x8d0] sm:$0xff]
    %v2973 = vld [vmem:[%s3 + $0x8d8] sm:$0xff]
    %v2974 = vld [vmem:[%s3 + $0x8e0] sm:$0xff]
    %v2975 = vld [vmem:[%s3 + $0x8e8] sm:$0xff]
    %v2976 = vld [vmem:[%s3 + $0x8f0] sm:$0xff]
    %v2977 = vld [vmem:[%s3 + $0x8f8] sm:$0xff]
    %v2978 = vld [vmem:[%s3 + $0x900] sm:$0xff]
    %v2979 = vld [vmem:[%s3 + $0x908] sm:$0xff]
    %v2980 = vmul.f32 %v2632, %v2690
    %v2981 = vmul.f32 %v2633, %v2691
    %v2982 = vmul.f32 %v2634, %v2692
    %v2983 = vmul.f32 %v2635, %v2693
    %v2984 = vmul.f32 %v2636, %v2694
    %v2985 = vmul.f32 %v2637, %v2695
    %v2986 = vmul.f32 %v2638, %v2696
    %v2987 = vmul.f32 %v2639, %v2697
    %v2988 = vmul.f32 %v2640, %v2698
    %v2989 = vmul.f32 %v2641, %v2699
    %v2990 = vmul.f32 %v2642, %v2700
    %v2991 = vmul.f32 %v2643, %v2701
    %v2992 = vmul.f32 %v2644, %v2702
    %v2993 = vmul.f32 %v2645, %v2703
    %v2994 = vmul.f32 %v2646, %v2704
    %v2995 = vmul.f32 %v2647, %v2705
    %v2996 = vmul.f32 %v2648, %v2706
    %v2997 = vmul.f32 %v2649, %v2707
    %v2998 = vmul.f32 %v2650, %v2708
    %v2999 = vmul.f32 %v2651, %v2709
    %v3000 = vmul.f32 %v2652, %v2710
    %v3001 = vmul.f32 %v2653, %v2711
    %v3002 = vmul.f32 %v2654, %v2712
    %v3003 = vmul.f32 %v2655, %v2713
    %v3004 = vmul.f32 %v2656, %v2714
    %v3005 = vmul.f32 %v2657, %v2715
    %v3006 = vmul.f32 %v2658, %v2716
    %v3007 = vmul.f32 %v2659, %v2717
    %v3008 = vmul.f32 %v2660, %v2718
    %v3009 = vmul.f32 %v2632, %v2719
    %v3010 = vmul.f32 %v2633, %v2720
    %v3011 = vmul.f32 %v2634, %v2721
    %v3012 = vmul.f32 %v2635, %v2722
    %v3013 = vmul.f32 %v2636, %v2723
    %v3014 = vmul.f32 %v2637, %v2724
    %v3015 = vmul.f32 %v2638, %v2725
    %v3016 = vmul.f32 %v2639, %v2726
    %v3017 = vmul.f32 %v2640, %v2727
    %v3018 = vmul.f32 %v2641, %v2728
    %v3019 = vmul.f32 %v2642, %v2729
    %v3020 = vmul.f32 %v2643, %v2730
    %v3021 = vmul.f32 %v2644, %v2731
    %v3022 = vmul.f32 %v2645, %v2732
    %v3023 = vmul.f32 %v2646, %v2733
    %v3024 = vmul.f32 %v2647, %v2734
    %v3025 = vmul.f32 %v2648, %v2735
    %v3026 = vmul.f32 %v2649, %v2736
    %v3027 = vmul.f32 %v2650, %v2737
    %v3028 = vmul.f32 %v2651, %v2738
    %v3029 = vmul.f32 %v2652, %v2739
    %v3030 = vmul.f32 %v2653, %v2740
    %v3031 = vmul.f32 %v2654, %v2741
    %v3032 = vmul.f32 %v2655, %v2742
    %v3033 = vmul.f32 %v2656, %v2743
    %v3034 = vmul.f32 %v2657, %v2744
    %v3035 = vmul.f32 %v2658, %v2745
    %v3036 = vmul.f32 %v2659, %v2746
    %v3037 = vmul.f32 %v2660, %v2747
    %v3038 = vmul.f32 %v2632, %v2748
    %v3039 = vmul.f32 %v2633, %v2749
    %v3040 = vmul.f32 %v2634, %v2750
    %v3041 = vmul.f32 %v2635, %v2751
    %v3042 = vmul.f32 %v2636, %v2752
    %v3043 = vmul.f32 %v2637, %v2753
    %v3044 = vmul.f32 %v2638, %v2754
    %v3045 = vmul.f32 %v2639, %v2755
    %v3046 = vmul.f32 %v2640, %v2756
    %v3047 = vmul.f32 %v2641, %v2757
    %v3048 = vmul.f32 %v2642, %v2758
    %v3049 = vmul.f32 %v2643, %v2759
    %v3050 = vmul.f32 %v2644, %v2760
    %v3051 = vmul.f32 %v2645, %v2761
    %v3052 = vmul.f32 %v2646, %v2762
    %v3053 = vmul.f32 %v2647, %v2763
    %v3054 = vmul.f32 %v2648, %v2764
    %v3055 = vmul.f32 %v2649, %v2765
    %v3056 = vmul.f32 %v2650, %v2766
    %v3057 = vmul.f32 %v2651, %v2767
    %v3058 = vmul.f32 %v2652, %v2768
    %v3059 = vmul.f32 %v2653, %v2769
    %v3060 = vmul.f32 %v2654, %v2770
    %v3061 = vmul.f32 %v2655, %v2771
    %v3062 = vmul.f32 %v2656, %v2772
    %v3063 = vmul.f32 %v2657, %v2773
    %v3064 = vmul.f32 %v2658, %v2774
    %v3065 = vmul.f32 %v2659, %v2775
    %v3066 = vmul.f32 %v2660, %v2776
    %v3067 = vmul.f32 %v2632, %v2777
    %v3068 = vmul.f32 %v2633, %v2778
    %v3069 = vmul.f32 %v2634, %v2779
    %v3070 = vmul.f32 %v2635, %v2780
    %v3071 = vmul.f32 %v2636, %v2781
    %v3072 = vmul.f32 %v2637, %v2782
    %v3073 = vmul.f32 %v2638, %v2783
    %v3074 = vmul.f32 %v2639, %v2784
    %v3075 = vmul.f32 %v2640, %v2785
    %v3076 = vmul.f32 %v2641, %v2786
    %v3077 = vmul.f32 %v2642, %v2787
    %v3078 = vmul.f32 %v2643, %v2788
    %v3079 = vmul.f32 %v2644, %v2789
    %v3080 = vmul.f32 %v2645, %v2790
    %v3081 = vmul.f32 %v2646, %v2791
    %v3082 = vmul.f32 %v2647, %v2792
    %v3083 = vmul.f32 %v2648, %v2793
    %v3084 = vmul.f32 %v2649, %v2794
    %v3085 = vmul.f32 %v2650, %v2795
    %v3086 = vmul.f32 %v2651, %v2796
    %v3087 = vmul.f32 %v2652, %v2797
    %v3088 = vmul.f32 %v2653, %v2798
    %v3089 = vmul.f32 %v2654, %v2799
    %v3090 = vmul.f32 %v2655, %v2800
    %v3091 = vmul.f32 %v2656, %v2801
    %v3092 = vmul.f32 %v2657, %v2802
    %v3093 = vmul.f32 %v2658, %v2803
    %v3094 = vmul.f32 %v2659, %v2804
    %v3095 = vmul.f32 %v2660, %v2805
    %v3096 = vmul.f32 %v2632, %v2806
    %v3097 = vmul.f32 %v2633, %v2807
    %v3098 = vmul.f32 %v2634, %v2808
    %v3099 = vmul.f32 %v2635, %v2809
    %v3100 = vmul.f32 %v2636, %v2810
    %v3101 = vmul.f32 %v2637, %v2811
    %v3102 = vmul.f32 %v2638, %v2812
    %v3103 = vmul.f32 %v2639, %v2813
    %v3104 = vmul.f32 %v2640, %v2814
    %v3105 = vmul.f32 %v2641, %v2815
    %v3106 = vmul.f32 %v2642, %v2816
    %v3107 = vmul.f32 %v2643, %v2817
    %v3108 = vmul.f32 %v2644, %v2818
    %v3109 = vmul.f32 %v2645, %v2819
    %v3110 = vmul.f32 %v2646, %v2820
    %v3111 = vmul.f32 %v2647, %v2821
    %v3112 = vmul.f32 %v2648, %v2822
    %v3113 = vmul.f32 %v2649, %v2823
    %v3114 = vmul.f32 %v2650, %v2824
    %v3115 = vmul.f32 %v2651, %v2825
    %v3116 = vmul.f32 %v2652, %v2826
    %v3117 = vmul.f32 %v2653, %v2827
    %v3118 = vmul.f32 %v2654, %v2828
    %v3119 = vmul.f32 %v2655, %v2829
    %v3120 = vmul.f32 %v2656, %v2830
    %v3121 = vmul.f32 %v2657, %v2831
    %v3122 = vmul.f32 %v2658, %v2832
    %v3123 = vmul.f32 %v2659, %v2833
    %v3124 = vmul.f32 %v2660, %v2834
    %v3125 = vmul.f32 %v2632, %v2835
    %v3126 = vmul.f32 %v2633, %v2836
    %v3127 = vmul.f32 %v2634, %v2837
    %v3128 = vmul.f32 %v2635, %v2838
    %v3129 = vmul.f32 %v2636, %v2839
    %v3130 = vmul.f32 %v2637, %v2840
    %v3131 = vmul.f32 %v2638, %v2841
    %v3132 = vmul.f32 %v2639, %v2842
    %v3133 = vmul.f32 %v2640, %v2843
    %v3134 = vmul.f32 %v2641, %v2844
    %v3135 = vmul.f32 %v2642, %v2845
    %v3136 = vmul.f32 %v2643, %v2846
    %v3137 = vmul.f32 %v2644, %v2847
    %v3138 = vmul.f32 %v2645, %v2848
    %v3139 = vmul.f32 %v2646, %v2849
    %v3140 = vmul.f32 %v2647, %v2850
    %v3141 = vmul.f32 %v2648, %v2851
    %v3142 = vmul.f32 %v2649, %v2852
    %v3143 = vmul.f32 %v2650, %v2853
    %v3144 = vmul.f32 %v2651, %v2854
    %v3145 = vmul.f32 %v2652, %v2855
    %v3146 = vmul.f32 %v2653, %v2856
    %v3147 = vmul.f32 %v2654, %v2857
    %v3148 = vmul.f32 %v2655, %v2858
    %v3149 = vmul.f32 %v2656, %v2859
    %v3150 = vmul.f32 %v2657, %v2860
    %v3151 = vmul.f32 %v2658, %v2861
    %v3152 = vmul.f32 %v2659, %v2862
    %v3153 = vmul.f32 %v2660, %v2863
    %v3154 = vmul.f32 %v2632, %v2864
    %v3155 = vmul.f32 %v2633, %v2865
    %v3156 = vmul.f32 %v2634, %v2866
    %v3157 = vmul.f32 %v2635, %v2867
    %v3158 = vmul.f32 %v2636, %v2868
    %v3159 = vmul.f32 %v2637, %v2869
    %v3160 = vmul.f32 %v2638, %v2870
    %v3161 = vmul.f32 %v2639, %v2871
    %v3162 = vmul.f32 %v2640, %v2872
    %v3163 = vmul.f32 %v2641, %v2873
    %v3164 = vmul.f32 %v2642, %v2874
    %v3165 = vmul.f32 %v2643, %v2875
    %v3166 = vmul.f32 %v2644, %v2876
    %v3167 = vmul.f32 %v2645, %v2877
    %v3168 = vmul.f32 %v2646, %v2878
    %v3169 = vmul.f32 %v2647, %v2879
    %v3170 = vmul.f32 %v2648, %v2880
    %v3171 = vmul.f32 %v2649, %v2881
    %v3172 = vmul.f32 %v2650, %v2882
    %v3173 = vmul.f32 %v2651, %v2883
    %v3174 = vmul.f32 %v2652, %v2884
    %v3175 = vmul.f32 %v2653, %v2885
    %v3176 = vmul.f32 %v2654, %v2886
    %v3177 = vmul.f32 %v2655, %v2887
    %v3178 = vmul.f32 %v2656, %v2888
    %v3179 = vmul.f32 %v2657, %v2889
    %v3180 = vmul.f32 %v2658, %v2890
    %v3181 = vmul.f32 %v2659, %v2891
    %v3182 = vmul.f32 %v2660, %v2892
    %v3183 = vmul.f32 %v2632, %v2893
    %v3184 = vmul.f32 %v2633, %v2894
    %v3185 = vmul.f32 %v2634, %v2895
    %v3186 = vmul.f32 %v2635, %v2896
    %v3187 = vmul.f32 %v2636, %v2897
    %v3188 = vmul.f32 %v2637, %v2898
    %v3189 = vmul.f32 %v2638, %v2899
    %v3190 = vmul.f32 %v2639, %v2900
    %v3191 = vmul.f32 %v2640, %v2901
    %v3192 = vmul.f32 %v2641, %v2902
    %v3193 = vmul.f32 %v2642, %v2903
    %v3194 = vmul.f32 %v2643, %v2904
    %v3195 = vmul.f32 %v2644, %v2905
    %v3196 = vmul.f32 %v2645, %v2906
    %v3197 = vmul.f32 %v2646, %v2907
    %v3198 = vmul.f32 %v2647, %v2908
    %v3199 = vmul.f32 %v2648, %v2909
    %v3200 = vmul.f32 %v2649, %v2910
    %v3201 = vmul.f32 %v2650, %v2911
    %v3202 = vmul.f32 %v2651, %v2912
    %v3203 = vmul.f32 %v2652, %v2913
    %v3204 = vmul.f32 %v2653, %v2914
    %v3205 = vmul.f32 %v2654, %v2915
    %v3206 = vmul.f32 %v2655, %v2916
    %v3207 = vmul.f32 %v2656, %v2917
    %v3208 = vmul.f32 %v2657, %v2918
    %v3209 = vmul.f32 %v2658, %v2919
    %v3210 = vmul.f32 %v2659, %v2920
    %v3211 = vmul.f32 %v2660, %v2921
    %v3212 = vmul.f32 %v2632, %v2922
    %v3213 = vmul.f32 %v2633, %v2923
    %v3214 = vmul.f32 %v2634, %v2924
    %v3215 = vmul.f32 %v2635, %v2925
    %v3216 = vmul.f32 %v2636, %v2926
    %v3217 = vmul.f32 %v2637, %v2927
    %v3218 = vmul.f32 %v2638, %v2928
    %v3219 = vmul.f32 %v2639, %v2929
    %v3220 = vmul.f32 %v2640, %v2930
    %v3221 = vmul.f32 %v2641, %v2931
    %v3222 = vmul.f32 %v2642, %v2932
    %v3223 = vmul.f32 %v2643, %v2933
    %v3224 = vmul.f32 %v2644, %v2934
    %v3225 = vmul.f32 %v2645, %v2935
    %v3226 = vmul.f32 %v2646, %v2936
    %v3227 = vmul.f32 %v2647, %v2937
    %v3228 = vmul.f32 %v2648, %v2938
    %v3229 = vmul.f32 %v2649, %v2939
    %v3230 = vmul.f32 %v2650, %v2940
    %v3231 = vmul.f32 %v2651, %v2941
    %v3232 = vmul.f32 %v2652, %v2942
    %v3233 = vmul.f32 %v2653, %v2943
    %v3234 = vmul.f32 %v2654, %v2944
    %v3235 = vmul.f32 %v2655, %v2945
    %v3236 = vmul.f32 %v2656, %v2946
    %v3237 = vmul.f32 %v2657, %v2947
    %v3238 = vmul.f32 %v2658, %v2948
    %v3239 = vmul.f32 %v2659, %v2949
    %v3240 = vmul.f32 %v2660, %v2950
    %v3241 = vmul.f32 %v2632, %v2951
    %v3242 = vmul.f32 %v2633, %v2952
    %v3243 = vmul.f32 %v2634, %v2953
    %v3244 = vmul.f32 %v2635, %v2954
    %v3245 = vmul.f32 %v2636, %v2955
    %v3246 = vmul.f32 %v2637, %v2956
    %v3247 = vmul.f32 %v2638, %v2957
    %v3248 = vmul.f32 %v2639, %v2958
    %v3249 = vmul.f32 %v2640, %v2959
    %v3250 = vmul.f32 %v2641, %v2960
    %v3251 = vmul.f32 %v2642, %v2961
    %v3252 = vmul.f32 %v2643, %v2962
    %v3253 = vmul.f32 %v2644, %v2963
    %v3254 = vmul.f32 %v2645, %v2964
    %v3255 = vmul.f32 %v2646, %v2965
    %v3256 = vmul.f32 %v2647, %v2966
    %v3257 = vmul.f32 %v2648, %v2967
    %v3258 = vmul.f32 %v2649, %v2968
    %v3259 = vmul.f32 %v2650, %v2969
    %v3260 = vmul.f32 %v2651, %v2970
    %v3261 = vmul.f32 %v2652, %v2971
    %v3262 = vmul.f32 %v2653, %v2972
    %v3263 = vmul.f32 %v2654, %v2973
    %v3264 = vmul.f32 %v2655, %v2974
    %v3265 = vmul.f32 %v2656, %v2975
    %v3266 = vmul.f32 %v2657, %v2976
    %v3267 = vmul.f32 %v2658, %v2977
    %v3268 = vmul.f32 %v2659, %v2978
    %v3269 = vmul.f32 %v2660, %v2979
    %v3270 = vmul.f32 %v2661, %v2690
    %v3271 = vmul.f32 %v2662, %v2691
    %v3272 = vmul.f32 %v2663, %v2692
    %v3273 = vmul.f32 %v2664, %v2693
    %v3274 = vmul.f32 %v2665, %v2694
    %v3275 = vmul.f32 %v2666, %v2695
    %v3276 = vmul.f32 %v2667, %v2696
    %v3277 = vmul.f32 %v2668, %v2697
    %v3278 = vmul.f32 %v2669, %v2698
    %v3279 = vmul.f32 %v2670, %v2699
    %v3280 = vmul.f32 %v2671, %v2700
    %v3281 = vmul.f32 %v2672, %v2701
    %v3282 = vmul.f32 %v2673, %v2702
    %v3283 = vmul.f32 %v2674, %v2703
    %v3284 = vmul.f32 %v2675, %v2704
    %v3285 = vmul.f32 %v2676, %v2705
    %v3286 = vmul.f32 %v2677, %v2706
    %v3287 = vmul.f32 %v2678, %v2707
    %v3288 = vmul.f32 %v2679, %v2708
    %v3289 = vmul.f32 %v2680, %v2709
    %v3290 = vmul.f32 %v2681, %v2710
    %v3291 = vmul.f32 %v2682, %v2711
    %v3292 = vmul.f32 %v2683, %v2712
    %v3293 = vmul.f32 %v2684, %v2713
    %v3294 = vmul.f32 %v2685, %v2714
    %v3295 = vmul.f32 %v2686, %v2715
    %v3296 = vmul.f32 %v2687, %v2716
    %v3297 = vmul.f32 %v2688, %v2717
    %v3298 = vmul.f32 %v2689, %v2718
    %v3299 = vmul.f32 %v2661, %v2719
    %v3300 = vmul.f32 %v2662, %v2720
    %v3301 = vmul.f32 %v2663, %v2721
    %v3302 = vmul.f32 %v2664, %v2722
    %v3303 = vmul.f32 %v2665, %v2723
    %v3304 = vmul.f32 %v2666, %v2724
    %v3305 = vmul.f32 %v2667, %v2725
    %v3306 = vmul.f32 %v2668, %v2726
    %v3307 = vmul.f32 %v2669, %v2727
    %v3308 = vmul.f32 %v2670, %v2728
    %v3309 = vmul.f32 %v2671, %v2729
    %v3310 = vmul.f32 %v2672, %v2730
    %v3311 = vmul.f32 %v2673, %v2731
    %v3312 = vmul.f32 %v2674, %v2732
    %v3313 = vmul.f32 %v2675, %v2733
    %v3314 = vmul.f32 %v2676, %v2734
    %v3315 = vmul.f32 %v2677, %v2735
    %v3316 = vmul.f32 %v2678, %v2736
    %v3317 = vmul.f32 %v2679, %v2737
    %v3318 = vmul.f32 %v2680, %v2738
    %v3319 = vmul.f32 %v2681, %v2739
    %v3320 = vmul.f32 %v2682, %v2740
    %v3321 = vmul.f32 %v2683, %v2741
    %v3322 = vmul.f32 %v2684, %v2742
    %v3323 = vmul.f32 %v2685, %v2743
    %v3324 = vmul.f32 %v2686, %v2744
    %v3325 = vmul.f32 %v2687, %v2745
    %v3326 = vmul.f32 %v2688, %v2746
    %v3327 = vmul.f32 %v2689, %v2747
    %v3328 = vmul.f32 %v2661, %v2748
    %v3329 = vmul.f32 %v2662, %v2749
    %v3330 = vmul.f32 %v2663, %v2750
    %v3331 = vmul.f32 %v2664, %v2751
    %v3332 = vmul.f32 %v2665, %v2752
    %v3333 = vmul.f32 %v2666, %v2753
    %v3334 = vmul.f32 %v2667, %v2754
    %v3335 = vmul.f32 %v2668, %v2755
    %v3336 = vmul.f32 %v2669, %v2756
    %v3337 = vmul.f32 %v2670, %v2757
    %v3338 = vmul.f32 %v2671, %v2758
    %v3339 = vmul.f32 %v2672, %v2759
    %v3340 = vmul.f32 %v2673, %v2760
    %v3341 = vmul.f32 %v2674, %v2761
    %v3342 = vmul.f32 %v2675, %v2762
    %v3343 = vmul.f32 %v2676, %v2763
    %v3344 = vmul.f32 %v2677, %v2764
    %v3345 = vmul.f32 %v2678, %v2765
    %v3346 = vmul.f32 %v2679, %v2766
    %v3347 = vmul.f32 %v2680, %v2767
    %v3348 = vmul.f32 %v2681, %v2768
    %v3349 = vmul.f32 %v2682, %v2769
    %v3350 = vmul.f32 %v2683, %v2770
    %v3351 = vmul.f32 %v2684, %v2771
    %v3352 = vmul.f32 %v2685, %v2772
    %v3353 = vmul.f32 %v2686, %v2773
    %v3354 = vmul.f32 %v2687, %v2774
    %v3355 = vmul.f32 %v2688, %v2775
    %v3356 = vmul.f32 %v2689, %v2776
    %v3357 = vmul.f32 %v2661, %v2777
    %v3358 = vmul.f32 %v2662, %v2778
    %v3359 = vmul.f32 %v2663, %v2779
    %v3360 = vmul.f32 %v2664, %v2780
    %v3361 = vmul.f32 %v2665, %v2781
    %v3362 = vmul.f32 %v2666, %v2782
    %v3363 = vmul.f32 %v2667, %v2783
    %v3364 = vmul.f32 %v2668, %v2784
    %v3365 = vmul.f32 %v2669, %v2785
    %v3366 = vmul.f32 %v2670, %v2786
    %v3367 = vmul.f32 %v2671, %v2787
    %v3368 = vmul.f32 %v2672, %v2788
    %v3369 = vmul.f32 %v2673, %v2789
    %v3370 = vmul.f32 %v2674, %v2790
    %v3371 = vmul.f32 %v2675, %v2791
    %v3372 = vmul.f32 %v2676, %v2792
    %v3373 = vmul.f32 %v2677, %v2793
    %v3374 = vmul.f32 %v2678, %v2794
    %v3375 = vmul.f32 %v2679, %v2795
    %v3376 = vmul.f32 %v2680, %v2796
    %v3377 = vmul.f32 %v2681, %v2797
    %v3378 = vmul.f32 %v2682, %v2798
    %v3379 = vmul.f32 %v2683, %v2799
    %v3380 = vmul.f32 %v2684, %v2800
    %v3381 = vmul.f32 %v2685, %v2801
    %v3382 = vmul.f32 %v2686, %v2802
    %v3383 = vmul.f32 %v2687, %v2803
    %v3384 = vmul.f32 %v2688, %v2804
    %v3385 = vmul.f32 %v2689, %v2805
    %v3386 = vmul.f32 %v2661, %v2806
    %v3387 = vmul.f32 %v2662, %v2807
    %v3388 = vmul.f32 %v2663, %v2808
    %v3389 = vmul.f32 %v2664, %v2809
    %v3390 = vmul.f32 %v2665, %v2810
    %v3391 = vmul.f32 %v2666, %v2811
    %v3392 = vmul.f32 %v2667, %v2812
    %v3393 = vmul.f32 %v2668, %v2813
    %v3394 = vmul.f32 %v2669, %v2814
    %v3395 = vmul.f32 %v2670, %v2815
    %v3396 = vmul.f32 %v2671, %v2816
    %v3397 = vmul.f32 %v2672, %v2817
    %v3398 = vmul.f32 %v2673, %v2818
    %v3399 = vmul.f32 %v2674, %v2819
    %v3400 = vmul.f32 %v2675, %v2820
    %v3401 = vmul.f32 %v2676, %v2821
    %v3402 = vmul.f32 %v2677, %v2822
    %v3403 = vmul.f32 %v2678, %v2823
    %v3404 = vmul.f32 %v2679, %v2824
    %v3405 = vmul.f32 %v2680, %v2825
    %v3406 = vmul.f32 %v2681, %v2826
    %v3407 = vmul.f32 %v2682, %v2827
    %v3408 = vmul.f32 %v2683, %v2828
    %v3409 = vmul.f32 %v2684, %v2829
    %v3410 = vmul.f32 %v2685, %v2830
    %v3411 = vmul.f32 %v2686, %v2831
    %v3412 = vmul.f32 %v2687, %v2832
    %v3413 = vmul.f32 %v2688, %v2833
    %v3414 = vmul.f32 %v2689, %v2834
    %v3415 = vmul.f32 %v2661, %v2835
    %v3416 = vmul.f32 %v2662, %v2836
    %v3417 = vmul.f32 %v2663, %v2837
    %v3418 = vmul.f32 %v2664, %v2838
    %v3419 = vmul.f32 %v2665, %v2839
    %v3420 = vmul.f32 %v2666, %v2840
    %v3421 = vmul.f32 %v2667, %v2841
    %v3422 = vmul.f32 %v2668, %v2842
    %v3423 = vmul.f32 %v2669, %v2843
    %v3424 = vmul.f32 %v2670, %v2844
    %v3425 = vmul.f32 %v2671, %v2845
    %v3426 = vmul.f32 %v2672, %v2846
    %v3427 = vmul.f32 %v2673, %v2847
    %v3428 = vmul.f32 %v2674, %v2848
    %v3429 = vmul.f32 %v2675, %v2849
    %v3430 = vmul.f32 %v2676, %v2850
    %v3431 = vmul.f32 %v2677, %v2851
    %v3432 = vmul.f32 %v2678, %v2852
    %v3433 = vmul.f32 %v2679, %v2853
    %v3434 = vmul.f32 %v2680, %v2854
    %v3435 = vmul.f32 %v2681, %v2855
    %v3436 = vmul.f32 %v2682, %v2856
    %v3437 = vmul.f32 %v2683, %v2857
    %v3438 = vmul.f32 %v2684, %v2858
    %v3439 = vmul.f32 %v2685, %v2859
    %v3440 = vmul.f32 %v2686, %v2860
    %v3441 = vmul.f32 %v2687, %v2861
    %v3442 = vmul.f32 %v2688, %v2862
    %v3443 = vmul.f32 %v2689, %v2863
    %v3444 = vmul.f32 %v2661, %v2864
    %v3445 = vmul.f32 %v2662, %v2865
    %v3446 = vmul.f32 %v2663, %v2866
    %v3447 = vmul.f32 %v2664, %v2867
    %v3448 = vmul.f32 %v2665, %v2868
    %v3449 = vmul.f32 %v2666, %v2869
    %v3450 = vmul.f32 %v2667, %v2870
    %v3451 = vmul.f32 %v2668, %v2871
    %v3452 = vmul.f32 %v2669, %v2872
    %v3453 = vmul.f32 %v2670, %v2873
    %v3454 = vmul.f32 %v2671, %v2874
    %v3455 = vmul.f32 %v2672, %v2875
    %v3456 = vmul.f32 %v2673, %v2876
    %v3457 = vmul.f32 %v2674, %v2877
    %v3458 = vmul.f32 %v2675, %v2878
    %v3459 = vmul.f32 %v2676, %v2879
    %v3460 = vmul.f32 %v2677, %v2880
    %v3461 = vmul.f32 %v2678, %v2881
    %v3462 = vmul.f32 %v2679, %v2882
    %v3463 = vmul.f32 %v2680, %v2883
    %v3464 = vmul.f32 %v2681, %v2884
    %v3465 = vmul.f32 %v2682, %v2885
    %v3466 = vmul.f32 %v2683, %v2886
    %v3467 = vmul.f32 %v2684, %v2887
    %v3468 = vmul.f32 %v2685, %v2888
    %v3469 = vmul.f32 %v2686, %v2889
    %v3470 = vmul.f32 %v2687, %v2890
    %v3471 = vmul.f32 %v2688, %v2891
    %v3472 = vmul.f32 %v2689, %v2892
    %v3473 = vmul.f32 %v2661, %v2893
    %v3474 = vmul.f32 %v2662, %v2894
    %v3475 = vmul.f32 %v2663, %v2895
    %v3476 = vmul.f32 %v2664, %v2896
    %v3477 = vmul.f32 %v2665, %v2897
    %v3478 = vmul.f32 %v2666, %v2898
    %v3479 = vmul.f32 %v2667, %v2899
    %v3480 = vmul.f32 %v2668, %v2900
    %v3481 = vmul.f32 %v2669, %v2901
    %v3482 = vmul.f32 %v2670, %v2902
    %v3483 = vmul.f32 %v2671, %v2903
    %v3484 = vmul.f32 %v2672, %v2904
    %v3485 = vmul.f32 %v2673, %v2905
    %v3486 = vmul.f32 %v2674, %v2906
    %v3487 = vmul.f32 %v2675, %v2907
    %v3488 = vmul.f32 %v2676, %v2908
    %v3489 = vmul.f32 %v2677, %v2909
    %v3490 = vmul.f32 %v2678, %v2910
    %v3491 = vmul.f32 %v2679, %v2911
    %v3492 = vmul.f32 %v2680, %v2912
    %v3493 = vmul.f32 %v2681, %v2913
    %v3494 = vmul.f32 %v2682, %v2914
    %v3495 = vmul.f32 %v2683, %v2915
    %v3496 = vmul.f32 %v2684, %v2916
    %v3497 = vmul.f32 %v2685, %v2917
    %v3498 = vmul.f32 %v2686, %v2918
    %v3499 = vmul.f32 %v2687, %v2919
    %v3500 = vmul.f32 %v2688, %v2920
    %v3501 = vmul.f32 %v2689, %v2921
    %v3502 = vmul.f32 %v2661, %v2922
    %v3503 = vmul.f32 %v2662, %v2923
    %v3504 = vmul.f32 %v2663, %v2924
    %v3505 = vmul.f32 %v2664, %v2925
    %v3506 = vmul.f32 %v2665, %v2926
    %v3507 = vmul.f32 %v2666, %v2927
    %v3508 = vmul.f32 %v2667, %v2928
    %v3509 = vmul.f32 %v2668, %v2929
    %v3510 = vmul.f32 %v2669, %v2930
    %v3511 = vmul.f32 %v2670, %v2931
    %v3512 = vmul.f32 %v2671, %v2932
    %v3513 = vmul.f32 %v2672, %v2933
    %v3514 = vmul.f32 %v2673, %v2934
    %v3515 = vmul.f32 %v2674, %v2935
    %v3516 = vmul.f32 %v2675, %v2936
    %v3517 = vmul.f32 %v2676, %v2937
    %v3518 = vmul.f32 %v2677, %v2938
    %v3519 = vmul.f32 %v2678, %v2939
    %v3520 = vmul.f32 %v2679, %v2940
    %v3521 = vmul.f32 %v2680, %v2941
    %v3522 = vmul.f32 %v2681, %v2942
    %v3523 = vmul.f32 %v2682, %v2943
    %v3524 = vmul.f32 %v2683, %v2944
    %v3525 = vmul.f32 %v2684, %v2945
    %v3526 = vmul.f32 %v2685, %v2946
    %v3527 = vmul.f32 %v2686, %v2947
    %v3528 = vmul.f32 %v2687, %v2948
    %v3529 = vmul.f32 %v2688, %v2949
    %v3530 = vmul.f32 %v2689, %v2950
    %v3531 = vmul.f32 %v2661, %v2951
    %v3532 = vmul.f32 %v2662, %v2952
    %v3533 = vmul.f32 %v2663, %v2953
    %v3534 = vmul.f32 %v2664, %v2954
    %v3535 = vmul.f32 %v2665, %v2955
    %v3536 = vmul.f32 %v2666, %v2956
    %v3537 = vmul.f32 %v2667, %v2957
    %v3538 = vmul.f32 %v2668, %v2958
    %v3539 = vmul.f32 %v2669, %v2959
    %v3540 = vmul.f32 %v2670, %v2960
    %v3541 = vmul.f32 %v2671, %v2961
    %v3542 = vmul.f32 %v2672, %v2962
    %v3543 = vmul.f32 %v2673, %v2963
    %v3544 = vmul.f32 %v2674, %v2964
    %v3545 = vmul.f32 %v2675, %v2965
    %v3546 = vmul.f32 %v2676, %v2966
    %v3547 = vmul.f32 %v2677, %v2967
    %v3548 = vmul.f32 %v2678, %v2968
    %v3549 = vmul.f32 %v2679, %v2969
    %v3550 = vmul.f32 %v2680, %v2970
    %v3551 = vmul.f32 %v2681, %v2971
    %v3552 = vmul.f32 %v2682, %v2972
    %v3553 = vmul.f32 %v2683, %v2973
    %v3554 = vmul.f32 %v2684, %v2974
    %v3555 = vmul.f32 %v2685, %v2975
    %v3556 = vmul.f32 %v2686, %v2976
    %v3557 = vmul.f32 %v2687, %v2977
    %v3558 = vmul.f32 %v2688, %v2978
    %v3559 = vmul.f32 %v2689, %v2979
    %v3560 = vsel %vm2160, %v2980, 0.0
    %3561 = vadd.xlane.f32.xlu0 %v3560
    %v3562 = vpop.xlane.xlu0 %3561
    %v3563 = vsel %vm2160, %v2981, 0.0
    %3564 = vadd.xlane.f32.xlu0 %v3563
    %v3565 = vpop.xlane.xlu0 %3564
    %v3566 = vsel %vm2160, %v2982, 0.0
    %3567 = vadd.xlane.f32.xlu0 %v3566
    %v3568 = vpop.xlane.xlu0 %3567
    %v3569 = vsel %vm2160, %v2983, 0.0
    %3570 = vadd.xlane.f32.xlu0 %v3569
    %v3571 = vpop.xlane.xlu0 %3570
    %v3572 = vsel %vm2160, %v2984, 0.0
    %3573 = vadd.xlane.f32.xlu0 %v3572
    %v3574 = vpop.xlane.xlu0 %3573
    %v3575 = vsel %vm2160, %v2985, 0.0
    %3576 = vadd.xlane.f32.xlu0 %v3575
    %v3577 = vpop.xlane.xlu0 %3576
    %v3578 = vsel %vm2160, %v2986, 0.0
    %3579 = vadd.xlane.f32.xlu0 %v3578
    %v3580 = vpop.xlane.xlu0 %3579
    %v3581 = vsel %vm2160, %v2987, 0.0
    %3582 = vadd.xlane.f32.xlu0 %v3581
    %v3583 = vpop.xlane.xlu0 %3582
    %v3584 = vsel %vm2160, %v2988, 0.0
    %3585 = vadd.xlane.f32.xlu0 %v3584
    %v3586 = vpop.xlane.xlu0 %3585
    %v3587 = vsel %vm2160, %v2989, 0.0
    %3588 = vadd.xlane.f32.xlu0 %v3587
    %v3589 = vpop.xlane.xlu0 %3588
    %v3590 = vsel %vm2160, %v2990, 0.0
    %3591 = vadd.xlane.f32.xlu0 %v3590
    %v3592 = vpop.xlane.xlu0 %3591
    %v3593 = vsel %vm2160, %v2991, 0.0
    %3594 = vadd.xlane.f32.xlu0 %v3593
    %v3595 = vpop.xlane.xlu0 %3594
    %v3596 = vsel %vm2160, %v2992, 0.0
    %3597 = vadd.xlane.f32.xlu0 %v3596
    %v3598 = vpop.xlane.xlu0 %3597
    %v3599 = vsel %vm2160, %v2993, 0.0
    %3600 = vadd.xlane.f32.xlu0 %v3599
    %v3601 = vpop.xlane.xlu0 %3600
    %v3602 = vsel %vm2160, %v2994, 0.0
    %3603 = vadd.xlane.f32.xlu0 %v3602
    %v3604 = vpop.xlane.xlu0 %3603
    %v3605 = vsel %vm2160, %v2995, 0.0
    %3606 = vadd.xlane.f32.xlu0 %v3605
    %v3607 = vpop.xlane.xlu0 %3606
    %v3608 = vsel %vm2160, %v2996, 0.0
    %3609 = vadd.xlane.f32.xlu0 %v3608
    %v3610 = vpop.xlane.xlu0 %3609
    %v3611 = vsel %vm2160, %v2997, 0.0
    %3612 = vadd.xlane.f32.xlu0 %v3611
    %v3613 = vpop.xlane.xlu0 %3612
    %v3614 = vsel %vm2160, %v2998, 0.0
    %3615 = vadd.xlane.f32.xlu0 %v3614
    %v3616 = vpop.xlane.xlu0 %3615
    %v3617 = vsel %vm2160, %v2999, 0.0
    %3618 = vadd.xlane.f32.xlu0 %v3617
    %v3619 = vpop.xlane.xlu0 %3618
    %v3620 = vsel %vm2160, %v3000, 0.0
    %3621 = vadd.xlane.f32.xlu0 %v3620
    %v3622 = vpop.xlane.xlu0 %3621
    %v3623 = vsel %vm2160, %v3001, 0.0
    %3624 = vadd.xlane.f32.xlu0 %v3623
    %v3625 = vpop.xlane.xlu0 %3624
    %v3626 = vsel %vm2160, %v3002, 0.0
    %3627 = vadd.xlane.f32.xlu0 %v3626
    %v3628 = vpop.xlane.xlu0 %3627
    %v3629 = vsel %vm2160, %v3003, 0.0
    %3630 = vadd.xlane.f32.xlu0 %v3629
    %v3631 = vpop.xlane.xlu0 %3630
    %v3632 = vsel %vm2160, %v3004, 0.0
    %3633 = vadd.xlane.f32.xlu0 %v3632
    %v3634 = vpop.xlane.xlu0 %3633
    %v3635 = vsel %vm2160, %v3005, 0.0
    %3636 = vadd.xlane.f32.xlu0 %v3635
    %v3637 = vpop.xlane.xlu0 %3636
    %v3638 = vsel %vm2160, %v3006, 0.0
    %3639 = vadd.xlane.f32.xlu0 %v3638
    %v3640 = vpop.xlane.xlu0 %3639
    %v3641 = vsel %vm2160, %v3007, 0.0
    %3642 = vadd.xlane.f32.xlu0 %v3641
    %v3643 = vpop.xlane.xlu0 %3642
    %v3644 = vsel %vm2160, %v3008, 0.0
    %3645 = vadd.xlane.f32.xlu0 %v3644
    %v3646 = vpop.xlane.xlu0 %3645
    %v3647 = vsel %vm2160, %v3009, 0.0
    %3648 = vadd.xlane.f32.xlu0 %v3647
    %v3649 = vpop.xlane.xlu0 %3648
    %v3650 = vsel %vm2160, %v3010, 0.0
    %3651 = vadd.xlane.f32.xlu0 %v3650
    %v3652 = vpop.xlane.xlu0 %3651
    %v3653 = vsel %vm2160, %v3011, 0.0
    %3654 = vadd.xlane.f32.xlu0 %v3653
    %v3655 = vpop.xlane.xlu0 %3654
    %v3656 = vsel %vm2160, %v3012, 0.0
    %3657 = vadd.xlane.f32.xlu0 %v3656
    %v3658 = vpop.xlane.xlu0 %3657
    %v3659 = vsel %vm2160, %v3013, 0.0
    %3660 = vadd.xlane.f32.xlu0 %v3659
    %v3661 = vpop.xlane.xlu0 %3660
    %v3662 = vsel %vm2160, %v3014, 0.0
    %3663 = vadd.xlane.f32.xlu0 %v3662
    %v3664 = vpop.xlane.xlu0 %3663
    %v3665 = vsel %vm2160, %v3015, 0.0
    %3666 = vadd.xlane.f32.xlu0 %v3665
    %v3667 = vpop.xlane.xlu0 %3666
    %v3668 = vsel %vm2160, %v3016, 0.0
    %3669 = vadd.xlane.f32.xlu0 %v3668
    %v3670 = vpop.xlane.xlu0 %3669
    %v3671 = vsel %vm2160, %v3017, 0.0
    %3672 = vadd.xlane.f32.xlu0 %v3671
    %v3673 = vpop.xlane.xlu0 %3672
    %v3674 = vsel %vm2160, %v3018, 0.0
    %3675 = vadd.xlane.f32.xlu0 %v3674
    %v3676 = vpop.xlane.xlu0 %3675
    %v3677 = vsel %vm2160, %v3019, 0.0
    %3678 = vadd.xlane.f32.xlu0 %v3677
    %v3679 = vpop.xlane.xlu0 %3678
    %v3680 = vsel %vm2160, %v3020, 0.0
    %3681 = vadd.xlane.f32.xlu0 %v3680
    %v3682 = vpop.xlane.xlu0 %3681
    %v3683 = vsel %vm2160, %v3021, 0.0
    %3684 = vadd.xlane.f32.xlu0 %v3683
    %v3685 = vpop.xlane.xlu0 %3684
    %v3686 = vsel %vm2160, %v3022, 0.0
    %3687 = vadd.xlane.f32.xlu0 %v3686
    %v3688 = vpop.xlane.xlu0 %3687
    %v3689 = vsel %vm2160, %v3023, 0.0
    %3690 = vadd.xlane.f32.xlu0 %v3689
    %v3691 = vpop.xlane.xlu0 %3690
    %v3692 = vsel %vm2160, %v3024, 0.0
    %3693 = vadd.xlane.f32.xlu0 %v3692
    %v3694 = vpop.xlane.xlu0 %3693
    %v3695 = vsel %vm2160, %v3025, 0.0
    %3696 = vadd.xlane.f32.xlu0 %v3695
    %v3697 = vpop.xlane.xlu0 %3696
    %v3698 = vsel %vm2160, %v3026, 0.0
    %3699 = vadd.xlane.f32.xlu0 %v3698
    %v3700 = vpop.xlane.xlu0 %3699
    %v3701 = vsel %vm2160, %v3027, 0.0
    %3702 = vadd.xlane.f32.xlu0 %v3701
    %v3703 = vpop.xlane.xlu0 %3702
    %v3704 = vsel %vm2160, %v3028, 0.0
    %3705 = vadd.xlane.f32.xlu0 %v3704
    %v3706 = vpop.xlane.xlu0 %3705
    %v3707 = vsel %vm2160, %v3029, 0.0
    %3708 = vadd.xlane.f32.xlu0 %v3707
    %v3709 = vpop.xlane.xlu0 %3708
    %v3710 = vsel %vm2160, %v3030, 0.0
    %3711 = vadd.xlane.f32.xlu0 %v3710
    %v3712 = vpop.xlane.xlu0 %3711
    %v3713 = vsel %vm2160, %v3031, 0.0
    %3714 = vadd.xlane.f32.xlu0 %v3713
    %v3715 = vpop.xlane.xlu0 %3714
    %v3716 = vsel %vm2160, %v3032, 0.0
    %3717 = vadd.xlane.f32.xlu0 %v3716
    %v3718 = vpop.xlane.xlu0 %3717
    %v3719 = vsel %vm2160, %v3033, 0.0
    %3720 = vadd.xlane.f32.xlu0 %v3719
    %v3721 = vpop.xlane.xlu0 %3720
    %v3722 = vsel %vm2160, %v3034, 0.0
    %3723 = vadd.xlane.f32.xlu0 %v3722
    %v3724 = vpop.xlane.xlu0 %3723
    %v3725 = vsel %vm2160, %v3035, 0.0
    %3726 = vadd.xlane.f32.xlu0 %v3725
    %v3727 = vpop.xlane.xlu0 %3726
    %v3728 = vsel %vm2160, %v3036, 0.0
    %3729 = vadd.xlane.f32.xlu0 %v3728
    %v3730 = vpop.xlane.xlu0 %3729
    %v3731 = vsel %vm2160, %v3037, 0.0
    %3732 = vadd.xlane.f32.xlu0 %v3731
    %v3733 = vpop.xlane.xlu0 %3732
    %v3734 = vsel %vm2160, %v3038, 0.0
    %3735 = vadd.xlane.f32.xlu0 %v3734
    %v3736 = vpop.xlane.xlu0 %3735
    %v3737 = vsel %vm2160, %v3039, 0.0
    %3738 = vadd.xlane.f32.xlu0 %v3737
    %v3739 = vpop.xlane.xlu0 %3738
    %v3740 = vsel %vm2160, %v3040, 0.0
    %3741 = vadd.xlane.f32.xlu0 %v3740
    %v3742 = vpop.xlane.xlu0 %3741
    %v3743 = vsel %vm2160, %v3041, 0.0
    %3744 = vadd.xlane.f32.xlu0 %v3743
    %v3745 = vpop.xlane.xlu0 %3744
    %v3746 = vsel %vm2160, %v3042, 0.0
    %3747 = vadd.xlane.f32.xlu0 %v3746
    %v3748 = vpop.xlane.xlu0 %3747
    %v3749 = vsel %vm2160, %v3043, 0.0
    %3750 = vadd.xlane.f32.xlu0 %v3749
    %v3751 = vpop.xlane.xlu0 %3750
    %v3752 = vsel %vm2160, %v3044, 0.0
    %3753 = vadd.xlane.f32.xlu0 %v3752
    %v3754 = vpop.xlane.xlu0 %3753
    %v3755 = vsel %vm2160, %v3045, 0.0
    %3756 = vadd.xlane.f32.xlu0 %v3755
    %v3757 = vpop.xlane.xlu0 %3756
    %v3758 = vsel %vm2160, %v3046, 0.0
    %3759 = vadd.xlane.f32.xlu0 %v3758
    %v3760 = vpop.xlane.xlu0 %3759
    %v3761 = vsel %vm2160, %v3047, 0.0
    %3762 = vadd.xlane.f32.xlu0 %v3761
    %v3763 = vpop.xlane.xlu0 %3762
    %v3764 = vsel %vm2160, %v3048, 0.0
    %3765 = vadd.xlane.f32.xlu0 %v3764
    %v3766 = vpop.xlane.xlu0 %3765
    %v3767 = vsel %vm2160, %v3049, 0.0
    %3768 = vadd.xlane.f32.xlu0 %v3767
    %v3769 = vpop.xlane.xlu0 %3768
    %v3770 = vsel %vm2160, %v3050, 0.0
    %3771 = vadd.xlane.f32.xlu0 %v3770
    %v3772 = vpop.xlane.xlu0 %3771
    %v3773 = vsel %vm2160, %v3051, 0.0
    %3774 = vadd.xlane.f32.xlu0 %v3773
    %v3775 = vpop.xlane.xlu0 %3774
    %v3776 = vsel %vm2160, %v3052, 0.0
    %3777 = vadd.xlane.f32.xlu0 %v3776
    %v3778 = vpop.xlane.xlu0 %3777
    %v3779 = vsel %vm2160, %v3053, 0.0
    %3780 = vadd.xlane.f32.xlu0 %v3779
    %v3781 = vpop.xlane.xlu0 %3780
    %v3782 = vsel %vm2160, %v3054, 0.0
    %3783 = vadd.xlane.f32.xlu0 %v3782
    %v3784 = vpop.xlane.xlu0 %3783
    %v3785 = vsel %vm2160, %v3055, 0.0
    %3786 = vadd.xlane.f32.xlu0 %v3785
    %v3787 = vpop.xlane.xlu0 %3786
    %v3788 = vsel %vm2160, %v3056, 0.0
    %3789 = vadd.xlane.f32.xlu0 %v3788
    %v3790 = vpop.xlane.xlu0 %3789
    %v3791 = vsel %vm2160, %v3057, 0.0
    %3792 = vadd.xlane.f32.xlu0 %v3791
    %v3793 = vpop.xlane.xlu0 %3792
    %v3794 = vsel %vm2160, %v3058, 0.0
    %3795 = vadd.xlane.f32.xlu0 %v3794
    %v3796 = vpop.xlane.xlu0 %3795
    %v3797 = vsel %vm2160, %v3059, 0.0
    %3798 = vadd.xlane.f32.xlu0 %v3797
    %v3799 = vpop.xlane.xlu0 %3798
    %v3800 = vsel %vm2160, %v3060, 0.0
    %3801 = vadd.xlane.f32.xlu0 %v3800
    %v3802 = vpop.xlane.xlu0 %3801
    %v3803 = vsel %vm2160, %v3061, 0.0
    %3804 = vadd.xlane.f32.xlu0 %v3803
    %v3805 = vpop.xlane.xlu0 %3804
    %v3806 = vsel %vm2160, %v3062, 0.0
    %3807 = vadd.xlane.f32.xlu0 %v3806
    %v3808 = vpop.xlane.xlu0 %3807
    %v3809 = vsel %vm2160, %v3063, 0.0
    %3810 = vadd.xlane.f32.xlu0 %v3809
    %v3811 = vpop.xlane.xlu0 %3810
    %v3812 = vsel %vm2160, %v3064, 0.0
    %3813 = vadd.xlane.f32.xlu0 %v3812
    %v3814 = vpop.xlane.xlu0 %3813
    %v3815 = vsel %vm2160, %v3065, 0.0
    %3816 = vadd.xlane.f32.xlu0 %v3815
    %v3817 = vpop.xlane.xlu0 %3816
    %v3818 = vsel %vm2160, %v3066, 0.0
    %3819 = vadd.xlane.f32.xlu0 %v3818
    %v3820 = vpop.xlane.xlu0 %3819
    %v3821 = vsel %vm2160, %v3067, 0.0
    %3822 = vadd.xlane.f32.xlu0 %v3821
    %v3823 = vpop.xlane.xlu0 %3822
    %v3824 = vsel %vm2160, %v3068, 0.0
    %3825 = vadd.xlane.f32.xlu0 %v3824
    %v3826 = vpop.xlane.xlu0 %3825
    %v3827 = vsel %vm2160, %v3069, 0.0
    %3828 = vadd.xlane.f32.xlu0 %v3827
    %v3829 = vpop.xlane.xlu0 %3828
    %v3830 = vsel %vm2160, %v3070, 0.0
    %3831 = vadd.xlane.f32.xlu0 %v3830
    %v3832 = vpop.xlane.xlu0 %3831
    %v3833 = vsel %vm2160, %v3071, 0.0
    %3834 = vadd.xlane.f32.xlu0 %v3833
    %v3835 = vpop.xlane.xlu0 %3834
    %v3836 = vsel %vm2160, %v3072, 0.0
    %3837 = vadd.xlane.f32.xlu0 %v3836
    %v3838 = vpop.xlane.xlu0 %3837
    %v3839 = vsel %vm2160, %v3073, 0.0
    %3840 = vadd.xlane.f32.xlu0 %v3839
    %v3841 = vpop.xlane.xlu0 %3840
    %v3842 = vsel %vm2160, %v3074, 0.0
    %3843 = vadd.xlane.f32.xlu0 %v3842
    %v3844 = vpop.xlane.xlu0 %3843
    %v3845 = vsel %vm2160, %v3075, 0.0
    %3846 = vadd.xlane.f32.xlu0 %v3845
    %v3847 = vpop.xlane.xlu0 %3846
    %v3848 = vsel %vm2160, %v3076, 0.0
    %3849 = vadd.xlane.f32.xlu0 %v3848
    %v3850 = vpop.xlane.xlu0 %3849
    %v3851 = vsel %vm2160, %v3077, 0.0
    %3852 = vadd.xlane.f32.xlu0 %v3851
    %v3853 = vpop.xlane.xlu0 %3852
    %v3854 = vsel %vm2160, %v3078, 0.0
    %3855 = vadd.xlane.f32.xlu0 %v3854
    %v3856 = vpop.xlane.xlu0 %3855
    %v3857 = vsel %vm2160, %v3079, 0.0
    %3858 = vadd.xlane.f32.xlu0 %v3857
    %v3859 = vpop.xlane.xlu0 %3858
    %v3860 = vsel %vm2160, %v3080, 0.0
    %3861 = vadd.xlane.f32.xlu0 %v3860
    %v3862 = vpop.xlane.xlu0 %3861
    %v3863 = vsel %vm2160, %v3081, 0.0
    %3864 = vadd.xlane.f32.xlu0 %v3863
    %v3865 = vpop.xlane.xlu0 %3864
    %v3866 = vsel %vm2160, %v3082, 0.0
    %3867 = vadd.xlane.f32.xlu0 %v3866
    %v3868 = vpop.xlane.xlu0 %3867
    %v3869 = vsel %vm2160, %v3083, 0.0
    %3870 = vadd.xlane.f32.xlu0 %v3869
    %v3871 = vpop.xlane.xlu0 %3870
    %v3872 = vsel %vm2160, %v3084, 0.0
    %3873 = vadd.xlane.f32.xlu0 %v3872
    %v3874 = vpop.xlane.xlu0 %3873
    %v3875 = vsel %vm2160, %v3085, 0.0
    %3876 = vadd.xlane.f32.xlu0 %v3875
    %v3877 = vpop.xlane.xlu0 %3876
    %v3878 = vsel %vm2160, %v3086, 0.0
    %3879 = vadd.xlane.f32.xlu0 %v3878
    %v3880 = vpop.xlane.xlu0 %3879
    %v3881 = vsel %vm2160, %v3087, 0.0
    %3882 = vadd.xlane.f32.xlu0 %v3881
    %v3883 = vpop.xlane.xlu0 %3882
    %v3884 = vsel %vm2160, %v3088, 0.0
    %3885 = vadd.xlane.f32.xlu0 %v3884
    %v3886 = vpop.xlane.xlu0 %3885
    %v3887 = vsel %vm2160, %v3089, 0.0
    %3888 = vadd.xlane.f32.xlu0 %v3887
    %v3889 = vpop.xlane.xlu0 %3888
    %v3890 = vsel %vm2160, %v3090, 0.0
    %3891 = vadd.xlane.f32.xlu0 %v3890
    %v3892 = vpop.xlane.xlu0 %3891
    %v3893 = vsel %vm2160, %v3091, 0.0
    %3894 = vadd.xlane.f32.xlu0 %v3893
    %v3895 = vpop.xlane.xlu0 %3894
    %v3896 = vsel %vm2160, %v3092, 0.0
    %3897 = vadd.xlane.f32.xlu0 %v3896
    %v3898 = vpop.xlane.xlu0 %3897
    %v3899 = vsel %vm2160, %v3093, 0.0
    %3900 = vadd.xlane.f32.xlu0 %v3899
    %v3901 = vpop.xlane.xlu0 %3900
    %v3902 = vsel %vm2160, %v3094, 0.0
    %3903 = vadd.xlane.f32.xlu0 %v3902
    %v3904 = vpop.xlane.xlu0 %3903
    %v3905 = vsel %vm2160, %v3095, 0.0
    %3906 = vadd.xlane.f32.xlu0 %v3905
    %v3907 = vpop.xlane.xlu0 %3906
    %v3908 = vsel %vm2160, %v3096, 0.0
    %3909 = vadd.xlane.f32.xlu0 %v3908
    %v3910 = vpop.xlane.xlu0 %3909
    %v3911 = vsel %vm2160, %v3097, 0.0
    %3912 = vadd.xlane.f32.xlu0 %v3911
    %v3913 = vpop.xlane.xlu0 %3912
    %v3914 = vsel %vm2160, %v3098, 0.0
    %3915 = vadd.xlane.f32.xlu0 %v3914
    %v3916 = vpop.xlane.xlu0 %3915
    %v3917 = vsel %vm2160, %v3099, 0.0
    %3918 = vadd.xlane.f32.xlu0 %v3917
    %v3919 = vpop.xlane.xlu0 %3918
    %v3920 = vsel %vm2160, %v3100, 0.0
    %3921 = vadd.xlane.f32.xlu0 %v3920
    %v3922 = vpop.xlane.xlu0 %3921
    %v3923 = vsel %vm2160, %v3101, 0.0
    %3924 = vadd.xlane.f32.xlu0 %v3923
    %v3925 = vpop.xlane.xlu0 %3924
    %v3926 = vsel %vm2160, %v3102, 0.0
    %3927 = vadd.xlane.f32.xlu0 %v3926
    %v3928 = vpop.xlane.xlu0 %3927
    %v3929 = vsel %vm2160, %v3103, 0.0
    %3930 = vadd.xlane.f32.xlu0 %v3929
    %v3931 = vpop.xlane.xlu0 %3930
    %v3932 = vsel %vm2160, %v3104, 0.0
    %3933 = vadd.xlane.f32.xlu0 %v3932
    %v3934 = vpop.xlane.xlu0 %3933
    %v3935 = vsel %vm2160, %v3105, 0.0
    %3936 = vadd.xlane.f32.xlu0 %v3935
    %v3937 = vpop.xlane.xlu0 %3936
    %v3938 = vsel %vm2160, %v3106, 0.0
    %3939 = vadd.xlane.f32.xlu0 %v3938
    %v3940 = vpop.xlane.xlu0 %3939
    %v3941 = vsel %vm2160, %v3107, 0.0
    %3942 = vadd.xlane.f32.xlu0 %v3941
    %v3943 = vpop.xlane.xlu0 %3942
    %v3944 = vsel %vm2160, %v3108, 0.0
    %3945 = vadd.xlane.f32.xlu0 %v3944
    %v3946 = vpop.xlane.xlu0 %3945
    %v3947 = vsel %vm2160, %v3109, 0.0
    %3948 = vadd.xlane.f32.xlu0 %v3947
    %v3949 = vpop.xlane.xlu0 %3948
    %v3950 = vsel %vm2160, %v3110, 0.0
    %3951 = vadd.xlane.f32.xlu0 %v3950
    %v3952 = vpop.xlane.xlu0 %3951
    %v3953 = vsel %vm2160, %v3111, 0.0
    %3954 = vadd.xlane.f32.xlu0 %v3953
    %v3955 = vpop.xlane.xlu0 %3954
    %v3956 = vsel %vm2160, %v3112, 0.0
    %3957 = vadd.xlane.f32.xlu0 %v3956
    %v3958 = vpop.xlane.xlu0 %3957
    %v3959 = vsel %vm2160, %v3113, 0.0
    %3960 = vadd.xlane.f32.xlu0 %v3959
    %v3961 = vpop.xlane.xlu0 %3960
    %v3962 = vsel %vm2160, %v3114, 0.0
    %3963 = vadd.xlane.f32.xlu0 %v3962
    %v3964 = vpop.xlane.xlu0 %3963
    %v3965 = vsel %vm2160, %v3115, 0.0
    %3966 = vadd.xlane.f32.xlu0 %v3965
    %v3967 = vpop.xlane.xlu0 %3966
    %v3968 = vsel %vm2160, %v3116, 0.0
    %3969 = vadd.xlane.f32.xlu0 %v3968
    %v3970 = vpop.xlane.xlu0 %3969
    %v3971 = vsel %vm2160, %v3117, 0.0
    %3972 = vadd.xlane.f32.xlu0 %v3971
    %v3973 = vpop.xlane.xlu0 %3972
    %v3974 = vsel %vm2160, %v3118, 0.0
    %3975 = vadd.xlane.f32.xlu0 %v3974
    %v3976 = vpop.xlane.xlu0 %3975
    %v3977 = vsel %vm2160, %v3119, 0.0
    %3978 = vadd.xlane.f32.xlu0 %v3977
    %v3979 = vpop.xlane.xlu0 %3978
    %v3980 = vsel %vm2160, %v3120, 0.0
    %3981 = vadd.xlane.f32.xlu0 %v3980
    %v3982 = vpop.xlane.xlu0 %3981
    %v3983 = vsel %vm2160, %v3121, 0.0
    %3984 = vadd.xlane.f32.xlu0 %v3983
    %v3985 = vpop.xlane.xlu0 %3984
    %v3986 = vsel %vm2160, %v3122, 0.0
    %3987 = vadd.xlane.f32.xlu0 %v3986
    %v3988 = vpop.xlane.xlu0 %3987
    %v3989 = vsel %vm2160, %v3123, 0.0
    %3990 = vadd.xlane.f32.xlu0 %v3989
    %v3991 = vpop.xlane.xlu0 %3990
    %v3992 = vsel %vm2160, %v3124, 0.0
    %3993 = vadd.xlane.f32.xlu0 %v3992
    %v3994 = vpop.xlane.xlu0 %3993
    %v3995 = vsel %vm2160, %v3125, 0.0
    %3996 = vadd.xlane.f32.xlu0 %v3995
    %v3997 = vpop.xlane.xlu0 %3996
    %v3998 = vsel %vm2160, %v3126, 0.0
    %3999 = vadd.xlane.f32.xlu0 %v3998
    %v4000 = vpop.xlane.xlu0 %3999
    %v4001 = vsel %vm2160, %v3127, 0.0
    %4002 = vadd.xlane.f32.xlu0 %v4001
    %v4003 = vpop.xlane.xlu0 %4002
    %v4004 = vsel %vm2160, %v3128, 0.0
    %4005 = vadd.xlane.f32.xlu0 %v4004
    %v4006 = vpop.xlane.xlu0 %4005
    %v4007 = vsel %vm2160, %v3129, 0.0
    %4008 = vadd.xlane.f32.xlu0 %v4007
    %v4009 = vpop.xlane.xlu0 %4008
    %v4010 = vsel %vm2160, %v3130, 0.0
    %4011 = vadd.xlane.f32.xlu0 %v4010
    %v4012 = vpop.xlane.xlu0 %4011
    %v4013 = vsel %vm2160, %v3131, 0.0
    %4014 = vadd.xlane.f32.xlu0 %v4013
    %v4015 = vpop.xlane.xlu0 %4014
    %v4016 = vsel %vm2160, %v3132, 0.0
    %4017 = vadd.xlane.f32.xlu0 %v4016
    %v4018 = vpop.xlane.xlu0 %4017
    %v4019 = vsel %vm2160, %v3133, 0.0
    %4020 = vadd.xlane.f32.xlu0 %v4019
    %v4021 = vpop.xlane.xlu0 %4020
    %v4022 = vsel %vm2160, %v3134, 0.0
    %4023 = vadd.xlane.f32.xlu0 %v4022
    %v4024 = vpop.xlane.xlu0 %4023
    %v4025 = vsel %vm2160, %v3135, 0.0
    %4026 = vadd.xlane.f32.xlu0 %v4025
    %v4027 = vpop.xlane.xlu0 %4026
    %v4028 = vsel %vm2160, %v3136, 0.0
    %4029 = vadd.xlane.f32.xlu0 %v4028
    %v4030 = vpop.xlane.xlu0 %4029
    %v4031 = vsel %vm2160, %v3137, 0.0
    %4032 = vadd.xlane.f32.xlu0 %v4031
    %v4033 = vpop.xlane.xlu0 %4032
    %v4034 = vsel %vm2160, %v3138, 0.0
    %4035 = vadd.xlane.f32.xlu0 %v4034
    %v4036 = vpop.xlane.xlu0 %4035
    %v4037 = vsel %vm2160, %v3139, 0.0
    %4038 = vadd.xlane.f32.xlu0 %v4037
    %v4039 = vpop.xlane.xlu0 %4038
    %v4040 = vsel %vm2160, %v3140, 0.0
    %4041 = vadd.xlane.f32.xlu0 %v4040
    %v4042 = vpop.xlane.xlu0 %4041
    %v4043 = vsel %vm2160, %v3141, 0.0
    %4044 = vadd.xlane.f32.xlu0 %v4043
    %v4045 = vpop.xlane.xlu0 %4044
    %v4046 = vsel %vm2160, %v3142, 0.0
    %4047 = vadd.xlane.f32.xlu0 %v4046
    %v4048 = vpop.xlane.xlu0 %4047
    %v4049 = vsel %vm2160, %v3143, 0.0
    %4050 = vadd.xlane.f32.xlu0 %v4049
    %v4051 = vpop.xlane.xlu0 %4050
    %v4052 = vsel %vm2160, %v3144, 0.0
    %4053 = vadd.xlane.f32.xlu0 %v4052
    %v4054 = vpop.xlane.xlu0 %4053
    %v4055 = vsel %vm2160, %v3145, 0.0
    %4056 = vadd.xlane.f32.xlu0 %v4055
    %v4057 = vpop.xlane.xlu0 %4056
    %v4058 = vsel %vm2160, %v3146, 0.0
    %4059 = vadd.xlane.f32.xlu0 %v4058
    %v4060 = vpop.xlane.xlu0 %4059
    %v4061 = vsel %vm2160, %v3147, 0.0
    %4062 = vadd.xlane.f32.xlu0 %v4061
    %v4063 = vpop.xlane.xlu0 %4062
    %v4064 = vsel %vm2160, %v3148, 0.0
    %4065 = vadd.xlane.f32.xlu0 %v4064
    %v4066 = vpop.xlane.xlu0 %4065
    %v4067 = vsel %vm2160, %v3149, 0.0
    %4068 = vadd.xlane.f32.xlu0 %v4067
    %v4069 = vpop.xlane.xlu0 %4068
    %v4070 = vsel %vm2160, %v3150, 0.0
    %4071 = vadd.xlane.f32.xlu0 %v4070
    %v4072 = vpop.xlane.xlu0 %4071
    %v4073 = vsel %vm2160, %v3151, 0.0
    %4074 = vadd.xlane.f32.xlu0 %v4073
    %v4075 = vpop.xlane.xlu0 %4074
    %v4076 = vsel %vm2160, %v3152, 0.0
    %4077 = vadd.xlane.f32.xlu0 %v4076
    %v4078 = vpop.xlane.xlu0 %4077
    %v4079 = vsel %vm2160, %v3153, 0.0
    %4080 = vadd.xlane.f32.xlu0 %v4079
    %v4081 = vpop.xlane.xlu0 %4080
    %v4082 = vsel %vm2160, %v3154, 0.0
    %4083 = vadd.xlane.f32.xlu0 %v4082
    %v4084 = vpop.xlane.xlu0 %4083
    %v4085 = vsel %vm2160, %v3155, 0.0
    %4086 = vadd.xlane.f32.xlu0 %v4085
    %v4087 = vpop.xlane.xlu0 %4086
    %v4088 = vsel %vm2160, %v3156, 0.0
    %4089 = vadd.xlane.f32.xlu0 %v4088
    %v4090 = vpop.xlane.xlu0 %4089
    %v4091 = vsel %vm2160, %v3157, 0.0
    %4092 = vadd.xlane.f32.xlu0 %v4091
    %v4093 = vpop.xlane.xlu0 %4092
    %v4094 = vsel %vm2160, %v3158, 0.0
    %4095 = vadd.xlane.f32.xlu0 %v4094
    %v4096 = vpop.xlane.xlu0 %4095
    %v4097 = vsel %vm2160, %v3159, 0.0
    %4098 = vadd.xlane.f32.xlu0 %v4097
    %v4099 = vpop.xlane.xlu0 %4098
    %v4100 = vsel %vm2160, %v3160, 0.0
    %4101 = vadd.xlane.f32.xlu0 %v4100
    %v4102 = vpop.xlane.xlu0 %4101
    %v4103 = vsel %vm2160, %v3161, 0.0
    %4104 = vadd.xlane.f32.xlu0 %v4103
    %v4105 = vpop.xlane.xlu0 %4104
    %v4106 = vsel %vm2160, %v3162, 0.0
    %4107 = vadd.xlane.f32.xlu0 %v4106
    %v4108 = vpop.xlane.xlu0 %4107
    %v4109 = vsel %vm2160, %v3163, 0.0
    %4110 = vadd.xlane.f32.xlu0 %v4109
    %v4111 = vpop.xlane.xlu0 %4110
    %v4112 = vsel %vm2160, %v3164, 0.0
    %4113 = vadd.xlane.f32.xlu0 %v4112
    %v4114 = vpop.xlane.xlu0 %4113
    %v4115 = vsel %vm2160, %v3165, 0.0
    %4116 = vadd.xlane.f32.xlu0 %v4115
    %v4117 = vpop.xlane.xlu0 %4116
    %v4118 = vsel %vm2160, %v3166, 0.0
    %4119 = vadd.xlane.f32.xlu0 %v4118
    %v4120 = vpop.xlane.xlu0 %4119
    %v4121 = vsel %vm2160, %v3167, 0.0
    %4122 = vadd.xlane.f32.xlu0 %v4121
    %v4123 = vpop.xlane.xlu0 %4122
    %v4124 = vsel %vm2160, %v3168, 0.0
    %4125 = vadd.xlane.f32.xlu0 %v4124
    %v4126 = vpop.xlane.xlu0 %4125
    %v4127 = vsel %vm2160, %v3169, 0.0
    %4128 = vadd.xlane.f32.xlu0 %v4127
    %v4129 = vpop.xlane.xlu0 %4128
    %v4130 = vsel %vm2160, %v3170, 0.0
    %4131 = vadd.xlane.f32.xlu0 %v4130
    %v4132 = vpop.xlane.xlu0 %4131
    %v4133 = vsel %vm2160, %v3171, 0.0
    %4134 = vadd.xlane.f32.xlu0 %v4133
    %v4135 = vpop.xlane.xlu0 %4134
    %v4136 = vsel %vm2160, %v3172, 0.0
    %4137 = vadd.xlane.f32.xlu0 %v4136
    %v4138 = vpop.xlane.xlu0 %4137
    %v4139 = vsel %vm2160, %v3173, 0.0
    %4140 = vadd.xlane.f32.xlu0 %v4139
    %v4141 = vpop.xlane.xlu0 %4140
    %v4142 = vsel %vm2160, %v3174, 0.0
    %4143 = vadd.xlane.f32.xlu0 %v4142
    %v4144 = vpop.xlane.xlu0 %4143
    %v4145 = vsel %vm2160, %v3175, 0.0
    %4146 = vadd.xlane.f32.xlu0 %v4145
    %v4147 = vpop.xlane.xlu0 %4146
    %v4148 = vsel %vm2160, %v3176, 0.0
    %4149 = vadd.xlane.f32.xlu0 %v4148
    %v4150 = vpop.xlane.xlu0 %4149
    %v4151 = vsel %vm2160, %v3177, 0.0
    %4152 = vadd.xlane.f32.xlu0 %v4151
    %v4153 = vpop.xlane.xlu0 %4152
    %v4154 = vsel %vm2160, %v3178, 0.0
    %4155 = vadd.xlane.f32.xlu0 %v4154
    %v4156 = vpop.xlane.xlu0 %4155
    %v4157 = vsel %vm2160, %v3179, 0.0
    %4158 = vadd.xlane.f32.xlu0 %v4157
    %v4159 = vpop.xlane.xlu0 %4158
    %v4160 = vsel %vm2160, %v3180, 0.0
    %4161 = vadd.xlane.f32.xlu0 %v4160
    %v4162 = vpop.xlane.xlu0 %4161
    %v4163 = vsel %vm2160, %v3181, 0.0
    %4164 = vadd.xlane.f32.xlu0 %v4163
    %v4165 = vpop.xlane.xlu0 %4164
    %v4166 = vsel %vm2160, %v3182, 0.0
    %4167 = vadd.xlane.f32.xlu0 %v4166
    %v4168 = vpop.xlane.xlu0 %4167
    %v4169 = vsel %vm2160, %v3183, 0.0
    %4170 = vadd.xlane.f32.xlu0 %v4169
    %v4171 = vpop.xlane.xlu0 %4170
    %v4172 = vsel %vm2160, %v3184, 0.0
    %4173 = vadd.xlane.f32.xlu0 %v4172
    %v4174 = vpop.xlane.xlu0 %4173
    %v4175 = vsel %vm2160, %v3185, 0.0
    %4176 = vadd.xlane.f32.xlu0 %v4175
    %v4177 = vpop.xlane.xlu0 %4176
    %v4178 = vsel %vm2160, %v3186, 0.0
    %4179 = vadd.xlane.f32.xlu0 %v4178
    %v4180 = vpop.xlane.xlu0 %4179
    %v4181 = vsel %vm2160, %v3187, 0.0
    %4182 = vadd.xlane.f32.xlu0 %v4181
    %v4183 = vpop.xlane.xlu0 %4182
    %v4184 = vsel %vm2160, %v3188, 0.0
    %4185 = vadd.xlane.f32.xlu0 %v4184
    %v4186 = vpop.xlane.xlu0 %4185
    %v4187 = vsel %vm2160, %v3189, 0.0
    %4188 = vadd.xlane.f32.xlu0 %v4187
    %v4189 = vpop.xlane.xlu0 %4188
    %v4190 = vsel %vm2160, %v3190, 0.0
    %4191 = vadd.xlane.f32.xlu0 %v4190
    %v4192 = vpop.xlane.xlu0 %4191
    %v4193 = vsel %vm2160, %v3191, 0.0
    %4194 = vadd.xlane.f32.xlu0 %v4193
    %v4195 = vpop.xlane.xlu0 %4194
    %v4196 = vsel %vm2160, %v3192, 0.0
    %4197 = vadd.xlane.f32.xlu0 %v4196
    %v4198 = vpop.xlane.xlu0 %4197
    %v4199 = vsel %vm2160, %v3193, 0.0
    %4200 = vadd.xlane.f32.xlu0 %v4199
    %v4201 = vpop.xlane.xlu0 %4200
    %v4202 = vsel %vm2160, %v3194, 0.0
    %4203 = vadd.xlane.f32.xlu0 %v4202
    %v4204 = vpop.xlane.xlu0 %4203
    %v4205 = vsel %vm2160, %v3195, 0.0
    %4206 = vadd.xlane.f32.xlu0 %v4205
    %v4207 = vpop.xlane.xlu0 %4206
    %v4208 = vsel %vm2160, %v3196, 0.0
    %4209 = vadd.xlane.f32.xlu0 %v4208
    %v4210 = vpop.xlane.xlu0 %4209
    %v4211 = vsel %vm2160, %v3197, 0.0
    %4212 = vadd.xlane.f32.xlu0 %v4211
    %v4213 = vpop.xlane.xlu0 %4212
    %v4214 = vsel %vm2160, %v3198, 0.0
    %4215 = vadd.xlane.f32.xlu0 %v4214
    %v4216 = vpop.xlane.xlu0 %4215
    %v4217 = vsel %vm2160, %v3199, 0.0
    %4218 = vadd.xlane.f32.xlu0 %v4217
    %v4219 = vpop.xlane.xlu0 %4218
    %v4220 = vsel %vm2160, %v3200, 0.0
    %4221 = vadd.xlane.f32.xlu0 %v4220
    %v4222 = vpop.xlane.xlu0 %4221
    %v4223 = vsel %vm2160, %v3201, 0.0
    %4224 = vadd.xlane.f32.xlu0 %v4223
    %v4225 = vpop.xlane.xlu0 %4224
    %v4226 = vsel %vm2160, %v3202, 0.0
    %4227 = vadd.xlane.f32.xlu0 %v4226
    %v4228 = vpop.xlane.xlu0 %4227
    %v4229 = vsel %vm2160, %v3203, 0.0
    %4230 = vadd.xlane.f32.xlu0 %v4229
    %v4231 = vpop.xlane.xlu0 %4230
    %v4232 = vsel %vm2160, %v3204, 0.0
    %4233 = vadd.xlane.f32.xlu0 %v4232
    %v4234 = vpop.xlane.xlu0 %4233
    %v4235 = vsel %vm2160, %v3205, 0.0
    %4236 = vadd.xlane.f32.xlu0 %v4235
    %v4237 = vpop.xlane.xlu0 %4236
    %v4238 = vsel %vm2160, %v3206, 0.0
    %4239 = vadd.xlane.f32.xlu0 %v4238
    %v4240 = vpop.xlane.xlu0 %4239
    %v4241 = vsel %vm2160, %v3207, 0.0
    %4242 = vadd.xlane.f32.xlu0 %v4241
    %v4243 = vpop.xlane.xlu0 %4242
    %v4244 = vsel %vm2160, %v3208, 0.0
    %4245 = vadd.xlane.f32.xlu0 %v4244
    %v4246 = vpop.xlane.xlu0 %4245
    %v4247 = vsel %vm2160, %v3209, 0.0
    %4248 = vadd.xlane.f32.xlu0 %v4247
    %v4249 = vpop.xlane.xlu0 %4248
    %v4250 = vsel %vm2160, %v3210, 0.0
    %4251 = vadd.xlane.f32.xlu0 %v4250
    %v4252 = vpop.xlane.xlu0 %4251
    %v4253 = vsel %vm2160, %v3211, 0.0
    %4254 = vadd.xlane.f32.xlu0 %v4253
    %v4255 = vpop.xlane.xlu0 %4254
    %v4256 = vsel %vm2160, %v3212, 0.0
    %4257 = vadd.xlane.f32.xlu0 %v4256
    %v4258 = vpop.xlane.xlu0 %4257
    %v4259 = vsel %vm2160, %v3213, 0.0
    %4260 = vadd.xlane.f32.xlu0 %v4259
    %v4261 = vpop.xlane.xlu0 %4260
    %v4262 = vsel %vm2160, %v3214, 0.0
    %4263 = vadd.xlane.f32.xlu0 %v4262
    %v4264 = vpop.xlane.xlu0 %4263
    %v4265 = vsel %vm2160, %v3215, 0.0
    %4266 = vadd.xlane.f32.xlu0 %v4265
    %v4267 = vpop.xlane.xlu0 %4266
    %v4268 = vsel %vm2160, %v3216, 0.0
    %4269 = vadd.xlane.f32.xlu0 %v4268
    %v4270 = vpop.xlane.xlu0 %4269
    %v4271 = vsel %vm2160, %v3217, 0.0
    %4272 = vadd.xlane.f32.xlu0 %v4271
    %v4273 = vpop.xlane.xlu0 %4272
    %v4274 = vsel %vm2160, %v3218, 0.0
    %4275 = vadd.xlane.f32.xlu0 %v4274
    %v4276 = vpop.xlane.xlu0 %4275
    %v4277 = vsel %vm2160, %v3219, 0.0
    %4278 = vadd.xlane.f32.xlu0 %v4277
    %v4279 = vpop.xlane.xlu0 %4278
    %v4280 = vsel %vm2160, %v3220, 0.0
    %4281 = vadd.xlane.f32.xlu0 %v4280
    %v4282 = vpop.xlane.xlu0 %4281
    %v4283 = vsel %vm2160, %v3221, 0.0
    %4284 = vadd.xlane.f32.xlu0 %v4283
    %v4285 = vpop.xlane.xlu0 %4284
    %v4286 = vsel %vm2160, %v3222, 0.0
    %4287 = vadd.xlane.f32.xlu0 %v4286
    %v4288 = vpop.xlane.xlu0 %4287
    %v4289 = vsel %vm2160, %v3223, 0.0
    %4290 = vadd.xlane.f32.xlu0 %v4289
    %v4291 = vpop.xlane.xlu0 %4290
    %v4292 = vsel %vm2160, %v3224, 0.0
    %4293 = vadd.xlane.f32.xlu0 %v4292
    %v4294 = vpop.xlane.xlu0 %4293
    %v4295 = vsel %vm2160, %v3225, 0.0
    %4296 = vadd.xlane.f32.xlu0 %v4295
    %v4297 = vpop.xlane.xlu0 %4296
    %v4298 = vsel %vm2160, %v3226, 0.0
    %4299 = vadd.xlane.f32.xlu0 %v4298
    %v4300 = vpop.xlane.xlu0 %4299
    %v4301 = vsel %vm2160, %v3227, 0.0
    %4302 = vadd.xlane.f32.xlu0 %v4301
    %v4303 = vpop.xlane.xlu0 %4302
    %v4304 = vsel %vm2160, %v3228, 0.0
    %4305 = vadd.xlane.f32.xlu0 %v4304
    %v4306 = vpop.xlane.xlu0 %4305
    %v4307 = vsel %vm2160, %v3229, 0.0
    %4308 = vadd.xlane.f32.xlu0 %v4307
    %v4309 = vpop.xlane.xlu0 %4308
    %v4310 = vsel %vm2160, %v3230, 0.0
    %4311 = vadd.xlane.f32.xlu0 %v4310
    %v4312 = vpop.xlane.xlu0 %4311
    %v4313 = vsel %vm2160, %v3231, 0.0
    %4314 = vadd.xlane.f32.xlu0 %v4313
    %v4315 = vpop.xlane.xlu0 %4314
    %v4316 = vsel %vm2160, %v3232, 0.0
    %4317 = vadd.xlane.f32.xlu0 %v4316
    %v4318 = vpop.xlane.xlu0 %4317
    %v4319 = vsel %vm2160, %v3233, 0.0
    %4320 = vadd.xlane.f32.xlu0 %v4319
    %v4321 = vpop.xlane.xlu0 %4320
    %v4322 = vsel %vm2160, %v3234, 0.0
    %4323 = vadd.xlane.f32.xlu0 %v4322
    %v4324 = vpop.xlane.xlu0 %4323
    %v4325 = vsel %vm2160, %v3235, 0.0
    %4326 = vadd.xlane.f32.xlu0 %v4325
    %v4327 = vpop.xlane.xlu0 %4326
    %v4328 = vsel %vm2160, %v3236, 0.0
    %4329 = vadd.xlane.f32.xlu0 %v4328
    %v4330 = vpop.xlane.xlu0 %4329
    %v4331 = vsel %vm2160, %v3237, 0.0
    %4332 = vadd.xlane.f32.xlu0 %v4331
    %v4333 = vpop.xlane.xlu0 %4332
    %v4334 = vsel %vm2160, %v3238, 0.0
    %4335 = vadd.xlane.f32.xlu0 %v4334
    %v4336 = vpop.xlane.xlu0 %4335
    %v4337 = vsel %vm2160, %v3239, 0.0
    %4338 = vadd.xlane.f32.xlu0 %v4337
    %v4339 = vpop.xlane.xlu0 %4338
    %v4340 = vsel %vm2160, %v3240, 0.0
    %4341 = vadd.xlane.f32.xlu0 %v4340
    %v4342 = vpop.xlane.xlu0 %4341
    %v4343 = vsel %vm2160, %v3241, 0.0
    %4344 = vadd.xlane.f32.xlu0 %v4343
    %v4345 = vpop.xlane.xlu0 %4344
    %v4346 = vsel %vm2160, %v3242, 0.0
    %4347 = vadd.xlane.f32.xlu0 %v4346
    %v4348 = vpop.xlane.xlu0 %4347
    %v4349 = vsel %vm2160, %v3243, 0.0
    %4350 = vadd.xlane.f32.xlu0 %v4349
    %v4351 = vpop.xlane.xlu0 %4350
    %v4352 = vsel %vm2160, %v3244, 0.0
    %4353 = vadd.xlane.f32.xlu0 %v4352
    %v4354 = vpop.xlane.xlu0 %4353
    %v4355 = vsel %vm2160, %v3245, 0.0
    %4356 = vadd.xlane.f32.xlu0 %v4355
    %v4357 = vpop.xlane.xlu0 %4356
    %v4358 = vsel %vm2160, %v3246, 0.0
    %4359 = vadd.xlane.f32.xlu0 %v4358
    %v4360 = vpop.xlane.xlu0 %4359
    %v4361 = vsel %vm2160, %v3247, 0.0
    %4362 = vadd.xlane.f32.xlu0 %v4361
    %v4363 = vpop.xlane.xlu0 %4362
    %v4364 = vsel %vm2160, %v3248, 0.0
    %4365 = vadd.xlane.f32.xlu0 %v4364
    %v4366 = vpop.xlane.xlu0 %4365
    %v4367 = vsel %vm2160, %v3249, 0.0
    %4368 = vadd.xlane.f32.xlu0 %v4367
    %v4369 = vpop.xlane.xlu0 %4368
    %v4370 = vsel %vm2160, %v3250, 0.0
    %4371 = vadd.xlane.f32.xlu0 %v4370
    %v4372 = vpop.xlane.xlu0 %4371
    %v4373 = vsel %vm2160, %v3251, 0.0
    %4374 = vadd.xlane.f32.xlu0 %v4373
    %v4375 = vpop.xlane.xlu0 %4374
    %v4376 = vsel %vm2160, %v3252, 0.0
    %4377 = vadd.xlane.f32.xlu0 %v4376
    %v4378 = vpop.xlane.xlu0 %4377
    %v4379 = vsel %vm2160, %v3253, 0.0
    %4380 = vadd.xlane.f32.xlu0 %v4379
    %v4381 = vpop.xlane.xlu0 %4380
    %v4382 = vsel %vm2160, %v3254, 0.0
    %4383 = vadd.xlane.f32.xlu0 %v4382
    %v4384 = vpop.xlane.xlu0 %4383
    %v4385 = vsel %vm2160, %v3255, 0.0
    %4386 = vadd.xlane.f32.xlu0 %v4385
    %v4387 = vpop.xlane.xlu0 %4386
    %v4388 = vsel %vm2160, %v3256, 0.0
    %4389 = vadd.xlane.f32.xlu0 %v4388
    %v4390 = vpop.xlane.xlu0 %4389
    %v4391 = vsel %vm2160, %v3257, 0.0
    %4392 = vadd.xlane.f32.xlu0 %v4391
    %v4393 = vpop.xlane.xlu0 %4392
    %v4394 = vsel %vm2160, %v3258, 0.0
    %4395 = vadd.xlane.f32.xlu0 %v4394
    %v4396 = vpop.xlane.xlu0 %4395
    %v4397 = vsel %vm2160, %v3259, 0.0
    %4398 = vadd.xlane.f32.xlu0 %v4397
    %v4399 = vpop.xlane.xlu0 %4398
    %v4400 = vsel %vm2160, %v3260, 0.0
    %4401 = vadd.xlane.f32.xlu0 %v4400
    %v4402 = vpop.xlane.xlu0 %4401
    %v4403 = vsel %vm2160, %v3261, 0.0
    %4404 = vadd.xlane.f32.xlu0 %v4403
    %v4405 = vpop.xlane.xlu0 %4404
    %v4406 = vsel %vm2160, %v3262, 0.0
    %4407 = vadd.xlane.f32.xlu0 %v4406
    %v4408 = vpop.xlane.xlu0 %4407
    %v4409 = vsel %vm2160, %v3263, 0.0
    %4410 = vadd.xlane.f32.xlu0 %v4409
    %v4411 = vpop.xlane.xlu0 %4410
    %v4412 = vsel %vm2160, %v3264, 0.0
    %4413 = vadd.xlane.f32.xlu0 %v4412
    %v4414 = vpop.xlane.xlu0 %4413
    %v4415 = vsel %vm2160, %v3265, 0.0
    %4416 = vadd.xlane.f32.xlu0 %v4415
    %v4417 = vpop.xlane.xlu0 %4416
    %v4418 = vsel %vm2160, %v3266, 0.0
    %4419 = vadd.xlane.f32.xlu0 %v4418
    %v4420 = vpop.xlane.xlu0 %4419
    %v4421 = vsel %vm2160, %v3267, 0.0
    %4422 = vadd.xlane.f32.xlu0 %v4421
    %v4423 = vpop.xlane.xlu0 %4422
    %v4424 = vsel %vm2160, %v3268, 0.0
    %4425 = vadd.xlane.f32.xlu0 %v4424
    %v4426 = vpop.xlane.xlu0 %4425
    %v4427 = vsel %vm2160, %v3269, 0.0
    %4428 = vadd.xlane.f32.xlu0 %v4427
    %v4429 = vpop.xlane.xlu0 %4428
    %v4430 = vsel %vm2160, %v3270, 0.0
    %4431 = vadd.xlane.f32.xlu0 %v4430
    %v4432 = vpop.xlane.xlu0 %4431
    %v4433 = vsel %vm2160, %v3271, 0.0
    %4434 = vadd.xlane.f32.xlu0 %v4433
    %v4435 = vpop.xlane.xlu0 %4434
    %v4436 = vsel %vm2160, %v3272, 0.0
    %4437 = vadd.xlane.f32.xlu0 %v4436
    %v4438 = vpop.xlane.xlu0 %4437
    %v4439 = vsel %vm2160, %v3273, 0.0
    %4440 = vadd.xlane.f32.xlu0 %v4439
    %v4441 = vpop.xlane.xlu0 %4440
    %v4442 = vsel %vm2160, %v3274, 0.0
    %4443 = vadd.xlane.f32.xlu0 %v4442
    %v4444 = vpop.xlane.xlu0 %4443
    %v4445 = vsel %vm2160, %v3275, 0.0
    %4446 = vadd.xlane.f32.xlu0 %v4445
    %v4447 = vpop.xlane.xlu0 %4446
    %v4448 = vsel %vm2160, %v3276, 0.0
    %4449 = vadd.xlane.f32.xlu0 %v4448
    %v4450 = vpop.xlane.xlu0 %4449
    %v4451 = vsel %vm2160, %v3277, 0.0
    %4452 = vadd.xlane.f32.xlu0 %v4451
    %v4453 = vpop.xlane.xlu0 %4452
    %v4454 = vsel %vm2160, %v3278, 0.0
    %4455 = vadd.xlane.f32.xlu0 %v4454
    %v4456 = vpop.xlane.xlu0 %4455
    %v4457 = vsel %vm2160, %v3279, 0.0
    %4458 = vadd.xlane.f32.xlu0 %v4457
    %v4459 = vpop.xlane.xlu0 %4458
    %v4460 = vsel %vm2160, %v3280, 0.0
    %4461 = vadd.xlane.f32.xlu0 %v4460
    %v4462 = vpop.xlane.xlu0 %4461
    %v4463 = vsel %vm2160, %v3281, 0.0
    %4464 = vadd.xlane.f32.xlu0 %v4463
    %v4465 = vpop.xlane.xlu0 %4464
    %v4466 = vsel %vm2160, %v3282, 0.0
    %4467 = vadd.xlane.f32.xlu0 %v4466
    %v4468 = vpop.xlane.xlu0 %4467
    %v4469 = vsel %vm2160, %v3283, 0.0
    %4470 = vadd.xlane.f32.xlu0 %v4469
    %v4471 = vpop.xlane.xlu0 %4470
    %v4472 = vsel %vm2160, %v3284, 0.0
    %4473 = vadd.xlane.f32.xlu0 %v4472
    %v4474 = vpop.xlane.xlu0 %4473
    %v4475 = vsel %vm2160, %v3285, 0.0
    %4476 = vadd.xlane.f32.xlu0 %v4475
    %v4477 = vpop.xlane.xlu0 %4476
    %v4478 = vsel %vm2160, %v3286, 0.0
    %4479 = vadd.xlane.f32.xlu0 %v4478
    %v4480 = vpop.xlane.xlu0 %4479
    %v4481 = vsel %vm2160, %v3287, 0.0
    %4482 = vadd.xlane.f32.xlu0 %v4481
    %v4483 = vpop.xlane.xlu0 %4482
    %v4484 = vsel %vm2160, %v3288, 0.0
    %4485 = vadd.xlane.f32.xlu0 %v4484
    %v4486 = vpop.xlane.xlu0 %4485
    %v4487 = vsel %vm2160, %v3289, 0.0
    %4488 = vadd.xlane.f32.xlu0 %v4487
    %v4489 = vpop.xlane.xlu0 %4488
    %v4490 = vsel %vm2160, %v3290, 0.0
    %4491 = vadd.xlane.f32.xlu0 %v4490
    %v4492 = vpop.xlane.xlu0 %4491
    %v4493 = vsel %vm2160, %v3291, 0.0
    %4494 = vadd.xlane.f32.xlu0 %v4493
    %v4495 = vpop.xlane.xlu0 %4494
    %v4496 = vsel %vm2160, %v3292, 0.0
    %4497 = vadd.xlane.f32.xlu0 %v4496
    %v4498 = vpop.xlane.xlu0 %4497
    %v4499 = vsel %vm2160, %v3293, 0.0
    %4500 = vadd.xlane.f32.xlu0 %v4499
    %v4501 = vpop.xlane.xlu0 %4500
    %v4502 = vsel %vm2160, %v3294, 0.0
    %4503 = vadd.xlane.f32.xlu0 %v4502
    %v4504 = vpop.xlane.xlu0 %4503
    %v4505 = vsel %vm2160, %v3295, 0.0
    %4506 = vadd.xlane.f32.xlu0 %v4505
    %v4507 = vpop.xlane.xlu0 %4506
    %v4508 = vsel %vm2160, %v3296, 0.0
    %4509 = vadd.xlane.f32.xlu0 %v4508
    %v4510 = vpop.xlane.xlu0 %4509
    %v4511 = vsel %vm2160, %v3297, 0.0
    %4512 = vadd.xlane.f32.xlu0 %v4511
    %v4513 = vpop.xlane.xlu0 %4512
    %v4514 = vsel %vm2160, %v3298, 0.0
    %4515 = vadd.xlane.f32.xlu0 %v4514
    %v4516 = vpop.xlane.xlu0 %4515
    %v4517 = vsel %vm2160, %v3299, 0.0
    %4518 = vadd.xlane.f32.xlu0 %v4517
    %v4519 = vpop.xlane.xlu0 %4518
    %v4520 = vsel %vm2160, %v3300, 0.0
    %4521 = vadd.xlane.f32.xlu0 %v4520
    %v4522 = vpop.xlane.xlu0 %4521
    %v4523 = vsel %vm2160, %v3301, 0.0
    %4524 = vadd.xlane.f32.xlu0 %v4523
    %v4525 = vpop.xlane.xlu0 %4524
    %v4526 = vsel %vm2160, %v3302, 0.0
    %4527 = vadd.xlane.f32.xlu0 %v4526
    %v4528 = vpop.xlane.xlu0 %4527
    %v4529 = vsel %vm2160, %v3303, 0.0
    %4530 = vadd.xlane.f32.xlu0 %v4529
    %v4531 = vpop.xlane.xlu0 %4530
    %v4532 = vsel %vm2160, %v3304, 0.0
    %4533 = vadd.xlane.f32.xlu0 %v4532
    %v4534 = vpop.xlane.xlu0 %4533
    %v4535 = vsel %vm2160, %v3305, 0.0
    %4536 = vadd.xlane.f32.xlu0 %v4535
    %v4537 = vpop.xlane.xlu0 %4536
    %v4538 = vsel %vm2160, %v3306, 0.0
    %4539 = vadd.xlane.f32.xlu0 %v4538
    %v4540 = vpop.xlane.xlu0 %4539
    %v4541 = vsel %vm2160, %v3307, 0.0
    %4542 = vadd.xlane.f32.xlu0 %v4541
    %v4543 = vpop.xlane.xlu0 %4542
    %v4544 = vsel %vm2160, %v3308, 0.0
    %4545 = vadd.xlane.f32.xlu0 %v4544
    %v4546 = vpop.xlane.xlu0 %4545
    %v4547 = vsel %vm2160, %v3309, 0.0
    %4548 = vadd.xlane.f32.xlu0 %v4547
    %v4549 = vpop.xlane.xlu0 %4548
    %v4550 = vsel %vm2160, %v3310, 0.0
    %4551 = vadd.xlane.f32.xlu0 %v4550
    %v4552 = vpop.xlane.xlu0 %4551
    %v4553 = vsel %vm2160, %v3311, 0.0
    %4554 = vadd.xlane.f32.xlu0 %v4553
    %v4555 = vpop.xlane.xlu0 %4554
    %v4556 = vsel %vm2160, %v3312, 0.0
    %4557 = vadd.xlane.f32.xlu0 %v4556
    %v4558 = vpop.xlane.xlu0 %4557
    %v4559 = vsel %vm2160, %v3313, 0.0
    %4560 = vadd.xlane.f32.xlu0 %v4559
    %v4561 = vpop.xlane.xlu0 %4560
    %v4562 = vsel %vm2160, %v3314, 0.0
    %4563 = vadd.xlane.f32.xlu0 %v4562
    %v4564 = vpop.xlane.xlu0 %4563
    %v4565 = vsel %vm2160, %v3315, 0.0
    %4566 = vadd.xlane.f32.xlu0 %v4565
    %v4567 = vpop.xlane.xlu0 %4566
    %v4568 = vsel %vm2160, %v3316, 0.0
    %4569 = vadd.xlane.f32.xlu0 %v4568
    %v4570 = vpop.xlane.xlu0 %4569
    %v4571 = vsel %vm2160, %v3317, 0.0
    %4572 = vadd.xlane.f32.xlu0 %v4571
    %v4573 = vpop.xlane.xlu0 %4572
    %v4574 = vsel %vm2160, %v3318, 0.0
    %4575 = vadd.xlane.f32.xlu0 %v4574
    %v4576 = vpop.xlane.xlu0 %4575
    %v4577 = vsel %vm2160, %v3319, 0.0
    %4578 = vadd.xlane.f32.xlu0 %v4577
    %v4579 = vpop.xlane.xlu0 %4578
    %v4580 = vsel %vm2160, %v3320, 0.0
    %4581 = vadd.xlane.f32.xlu0 %v4580
    %v4582 = vpop.xlane.xlu0 %4581
    %v4583 = vsel %vm2160, %v3321, 0.0
    %4584 = vadd.xlane.f32.xlu0 %v4583
    %v4585 = vpop.xlane.xlu0 %4584
    %v4586 = vsel %vm2160, %v3322, 0.0
    %4587 = vadd.xlane.f32.xlu0 %v4586
    %v4588 = vpop.xlane.xlu0 %4587
    %v4589 = vsel %vm2160, %v3323, 0.0
    %4590 = vadd.xlane.f32.xlu0 %v4589
    %v4591 = vpop.xlane.xlu0 %4590
    %v4592 = vsel %vm2160, %v3324, 0.0
    %4593 = vadd.xlane.f32.xlu0 %v4592
    %v4594 = vpop.xlane.xlu0 %4593
    %v4595 = vsel %vm2160, %v3325, 0.0
    %4596 = vadd.xlane.f32.xlu0 %v4595
    %v4597 = vpop.xlane.xlu0 %4596
    %v4598 = vsel %vm2160, %v3326, 0.0
    %4599 = vadd.xlane.f32.xlu0 %v4598
    %v4600 = vpop.xlane.xlu0 %4599
    %v4601 = vsel %vm2160, %v3327, 0.0
    %4602 = vadd.xlane.f32.xlu0 %v4601
    %v4603 = vpop.xlane.xlu0 %4602
    %v4604 = vsel %vm2160, %v3328, 0.0
    %4605 = vadd.xlane.f32.xlu0 %v4604
    %v4606 = vpop.xlane.xlu0 %4605
    %v4607 = vsel %vm2160, %v3329, 0.0
    %4608 = vadd.xlane.f32.xlu0 %v4607
    %v4609 = vpop.xlane.xlu0 %4608
    %v4610 = vsel %vm2160, %v3330, 0.0
    %4611 = vadd.xlane.f32.xlu0 %v4610
    %v4612 = vpop.xlane.xlu0 %4611
    %v4613 = vsel %vm2160, %v3331, 0.0
    %4614 = vadd.xlane.f32.xlu0 %v4613
    %v4615 = vpop.xlane.xlu0 %4614
    %v4616 = vsel %vm2160, %v3332, 0.0
    %4617 = vadd.xlane.f32.xlu0 %v4616
    %v4618 = vpop.xlane.xlu0 %4617
    %v4619 = vsel %vm2160, %v3333, 0.0
    %4620 = vadd.xlane.f32.xlu0 %v4619
    %v4621 = vpop.xlane.xlu0 %4620
    %v4622 = vsel %vm2160, %v3334, 0.0
    %4623 = vadd.xlane.f32.xlu0 %v4622
    %v4624 = vpop.xlane.xlu0 %4623
    %v4625 = vsel %vm2160, %v3335, 0.0
    %4626 = vadd.xlane.f32.xlu0 %v4625
    %v4627 = vpop.xlane.xlu0 %4626
    %v4628 = vsel %vm2160, %v3336, 0.0
    %4629 = vadd.xlane.f32.xlu0 %v4628
    %v4630 = vpop.xlane.xlu0 %4629
    %v4631 = vsel %vm2160, %v3337, 0.0
    %4632 = vadd.xlane.f32.xlu0 %v4631
    %v4633 = vpop.xlane.xlu0 %4632
    %v4634 = vsel %vm2160, %v3338, 0.0
    %4635 = vadd.xlane.f32.xlu0 %v4634
    %v4636 = vpop.xlane.xlu0 %4635
    %v4637 = vsel %vm2160, %v3339, 0.0
    %4638 = vadd.xlane.f32.xlu0 %v4637
    %v4639 = vpop.xlane.xlu0 %4638
    %v4640 = vsel %vm2160, %v3340, 0.0
    %4641 = vadd.xlane.f32.xlu0 %v4640
    %v4642 = vpop.xlane.xlu0 %4641
    %v4643 = vsel %vm2160, %v3341, 0.0
    %4644 = vadd.xlane.f32.xlu0 %v4643
    %v4645 = vpop.xlane.xlu0 %4644
    %v4646 = vsel %vm2160, %v3342, 0.0
    %4647 = vadd.xlane.f32.xlu0 %v4646
    %v4648 = vpop.xlane.xlu0 %4647
    %v4649 = vsel %vm2160, %v3343, 0.0
    %4650 = vadd.xlane.f32.xlu0 %v4649
    %v4651 = vpop.xlane.xlu0 %4650
    %v4652 = vsel %vm2160, %v3344, 0.0
    %4653 = vadd.xlane.f32.xlu0 %v4652
    %v4654 = vpop.xlane.xlu0 %4653
    %v4655 = vsel %vm2160, %v3345, 0.0
    %4656 = vadd.xlane.f32.xlu0 %v4655
    %v4657 = vpop.xlane.xlu0 %4656
    %v4658 = vsel %vm2160, %v3346, 0.0
    %4659 = vadd.xlane.f32.xlu0 %v4658
    %v4660 = vpop.xlane.xlu0 %4659
    %v4661 = vsel %vm2160, %v3347, 0.0
    %4662 = vadd.xlane.f32.xlu0 %v4661
    %v4663 = vpop.xlane.xlu0 %4662
    %v4664 = vsel %vm2160, %v3348, 0.0
    %4665 = vadd.xlane.f32.xlu0 %v4664
    %v4666 = vpop.xlane.xlu0 %4665
    %v4667 = vsel %vm2160, %v3349, 0.0
    %4668 = vadd.xlane.f32.xlu0 %v4667
    %v4669 = vpop.xlane.xlu0 %4668
    %v4670 = vsel %vm2160, %v3350, 0.0
    %4671 = vadd.xlane.f32.xlu0 %v4670
    %v4672 = vpop.xlane.xlu0 %4671
    %v4673 = vsel %vm2160, %v3351, 0.0
    %4674 = vadd.xlane.f32.xlu0 %v4673
    %v4675 = vpop.xlane.xlu0 %4674
    %v4676 = vsel %vm2160, %v3352, 0.0
    %4677 = vadd.xlane.f32.xlu0 %v4676
    %v4678 = vpop.xlane.xlu0 %4677
    %v4679 = vsel %vm2160, %v3353, 0.0
    %4680 = vadd.xlane.f32.xlu0 %v4679
    %v4681 = vpop.xlane.xlu0 %4680
    %v4682 = vsel %vm2160, %v3354, 0.0
    %4683 = vadd.xlane.f32.xlu0 %v4682
    %v4684 = vpop.xlane.xlu0 %4683
    %v4685 = vsel %vm2160, %v3355, 0.0
    %4686 = vadd.xlane.f32.xlu0 %v4685
    %v4687 = vpop.xlane.xlu0 %4686
    %v4688 = vsel %vm2160, %v3356, 0.0
    %4689 = vadd.xlane.f32.xlu0 %v4688
    %v4690 = vpop.xlane.xlu0 %4689
    %v4691 = vsel %vm2160, %v3357, 0.0
    %4692 = vadd.xlane.f32.xlu0 %v4691
    %v4693 = vpop.xlane.xlu0 %4692
    %v4694 = vsel %vm2160, %v3358, 0.0
    %4695 = vadd.xlane.f32.xlu0 %v4694
    %v4696 = vpop.xlane.xlu0 %4695
    %v4697 = vsel %vm2160, %v3359, 0.0
    %4698 = vadd.xlane.f32.xlu0 %v4697
    %v4699 = vpop.xlane.xlu0 %4698
    %v4700 = vsel %vm2160, %v3360, 0.0
    %4701 = vadd.xlane.f32.xlu0 %v4700
    %v4702 = vpop.xlane.xlu0 %4701
    %v4703 = vsel %vm2160, %v3361, 0.0
    %4704 = vadd.xlane.f32.xlu0 %v4703
    %v4705 = vpop.xlane.xlu0 %4704
    %v4706 = vsel %vm2160, %v3362, 0.0
    %4707 = vadd.xlane.f32.xlu0 %v4706
    %v4708 = vpop.xlane.xlu0 %4707
    %v4709 = vsel %vm2160, %v3363, 0.0
    %4710 = vadd.xlane.f32.xlu0 %v4709
    %v4711 = vpop.xlane.xlu0 %4710
    %v4712 = vsel %vm2160, %v3364, 0.0
    %4713 = vadd.xlane.f32.xlu0 %v4712
    %v4714 = vpop.xlane.xlu0 %4713
    %v4715 = vsel %vm2160, %v3365, 0.0
    %4716 = vadd.xlane.f32.xlu0 %v4715
    %v4717 = vpop.xlane.xlu0 %4716
    %v4718 = vsel %vm2160, %v3366, 0.0
    %4719 = vadd.xlane.f32.xlu0 %v4718
    %v4720 = vpop.xlane.xlu0 %4719
    %v4721 = vsel %vm2160, %v3367, 0.0
    %4722 = vadd.xlane.f32.xlu0 %v4721
    %v4723 = vpop.xlane.xlu0 %4722
    %v4724 = vsel %vm2160, %v3368, 0.0
    %4725 = vadd.xlane.f32.xlu0 %v4724
    %v4726 = vpop.xlane.xlu0 %4725
    %v4727 = vsel %vm2160, %v3369, 0.0
    %4728 = vadd.xlane.f32.xlu0 %v4727
    %v4729 = vpop.xlane.xlu0 %4728
    %v4730 = vsel %vm2160, %v3370, 0.0
    %4731 = vadd.xlane.f32.xlu0 %v4730
    %v4732 = vpop.xlane.xlu0 %4731
    %v4733 = vsel %vm2160, %v3371, 0.0
    %4734 = vadd.xlane.f32.xlu0 %v4733
    %v4735 = vpop.xlane.xlu0 %4734
    %v4736 = vsel %vm2160, %v3372, 0.0
    %4737 = vadd.xlane.f32.xlu0 %v4736
    %v4738 = vpop.xlane.xlu0 %4737
    %v4739 = vsel %vm2160, %v3373, 0.0
    %4740 = vadd.xlane.f32.xlu0 %v4739
    %v4741 = vpop.xlane.xlu0 %4740
    %v4742 = vsel %vm2160, %v3374, 0.0
    %4743 = vadd.xlane.f32.xlu0 %v4742
    %v4744 = vpop.xlane.xlu0 %4743
    %v4745 = vsel %vm2160, %v3375, 0.0
    %4746 = vadd.xlane.f32.xlu0 %v4745
    %v4747 = vpop.xlane.xlu0 %4746
    %v4748 = vsel %vm2160, %v3376, 0.0
    %4749 = vadd.xlane.f32.xlu0 %v4748
    %v4750 = vpop.xlane.xlu0 %4749
    %v4751 = vsel %vm2160, %v3377, 0.0
    %4752 = vadd.xlane.f32.xlu0 %v4751
    %v4753 = vpop.xlane.xlu0 %4752
    %v4754 = vsel %vm2160, %v3378, 0.0
    %4755 = vadd.xlane.f32.xlu0 %v4754
    %v4756 = vpop.xlane.xlu0 %4755
    %v4757 = vsel %vm2160, %v3379, 0.0
    %4758 = vadd.xlane.f32.xlu0 %v4757
    %v4759 = vpop.xlane.xlu0 %4758
    %v4760 = vsel %vm2160, %v3380, 0.0
    %4761 = vadd.xlane.f32.xlu0 %v4760
    %v4762 = vpop.xlane.xlu0 %4761
    %v4763 = vsel %vm2160, %v3381, 0.0
    %4764 = vadd.xlane.f32.xlu0 %v4763
    %v4765 = vpop.xlane.xlu0 %4764
    %v4766 = vsel %vm2160, %v3382, 0.0
    %4767 = vadd.xlane.f32.xlu0 %v4766
    %v4768 = vpop.xlane.xlu0 %4767
    %v4769 = vsel %vm2160, %v3383, 0.0
    %4770 = vadd.xlane.f32.xlu0 %v4769
    %v4771 = vpop.xlane.xlu0 %4770
    %v4772 = vsel %vm2160, %v3384, 0.0
    %4773 = vadd.xlane.f32.xlu0 %v4772
    %v4774 = vpop.xlane.xlu0 %4773
    %v4775 = vsel %vm2160, %v3385, 0.0
    %4776 = vadd.xlane.f32.xlu0 %v4775
    %v4777 = vpop.xlane.xlu0 %4776
    %v4778 = vsel %vm2160, %v3386, 0.0
    %4779 = vadd.xlane.f32.xlu0 %v4778
    %v4780 = vpop.xlane.xlu0 %4779
    %v4781 = vsel %vm2160, %v3387, 0.0
    %4782 = vadd.xlane.f32.xlu0 %v4781
    %v4783 = vpop.xlane.xlu0 %4782
    %v4784 = vsel %vm2160, %v3388, 0.0
    %4785 = vadd.xlane.f32.xlu0 %v4784
    %v4786 = vpop.xlane.xlu0 %4785
    %v4787 = vsel %vm2160, %v3389, 0.0
    %4788 = vadd.xlane.f32.xlu0 %v4787
    %v4789 = vpop.xlane.xlu0 %4788
    %v4790 = vsel %vm2160, %v3390, 0.0
    %4791 = vadd.xlane.f32.xlu0 %v4790
    %v4792 = vpop.xlane.xlu0 %4791
    %v4793 = vsel %vm2160, %v3391, 0.0
    %4794 = vadd.xlane.f32.xlu0 %v4793
    %v4795 = vpop.xlane.xlu0 %4794
    %v4796 = vsel %vm2160, %v3392, 0.0
    %4797 = vadd.xlane.f32.xlu0 %v4796
    %v4798 = vpop.xlane.xlu0 %4797
    %v4799 = vsel %vm2160, %v3393, 0.0
    %4800 = vadd.xlane.f32.xlu0 %v4799
    %v4801 = vpop.xlane.xlu0 %4800
    %v4802 = vsel %vm2160, %v3394, 0.0
    %4803 = vadd.xlane.f32.xlu0 %v4802
    %v4804 = vpop.xlane.xlu0 %4803
    %v4805 = vsel %vm2160, %v3395, 0.0
    %4806 = vadd.xlane.f32.xlu0 %v4805
    %v4807 = vpop.xlane.xlu0 %4806
    %v4808 = vsel %vm2160, %v3396, 0.0
    %4809 = vadd.xlane.f32.xlu0 %v4808
    %v4810 = vpop.xlane.xlu0 %4809
    %v4811 = vsel %vm2160, %v3397, 0.0
    %4812 = vadd.xlane.f32.xlu0 %v4811
    %v4813 = vpop.xlane.xlu0 %4812
    %v4814 = vsel %vm2160, %v3398, 0.0
    %4815 = vadd.xlane.f32.xlu0 %v4814
    %v4816 = vpop.xlane.xlu0 %4815
    %v4817 = vsel %vm2160, %v3399, 0.0
    %4818 = vadd.xlane.f32.xlu0 %v4817
    %v4819 = vpop.xlane.xlu0 %4818
    %v4820 = vsel %vm2160, %v3400, 0.0
    %4821 = vadd.xlane.f32.xlu0 %v4820
    %v4822 = vpop.xlane.xlu0 %4821
    %v4823 = vsel %vm2160, %v3401, 0.0
    %4824 = vadd.xlane.f32.xlu0 %v4823
    %v4825 = vpop.xlane.xlu0 %4824
    %v4826 = vsel %vm2160, %v3402, 0.0
    %4827 = vadd.xlane.f32.xlu0 %v4826
    %v4828 = vpop.xlane.xlu0 %4827
    %v4829 = vsel %vm2160, %v3403, 0.0
    %4830 = vadd.xlane.f32.xlu0 %v4829
    %v4831 = vpop.xlane.xlu0 %4830
    %v4832 = vsel %vm2160, %v3404, 0.0
    %4833 = vadd.xlane.f32.xlu0 %v4832
    %v4834 = vpop.xlane.xlu0 %4833
    %v4835 = vsel %vm2160, %v3405, 0.0
    %4836 = vadd.xlane.f32.xlu0 %v4835
    %v4837 = vpop.xlane.xlu0 %4836
    %v4838 = vsel %vm2160, %v3406, 0.0
    %4839 = vadd.xlane.f32.xlu0 %v4838
    %v4840 = vpop.xlane.xlu0 %4839
    %v4841 = vsel %vm2160, %v3407, 0.0
    %4842 = vadd.xlane.f32.xlu0 %v4841
    %v4843 = vpop.xlane.xlu0 %4842
    %v4844 = vsel %vm2160, %v3408, 0.0
    %4845 = vadd.xlane.f32.xlu0 %v4844
    %v4846 = vpop.xlane.xlu0 %4845
    %v4847 = vsel %vm2160, %v3409, 0.0
    %4848 = vadd.xlane.f32.xlu0 %v4847
    %v4849 = vpop.xlane.xlu0 %4848
    %v4850 = vsel %vm2160, %v3410, 0.0
    %4851 = vadd.xlane.f32.xlu0 %v4850
    %v4852 = vpop.xlane.xlu0 %4851
    %v4853 = vsel %vm2160, %v3411, 0.0
    %4854 = vadd.xlane.f32.xlu0 %v4853
    %v4855 = vpop.xlane.xlu0 %4854
    %v4856 = vsel %vm2160, %v3412, 0.0
    %4857 = vadd.xlane.f32.xlu0 %v4856
    %v4858 = vpop.xlane.xlu0 %4857
    %v4859 = vsel %vm2160, %v3413, 0.0
    %4860 = vadd.xlane.f32.xlu0 %v4859
    %v4861 = vpop.xlane.xlu0 %4860
    %v4862 = vsel %vm2160, %v3414, 0.0
    %4863 = vadd.xlane.f32.xlu0 %v4862
    %v4864 = vpop.xlane.xlu0 %4863
    %v4865 = vsel %vm2160, %v3415, 0.0
    %4866 = vadd.xlane.f32.xlu0 %v4865
    %v4867 = vpop.xlane.xlu0 %4866
    %v4868 = vsel %vm2160, %v3416, 0.0
    %4869 = vadd.xlane.f32.xlu0 %v4868
    %v4870 = vpop.xlane.xlu0 %4869
    %v4871 = vsel %vm2160, %v3417, 0.0
    %4872 = vadd.xlane.f32.xlu0 %v4871
    %v4873 = vpop.xlane.xlu0 %4872
    %v4874 = vsel %vm2160, %v3418, 0.0
    %4875 = vadd.xlane.f32.xlu0 %v4874
    %v4876 = vpop.xlane.xlu0 %4875
    %v4877 = vsel %vm2160, %v3419, 0.0
    %4878 = vadd.xlane.f32.xlu0 %v4877
    %v4879 = vpop.xlane.xlu0 %4878
    %v4880 = vsel %vm2160, %v3420, 0.0
    %4881 = vadd.xlane.f32.xlu0 %v4880
    %v4882 = vpop.xlane.xlu0 %4881
    %v4883 = vsel %vm2160, %v3421, 0.0
    %4884 = vadd.xlane.f32.xlu0 %v4883
    %v4885 = vpop.xlane.xlu0 %4884
    %v4886 = vsel %vm2160, %v3422, 0.0
    %4887 = vadd.xlane.f32.xlu0 %v4886
    %v4888 = vpop.xlane.xlu0 %4887
    %v4889 = vsel %vm2160, %v3423, 0.0
    %4890 = vadd.xlane.f32.xlu0 %v4889
    %v4891 = vpop.xlane.xlu0 %4890
    %v4892 = vsel %vm2160, %v3424, 0.0
    %4893 = vadd.xlane.f32.xlu0 %v4892
    %v4894 = vpop.xlane.xlu0 %4893
    %v4895 = vsel %vm2160, %v3425, 0.0
    %4896 = vadd.xlane.f32.xlu0 %v4895
    %v4897 = vpop.xlane.xlu0 %4896
    %v4898 = vsel %vm2160, %v3426, 0.0
    %4899 = vadd.xlane.f32.xlu0 %v4898
    %v4900 = vpop.xlane.xlu0 %4899
    %v4901 = vsel %vm2160, %v3427, 0.0
    %4902 = vadd.xlane.f32.xlu0 %v4901
    %v4903 = vpop.xlane.xlu0 %4902
    %v4904 = vsel %vm2160, %v3428, 0.0
    %4905 = vadd.xlane.f32.xlu0 %v4904
    %v4906 = vpop.xlane.xlu0 %4905
    %v4907 = vsel %vm2160, %v3429, 0.0
    %4908 = vadd.xlane.f32.xlu0 %v4907
    %v4909 = vpop.xlane.xlu0 %4908
    %v4910 = vsel %vm2160, %v3430, 0.0
    %4911 = vadd.xlane.f32.xlu0 %v4910
    %v4912 = vpop.xlane.xlu0 %4911
    %v4913 = vsel %vm2160, %v3431, 0.0
    %4914 = vadd.xlane.f32.xlu0 %v4913
    %v4915 = vpop.xlane.xlu0 %4914
    %v4916 = vsel %vm2160, %v3432, 0.0
    %4917 = vadd.xlane.f32.xlu0 %v4916
    %v4918 = vpop.xlane.xlu0 %4917
    %v4919 = vsel %vm2160, %v3433, 0.0
    %4920 = vadd.xlane.f32.xlu0 %v4919
    %v4921 = vpop.xlane.xlu0 %4920
    %v4922 = vsel %vm2160, %v3434, 0.0
    %4923 = vadd.xlane.f32.xlu0 %v4922
    %v4924 = vpop.xlane.xlu0 %4923
    %v4925 = vsel %vm2160, %v3435, 0.0
    %4926 = vadd.xlane.f32.xlu0 %v4925
    %v4927 = vpop.xlane.xlu0 %4926
    %v4928 = vsel %vm2160, %v3436, 0.0
    %4929 = vadd.xlane.f32.xlu0 %v4928
    %v4930 = vpop.xlane.xlu0 %4929
    %v4931 = vsel %vm2160, %v3437, 0.0
    %4932 = vadd.xlane.f32.xlu0 %v4931
    %v4933 = vpop.xlane.xlu0 %4932
    %v4934 = vsel %vm2160, %v3438, 0.0
    %4935 = vadd.xlane.f32.xlu0 %v4934
    %v4936 = vpop.xlane.xlu0 %4935
    %v4937 = vsel %vm2160, %v3439, 0.0
    %4938 = vadd.xlane.f32.xlu0 %v4937
    %v4939 = vpop.xlane.xlu0 %4938
    %v4940 = vsel %vm2160, %v3440, 0.0
    %4941 = vadd.xlane.f32.xlu0 %v4940
    %v4942 = vpop.xlane.xlu0 %4941
    %v4943 = vsel %vm2160, %v3441, 0.0
    %4944 = vadd.xlane.f32.xlu0 %v4943
    %v4945 = vpop.xlane.xlu0 %4944
    %v4946 = vsel %vm2160, %v3442, 0.0
    %4947 = vadd.xlane.f32.xlu0 %v4946
    %v4948 = vpop.xlane.xlu0 %4947
    %v4949 = vsel %vm2160, %v3443, 0.0
    %4950 = vadd.xlane.f32.xlu0 %v4949
    %v4951 = vpop.xlane.xlu0 %4950
    %v4952 = vsel %vm2160, %v3444, 0.0
    %4953 = vadd.xlane.f32.xlu0 %v4952
    %v4954 = vpop.xlane.xlu0 %4953
    %v4955 = vsel %vm2160, %v3445, 0.0
    %4956 = vadd.xlane.f32.xlu0 %v4955
    %v4957 = vpop.xlane.xlu0 %4956
    %v4958 = vsel %vm2160, %v3446, 0.0
    %4959 = vadd.xlane.f32.xlu0 %v4958
    %v4960 = vpop.xlane.xlu0 %4959
    %v4961 = vsel %vm2160, %v3447, 0.0
    %4962 = vadd.xlane.f32.xlu0 %v4961
    %v4963 = vpop.xlane.xlu0 %4962
    %v4964 = vsel %vm2160, %v3448, 0.0
    %4965 = vadd.xlane.f32.xlu0 %v4964
    %v4966 = vpop.xlane.xlu0 %4965
    %v4967 = vsel %vm2160, %v3449, 0.0
    %4968 = vadd.xlane.f32.xlu0 %v4967
    %v4969 = vpop.xlane.xlu0 %4968
    %v4970 = vsel %vm2160, %v3450, 0.0
    %4971 = vadd.xlane.f32.xlu0 %v4970
    %v4972 = vpop.xlane.xlu0 %4971
    %v4973 = vsel %vm2160, %v3451, 0.0
    %4974 = vadd.xlane.f32.xlu0 %v4973
    %v4975 = vpop.xlane.xlu0 %4974
    %v4976 = vsel %vm2160, %v3452, 0.0
    %4977 = vadd.xlane.f32.xlu0 %v4976
    %v4978 = vpop.xlane.xlu0 %4977
    %v4979 = vsel %vm2160, %v3453, 0.0
    %4980 = vadd.xlane.f32.xlu0 %v4979
    %v4981 = vpop.xlane.xlu0 %4980
    %v4982 = vsel %vm2160, %v3454, 0.0
    %4983 = vadd.xlane.f32.xlu0 %v4982
    %v4984 = vpop.xlane.xlu0 %4983
    %v4985 = vsel %vm2160, %v3455, 0.0
    %4986 = vadd.xlane.f32.xlu0 %v4985
    %v4987 = vpop.xlane.xlu0 %4986
    %v4988 = vsel %vm2160, %v3456, 0.0
    %4989 = vadd.xlane.f32.xlu0 %v4988
    %v4990 = vpop.xlane.xlu0 %4989
    %v4991 = vsel %vm2160, %v3457, 0.0
    %4992 = vadd.xlane.f32.xlu0 %v4991
    %v4993 = vpop.xlane.xlu0 %4992
    %v4994 = vsel %vm2160, %v3458, 0.0
    %4995 = vadd.xlane.f32.xlu0 %v4994
    %v4996 = vpop.xlane.xlu0 %4995
    %v4997 = vsel %vm2160, %v3459, 0.0
    %4998 = vadd.xlane.f32.xlu0 %v4997
    %v4999 = vpop.xlane.xlu0 %4998
    %v5000 = vsel %vm2160, %v3460, 0.0
    %5001 = vadd.xlane.f32.xlu0 %v5000
    %v5002 = vpop.xlane.xlu0 %5001
    %v5003 = vsel %vm2160, %v3461, 0.0
    %5004 = vadd.xlane.f32.xlu0 %v5003
    %v5005 = vpop.xlane.xlu0 %5004
    %v5006 = vsel %vm2160, %v3462, 0.0
    %5007 = vadd.xlane.f32.xlu0 %v5006
    %v5008 = vpop.xlane.xlu0 %5007
    %v5009 = vsel %vm2160, %v3463, 0.0
    %5010 = vadd.xlane.f32.xlu0 %v5009
    %v5011 = vpop.xlane.xlu0 %5010
    %v5012 = vsel %vm2160, %v3464, 0.0
    %5013 = vadd.xlane.f32.xlu0 %v5012
    %v5014 = vpop.xlane.xlu0 %5013
    %v5015 = vsel %vm2160, %v3465, 0.0
    %5016 = vadd.xlane.f32.xlu0 %v5015
    %v5017 = vpop.xlane.xlu0 %5016
    %v5018 = vsel %vm2160, %v3466, 0.0
    %5019 = vadd.xlane.f32.xlu0 %v5018
    %v5020 = vpop.xlane.xlu0 %5019
    %v5021 = vsel %vm2160, %v3467, 0.0
    %5022 = vadd.xlane.f32.xlu0 %v5021
    %v5023 = vpop.xlane.xlu0 %5022
    %v5024 = vsel %vm2160, %v3468, 0.0
    %5025 = vadd.xlane.f32.xlu0 %v5024
    %v5026 = vpop.xlane.xlu0 %5025
    %v5027 = vsel %vm2160, %v3469, 0.0
    %5028 = vadd.xlane.f32.xlu0 %v5027
    %v5029 = vpop.xlane.xlu0 %5028
    %v5030 = vsel %vm2160, %v3470, 0.0
    %5031 = vadd.xlane.f32.xlu0 %v5030
    %v5032 = vpop.xlane.xlu0 %5031
    %v5033 = vsel %vm2160, %v3471, 0.0
    %5034 = vadd.xlane.f32.xlu0 %v5033
    %v5035 = vpop.xlane.xlu0 %5034
    %v5036 = vsel %vm2160, %v3472, 0.0
    %5037 = vadd.xlane.f32.xlu0 %v5036
    %v5038 = vpop.xlane.xlu0 %5037
    %v5039 = vsel %vm2160, %v3473, 0.0
    %5040 = vadd.xlane.f32.xlu0 %v5039
    %v5041 = vpop.xlane.xlu0 %5040
    %v5042 = vsel %vm2160, %v3474, 0.0
    %5043 = vadd.xlane.f32.xlu0 %v5042
    %v5044 = vpop.xlane.xlu0 %5043
    %v5045 = vsel %vm2160, %v3475, 0.0
    %5046 = vadd.xlane.f32.xlu0 %v5045
    %v5047 = vpop.xlane.xlu0 %5046
    %v5048 = vsel %vm2160, %v3476, 0.0
    %5049 = vadd.xlane.f32.xlu0 %v5048
    %v5050 = vpop.xlane.xlu0 %5049
    %v5051 = vsel %vm2160, %v3477, 0.0
    %5052 = vadd.xlane.f32.xlu0 %v5051
    %v5053 = vpop.xlane.xlu0 %5052
    %v5054 = vsel %vm2160, %v3478, 0.0
    %5055 = vadd.xlane.f32.xlu0 %v5054
    %v5056 = vpop.xlane.xlu0 %5055
    %v5057 = vsel %vm2160, %v3479, 0.0
    %5058 = vadd.xlane.f32.xlu0 %v5057
    %v5059 = vpop.xlane.xlu0 %5058
    %v5060 = vsel %vm2160, %v3480, 0.0
    %5061 = vadd.xlane.f32.xlu0 %v5060
    %v5062 = vpop.xlane.xlu0 %5061
    %v5063 = vsel %vm2160, %v3481, 0.0
    %5064 = vadd.xlane.f32.xlu0 %v5063
    %v5065 = vpop.xlane.xlu0 %5064
    %v5066 = vsel %vm2160, %v3482, 0.0
    %5067 = vadd.xlane.f32.xlu0 %v5066
    %v5068 = vpop.xlane.xlu0 %5067
    %v5069 = vsel %vm2160, %v3483, 0.0
    %5070 = vadd.xlane.f32.xlu0 %v5069
    %v5071 = vpop.xlane.xlu0 %5070
    %v5072 = vsel %vm2160, %v3484, 0.0
    %5073 = vadd.xlane.f32.xlu0 %v5072
    %v5074 = vpop.xlane.xlu0 %5073
    %v5075 = vsel %vm2160, %v3485, 0.0
    %5076 = vadd.xlane.f32.xlu0 %v5075
    %v5077 = vpop.xlane.xlu0 %5076
    %v5078 = vsel %vm2160, %v3486, 0.0
    %5079 = vadd.xlane.f32.xlu0 %v5078
    %v5080 = vpop.xlane.xlu0 %5079
    %v5081 = vsel %vm2160, %v3487, 0.0
    %5082 = vadd.xlane.f32.xlu0 %v5081
    %v5083 = vpop.xlane.xlu0 %5082
    %v5084 = vsel %vm2160, %v3488, 0.0
    %5085 = vadd.xlane.f32.xlu0 %v5084
    %v5086 = vpop.xlane.xlu0 %5085
    %v5087 = vsel %vm2160, %v3489, 0.0
    %5088 = vadd.xlane.f32.xlu0 %v5087
    %v5089 = vpop.xlane.xlu0 %5088
    %v5090 = vsel %vm2160, %v3490, 0.0
    %5091 = vadd.xlane.f32.xlu0 %v5090
    %v5092 = vpop.xlane.xlu0 %5091
    %v5093 = vsel %vm2160, %v3491, 0.0
    %5094 = vadd.xlane.f32.xlu0 %v5093
    %v5095 = vpop.xlane.xlu0 %5094
    %v5096 = vsel %vm2160, %v3492, 0.0
    %5097 = vadd.xlane.f32.xlu0 %v5096
    %v5098 = vpop.xlane.xlu0 %5097
    %v5099 = vsel %vm2160, %v3493, 0.0
    %5100 = vadd.xlane.f32.xlu0 %v5099
    %v5101 = vpop.xlane.xlu0 %5100
    %v5102 = vsel %vm2160, %v3494, 0.0
    %5103 = vadd.xlane.f32.xlu0 %v5102
    %v5104 = vpop.xlane.xlu0 %5103
    %v5105 = vsel %vm2160, %v3495, 0.0
    %5106 = vadd.xlane.f32.xlu0 %v5105
    %v5107 = vpop.xlane.xlu0 %5106
    %v5108 = vsel %vm2160, %v3496, 0.0
    %5109 = vadd.xlane.f32.xlu0 %v5108
    %v5110 = vpop.xlane.xlu0 %5109
    %v5111 = vsel %vm2160, %v3497, 0.0
    %5112 = vadd.xlane.f32.xlu0 %v5111
    %v5113 = vpop.xlane.xlu0 %5112
    %v5114 = vsel %vm2160, %v3498, 0.0
    %5115 = vadd.xlane.f32.xlu0 %v5114
    %v5116 = vpop.xlane.xlu0 %5115
    %v5117 = vsel %vm2160, %v3499, 0.0
    %5118 = vadd.xlane.f32.xlu0 %v5117
    %v5119 = vpop.xlane.xlu0 %5118
    %v5120 = vsel %vm2160, %v3500, 0.0
    %5121 = vadd.xlane.f32.xlu0 %v5120
    %v5122 = vpop.xlane.xlu0 %5121
    %v5123 = vsel %vm2160, %v3501, 0.0
    %5124 = vadd.xlane.f32.xlu0 %v5123
    %v5125 = vpop.xlane.xlu0 %5124
    %v5126 = vsel %vm2160, %v3502, 0.0
    %5127 = vadd.xlane.f32.xlu0 %v5126
    %v5128 = vpop.xlane.xlu0 %5127
    %v5129 = vsel %vm2160, %v3503, 0.0
    %5130 = vadd.xlane.f32.xlu0 %v5129
    %v5131 = vpop.xlane.xlu0 %5130
    %v5132 = vsel %vm2160, %v3504, 0.0
    %5133 = vadd.xlane.f32.xlu0 %v5132
    %v5134 = vpop.xlane.xlu0 %5133
    %v5135 = vsel %vm2160, %v3505, 0.0
    %5136 = vadd.xlane.f32.xlu0 %v5135
    %v5137 = vpop.xlane.xlu0 %5136
    %v5138 = vsel %vm2160, %v3506, 0.0
    %5139 = vadd.xlane.f32.xlu0 %v5138
    %v5140 = vpop.xlane.xlu0 %5139
    %v5141 = vsel %vm2160, %v3507, 0.0
    %5142 = vadd.xlane.f32.xlu0 %v5141
    %v5143 = vpop.xlane.xlu0 %5142
    %v5144 = vsel %vm2160, %v3508, 0.0
    %5145 = vadd.xlane.f32.xlu0 %v5144
    %v5146 = vpop.xlane.xlu0 %5145
    %v5147 = vsel %vm2160, %v3509, 0.0
    %5148 = vadd.xlane.f32.xlu0 %v5147
    %v5149 = vpop.xlane.xlu0 %5148
    %v5150 = vsel %vm2160, %v3510, 0.0
    %5151 = vadd.xlane.f32.xlu0 %v5150
    %v5152 = vpop.xlane.xlu0 %5151
    %v5153 = vsel %vm2160, %v3511, 0.0
    %5154 = vadd.xlane.f32.xlu0 %v5153
    %v5155 = vpop.xlane.xlu0 %5154
    %v5156 = vsel %vm2160, %v3512, 0.0
    %5157 = vadd.xlane.f32.xlu0 %v5156
    %v5158 = vpop.xlane.xlu0 %5157
    %v5159 = vsel %vm2160, %v3513, 0.0
    %5160 = vadd.xlane.f32.xlu0 %v5159
    %v5161 = vpop.xlane.xlu0 %5160
    %v5162 = vsel %vm2160, %v3514, 0.0
    %5163 = vadd.xlane.f32.xlu0 %v5162
    %v5164 = vpop.xlane.xlu0 %5163
    %v5165 = vsel %vm2160, %v3515, 0.0
    %5166 = vadd.xlane.f32.xlu0 %v5165
    %v5167 = vpop.xlane.xlu0 %5166
    %v5168 = vsel %vm2160, %v3516, 0.0
    %5169 = vadd.xlane.f32.xlu0 %v5168
    %v5170 = vpop.xlane.xlu0 %5169
    %v5171 = vsel %vm2160, %v3517, 0.0
    %5172 = vadd.xlane.f32.xlu0 %v5171
    %v5173 = vpop.xlane.xlu0 %5172
    %v5174 = vsel %vm2160, %v3518, 0.0
    %5175 = vadd.xlane.f32.xlu0 %v5174
    %v5176 = vpop.xlane.xlu0 %5175
    %v5177 = vsel %vm2160, %v3519, 0.0
    %5178 = vadd.xlane.f32.xlu0 %v5177
    %v5179 = vpop.xlane.xlu0 %5178
    %v5180 = vsel %vm2160, %v3520, 0.0
    %5181 = vadd.xlane.f32.xlu0 %v5180
    %v5182 = vpop.xlane.xlu0 %5181
    %v5183 = vsel %vm2160, %v3521, 0.0
    %5184 = vadd.xlane.f32.xlu0 %v5183
    %v5185 = vpop.xlane.xlu0 %5184
    %v5186 = vsel %vm2160, %v3522, 0.0
    %5187 = vadd.xlane.f32.xlu0 %v5186
    %v5188 = vpop.xlane.xlu0 %5187
    %v5189 = vsel %vm2160, %v3523, 0.0
    %5190 = vadd.xlane.f32.xlu0 %v5189
    %v5191 = vpop.xlane.xlu0 %5190
    %v5192 = vsel %vm2160, %v3524, 0.0
    %5193 = vadd.xlane.f32.xlu0 %v5192
    %v5194 = vpop.xlane.xlu0 %5193
    %v5195 = vsel %vm2160, %v3525, 0.0
    %5196 = vadd.xlane.f32.xlu0 %v5195
    %v5197 = vpop.xlane.xlu0 %5196
    %v5198 = vsel %vm2160, %v3526, 0.0
    %5199 = vadd.xlane.f32.xlu0 %v5198
    %v5200 = vpop.xlane.xlu0 %5199
    %v5201 = vsel %vm2160, %v3527, 0.0
    %5202 = vadd.xlane.f32.xlu0 %v5201
    %v5203 = vpop.xlane.xlu0 %5202
    %v5204 = vsel %vm2160, %v3528, 0.0
    %5205 = vadd.xlane.f32.xlu0 %v5204
    %v5206 = vpop.xlane.xlu0 %5205
    %v5207 = vsel %vm2160, %v3529, 0.0
    %5208 = vadd.xlane.f32.xlu0 %v5207
    %v5209 = vpop.xlane.xlu0 %5208
    %v5210 = vsel %vm2160, %v3530, 0.0
    %5211 = vadd.xlane.f32.xlu0 %v5210
    %v5212 = vpop.xlane.xlu0 %5211
    %v5213 = vsel %vm2160, %v3531, 0.0
    %5214 = vadd.xlane.f32.xlu0 %v5213
    %v5215 = vpop.xlane.xlu0 %5214
    %v5216 = vsel %vm2160, %v3532, 0.0
    %5217 = vadd.xlane.f32.xlu0 %v5216
    %v5218 = vpop.xlane.xlu0 %5217
    %v5219 = vsel %vm2160, %v3533, 0.0
    %5220 = vadd.xlane.f32.xlu0 %v5219
    %v5221 = vpop.xlane.xlu0 %5220
    %v5222 = vsel %vm2160, %v3534, 0.0
    %5223 = vadd.xlane.f32.xlu0 %v5222
    %v5224 = vpop.xlane.xlu0 %5223
    %v5225 = vsel %vm2160, %v3535, 0.0
    %5226 = vadd.xlane.f32.xlu0 %v5225
    %v5227 = vpop.xlane.xlu0 %5226
    %v5228 = vsel %vm2160, %v3536, 0.0
    %5229 = vadd.xlane.f32.xlu0 %v5228
    %v5230 = vpop.xlane.xlu0 %5229
    %v5231 = vsel %vm2160, %v3537, 0.0
    %5232 = vadd.xlane.f32.xlu0 %v5231
    %v5233 = vpop.xlane.xlu0 %5232
    %v5234 = vsel %vm2160, %v3538, 0.0
    %5235 = vadd.xlane.f32.xlu0 %v5234
    %v5236 = vpop.xlane.xlu0 %5235
    %v5237 = vsel %vm2160, %v3539, 0.0
    %5238 = vadd.xlane.f32.xlu0 %v5237
    %v5239 = vpop.xlane.xlu0 %5238
    %v5240 = vsel %vm2160, %v3540, 0.0
    %5241 = vadd.xlane.f32.xlu0 %v5240
    %v5242 = vpop.xlane.xlu0 %5241
    %v5243 = vsel %vm2160, %v3541, 0.0
    %5244 = vadd.xlane.f32.xlu0 %v5243
    %v5245 = vpop.xlane.xlu0 %5244
    %v5246 = vsel %vm2160, %v3542, 0.0
    %5247 = vadd.xlane.f32.xlu0 %v5246
    %v5248 = vpop.xlane.xlu0 %5247
    %v5249 = vsel %vm2160, %v3543, 0.0
    %5250 = vadd.xlane.f32.xlu0 %v5249
    %v5251 = vpop.xlane.xlu0 %5250
    %v5252 = vsel %vm2160, %v3544, 0.0
    %5253 = vadd.xlane.f32.xlu0 %v5252
    %v5254 = vpop.xlane.xlu0 %5253
    %v5255 = vsel %vm2160, %v3545, 0.0
    %5256 = vadd.xlane.f32.xlu0 %v5255
    %v5257 = vpop.xlane.xlu0 %5256
    %v5258 = vsel %vm2160, %v3546, 0.0
    %5259 = vadd.xlane.f32.xlu0 %v5258
    %v5260 = vpop.xlane.xlu0 %5259
    %v5261 = vsel %vm2160, %v3547, 0.0
    %5262 = vadd.xlane.f32.xlu0 %v5261
    %v5263 = vpop.xlane.xlu0 %5262
    %v5264 = vsel %vm2160, %v3548, 0.0
    %5265 = vadd.xlane.f32.xlu0 %v5264
    %v5266 = vpop.xlane.xlu0 %5265
    %v5267 = vsel %vm2160, %v3549, 0.0
    %5268 = vadd.xlane.f32.xlu0 %v5267
    %v5269 = vpop.xlane.xlu0 %5268
    %v5270 = vsel %vm2160, %v3550, 0.0
    %5271 = vadd.xlane.f32.xlu0 %v5270
    %v5272 = vpop.xlane.xlu0 %5271
    %v5273 = vsel %vm2160, %v3551, 0.0
    %5274 = vadd.xlane.f32.xlu0 %v5273
    %v5275 = vpop.xlane.xlu0 %5274
    %v5276 = vsel %vm2160, %v3552, 0.0
    %5277 = vadd.xlane.f32.xlu0 %v5276
    %v5278 = vpop.xlane.xlu0 %5277
    %v5279 = vsel %vm2160, %v3553, 0.0
    %5280 = vadd.xlane.f32.xlu0 %v5279
    %v5281 = vpop.xlane.xlu0 %5280
    %v5282 = vsel %vm2160, %v3554, 0.0
    %5283 = vadd.xlane.f32.xlu0 %v5282
    %v5284 = vpop.xlane.xlu0 %5283
    %v5285 = vsel %vm2160, %v3555, 0.0
    %5286 = vadd.xlane.f32.xlu0 %v5285
    %v5287 = vpop.xlane.xlu0 %5286
    %v5288 = vsel %vm2160, %v3556, 0.0
    %5289 = vadd.xlane.f32.xlu0 %v5288
    %v5290 = vpop.xlane.xlu0 %5289
    %v5291 = vsel %vm2160, %v3557, 0.0
    %5292 = vadd.xlane.f32.xlu0 %v5291
    %v5293 = vpop.xlane.xlu0 %5292
    %v5294 = vsel %vm2160, %v3558, 0.0
    %5295 = vadd.xlane.f32.xlu0 %v5294
    %v5296 = vpop.xlane.xlu0 %5295
    %v5297 = vsel %vm2160, %v3559, 0.0
    %5298 = vadd.xlane.f32.xlu0 %v5297
    %v5299 = vpop.xlane.xlu0 %5298
    %v5880 = vlaneseq
    %v5881 = vand.u32 %v5880, 127
    %v5882 = vlaneseq
    %v5883 = vshrl.u32 %v5882, 7
    %v5884 = vsub.s32 %v5881, %v5883
    %v5885 = vrot.slane %v3562, %v5884
    %v5886 = vadd.s32 %v5881, 4294967288
    %v5887 = vlaneseq
    %v5888 = vshrl.u32 %v5887, 7
    %v5889 = vsub.s32 %v5886, %v5888
    %v5890 = vrot.slane %v3565, %v5889
    %vm5891 = vcmask 130112
    %v5892 = vsel %vm5891, %v5890, %v5885
    %v5893 = vadd.s32 %v5881, 4294967280
    %v5894 = vlaneseq
    %v5895 = vshrl.u32 %v5894, 7
    %v5896 = vsub.s32 %v5893, %v5895
    %v5897 = vrot.slane %v3568, %v5896
    %vm5898 = vcmask 195712
    %v5899 = vsel %vm5898, %v5897, %v5892
    %v5900 = vadd.s32 %v5881, 4294967272
    %v5901 = vlaneseq
    %v5902 = vshrl.u32 %v5901, 7
    %v5903 = vsub.s32 %v5900, %v5902
    %v5904 = vrot.slane %v3571, %v5903
    %vm5905 = vcmask 261312
    %v5906 = vsel %vm5905, %v5904, %v5899
    %v5907 = vadd.s32 %v5881, 4294967264
    %v5908 = vlaneseq
    %v5909 = vshrl.u32 %v5908, 7
    %v5910 = vsub.s32 %v5907, %v5909
    %v5911 = vrot.slane %v3574, %v5910
    %vm5912 = vcmask 326912
    %v5913 = vsel %vm5912, %v5911, %v5906
    %v5914 = vadd.s32 %v5881, 4294967256
    %v5915 = vlaneseq
    %v5916 = vshrl.u32 %v5915, 7
    %v5917 = vsub.s32 %v5914, %v5916
    %v5918 = vrot.slane %v3577, %v5917
    %vm5919 = vcmask 392512
    %v5920 = vsel %vm5919, %v5918, %v5913
    %v5921 = vadd.s32 %v5881, 4294967248
    %v5922 = vlaneseq
    %v5923 = vshrl.u32 %v5922, 7
    %v5924 = vsub.s32 %v5921, %v5923
    %v5925 = vrot.slane %v3580, %v5924
    %vm5926 = vcmask 458112
    %v5927 = vsel %vm5926, %v5925, %v5920
    %v5928 = vadd.s32 %v5881, 4294967240
    %v5929 = vlaneseq
    %v5930 = vshrl.u32 %v5929, 7
    %v5931 = vsub.s32 %v5928, %v5930
    %v5932 = vrot.slane %v3583, %v5931
    %vm5933 = vcmask 523712
    %v5934 = vsel %vm5933, %v5932, %v5927
    %v5935 = vadd.s32 %v5881, 4294967232
    %v5936 = vlaneseq
    %v5937 = vshrl.u32 %v5936, 7
    %v5938 = vsub.s32 %v5935, %v5937
    %v5939 = vrot.slane %v3586, %v5938
    %vm5940 = vcmask 589312
    %v5941 = vsel %vm5940, %v5939, %v5934
    %v5942 = vadd.s32 %v5881, 4294967224
    %v5943 = vlaneseq
    %v5944 = vshrl.u32 %v5943, 7
    %v5945 = vsub.s32 %v5942, %v5944
    %v5946 = vrot.slane %v3589, %v5945
    %vm5947 = vcmask 654912
    %v5948 = vsel %vm5947, %v5946, %v5941
    %v5949 = vadd.s32 %v5881, 4294967216
    %v5950 = vlaneseq
    %v5951 = vshrl.u32 %v5950, 7
    %v5952 = vsub.s32 %v5949, %v5951
    %v5953 = vrot.slane %v3592, %v5952
    %vm5954 = vcmask 720512
    %v5955 = vsel %vm5954, %v5953, %v5948
    %v5956 = vadd.s32 %v5881, 4294967208
    %v5957 = vlaneseq
    %v5958 = vshrl.u32 %v5957, 7
    %v5959 = vsub.s32 %v5956, %v5958
    %v5960 = vrot.slane %v3595, %v5959
    %vm5961 = vcmask 786112
    %v5962 = vsel %vm5961, %v5960, %v5955
    %v5963 = vadd.s32 %v5881, 4294967200
    %v5964 = vlaneseq
    %v5965 = vshrl.u32 %v5964, 7
    %v5966 = vsub.s32 %v5963, %v5965
    %v5967 = vrot.slane %v3598, %v5966
    %vm5968 = vcmask 851712
    %v5969 = vsel %vm5968, %v5967, %v5962
    %v5970 = vadd.s32 %v5881, 4294967192
    %v5971 = vlaneseq
    %v5972 = vshrl.u32 %v5971, 7
    %v5973 = vsub.s32 %v5970, %v5972
    %v5974 = vrot.slane %v3601, %v5973
    %vm5975 = vcmask 917312
    %v5976 = vsel %vm5975, %v5974, %v5969
    %v5977 = vadd.s32 %v5881, 4294967184
    %v5978 = vlaneseq
    %v5979 = vshrl.u32 %v5978, 7
    %v5980 = vsub.s32 %v5977, %v5979
    %v5981 = vrot.slane %v3604, %v5980
    %vm5982 = vcmask 982912
    %v5983 = vsel %vm5982, %v5981, %v5976
    %v5984 = vadd.s32 %v5881, 4294967176
    %v5985 = vlaneseq
    %v5986 = vshrl.u32 %v5985, 7
    %v5987 = vsub.s32 %v5984, %v5986
    %v5988 = vrot.slane %v3607, %v5987
    %vm5989 = vcmask 1048512
    %v5990 = vsel %vm5989, %v5988, %v5983
    %v5991 = vlaneseq
    %v5992 = vshrl.u32 %v5991, 7
    %v5993 = vsub.s32 %v5881, %v5992
    %v5994 = vrot.slane %v3610, %v5993
    %v5995 = vlaneseq
    %v5996 = vshrl.u32 %v5995, 7
    %v5997 = vsub.s32 %v5886, %v5996
    %v5998 = vrot.slane %v3613, %v5997
    %v5999 = vsel %vm5891, %v5998, %v5994
    %v6000 = vlaneseq
    %v6001 = vshrl.u32 %v6000, 7
    %v6002 = vsub.s32 %v5893, %v6001
    %v6003 = vrot.slane %v3616, %v6002
    %v6004 = vsel %vm5898, %v6003, %v5999
    %v6005 = vlaneseq
    %v6006 = vshrl.u32 %v6005, 7
    %v6007 = vsub.s32 %v5900, %v6006
    %v6008 = vrot.slane %v3619, %v6007
    %v6009 = vsel %vm5905, %v6008, %v6004
    %v6010 = vlaneseq
    %v6011 = vshrl.u32 %v6010, 7
    %v6012 = vsub.s32 %v5907, %v6011
    %v6013 = vrot.slane %v3622, %v6012
    %v6014 = vsel %vm5912, %v6013, %v6009
    %v6015 = vlaneseq
    %v6016 = vshrl.u32 %v6015, 7
    %v6017 = vsub.s32 %v5914, %v6016
    %v6018 = vrot.slane %v3625, %v6017
    %v6019 = vsel %vm5919, %v6018, %v6014
    %v6020 = vlaneseq
    %v6021 = vshrl.u32 %v6020, 7
    %v6022 = vsub.s32 %v5921, %v6021
    %v6023 = vrot.slane %v3628, %v6022
    %v6024 = vsel %vm5926, %v6023, %v6019
    %v6025 = vlaneseq
    %v6026 = vshrl.u32 %v6025, 7
    %v6027 = vsub.s32 %v5928, %v6026
    %v6028 = vrot.slane %v3631, %v6027
    %v6029 = vsel %vm5933, %v6028, %v6024
    %v6030 = vlaneseq
    %v6031 = vshrl.u32 %v6030, 7
    %v6032 = vsub.s32 %v5935, %v6031
    %v6033 = vrot.slane %v3634, %v6032
    %v6034 = vsel %vm5940, %v6033, %v6029
    %v6035 = vlaneseq
    %v6036 = vshrl.u32 %v6035, 7
    %v6037 = vsub.s32 %v5942, %v6036
    %v6038 = vrot.slane %v3637, %v6037
    %v6039 = vsel %vm5947, %v6038, %v6034
    %v6040 = vlaneseq
    %v6041 = vshrl.u32 %v6040, 7
    %v6042 = vsub.s32 %v5949, %v6041
    %v6043 = vrot.slane %v3640, %v6042
    %v6044 = vsel %vm5954, %v6043, %v6039
    %v6045 = vlaneseq
    %v6046 = vshrl.u32 %v6045, 7
    %v6047 = vsub.s32 %v5956, %v6046
    %v6048 = vrot.slane %v3643, %v6047
    %v6049 = vsel %vm5961, %v6048, %v6044
    %v6050 = vlaneseq
    %v6051 = vshrl.u32 %v6050, 7
    %v6052 = vsub.s32 %v5963, %v6051
    %v6053 = vrot.slane %v3646, %v6052
    %v6054 = vsel %vm5968, %v6053, %v6049
    %v6055 = vlaneseq
    %v6056 = vshrl.u32 %v6055, 7
    %v6057 = vsub.s32 %v5881, %v6056
    %v6058 = vrot.slane %v3649, %v6057
    %v6059 = vlaneseq
    %v6060 = vshrl.u32 %v6059, 7
    %v6061 = vsub.s32 %v5886, %v6060
    %v6062 = vrot.slane %v3652, %v6061
    %v6063 = vsel %vm5891, %v6062, %v6058
    %v6064 = vlaneseq
    %v6065 = vshrl.u32 %v6064, 7
    %v6066 = vsub.s32 %v5893, %v6065
    %v6067 = vrot.slane %v3655, %v6066
    %v6068 = vsel %vm5898, %v6067, %v6063
    %v6069 = vlaneseq
    %v6070 = vshrl.u32 %v6069, 7
    %v6071 = vsub.s32 %v5900, %v6070
    %v6072 = vrot.slane %v3658, %v6071
    %v6073 = vsel %vm5905, %v6072, %v6068
    %v6074 = vlaneseq
    %v6075 = vshrl.u32 %v6074, 7
    %v6076 = vsub.s32 %v5907, %v6075
    %v6077 = vrot.slane %v3661, %v6076
    %v6078 = vsel %vm5912, %v6077, %v6073
    %v6079 = vlaneseq
    %v6080 = vshrl.u32 %v6079, 7
    %v6081 = vsub.s32 %v5914, %v6080
    %v6082 = vrot.slane %v3664, %v6081
    %v6083 = vsel %vm5919, %v6082, %v6078
    %v6084 = vlaneseq
    %v6085 = vshrl.u32 %v6084, 7
    %v6086 = vsub.s32 %v5921, %v6085
    %v6087 = vrot.slane %v3667, %v6086
    %v6088 = vsel %vm5926, %v6087, %v6083
    %v6089 = vlaneseq
    %v6090 = vshrl.u32 %v6089, 7
    %v6091 = vsub.s32 %v5928, %v6090
    %v6092 = vrot.slane %v3670, %v6091
    %v6093 = vsel %vm5933, %v6092, %v6088
    %v6094 = vlaneseq
    %v6095 = vshrl.u32 %v6094, 7
    %v6096 = vsub.s32 %v5935, %v6095
    %v6097 = vrot.slane %v3673, %v6096
    %v6098 = vsel %vm5940, %v6097, %v6093
    %v6099 = vlaneseq
    %v6100 = vshrl.u32 %v6099, 7
    %v6101 = vsub.s32 %v5942, %v6100
    %v6102 = vrot.slane %v3676, %v6101
    %v6103 = vsel %vm5947, %v6102, %v6098
    %v6104 = vlaneseq
    %v6105 = vshrl.u32 %v6104, 7
    %v6106 = vsub.s32 %v5949, %v6105
    %v6107 = vrot.slane %v3679, %v6106
    %v6108 = vsel %vm5954, %v6107, %v6103
    %v6109 = vlaneseq
    %v6110 = vshrl.u32 %v6109, 7
    %v6111 = vsub.s32 %v5956, %v6110
    %v6112 = vrot.slane %v3682, %v6111
    %v6113 = vsel %vm5961, %v6112, %v6108
    %v6114 = vlaneseq
    %v6115 = vshrl.u32 %v6114, 7
    %v6116 = vsub.s32 %v5963, %v6115
    %v6117 = vrot.slane %v3685, %v6116
    %v6118 = vsel %vm5968, %v6117, %v6113
    %v6119 = vlaneseq
    %v6120 = vshrl.u32 %v6119, 7
    %v6121 = vsub.s32 %v5970, %v6120
    %v6122 = vrot.slane %v3688, %v6121
    %v6123 = vsel %vm5975, %v6122, %v6118
    %v6124 = vlaneseq
    %v6125 = vshrl.u32 %v6124, 7
    %v6126 = vsub.s32 %v5977, %v6125
    %v6127 = vrot.slane %v3691, %v6126
    %v6128 = vsel %vm5982, %v6127, %v6123
    %v6129 = vlaneseq
    %v6130 = vshrl.u32 %v6129, 7
    %v6131 = vsub.s32 %v5984, %v6130
    %v6132 = vrot.slane %v3694, %v6131
    %v6133 = vsel %vm5989, %v6132, %v6128
    %v6134 = vlaneseq
    %v6135 = vshrl.u32 %v6134, 7
    %v6136 = vsub.s32 %v5881, %v6135
    %v6137 = vrot.slane %v3697, %v6136
    %v6138 = vlaneseq
    %v6139 = vshrl.u32 %v6138, 7
    %v6140 = vsub.s32 %v5886, %v6139
    %v6141 = vrot.slane %v3700, %v6140
    %v6142 = vsel %vm5891, %v6141, %v6137
    %v6143 = vlaneseq
    %v6144 = vshrl.u32 %v6143, 7
    %v6145 = vsub.s32 %v5893, %v6144
    %v6146 = vrot.slane %v3703, %v6145
    %v6147 = vsel %vm5898, %v6146, %v6142
    %v6148 = vlaneseq
    %v6149 = vshrl.u32 %v6148, 7
    %v6150 = vsub.s32 %v5900, %v6149
    %v6151 = vrot.slane %v3706, %v6150
    %v6152 = vsel %vm5905, %v6151, %v6147
    %v6153 = vlaneseq
    %v6154 = vshrl.u32 %v6153, 7
    %v6155 = vsub.s32 %v5907, %v6154
    %v6156 = vrot.slane %v3709, %v6155
    %v6157 = vsel %vm5912, %v6156, %v6152
    %v6158 = vlaneseq
    %v6159 = vshrl.u32 %v6158, 7
    %v6160 = vsub.s32 %v5914, %v6159
    %v6161 = vrot.slane %v3712, %v6160
    %v6162 = vsel %vm5919, %v6161, %v6157
    %v6163 = vlaneseq
    %v6164 = vshrl.u32 %v6163, 7
    %v6165 = vsub.s32 %v5921, %v6164
    %v6166 = vrot.slane %v3715, %v6165
    %v6167 = vsel %vm5926, %v6166, %v6162
    %v6168 = vlaneseq
    %v6169 = vshrl.u32 %v6168, 7
    %v6170 = vsub.s32 %v5928, %v6169
    %v6171 = vrot.slane %v3718, %v6170
    %v6172 = vsel %vm5933, %v6171, %v6167
    %v6173 = vlaneseq
    %v6174 = vshrl.u32 %v6173, 7
    %v6175 = vsub.s32 %v5935, %v6174
    %v6176 = vrot.slane %v3721, %v6175
    %v6177 = vsel %vm5940, %v6176, %v6172
    %v6178 = vlaneseq
    %v6179 = vshrl.u32 %v6178, 7
    %v6180 = vsub.s32 %v5942, %v6179
    %v6181 = vrot.slane %v3724, %v6180
    %v6182 = vsel %vm5947, %v6181, %v6177
    %v6183 = vlaneseq
    %v6184 = vshrl.u32 %v6183, 7
    %v6185 = vsub.s32 %v5949, %v6184
    %v6186 = vrot.slane %v3727, %v6185
    %v6187 = vsel %vm5954, %v6186, %v6182
    %v6188 = vlaneseq
    %v6189 = vshrl.u32 %v6188, 7
    %v6190 = vsub.s32 %v5956, %v6189
    %v6191 = vrot.slane %v3730, %v6190
    %v6192 = vsel %vm5961, %v6191, %v6187
    %v6193 = vlaneseq
    %v6194 = vshrl.u32 %v6193, 7
    %v6195 = vsub.s32 %v5963, %v6194
    %v6196 = vrot.slane %v3733, %v6195
    %v6197 = vsel %vm5968, %v6196, %v6192
    %v6198 = vlaneseq
    %v6199 = vshrl.u32 %v6198, 7
    %v6200 = vsub.s32 %v5881, %v6199
    %v6201 = vrot.slane %v3736, %v6200
    %v6202 = vlaneseq
    %v6203 = vshrl.u32 %v6202, 7
    %v6204 = vsub.s32 %v5886, %v6203
    %v6205 = vrot.slane %v3739, %v6204
    %v6206 = vsel %vm5891, %v6205, %v6201
    %v6207 = vlaneseq
    %v6208 = vshrl.u32 %v6207, 7
    %v6209 = vsub.s32 %v5893, %v6208
    %v6210 = vrot.slane %v3742, %v6209
    %v6211 = vsel %vm5898, %v6210, %v6206
    %v6212 = vlaneseq
    %v6213 = vshrl.u32 %v6212, 7
    %v6214 = vsub.s32 %v5900, %v6213
    %v6215 = vrot.slane %v3745, %v6214
    %v6216 = vsel %vm5905, %v6215, %v6211
    %v6217 = vlaneseq
    %v6218 = vshrl.u32 %v6217, 7
    %v6219 = vsub.s32 %v5907, %v6218
    %v6220 = vrot.slane %v3748, %v6219
    %v6221 = vsel %vm5912, %v6220, %v6216
    %v6222 = vlaneseq
    %v6223 = vshrl.u32 %v6222, 7
    %v6224 = vsub.s32 %v5914, %v6223
    %v6225 = vrot.slane %v3751, %v6224
    %v6226 = vsel %vm5919, %v6225, %v6221
    %v6227 = vlaneseq
    %v6228 = vshrl.u32 %v6227, 7
    %v6229 = vsub.s32 %v5921, %v6228
    %v6230 = vrot.slane %v3754, %v6229
    %v6231 = vsel %vm5926, %v6230, %v6226
    %v6232 = vlaneseq
    %v6233 = vshrl.u32 %v6232, 7
    %v6234 = vsub.s32 %v5928, %v6233
    %v6235 = vrot.slane %v3757, %v6234
    %v6236 = vsel %vm5933, %v6235, %v6231
    %v6237 = vlaneseq
    %v6238 = vshrl.u32 %v6237, 7
    %v6239 = vsub.s32 %v5935, %v6238
    %v6240 = vrot.slane %v3760, %v6239
    %v6241 = vsel %vm5940, %v6240, %v6236
    %v6242 = vlaneseq
    %v6243 = vshrl.u32 %v6242, 7
    %v6244 = vsub.s32 %v5942, %v6243
    %v6245 = vrot.slane %v3763, %v6244
    %v6246 = vsel %vm5947, %v6245, %v6241
    %v6247 = vlaneseq
    %v6248 = vshrl.u32 %v6247, 7
    %v6249 = vsub.s32 %v5949, %v6248
    %v6250 = vrot.slane %v3766, %v6249
    %v6251 = vsel %vm5954, %v6250, %v6246
    %v6252 = vlaneseq
    %v6253 = vshrl.u32 %v6252, 7
    %v6254 = vsub.s32 %v5956, %v6253
    %v6255 = vrot.slane %v3769, %v6254
    %v6256 = vsel %vm5961, %v6255, %v6251
    %v6257 = vlaneseq
    %v6258 = vshrl.u32 %v6257, 7
    %v6259 = vsub.s32 %v5963, %v6258
    %v6260 = vrot.slane %v3772, %v6259
    %v6261 = vsel %vm5968, %v6260, %v6256
    %v6262 = vlaneseq
    %v6263 = vshrl.u32 %v6262, 7
    %v6264 = vsub.s32 %v5970, %v6263
    %v6265 = vrot.slane %v3775, %v6264
    %v6266 = vsel %vm5975, %v6265, %v6261
    %v6267 = vlaneseq
    %v6268 = vshrl.u32 %v6267, 7
    %v6269 = vsub.s32 %v5977, %v6268
    %v6270 = vrot.slane %v3778, %v6269
    %v6271 = vsel %vm5982, %v6270, %v6266
    %v6272 = vlaneseq
    %v6273 = vshrl.u32 %v6272, 7
    %v6274 = vsub.s32 %v5984, %v6273
    %v6275 = vrot.slane %v3781, %v6274
    %v6276 = vsel %vm5989, %v6275, %v6271
    %v6277 = vlaneseq
    %v6278 = vshrl.u32 %v6277, 7
    %v6279 = vsub.s32 %v5881, %v6278
    %v6280 = vrot.slane %v3784, %v6279
    %v6281 = vlaneseq
    %v6282 = vshrl.u32 %v6281, 7
    %v6283 = vsub.s32 %v5886, %v6282
    %v6284 = vrot.slane %v3787, %v6283
    %v6285 = vsel %vm5891, %v6284, %v6280
    %v6286 = vlaneseq
    %v6287 = vshrl.u32 %v6286, 7
    %v6288 = vsub.s32 %v5893, %v6287
    %v6289 = vrot.slane %v3790, %v6288
    %v6290 = vsel %vm5898, %v6289, %v6285
    %v6291 = vlaneseq
    %v6292 = vshrl.u32 %v6291, 7
    %v6293 = vsub.s32 %v5900, %v6292
    %v6294 = vrot.slane %v3793, %v6293
    %v6295 = vsel %vm5905, %v6294, %v6290
    %v6296 = vlaneseq
    %v6297 = vshrl.u32 %v6296, 7
    %v6298 = vsub.s32 %v5907, %v6297
    %v6299 = vrot.slane %v3796, %v6298
    %v6300 = vsel %vm5912, %v6299, %v6295
    %v6301 = vlaneseq
    %v6302 = vshrl.u32 %v6301, 7
    %v6303 = vsub.s32 %v5914, %v6302
    %v6304 = vrot.slane %v3799, %v6303
    %v6305 = vsel %vm5919, %v6304, %v6300
    %v6306 = vlaneseq
    %v6307 = vshrl.u32 %v6306, 7
    %v6308 = vsub.s32 %v5921, %v6307
    %v6309 = vrot.slane %v3802, %v6308
    %v6310 = vsel %vm5926, %v6309, %v6305
    %v6311 = vlaneseq
    %v6312 = vshrl.u32 %v6311, 7
    %v6313 = vsub.s32 %v5928, %v6312
    %v6314 = vrot.slane %v3805, %v6313
    %v6315 = vsel %vm5933, %v6314, %v6310
    %v6316 = vlaneseq
    %v6317 = vshrl.u32 %v6316, 7
    %v6318 = vsub.s32 %v5935, %v6317
    %v6319 = vrot.slane %v3808, %v6318
    %v6320 = vsel %vm5940, %v6319, %v6315
    %v6321 = vlaneseq
    %v6322 = vshrl.u32 %v6321, 7
    %v6323 = vsub.s32 %v5942, %v6322
    %v6324 = vrot.slane %v3811, %v6323
    %v6325 = vsel %vm5947, %v6324, %v6320
    %v6326 = vlaneseq
    %v6327 = vshrl.u32 %v6326, 7
    %v6328 = vsub.s32 %v5949, %v6327
    %v6329 = vrot.slane %v3814, %v6328
    %v6330 = vsel %vm5954, %v6329, %v6325
    %v6331 = vlaneseq
    %v6332 = vshrl.u32 %v6331, 7
    %v6333 = vsub.s32 %v5956, %v6332
    %v6334 = vrot.slane %v3817, %v6333
    %v6335 = vsel %vm5961, %v6334, %v6330
    %v6336 = vlaneseq
    %v6337 = vshrl.u32 %v6336, 7
    %v6338 = vsub.s32 %v5963, %v6337
    %v6339 = vrot.slane %v3820, %v6338
    %v6340 = vsel %vm5968, %v6339, %v6335
    %v6341 = vlaneseq
    %v6342 = vshrl.u32 %v6341, 7
    %v6343 = vsub.s32 %v5881, %v6342
    %v6344 = vrot.slane %v3823, %v6343
    %v6345 = vlaneseq
    %v6346 = vshrl.u32 %v6345, 7
    %v6347 = vsub.s32 %v5886, %v6346
    %v6348 = vrot.slane %v3826, %v6347
    %v6349 = vsel %vm5891, %v6348, %v6344
    %v6350 = vlaneseq
    %v6351 = vshrl.u32 %v6350, 7
    %v6352 = vsub.s32 %v5893, %v6351
    %v6353 = vrot.slane %v3829, %v6352
    %v6354 = vsel %vm5898, %v6353, %v6349
    %v6355 = vlaneseq
    %v6356 = vshrl.u32 %v6355, 7
    %v6357 = vsub.s32 %v5900, %v6356
    %v6358 = vrot.slane %v3832, %v6357
    %v6359 = vsel %vm5905, %v6358, %v6354
    %v6360 = vlaneseq
    %v6361 = vshrl.u32 %v6360, 7
    %v6362 = vsub.s32 %v5907, %v6361
    %v6363 = vrot.slane %v3835, %v6362
    %v6364 = vsel %vm5912, %v6363, %v6359
    %v6365 = vlaneseq
    %v6366 = vshrl.u32 %v6365, 7
    %v6367 = vsub.s32 %v5914, %v6366
    %v6368 = vrot.slane %v3838, %v6367
    %v6369 = vsel %vm5919, %v6368, %v6364
    %v6370 = vlaneseq
    %v6371 = vshrl.u32 %v6370, 7
    %v6372 = vsub.s32 %v5921, %v6371
    %v6373 = vrot.slane %v3841, %v6372
    %v6374 = vsel %vm5926, %v6373, %v6369
    %v6375 = vlaneseq
    %v6376 = vshrl.u32 %v6375, 7
    %v6377 = vsub.s32 %v5928, %v6376
    %v6378 = vrot.slane %v3844, %v6377
    %v6379 = vsel %vm5933, %v6378, %v6374
    %v6380 = vlaneseq
    %v6381 = vshrl.u32 %v6380, 7
    %v6382 = vsub.s32 %v5935, %v6381
    %v6383 = vrot.slane %v3847, %v6382
    %v6384 = vsel %vm5940, %v6383, %v6379
    %v6385 = vlaneseq
    %v6386 = vshrl.u32 %v6385, 7
    %v6387 = vsub.s32 %v5942, %v6386
    %v6388 = vrot.slane %v3850, %v6387
    %v6389 = vsel %vm5947, %v6388, %v6384
    %v6390 = vlaneseq
    %v6391 = vshrl.u32 %v6390, 7
    %v6392 = vsub.s32 %v5949, %v6391
    %v6393 = vrot.slane %v3853, %v6392
    %v6394 = vsel %vm5954, %v6393, %v6389
    %v6395 = vlaneseq
    %v6396 = vshrl.u32 %v6395, 7
    %v6397 = vsub.s32 %v5956, %v6396
    %v6398 = vrot.slane %v3856, %v6397
    %v6399 = vsel %vm5961, %v6398, %v6394
    %v6400 = vlaneseq
    %v6401 = vshrl.u32 %v6400, 7
    %v6402 = vsub.s32 %v5963, %v6401
    %v6403 = vrot.slane %v3859, %v6402
    %v6404 = vsel %vm5968, %v6403, %v6399
    %v6405 = vlaneseq
    %v6406 = vshrl.u32 %v6405, 7
    %v6407 = vsub.s32 %v5970, %v6406
    %v6408 = vrot.slane %v3862, %v6407
    %v6409 = vsel %vm5975, %v6408, %v6404
    %v6410 = vlaneseq
    %v6411 = vshrl.u32 %v6410, 7
    %v6412 = vsub.s32 %v5977, %v6411
    %v6413 = vrot.slane %v3865, %v6412
    %v6414 = vsel %vm5982, %v6413, %v6409
    %v6415 = vlaneseq
    %v6416 = vshrl.u32 %v6415, 7
    %v6417 = vsub.s32 %v5984, %v6416
    %v6418 = vrot.slane %v3868, %v6417
    %v6419 = vsel %vm5989, %v6418, %v6414
    %v6420 = vlaneseq
    %v6421 = vshrl.u32 %v6420, 7
    %v6422 = vsub.s32 %v5881, %v6421
    %v6423 = vrot.slane %v3871, %v6422
    %v6424 = vlaneseq
    %v6425 = vshrl.u32 %v6424, 7
    %v6426 = vsub.s32 %v5886, %v6425
    %v6427 = vrot.slane %v3874, %v6426
    %v6428 = vsel %vm5891, %v6427, %v6423
    %v6429 = vlaneseq
    %v6430 = vshrl.u32 %v6429, 7
    %v6431 = vsub.s32 %v5893, %v6430
    %v6432 = vrot.slane %v3877, %v6431
    %v6433 = vsel %vm5898, %v6432, %v6428
    %v6434 = vlaneseq
    %v6435 = vshrl.u32 %v6434, 7
    %v6436 = vsub.s32 %v5900, %v6435
    %v6437 = vrot.slane %v3880, %v6436
    %v6438 = vsel %vm5905, %v6437, %v6433
    %v6439 = vlaneseq
    %v6440 = vshrl.u32 %v6439, 7
    %v6441 = vsub.s32 %v5907, %v6440
    %v6442 = vrot.slane %v3883, %v6441
    %v6443 = vsel %vm5912, %v6442, %v6438
    %v6444 = vlaneseq
    %v6445 = vshrl.u32 %v6444, 7
    %v6446 = vsub.s32 %v5914, %v6445
    %v6447 = vrot.slane %v3886, %v6446
    %v6448 = vsel %vm5919, %v6447, %v6443
    %v6449 = vlaneseq
    %v6450 = vshrl.u32 %v6449, 7
    %v6451 = vsub.s32 %v5921, %v6450
    %v6452 = vrot.slane %v3889, %v6451
    %v6453 = vsel %vm5926, %v6452, %v6448
    %v6454 = vlaneseq
    %v6455 = vshrl.u32 %v6454, 7
    %v6456 = vsub.s32 %v5928, %v6455
    %v6457 = vrot.slane %v3892, %v6456
    %v6458 = vsel %vm5933, %v6457, %v6453
    %v6459 = vlaneseq
    %v6460 = vshrl.u32 %v6459, 7
    %v6461 = vsub.s32 %v5935, %v6460
    %v6462 = vrot.slane %v3895, %v6461
    %v6463 = vsel %vm5940, %v6462, %v6458
    %v6464 = vlaneseq
    %v6465 = vshrl.u32 %v6464, 7
    %v6466 = vsub.s32 %v5942, %v6465
    %v6467 = vrot.slane %v3898, %v6466
    %v6468 = vsel %vm5947, %v6467, %v6463
    %v6469 = vlaneseq
    %v6470 = vshrl.u32 %v6469, 7
    %v6471 = vsub.s32 %v5949, %v6470
    %v6472 = vrot.slane %v3901, %v6471
    %v6473 = vsel %vm5954, %v6472, %v6468
    %v6474 = vlaneseq
    %v6475 = vshrl.u32 %v6474, 7
    %v6476 = vsub.s32 %v5956, %v6475
    %v6477 = vrot.slane %v3904, %v6476
    %v6478 = vsel %vm5961, %v6477, %v6473
    %v6479 = vlaneseq
    %v6480 = vshrl.u32 %v6479, 7
    %v6481 = vsub.s32 %v5963, %v6480
    %v6482 = vrot.slane %v3907, %v6481
    %v6483 = vsel %vm5968, %v6482, %v6478
    %v6484 = vlaneseq
    %v6485 = vshrl.u32 %v6484, 7
    %v6486 = vsub.s32 %v5881, %v6485
    %v6487 = vrot.slane %v3910, %v6486
    %v6488 = vlaneseq
    %v6489 = vshrl.u32 %v6488, 7
    %v6490 = vsub.s32 %v5886, %v6489
    %v6491 = vrot.slane %v3913, %v6490
    %v6492 = vsel %vm5891, %v6491, %v6487
    %v6493 = vlaneseq
    %v6494 = vshrl.u32 %v6493, 7
    %v6495 = vsub.s32 %v5893, %v6494
    %v6496 = vrot.slane %v3916, %v6495
    %v6497 = vsel %vm5898, %v6496, %v6492
    %v6498 = vlaneseq
    %v6499 = vshrl.u32 %v6498, 7
    %v6500 = vsub.s32 %v5900, %v6499
    %v6501 = vrot.slane %v3919, %v6500
    %v6502 = vsel %vm5905, %v6501, %v6497
    %v6503 = vlaneseq
    %v6504 = vshrl.u32 %v6503, 7
    %v6505 = vsub.s32 %v5907, %v6504
    %v6506 = vrot.slane %v3922, %v6505
    %v6507 = vsel %vm5912, %v6506, %v6502
    %v6508 = vlaneseq
    %v6509 = vshrl.u32 %v6508, 7
    %v6510 = vsub.s32 %v5914, %v6509
    %v6511 = vrot.slane %v3925, %v6510
    %v6512 = vsel %vm5919, %v6511, %v6507
    %v6513 = vlaneseq
    %v6514 = vshrl.u32 %v6513, 7
    %v6515 = vsub.s32 %v5921, %v6514
    %v6516 = vrot.slane %v3928, %v6515
    %v6517 = vsel %vm5926, %v6516, %v6512
    %v6518 = vlaneseq
    %v6519 = vshrl.u32 %v6518, 7
    %v6520 = vsub.s32 %v5928, %v6519
    %v6521 = vrot.slane %v3931, %v6520
    %v6522 = vsel %vm5933, %v6521, %v6517
    %v6523 = vlaneseq
    %v6524 = vshrl.u32 %v6523, 7
    %v6525 = vsub.s32 %v5935, %v6524
    %v6526 = vrot.slane %v3934, %v6525
    %v6527 = vsel %vm5940, %v6526, %v6522
    %v6528 = vlaneseq
    %v6529 = vshrl.u32 %v6528, 7
    %v6530 = vsub.s32 %v5942, %v6529
    %v6531 = vrot.slane %v3937, %v6530
    %v6532 = vsel %vm5947, %v6531, %v6527
    %v6533 = vlaneseq
    %v6534 = vshrl.u32 %v6533, 7
    %v6535 = vsub.s32 %v5949, %v6534
    %v6536 = vrot.slane %v3940, %v6535
    %v6537 = vsel %vm5954, %v6536, %v6532
    %v6538 = vlaneseq
    %v6539 = vshrl.u32 %v6538, 7
    %v6540 = vsub.s32 %v5956, %v6539
    %v6541 = vrot.slane %v3943, %v6540
    %v6542 = vsel %vm5961, %v6541, %v6537
    %v6543 = vlaneseq
    %v6544 = vshrl.u32 %v6543, 7
    %v6545 = vsub.s32 %v5963, %v6544
    %v6546 = vrot.slane %v3946, %v6545
    %v6547 = vsel %vm5968, %v6546, %v6542
    %v6548 = vlaneseq
    %v6549 = vshrl.u32 %v6548, 7
    %v6550 = vsub.s32 %v5970, %v6549
    %v6551 = vrot.slane %v3949, %v6550
    %v6552 = vsel %vm5975, %v6551, %v6547
    %v6553 = vlaneseq
    %v6554 = vshrl.u32 %v6553, 7
    %v6555 = vsub.s32 %v5977, %v6554
    %v6556 = vrot.slane %v3952, %v6555
    %v6557 = vsel %vm5982, %v6556, %v6552
    %v6558 = vlaneseq
    %v6559 = vshrl.u32 %v6558, 7
    %v6560 = vsub.s32 %v5984, %v6559
    %v6561 = vrot.slane %v3955, %v6560
    %v6562 = vsel %vm5989, %v6561, %v6557
    %v6563 = vlaneseq
    %v6564 = vshrl.u32 %v6563, 7
    %v6565 = vsub.s32 %v5881, %v6564
    %v6566 = vrot.slane %v3958, %v6565
    %v6567 = vlaneseq
    %v6568 = vshrl.u32 %v6567, 7
    %v6569 = vsub.s32 %v5886, %v6568
    %v6570 = vrot.slane %v3961, %v6569
    %v6571 = vsel %vm5891, %v6570, %v6566
    %v6572 = vlaneseq
    %v6573 = vshrl.u32 %v6572, 7
    %v6574 = vsub.s32 %v5893, %v6573
    %v6575 = vrot.slane %v3964, %v6574
    %v6576 = vsel %vm5898, %v6575, %v6571
    %v6577 = vlaneseq
    %v6578 = vshrl.u32 %v6577, 7
    %v6579 = vsub.s32 %v5900, %v6578
    %v6580 = vrot.slane %v3967, %v6579
    %v6581 = vsel %vm5905, %v6580, %v6576
    %v6582 = vlaneseq
    %v6583 = vshrl.u32 %v6582, 7
    %v6584 = vsub.s32 %v5907, %v6583
    %v6585 = vrot.slane %v3970, %v6584
    %v6586 = vsel %vm5912, %v6585, %v6581
    %v6587 = vlaneseq
    %v6588 = vshrl.u32 %v6587, 7
    %v6589 = vsub.s32 %v5914, %v6588
    %v6590 = vrot.slane %v3973, %v6589
    %v6591 = vsel %vm5919, %v6590, %v6586
    %v6592 = vlaneseq
    %v6593 = vshrl.u32 %v6592, 7
    %v6594 = vsub.s32 %v5921, %v6593
    %v6595 = vrot.slane %v3976, %v6594
    %v6596 = vsel %vm5926, %v6595, %v6591
    %v6597 = vlaneseq
    %v6598 = vshrl.u32 %v6597, 7
    %v6599 = vsub.s32 %v5928, %v6598
    %v6600 = vrot.slane %v3979, %v6599
    %v6601 = vsel %vm5933, %v6600, %v6596
    %v6602 = vlaneseq
    %v6603 = vshrl.u32 %v6602, 7
    %v6604 = vsub.s32 %v5935, %v6603
    %v6605 = vrot.slane %v3982, %v6604
    %v6606 = vsel %vm5940, %v6605, %v6601
    %v6607 = vlaneseq
    %v6608 = vshrl.u32 %v6607, 7
    %v6609 = vsub.s32 %v5942, %v6608
    %v6610 = vrot.slane %v3985, %v6609
    %v6611 = vsel %vm5947, %v6610, %v6606
    %v6612 = vlaneseq
    %v6613 = vshrl.u32 %v6612, 7
    %v6614 = vsub.s32 %v5949, %v6613
    %v6615 = vrot.slane %v3988, %v6614
    %v6616 = vsel %vm5954, %v6615, %v6611
    %v6617 = vlaneseq
    %v6618 = vshrl.u32 %v6617, 7
    %v6619 = vsub.s32 %v5956, %v6618
    %v6620 = vrot.slane %v3991, %v6619
    %v6621 = vsel %vm5961, %v6620, %v6616
    %v6622 = vlaneseq
    %v6623 = vshrl.u32 %v6622, 7
    %v6624 = vsub.s32 %v5963, %v6623
    %v6625 = vrot.slane %v3994, %v6624
    %v6626 = vsel %vm5968, %v6625, %v6621
    %v6627 = vlaneseq
    %v6628 = vshrl.u32 %v6627, 7
    %v6629 = vsub.s32 %v5881, %v6628
    %v6630 = vrot.slane %v3997, %v6629
    %v6631 = vlaneseq
    %v6632 = vshrl.u32 %v6631, 7
    %v6633 = vsub.s32 %v5886, %v6632
    %v6634 = vrot.slane %v4000, %v6633
    %v6635 = vsel %vm5891, %v6634, %v6630
    %v6636 = vlaneseq
    %v6637 = vshrl.u32 %v6636, 7
    %v6638 = vsub.s32 %v5893, %v6637
    %v6639 = vrot.slane %v4003, %v6638
    %v6640 = vsel %vm5898, %v6639, %v6635
    %v6641 = vlaneseq
    %v6642 = vshrl.u32 %v6641, 7
    %v6643 = vsub.s32 %v5900, %v6642
    %v6644 = vrot.slane %v4006, %v6643
    %v6645 = vsel %vm5905, %v6644, %v6640
    %v6646 = vlaneseq
    %v6647 = vshrl.u32 %v6646, 7
    %v6648 = vsub.s32 %v5907, %v6647
    %v6649 = vrot.slane %v4009, %v6648
    %v6650 = vsel %vm5912, %v6649, %v6645
    %v6651 = vlaneseq
    %v6652 = vshrl.u32 %v6651, 7
    %v6653 = vsub.s32 %v5914, %v6652
    %v6654 = vrot.slane %v4012, %v6653
    %v6655 = vsel %vm5919, %v6654, %v6650
    %v6656 = vlaneseq
    %v6657 = vshrl.u32 %v6656, 7
    %v6658 = vsub.s32 %v5921, %v6657
    %v6659 = vrot.slane %v4015, %v6658
    %v6660 = vsel %vm5926, %v6659, %v6655
    %v6661 = vlaneseq
    %v6662 = vshrl.u32 %v6661, 7
    %v6663 = vsub.s32 %v5928, %v6662
    %v6664 = vrot.slane %v4018, %v6663
    %v6665 = vsel %vm5933, %v6664, %v6660
    %v6666 = vlaneseq
    %v6667 = vshrl.u32 %v6666, 7
    %v6668 = vsub.s32 %v5935, %v6667
    %v6669 = vrot.slane %v4021, %v6668
    %v6670 = vsel %vm5940, %v6669, %v6665
    %v6671 = vlaneseq
    %v6672 = vshrl.u32 %v6671, 7
    %v6673 = vsub.s32 %v5942, %v6672
    %v6674 = vrot.slane %v4024, %v6673
    %v6675 = vsel %vm5947, %v6674, %v6670
    %v6676 = vlaneseq
    %v6677 = vshrl.u32 %v6676, 7
    %v6678 = vsub.s32 %v5949, %v6677
    %v6679 = vrot.slane %v4027, %v6678
    %v6680 = vsel %vm5954, %v6679, %v6675
    %v6681 = vlaneseq
    %v6682 = vshrl.u32 %v6681, 7
    %v6683 = vsub.s32 %v5956, %v6682
    %v6684 = vrot.slane %v4030, %v6683
    %v6685 = vsel %vm5961, %v6684, %v6680
    %v6686 = vlaneseq
    %v6687 = vshrl.u32 %v6686, 7
    %v6688 = vsub.s32 %v5963, %v6687
    %v6689 = vrot.slane %v4033, %v6688
    %v6690 = vsel %vm5968, %v6689, %v6685
    %v6691 = vlaneseq
    %v6692 = vshrl.u32 %v6691, 7
    %v6693 = vsub.s32 %v5970, %v6692
    %v6694 = vrot.slane %v4036, %v6693
    %v6695 = vsel %vm5975, %v6694, %v6690
    %v6696 = vlaneseq
    %v6697 = vshrl.u32 %v6696, 7
    %v6698 = vsub.s32 %v5977, %v6697
    %v6699 = vrot.slane %v4039, %v6698
    %v6700 = vsel %vm5982, %v6699, %v6695
    %v6701 = vlaneseq
    %v6702 = vshrl.u32 %v6701, 7
    %v6703 = vsub.s32 %v5984, %v6702
    %v6704 = vrot.slane %v4042, %v6703
    %v6705 = vsel %vm5989, %v6704, %v6700
    %v6706 = vlaneseq
    %v6707 = vshrl.u32 %v6706, 7
    %v6708 = vsub.s32 %v5881, %v6707
    %v6709 = vrot.slane %v4045, %v6708
    %v6710 = vlaneseq
    %v6711 = vshrl.u32 %v6710, 7
    %v6712 = vsub.s32 %v5886, %v6711
    %v6713 = vrot.slane %v4048, %v6712
    %v6714 = vsel %vm5891, %v6713, %v6709
    %v6715 = vlaneseq
    %v6716 = vshrl.u32 %v6715, 7
    %v6717 = vsub.s32 %v5893, %v6716
    %v6718 = vrot.slane %v4051, %v6717
    %v6719 = vsel %vm5898, %v6718, %v6714
    %v6720 = vlaneseq
    %v6721 = vshrl.u32 %v6720, 7
    %v6722 = vsub.s32 %v5900, %v6721
    %v6723 = vrot.slane %v4054, %v6722
    %v6724 = vsel %vm5905, %v6723, %v6719
    %v6725 = vlaneseq
    %v6726 = vshrl.u32 %v6725, 7
    %v6727 = vsub.s32 %v5907, %v6726
    %v6728 = vrot.slane %v4057, %v6727
    %v6729 = vsel %vm5912, %v6728, %v6724
    %v6730 = vlaneseq
    %v6731 = vshrl.u32 %v6730, 7
    %v6732 = vsub.s32 %v5914, %v6731
    %v6733 = vrot.slane %v4060, %v6732
    %v6734 = vsel %vm5919, %v6733, %v6729
    %v6735 = vlaneseq
    %v6736 = vshrl.u32 %v6735, 7
    %v6737 = vsub.s32 %v5921, %v6736
    %v6738 = vrot.slane %v4063, %v6737
    %v6739 = vsel %vm5926, %v6738, %v6734
    %v6740 = vlaneseq
    %v6741 = vshrl.u32 %v6740, 7
    %v6742 = vsub.s32 %v5928, %v6741
    %v6743 = vrot.slane %v4066, %v6742
    %v6744 = vsel %vm5933, %v6743, %v6739
    %v6745 = vlaneseq
    %v6746 = vshrl.u32 %v6745, 7
    %v6747 = vsub.s32 %v5935, %v6746
    %v6748 = vrot.slane %v4069, %v6747
    %v6749 = vsel %vm5940, %v6748, %v6744
    %v6750 = vlaneseq
    %v6751 = vshrl.u32 %v6750, 7
    %v6752 = vsub.s32 %v5942, %v6751
    %v6753 = vrot.slane %v4072, %v6752
    %v6754 = vsel %vm5947, %v6753, %v6749
    %v6755 = vlaneseq
    %v6756 = vshrl.u32 %v6755, 7
    %v6757 = vsub.s32 %v5949, %v6756
    %v6758 = vrot.slane %v4075, %v6757
    %v6759 = vsel %vm5954, %v6758, %v6754
    %v6760 = vlaneseq
    %v6761 = vshrl.u32 %v6760, 7
    %v6762 = vsub.s32 %v5956, %v6761
    %v6763 = vrot.slane %v4078, %v6762
    %v6764 = vsel %vm5961, %v6763, %v6759
    %v6765 = vlaneseq
    %v6766 = vshrl.u32 %v6765, 7
    %v6767 = vsub.s32 %v5963, %v6766
    %v6768 = vrot.slane %v4081, %v6767
    %v6769 = vsel %vm5968, %v6768, %v6764
    %v6770 = vlaneseq
    %v6771 = vshrl.u32 %v6770, 7
    %v6772 = vsub.s32 %v5881, %v6771
    %v6773 = vrot.slane %v4084, %v6772
    %v6774 = vlaneseq
    %v6775 = vshrl.u32 %v6774, 7
    %v6776 = vsub.s32 %v5886, %v6775
    %v6777 = vrot.slane %v4087, %v6776
    %v6778 = vsel %vm5891, %v6777, %v6773
    %v6779 = vlaneseq
    %v6780 = vshrl.u32 %v6779, 7
    %v6781 = vsub.s32 %v5893, %v6780
    %v6782 = vrot.slane %v4090, %v6781
    %v6783 = vsel %vm5898, %v6782, %v6778
    %v6784 = vlaneseq
    %v6785 = vshrl.u32 %v6784, 7
    %v6786 = vsub.s32 %v5900, %v6785
    %v6787 = vrot.slane %v4093, %v6786
    %v6788 = vsel %vm5905, %v6787, %v6783
    %v6789 = vlaneseq
    %v6790 = vshrl.u32 %v6789, 7
    %v6791 = vsub.s32 %v5907, %v6790
    %v6792 = vrot.slane %v4096, %v6791
    %v6793 = vsel %vm5912, %v6792, %v6788
    %v6794 = vlaneseq
    %v6795 = vshrl.u32 %v6794, 7
    %v6796 = vsub.s32 %v5914, %v6795
    %v6797 = vrot.slane %v4099, %v6796
    %v6798 = vsel %vm5919, %v6797, %v6793
    %v6799 = vlaneseq
    %v6800 = vshrl.u32 %v6799, 7
    %v6801 = vsub.s32 %v5921, %v6800
    %v6802 = vrot.slane %v4102, %v6801
    %v6803 = vsel %vm5926, %v6802, %v6798
    %v6804 = vlaneseq
    %v6805 = vshrl.u32 %v6804, 7
    %v6806 = vsub.s32 %v5928, %v6805
    %v6807 = vrot.slane %v4105, %v6806
    %v6808 = vsel %vm5933, %v6807, %v6803
    %v6809 = vlaneseq
    %v6810 = vshrl.u32 %v6809, 7
    %v6811 = vsub.s32 %v5935, %v6810
    %v6812 = vrot.slane %v4108, %v6811
    %v6813 = vsel %vm5940, %v6812, %v6808
    %v6814 = vlaneseq
    %v6815 = vshrl.u32 %v6814, 7
    %v6816 = vsub.s32 %v5942, %v6815
    %v6817 = vrot.slane %v4111, %v6816
    %v6818 = vsel %vm5947, %v6817, %v6813
    %v6819 = vlaneseq
    %v6820 = vshrl.u32 %v6819, 7
    %v6821 = vsub.s32 %v5949, %v6820
    %v6822 = vrot.slane %v4114, %v6821
    %v6823 = vsel %vm5954, %v6822, %v6818
    %v6824 = vlaneseq
    %v6825 = vshrl.u32 %v6824, 7
    %v6826 = vsub.s32 %v5956, %v6825
    %v6827 = vrot.slane %v4117, %v6826
    %v6828 = vsel %vm5961, %v6827, %v6823
    %v6829 = vlaneseq
    %v6830 = vshrl.u32 %v6829, 7
    %v6831 = vsub.s32 %v5963, %v6830
    %v6832 = vrot.slane %v4120, %v6831
    %v6833 = vsel %vm5968, %v6832, %v6828
    %v6834 = vlaneseq
    %v6835 = vshrl.u32 %v6834, 7
    %v6836 = vsub.s32 %v5970, %v6835
    %v6837 = vrot.slane %v4123, %v6836
    %v6838 = vsel %vm5975, %v6837, %v6833
    %v6839 = vlaneseq
    %v6840 = vshrl.u32 %v6839, 7
    %v6841 = vsub.s32 %v5977, %v6840
    %v6842 = vrot.slane %v4126, %v6841
    %v6843 = vsel %vm5982, %v6842, %v6838
    %v6844 = vlaneseq
    %v6845 = vshrl.u32 %v6844, 7
    %v6846 = vsub.s32 %v5984, %v6845
    %v6847 = vrot.slane %v4129, %v6846
    %v6848 = vsel %vm5989, %v6847, %v6843
    %v6849 = vlaneseq
    %v6850 = vshrl.u32 %v6849, 7
    %v6851 = vsub.s32 %v5881, %v6850
    %v6852 = vrot.slane %v4132, %v6851
    %v6853 = vlaneseq
    %v6854 = vshrl.u32 %v6853, 7
    %v6855 = vsub.s32 %v5886, %v6854
    %v6856 = vrot.slane %v4135, %v6855
    %v6857 = vsel %vm5891, %v6856, %v6852
    %v6858 = vlaneseq
    %v6859 = vshrl.u32 %v6858, 7
    %v6860 = vsub.s32 %v5893, %v6859
    %v6861 = vrot.slane %v4138, %v6860
    %v6862 = vsel %vm5898, %v6861, %v6857
    %v6863 = vlaneseq
    %v6864 = vshrl.u32 %v6863, 7
    %v6865 = vsub.s32 %v5900, %v6864
    %v6866 = vrot.slane %v4141, %v6865
    %v6867 = vsel %vm5905, %v6866, %v6862
    %v6868 = vlaneseq
    %v6869 = vshrl.u32 %v6868, 7
    %v6870 = vsub.s32 %v5907, %v6869
    %v6871 = vrot.slane %v4144, %v6870
    %v6872 = vsel %vm5912, %v6871, %v6867
    %v6873 = vlaneseq
    %v6874 = vshrl.u32 %v6873, 7
    %v6875 = vsub.s32 %v5914, %v6874
    %v6876 = vrot.slane %v4147, %v6875
    %v6877 = vsel %vm5919, %v6876, %v6872
    %v6878 = vlaneseq
    %v6879 = vshrl.u32 %v6878, 7
    %v6880 = vsub.s32 %v5921, %v6879
    %v6881 = vrot.slane %v4150, %v6880
    %v6882 = vsel %vm5926, %v6881, %v6877
    %v6883 = vlaneseq
    %v6884 = vshrl.u32 %v6883, 7
    %v6885 = vsub.s32 %v5928, %v6884
    %v6886 = vrot.slane %v4153, %v6885
    %v6887 = vsel %vm5933, %v6886, %v6882
    %v6888 = vlaneseq
    %v6889 = vshrl.u32 %v6888, 7
    %v6890 = vsub.s32 %v5935, %v6889
    %v6891 = vrot.slane %v4156, %v6890
    %v6892 = vsel %vm5940, %v6891, %v6887
    %v6893 = vlaneseq
    %v6894 = vshrl.u32 %v6893, 7
    %v6895 = vsub.s32 %v5942, %v6894
    %v6896 = vrot.slane %v4159, %v6895
    %v6897 = vsel %vm5947, %v6896, %v6892
    %v6898 = vlaneseq
    %v6899 = vshrl.u32 %v6898, 7
    %v6900 = vsub.s32 %v5949, %v6899
    %v6901 = vrot.slane %v4162, %v6900
    %v6902 = vsel %vm5954, %v6901, %v6897
    %v6903 = vlaneseq
    %v6904 = vshrl.u32 %v6903, 7
    %v6905 = vsub.s32 %v5956, %v6904
    %v6906 = vrot.slane %v4165, %v6905
    %v6907 = vsel %vm5961, %v6906, %v6902
    %v6908 = vlaneseq
    %v6909 = vshrl.u32 %v6908, 7
    %v6910 = vsub.s32 %v5963, %v6909
    %v6911 = vrot.slane %v4168, %v6910
    %v6912 = vsel %vm5968, %v6911, %v6907
    %v6913 = vlaneseq
    %v6914 = vshrl.u32 %v6913, 7
    %v6915 = vsub.s32 %v5881, %v6914
    %v6916 = vrot.slane %v4171, %v6915
    %v6917 = vlaneseq
    %v6918 = vshrl.u32 %v6917, 7
    %v6919 = vsub.s32 %v5886, %v6918
    %v6920 = vrot.slane %v4174, %v6919
    %v6921 = vsel %vm5891, %v6920, %v6916
    %v6922 = vlaneseq
    %v6923 = vshrl.u32 %v6922, 7
    %v6924 = vsub.s32 %v5893, %v6923
    %v6925 = vrot.slane %v4177, %v6924
    %v6926 = vsel %vm5898, %v6925, %v6921
    %v6927 = vlaneseq
    %v6928 = vshrl.u32 %v6927, 7
    %v6929 = vsub.s32 %v5900, %v6928
    %v6930 = vrot.slane %v4180, %v6929
    %v6931 = vsel %vm5905, %v6930, %v6926
    %v6932 = vlaneseq
    %v6933 = vshrl.u32 %v6932, 7
    %v6934 = vsub.s32 %v5907, %v6933
    %v6935 = vrot.slane %v4183, %v6934
    %v6936 = vsel %vm5912, %v6935, %v6931
    %v6937 = vlaneseq
    %v6938 = vshrl.u32 %v6937, 7
    %v6939 = vsub.s32 %v5914, %v6938
    %v6940 = vrot.slane %v4186, %v6939
    %v6941 = vsel %vm5919, %v6940, %v6936
    %v6942 = vlaneseq
    %v6943 = vshrl.u32 %v6942, 7
    %v6944 = vsub.s32 %v5921, %v6943
    %v6945 = vrot.slane %v4189, %v6944
    %v6946 = vsel %vm5926, %v6945, %v6941
    %v6947 = vlaneseq
    %v6948 = vshrl.u32 %v6947, 7
    %v6949 = vsub.s32 %v5928, %v6948
    %v6950 = vrot.slane %v4192, %v6949
    %v6951 = vsel %vm5933, %v6950, %v6946
    %v6952 = vlaneseq
    %v6953 = vshrl.u32 %v6952, 7
    %v6954 = vsub.s32 %v5935, %v6953
    %v6955 = vrot.slane %v4195, %v6954
    %v6956 = vsel %vm5940, %v6955, %v6951
    %v6957 = vlaneseq
    %v6958 = vshrl.u32 %v6957, 7
    %v6959 = vsub.s32 %v5942, %v6958
    %v6960 = vrot.slane %v4198, %v6959
    %v6961 = vsel %vm5947, %v6960, %v6956
    %v6962 = vlaneseq
    %v6963 = vshrl.u32 %v6962, 7
    %v6964 = vsub.s32 %v5949, %v6963
    %v6965 = vrot.slane %v4201, %v6964
    %v6966 = vsel %vm5954, %v6965, %v6961
    %v6967 = vlaneseq
    %v6968 = vshrl.u32 %v6967, 7
    %v6969 = vsub.s32 %v5956, %v6968
    %v6970 = vrot.slane %v4204, %v6969
    %v6971 = vsel %vm5961, %v6970, %v6966
    %v6972 = vlaneseq
    %v6973 = vshrl.u32 %v6972, 7
    %v6974 = vsub.s32 %v5963, %v6973
    %v6975 = vrot.slane %v4207, %v6974
    %v6976 = vsel %vm5968, %v6975, %v6971
    %v6977 = vlaneseq
    %v6978 = vshrl.u32 %v6977, 7
    %v6979 = vsub.s32 %v5970, %v6978
    %v6980 = vrot.slane %v4210, %v6979
    %v6981 = vsel %vm5975, %v6980, %v6976
    %v6982 = vlaneseq
    %v6983 = vshrl.u32 %v6982, 7
    %v6984 = vsub.s32 %v5977, %v6983
    %v6985 = vrot.slane %v4213, %v6984
    %v6986 = vsel %vm5982, %v6985, %v6981
    %v6987 = vlaneseq
    %v6988 = vshrl.u32 %v6987, 7
    %v6989 = vsub.s32 %v5984, %v6988
    %v6990 = vrot.slane %v4216, %v6989
    %v6991 = vsel %vm5989, %v6990, %v6986
    %v6992 = vlaneseq
    %v6993 = vshrl.u32 %v6992, 7
    %v6994 = vsub.s32 %v5881, %v6993
    %v6995 = vrot.slane %v4219, %v6994
    %v6996 = vlaneseq
    %v6997 = vshrl.u32 %v6996, 7
    %v6998 = vsub.s32 %v5886, %v6997
    %v6999 = vrot.slane %v4222, %v6998
    %v7000 = vsel %vm5891, %v6999, %v6995
    %v7001 = vlaneseq
    %v7002 = vshrl.u32 %v7001, 7
    %v7003 = vsub.s32 %v5893, %v7002
    %v7004 = vrot.slane %v4225, %v7003
    %v7005 = vsel %vm5898, %v7004, %v7000
    %v7006 = vlaneseq
    %v7007 = vshrl.u32 %v7006, 7
    %v7008 = vsub.s32 %v5900, %v7007
    %v7009 = vrot.slane %v4228, %v7008
    %v7010 = vsel %vm5905, %v7009, %v7005
    %v7011 = vlaneseq
    %v7012 = vshrl.u32 %v7011, 7
    %v7013 = vsub.s32 %v5907, %v7012
    %v7014 = vrot.slane %v4231, %v7013
    %v7015 = vsel %vm5912, %v7014, %v7010
    %v7016 = vlaneseq
    %v7017 = vshrl.u32 %v7016, 7
    %v7018 = vsub.s32 %v5914, %v7017
    %v7019 = vrot.slane %v4234, %v7018
    %v7020 = vsel %vm5919, %v7019, %v7015
    %v7021 = vlaneseq
    %v7022 = vshrl.u32 %v7021, 7
    %v7023 = vsub.s32 %v5921, %v7022
    %v7024 = vrot.slane %v4237, %v7023
    %v7025 = vsel %vm5926, %v7024, %v7020
    %v7026 = vlaneseq
    %v7027 = vshrl.u32 %v7026, 7
    %v7028 = vsub.s32 %v5928, %v7027
    %v7029 = vrot.slane %v4240, %v7028
    %v7030 = vsel %vm5933, %v7029, %v7025
    %v7031 = vlaneseq
    %v7032 = vshrl.u32 %v7031, 7
    %v7033 = vsub.s32 %v5935, %v7032
    %v7034 = vrot.slane %v4243, %v7033
    %v7035 = vsel %vm5940, %v7034, %v7030
    %v7036 = vlaneseq
    %v7037 = vshrl.u32 %v7036, 7
    %v7038 = vsub.s32 %v5942, %v7037
    %v7039 = vrot.slane %v4246, %v7038
    %v7040 = vsel %vm5947, %v7039, %v7035
    %v7041 = vlaneseq
    %v7042 = vshrl.u32 %v7041, 7
    %v7043 = vsub.s32 %v5949, %v7042
    %v7044 = vrot.slane %v4249, %v7043
    %v7045 = vsel %vm5954, %v7044, %v7040
    %v7046 = vlaneseq
    %v7047 = vshrl.u32 %v7046, 7
    %v7048 = vsub.s32 %v5956, %v7047
    %v7049 = vrot.slane %v4252, %v7048
    %v7050 = vsel %vm5961, %v7049, %v7045
    %v7051 = vlaneseq
    %v7052 = vshrl.u32 %v7051, 7
    %v7053 = vsub.s32 %v5963, %v7052
    %v7054 = vrot.slane %v4255, %v7053
    %v7055 = vsel %vm5968, %v7054, %v7050
    %v7056 = vlaneseq
    %v7057 = vshrl.u32 %v7056, 7
    %v7058 = vsub.s32 %v5881, %v7057
    %v7059 = vrot.slane %v4258, %v7058
    %v7060 = vlaneseq
    %v7061 = vshrl.u32 %v7060, 7
    %v7062 = vsub.s32 %v5886, %v7061
    %v7063 = vrot.slane %v4261, %v7062
    %v7064 = vsel %vm5891, %v7063, %v7059
    %v7065 = vlaneseq
    %v7066 = vshrl.u32 %v7065, 7
    %v7067 = vsub.s32 %v5893, %v7066
    %v7068 = vrot.slane %v4264, %v7067
    %v7069 = vsel %vm5898, %v7068, %v7064
    %v7070 = vlaneseq
    %v7071 = vshrl.u32 %v7070, 7
    %v7072 = vsub.s32 %v5900, %v7071
    %v7073 = vrot.slane %v4267, %v7072
    %v7074 = vsel %vm5905, %v7073, %v7069
    %v7075 = vlaneseq
    %v7076 = vshrl.u32 %v7075, 7
    %v7077 = vsub.s32 %v5907, %v7076
    %v7078 = vrot.slane %v4270, %v7077
    %v7079 = vsel %vm5912, %v7078, %v7074
    %v7080 = vlaneseq
    %v7081 = vshrl.u32 %v7080, 7
    %v7082 = vsub.s32 %v5914, %v7081
    %v7083 = vrot.slane %v4273, %v7082
    %v7084 = vsel %vm5919, %v7083, %v7079
    %v7085 = vlaneseq
    %v7086 = vshrl.u32 %v7085, 7
    %v7087 = vsub.s32 %v5921, %v7086
    %v7088 = vrot.slane %v4276, %v7087
    %v7089 = vsel %vm5926, %v7088, %v7084
    %v7090 = vlaneseq
    %v7091 = vshrl.u32 %v7090, 7
    %v7092 = vsub.s32 %v5928, %v7091
    %v7093 = vrot.slane %v4279, %v7092
    %v7094 = vsel %vm5933, %v7093, %v7089
    %v7095 = vlaneseq
    %v7096 = vshrl.u32 %v7095, 7
    %v7097 = vsub.s32 %v5935, %v7096
    %v7098 = vrot.slane %v4282, %v7097
    %v7099 = vsel %vm5940, %v7098, %v7094
    %v7100 = vlaneseq
    %v7101 = vshrl.u32 %v7100, 7
    %v7102 = vsub.s32 %v5942, %v7101
    %v7103 = vrot.slane %v4285, %v7102
    %v7104 = vsel %vm5947, %v7103, %v7099
    %v7105 = vlaneseq
    %v7106 = vshrl.u32 %v7105, 7
    %v7107 = vsub.s32 %v5949, %v7106
    %v7108 = vrot.slane %v4288, %v7107
    %v7109 = vsel %vm5954, %v7108, %v7104
    %v7110 = vlaneseq
    %v7111 = vshrl.u32 %v7110, 7
    %v7112 = vsub.s32 %v5956, %v7111
    %v7113 = vrot.slane %v4291, %v7112
    %v7114 = vsel %vm5961, %v7113, %v7109
    %v7115 = vlaneseq
    %v7116 = vshrl.u32 %v7115, 7
    %v7117 = vsub.s32 %v5963, %v7116
    %v7118 = vrot.slane %v4294, %v7117
    %v7119 = vsel %vm5968, %v7118, %v7114
    %v7120 = vlaneseq
    %v7121 = vshrl.u32 %v7120, 7
    %v7122 = vsub.s32 %v5970, %v7121
    %v7123 = vrot.slane %v4297, %v7122
    %v7124 = vsel %vm5975, %v7123, %v7119
    %v7125 = vlaneseq
    %v7126 = vshrl.u32 %v7125, 7
    %v7127 = vsub.s32 %v5977, %v7126
    %v7128 = vrot.slane %v4300, %v7127
    %v7129 = vsel %vm5982, %v7128, %v7124
    %v7130 = vlaneseq
    %v7131 = vshrl.u32 %v7130, 7
    %v7132 = vsub.s32 %v5984, %v7131
    %v7133 = vrot.slane %v4303, %v7132
    %v7134 = vsel %vm5989, %v7133, %v7129
    %v7135 = vlaneseq
    %v7136 = vshrl.u32 %v7135, 7
    %v7137 = vsub.s32 %v5881, %v7136
    %v7138 = vrot.slane %v4306, %v7137
    %v7139 = vlaneseq
    %v7140 = vshrl.u32 %v7139, 7
    %v7141 = vsub.s32 %v5886, %v7140
    %v7142 = vrot.slane %v4309, %v7141
    %v7143 = vsel %vm5891, %v7142, %v7138
    %v7144 = vlaneseq
    %v7145 = vshrl.u32 %v7144, 7
    %v7146 = vsub.s32 %v5893, %v7145
    %v7147 = vrot.slane %v4312, %v7146
    %v7148 = vsel %vm5898, %v7147, %v7143
    %v7149 = vlaneseq
    %v7150 = vshrl.u32 %v7149, 7
    %v7151 = vsub.s32 %v5900, %v7150
    %v7152 = vrot.slane %v4315, %v7151
    %v7153 = vsel %vm5905, %v7152, %v7148
    %v7154 = vlaneseq
    %v7155 = vshrl.u32 %v7154, 7
    %v7156 = vsub.s32 %v5907, %v7155
    %v7157 = vrot.slane %v4318, %v7156
    %v7158 = vsel %vm5912, %v7157, %v7153
    %v7159 = vlaneseq
    %v7160 = vshrl.u32 %v7159, 7
    %v7161 = vsub.s32 %v5914, %v7160
    %v7162 = vrot.slane %v4321, %v7161
    %v7163 = vsel %vm5919, %v7162, %v7158
    %v7164 = vlaneseq
    %v7165 = vshrl.u32 %v7164, 7
    %v7166 = vsub.s32 %v5921, %v7165
    %v7167 = vrot.slane %v4324, %v7166
    %v7168 = vsel %vm5926, %v7167, %v7163
    %v7169 = vlaneseq
    %v7170 = vshrl.u32 %v7169, 7
    %v7171 = vsub.s32 %v5928, %v7170
    %v7172 = vrot.slane %v4327, %v7171
    %v7173 = vsel %vm5933, %v7172, %v7168
    %v7174 = vlaneseq
    %v7175 = vshrl.u32 %v7174, 7
    %v7176 = vsub.s32 %v5935, %v7175
    %v7177 = vrot.slane %v4330, %v7176
    %v7178 = vsel %vm5940, %v7177, %v7173
    %v7179 = vlaneseq
    %v7180 = vshrl.u32 %v7179, 7
    %v7181 = vsub.s32 %v5942, %v7180
    %v7182 = vrot.slane %v4333, %v7181
    %v7183 = vsel %vm5947, %v7182, %v7178
    %v7184 = vlaneseq
    %v7185 = vshrl.u32 %v7184, 7
    %v7186 = vsub.s32 %v5949, %v7185
    %v7187 = vrot.slane %v4336, %v7186
    %v7188 = vsel %vm5954, %v7187, %v7183
    %v7189 = vlaneseq
    %v7190 = vshrl.u32 %v7189, 7
    %v7191 = vsub.s32 %v5956, %v7190
    %v7192 = vrot.slane %v4339, %v7191
    %v7193 = vsel %vm5961, %v7192, %v7188
    %v7194 = vlaneseq
    %v7195 = vshrl.u32 %v7194, 7
    %v7196 = vsub.s32 %v5963, %v7195
    %v7197 = vrot.slane %v4342, %v7196
    %v7198 = vsel %vm5968, %v7197, %v7193
    %v7199 = vlaneseq
    %v7200 = vshrl.u32 %v7199, 7
    %v7201 = vsub.s32 %v5881, %v7200
    %v7202 = vrot.slane %v4345, %v7201
    %v7203 = vlaneseq
    %v7204 = vshrl.u32 %v7203, 7
    %v7205 = vsub.s32 %v5886, %v7204
    %v7206 = vrot.slane %v4348, %v7205
    %v7207 = vsel %vm5891, %v7206, %v7202
    %v7208 = vlaneseq
    %v7209 = vshrl.u32 %v7208, 7
    %v7210 = vsub.s32 %v5893, %v7209
    %v7211 = vrot.slane %v4351, %v7210
    %v7212 = vsel %vm5898, %v7211, %v7207
    %v7213 = vlaneseq
    %v7214 = vshrl.u32 %v7213, 7
    %v7215 = vsub.s32 %v5900, %v7214
    %v7216 = vrot.slane %v4354, %v7215
    %v7217 = vsel %vm5905, %v7216, %v7212
    %v7218 = vlaneseq
    %v7219 = vshrl.u32 %v7218, 7
    %v7220 = vsub.s32 %v5907, %v7219
    %v7221 = vrot.slane %v4357, %v7220
    %v7222 = vsel %vm5912, %v7221, %v7217
    %v7223 = vlaneseq
    %v7224 = vshrl.u32 %v7223, 7
    %v7225 = vsub.s32 %v5914, %v7224
    %v7226 = vrot.slane %v4360, %v7225
    %v7227 = vsel %vm5919, %v7226, %v7222
    %v7228 = vlaneseq
    %v7229 = vshrl.u32 %v7228, 7
    %v7230 = vsub.s32 %v5921, %v7229
    %v7231 = vrot.slane %v4363, %v7230
    %v7232 = vsel %vm5926, %v7231, %v7227
    %v7233 = vlaneseq
    %v7234 = vshrl.u32 %v7233, 7
    %v7235 = vsub.s32 %v5928, %v7234
    %v7236 = vrot.slane %v4366, %v7235
    %v7237 = vsel %vm5933, %v7236, %v7232
    %v7238 = vlaneseq
    %v7239 = vshrl.u32 %v7238, 7
    %v7240 = vsub.s32 %v5935, %v7239
    %v7241 = vrot.slane %v4369, %v7240
    %v7242 = vsel %vm5940, %v7241, %v7237
    %v7243 = vlaneseq
    %v7244 = vshrl.u32 %v7243, 7
    %v7245 = vsub.s32 %v5942, %v7244
    %v7246 = vrot.slane %v4372, %v7245
    %v7247 = vsel %vm5947, %v7246, %v7242
    %v7248 = vlaneseq
    %v7249 = vshrl.u32 %v7248, 7
    %v7250 = vsub.s32 %v5949, %v7249
    %v7251 = vrot.slane %v4375, %v7250
    %v7252 = vsel %vm5954, %v7251, %v7247
    %v7253 = vlaneseq
    %v7254 = vshrl.u32 %v7253, 7
    %v7255 = vsub.s32 %v5956, %v7254
    %v7256 = vrot.slane %v4378, %v7255
    %v7257 = vsel %vm5961, %v7256, %v7252
    %v7258 = vlaneseq
    %v7259 = vshrl.u32 %v7258, 7
    %v7260 = vsub.s32 %v5963, %v7259
    %v7261 = vrot.slane %v4381, %v7260
    %v7262 = vsel %vm5968, %v7261, %v7257
    %v7263 = vlaneseq
    %v7264 = vshrl.u32 %v7263, 7
    %v7265 = vsub.s32 %v5970, %v7264
    %v7266 = vrot.slane %v4384, %v7265
    %v7267 = vsel %vm5975, %v7266, %v7262
    %v7268 = vlaneseq
    %v7269 = vshrl.u32 %v7268, 7
    %v7270 = vsub.s32 %v5977, %v7269
    %v7271 = vrot.slane %v4387, %v7270
    %v7272 = vsel %vm5982, %v7271, %v7267
    %v7273 = vlaneseq
    %v7274 = vshrl.u32 %v7273, 7
    %v7275 = vsub.s32 %v5984, %v7274
    %v7276 = vrot.slane %v4390, %v7275
    %v7277 = vsel %vm5989, %v7276, %v7272
    %v7278 = vlaneseq
    %v7279 = vshrl.u32 %v7278, 7
    %v7280 = vsub.s32 %v5881, %v7279
    %v7281 = vrot.slane %v4393, %v7280
    %v7282 = vlaneseq
    %v7283 = vshrl.u32 %v7282, 7
    %v7284 = vsub.s32 %v5886, %v7283
    %v7285 = vrot.slane %v4396, %v7284
    %v7286 = vsel %vm5891, %v7285, %v7281
    %v7287 = vlaneseq
    %v7288 = vshrl.u32 %v7287, 7
    %v7289 = vsub.s32 %v5893, %v7288
    %v7290 = vrot.slane %v4399, %v7289
    %v7291 = vsel %vm5898, %v7290, %v7286
    %v7292 = vlaneseq
    %v7293 = vshrl.u32 %v7292, 7
    %v7294 = vsub.s32 %v5900, %v7293
    %v7295 = vrot.slane %v4402, %v7294
    %v7296 = vsel %vm5905, %v7295, %v7291
    %v7297 = vlaneseq
    %v7298 = vshrl.u32 %v7297, 7
    %v7299 = vsub.s32 %v5907, %v7298
    %v7300 = vrot.slane %v4405, %v7299
    %v7301 = vsel %vm5912, %v7300, %v7296
    %v7302 = vlaneseq
    %v7303 = vshrl.u32 %v7302, 7
    %v7304 = vsub.s32 %v5914, %v7303
    %v7305 = vrot.slane %v4408, %v7304
    %v7306 = vsel %vm5919, %v7305, %v7301
    %v7307 = vlaneseq
    %v7308 = vshrl.u32 %v7307, 7
    %v7309 = vsub.s32 %v5921, %v7308
    %v7310 = vrot.slane %v4411, %v7309
    %v7311 = vsel %vm5926, %v7310, %v7306
    %v7312 = vlaneseq
    %v7313 = vshrl.u32 %v7312, 7
    %v7314 = vsub.s32 %v5928, %v7313
    %v7315 = vrot.slane %v4414, %v7314
    %v7316 = vsel %vm5933, %v7315, %v7311
    %v7317 = vlaneseq
    %v7318 = vshrl.u32 %v7317, 7
    %v7319 = vsub.s32 %v5935, %v7318
    %v7320 = vrot.slane %v4417, %v7319
    %v7321 = vsel %vm5940, %v7320, %v7316
    %v7322 = vlaneseq
    %v7323 = vshrl.u32 %v7322, 7
    %v7324 = vsub.s32 %v5942, %v7323
    %v7325 = vrot.slane %v4420, %v7324
    %v7326 = vsel %vm5947, %v7325, %v7321
    %v7327 = vlaneseq
    %v7328 = vshrl.u32 %v7327, 7
    %v7329 = vsub.s32 %v5949, %v7328
    %v7330 = vrot.slane %v4423, %v7329
    %v7331 = vsel %vm5954, %v7330, %v7326
    %v7332 = vlaneseq
    %v7333 = vshrl.u32 %v7332, 7
    %v7334 = vsub.s32 %v5956, %v7333
    %v7335 = vrot.slane %v4426, %v7334
    %v7336 = vsel %vm5961, %v7335, %v7331
    %v7337 = vlaneseq
    %v7338 = vshrl.u32 %v7337, 7
    %v7339 = vsub.s32 %v5963, %v7338
    %v7340 = vrot.slane %v4429, %v7339
    %v7341 = vsel %vm5968, %v7340, %v7336
    %v7342 = vlaneseq
    %v7343 = vshrl.u32 %v7342, 7
    %v7344 = vsub.s32 %v5881, %v7343
    %v7345 = vrot.slane %v4432, %v7344
    %v7346 = vlaneseq
    %v7347 = vshrl.u32 %v7346, 7
    %v7348 = vsub.s32 %v5886, %v7347
    %v7349 = vrot.slane %v4435, %v7348
    %v7350 = vsel %vm5891, %v7349, %v7345
    %v7351 = vlaneseq
    %v7352 = vshrl.u32 %v7351, 7
    %v7353 = vsub.s32 %v5893, %v7352
    %v7354 = vrot.slane %v4438, %v7353
    %v7355 = vsel %vm5898, %v7354, %v7350
    %v7356 = vlaneseq
    %v7357 = vshrl.u32 %v7356, 7
    %v7358 = vsub.s32 %v5900, %v7357
    %v7359 = vrot.slane %v4441, %v7358
    %v7360 = vsel %vm5905, %v7359, %v7355
    %v7361 = vlaneseq
    %v7362 = vshrl.u32 %v7361, 7
    %v7363 = vsub.s32 %v5907, %v7362
    %v7364 = vrot.slane %v4444, %v7363
    %v7365 = vsel %vm5912, %v7364, %v7360
    %v7366 = vlaneseq
    %v7367 = vshrl.u32 %v7366, 7
    %v7368 = vsub.s32 %v5914, %v7367
    %v7369 = vrot.slane %v4447, %v7368
    %v7370 = vsel %vm5919, %v7369, %v7365
    %v7371 = vlaneseq
    %v7372 = vshrl.u32 %v7371, 7
    %v7373 = vsub.s32 %v5921, %v7372
    %v7374 = vrot.slane %v4450, %v7373
    %v7375 = vsel %vm5926, %v7374, %v7370
    %v7376 = vlaneseq
    %v7377 = vshrl.u32 %v7376, 7
    %v7378 = vsub.s32 %v5928, %v7377
    %v7379 = vrot.slane %v4453, %v7378
    %v7380 = vsel %vm5933, %v7379, %v7375
    %v7381 = vlaneseq
    %v7382 = vshrl.u32 %v7381, 7
    %v7383 = vsub.s32 %v5935, %v7382
    %v7384 = vrot.slane %v4456, %v7383
    %v7385 = vsel %vm5940, %v7384, %v7380
    %v7386 = vlaneseq
    %v7387 = vshrl.u32 %v7386, 7
    %v7388 = vsub.s32 %v5942, %v7387
    %v7389 = vrot.slane %v4459, %v7388
    %v7390 = vsel %vm5947, %v7389, %v7385
    %v7391 = vlaneseq
    %v7392 = vshrl.u32 %v7391, 7
    %v7393 = vsub.s32 %v5949, %v7392
    %v7394 = vrot.slane %v4462, %v7393
    %v7395 = vsel %vm5954, %v7394, %v7390
    %v7396 = vlaneseq
    %v7397 = vshrl.u32 %v7396, 7
    %v7398 = vsub.s32 %v5956, %v7397
    %v7399 = vrot.slane %v4465, %v7398
    %v7400 = vsel %vm5961, %v7399, %v7395
    %v7401 = vlaneseq
    %v7402 = vshrl.u32 %v7401, 7
    %v7403 = vsub.s32 %v5963, %v7402
    %v7404 = vrot.slane %v4468, %v7403
    %v7405 = vsel %vm5968, %v7404, %v7400
    %v7406 = vlaneseq
    %v7407 = vshrl.u32 %v7406, 7
    %v7408 = vsub.s32 %v5970, %v7407
    %v7409 = vrot.slane %v4471, %v7408
    %v7410 = vsel %vm5975, %v7409, %v7405
    %v7411 = vlaneseq
    %v7412 = vshrl.u32 %v7411, 7
    %v7413 = vsub.s32 %v5977, %v7412
    %v7414 = vrot.slane %v4474, %v7413
    %v7415 = vsel %vm5982, %v7414, %v7410
    %v7416 = vlaneseq
    %v7417 = vshrl.u32 %v7416, 7
    %v7418 = vsub.s32 %v5984, %v7417
    %v7419 = vrot.slane %v4477, %v7418
    %v7420 = vsel %vm5989, %v7419, %v7415
    %v7421 = vlaneseq
    %v7422 = vshrl.u32 %v7421, 7
    %v7423 = vsub.s32 %v5881, %v7422
    %v7424 = vrot.slane %v4480, %v7423
    %v7425 = vlaneseq
    %v7426 = vshrl.u32 %v7425, 7
    %v7427 = vsub.s32 %v5886, %v7426
    %v7428 = vrot.slane %v4483, %v7427
    %v7429 = vsel %vm5891, %v7428, %v7424
    %v7430 = vlaneseq
    %v7431 = vshrl.u32 %v7430, 7
    %v7432 = vsub.s32 %v5893, %v7431
    %v7433 = vrot.slane %v4486, %v7432
    %v7434 = vsel %vm5898, %v7433, %v7429
    %v7435 = vlaneseq
    %v7436 = vshrl.u32 %v7435, 7
    %v7437 = vsub.s32 %v5900, %v7436
    %v7438 = vrot.slane %v4489, %v7437
    %v7439 = vsel %vm5905, %v7438, %v7434
    %v7440 = vlaneseq
    %v7441 = vshrl.u32 %v7440, 7
    %v7442 = vsub.s32 %v5907, %v7441
    %v7443 = vrot.slane %v4492, %v7442
    %v7444 = vsel %vm5912, %v7443, %v7439
    %v7445 = vlaneseq
    %v7446 = vshrl.u32 %v7445, 7
    %v7447 = vsub.s32 %v5914, %v7446
    %v7448 = vrot.slane %v4495, %v7447
    %v7449 = vsel %vm5919, %v7448, %v7444
    %v7450 = vlaneseq
    %v7451 = vshrl.u32 %v7450, 7
    %v7452 = vsub.s32 %v5921, %v7451
    %v7453 = vrot.slane %v4498, %v7452
    %v7454 = vsel %vm5926, %v7453, %v7449
    %v7455 = vlaneseq
    %v7456 = vshrl.u32 %v7455, 7
    %v7457 = vsub.s32 %v5928, %v7456
    %v7458 = vrot.slane %v4501, %v7457
    %v7459 = vsel %vm5933, %v7458, %v7454
    %v7460 = vlaneseq
    %v7461 = vshrl.u32 %v7460, 7
    %v7462 = vsub.s32 %v5935, %v7461
    %v7463 = vrot.slane %v4504, %v7462
    %v7464 = vsel %vm5940, %v7463, %v7459
    %v7465 = vlaneseq
    %v7466 = vshrl.u32 %v7465, 7
    %v7467 = vsub.s32 %v5942, %v7466
    %v7468 = vrot.slane %v4507, %v7467
    %v7469 = vsel %vm5947, %v7468, %v7464
    %v7470 = vlaneseq
    %v7471 = vshrl.u32 %v7470, 7
    %v7472 = vsub.s32 %v5949, %v7471
    %v7473 = vrot.slane %v4510, %v7472
    %v7474 = vsel %vm5954, %v7473, %v7469
    %v7475 = vlaneseq
    %v7476 = vshrl.u32 %v7475, 7
    %v7477 = vsub.s32 %v5956, %v7476
    %v7478 = vrot.slane %v4513, %v7477
    %v7479 = vsel %vm5961, %v7478, %v7474
    %v7480 = vlaneseq
    %v7481 = vshrl.u32 %v7480, 7
    %v7482 = vsub.s32 %v5963, %v7481
    %v7483 = vrot.slane %v4516, %v7482
    %v7484 = vsel %vm5968, %v7483, %v7479
    %v7485 = vlaneseq
    %v7486 = vshrl.u32 %v7485, 7
    %v7487 = vsub.s32 %v5881, %v7486
    %v7488 = vrot.slane %v4519, %v7487
    %v7489 = vlaneseq
    %v7490 = vshrl.u32 %v7489, 7
    %v7491 = vsub.s32 %v5886, %v7490
    %v7492 = vrot.slane %v4522, %v7491
    %v7493 = vsel %vm5891, %v7492, %v7488
    %v7494 = vlaneseq
    %v7495 = vshrl.u32 %v7494, 7
    %v7496 = vsub.s32 %v5893, %v7495
    %v7497 = vrot.slane %v4525, %v7496
    %v7498 = vsel %vm5898, %v7497, %v7493
    %v7499 = vlaneseq
    %v7500 = vshrl.u32 %v7499, 7
    %v7501 = vsub.s32 %v5900, %v7500
    %v7502 = vrot.slane %v4528, %v7501
    %v7503 = vsel %vm5905, %v7502, %v7498
    %v7504 = vlaneseq
    %v7505 = vshrl.u32 %v7504, 7
    %v7506 = vsub.s32 %v5907, %v7505
    %v7507 = vrot.slane %v4531, %v7506
    %v7508 = vsel %vm5912, %v7507, %v7503
    %v7509 = vlaneseq
    %v7510 = vshrl.u32 %v7509, 7
    %v7511 = vsub.s32 %v5914, %v7510
    %v7512 = vrot.slane %v4534, %v7511
    %v7513 = vsel %vm5919, %v7512, %v7508
    %v7514 = vlaneseq
    %v7515 = vshrl.u32 %v7514, 7
    %v7516 = vsub.s32 %v5921, %v7515
    %v7517 = vrot.slane %v4537, %v7516
    %v7518 = vsel %vm5926, %v7517, %v7513
    %v7519 = vlaneseq
    %v7520 = vshrl.u32 %v7519, 7
    %v7521 = vsub.s32 %v5928, %v7520
    %v7522 = vrot.slane %v4540, %v7521
    %v7523 = vsel %vm5933, %v7522, %v7518
    %v7524 = vlaneseq
    %v7525 = vshrl.u32 %v7524, 7
    %v7526 = vsub.s32 %v5935, %v7525
    %v7527 = vrot.slane %v4543, %v7526
    %v7528 = vsel %vm5940, %v7527, %v7523
    %v7529 = vlaneseq
    %v7530 = vshrl.u32 %v7529, 7
    %v7531 = vsub.s32 %v5942, %v7530
    %v7532 = vrot.slane %v4546, %v7531
    %v7533 = vsel %vm5947, %v7532, %v7528
    %v7534 = vlaneseq
    %v7535 = vshrl.u32 %v7534, 7
    %v7536 = vsub.s32 %v5949, %v7535
    %v7537 = vrot.slane %v4549, %v7536
    %v7538 = vsel %vm5954, %v7537, %v7533
    %v7539 = vlaneseq
    %v7540 = vshrl.u32 %v7539, 7
    %v7541 = vsub.s32 %v5956, %v7540
    %v7542 = vrot.slane %v4552, %v7541
    %v7543 = vsel %vm5961, %v7542, %v7538
    %v7544 = vlaneseq
    %v7545 = vshrl.u32 %v7544, 7
    %v7546 = vsub.s32 %v5963, %v7545
    %v7547 = vrot.slane %v4555, %v7546
    %v7548 = vsel %vm5968, %v7547, %v7543
    %v7549 = vlaneseq
    %v7550 = vshrl.u32 %v7549, 7
    %v7551 = vsub.s32 %v5970, %v7550
    %v7552 = vrot.slane %v4558, %v7551
    %v7553 = vsel %vm5975, %v7552, %v7548
    %v7554 = vlaneseq
    %v7555 = vshrl.u32 %v7554, 7
    %v7556 = vsub.s32 %v5977, %v7555
    %v7557 = vrot.slane %v4561, %v7556
    %v7558 = vsel %vm5982, %v7557, %v7553
    %v7559 = vlaneseq
    %v7560 = vshrl.u32 %v7559, 7
    %v7561 = vsub.s32 %v5984, %v7560
    %v7562 = vrot.slane %v4564, %v7561
    %v7563 = vsel %vm5989, %v7562, %v7558
    %v7564 = vlaneseq
    %v7565 = vshrl.u32 %v7564, 7
    %v7566 = vsub.s32 %v5881, %v7565
    %v7567 = vrot.slane %v4567, %v7566
    %v7568 = vlaneseq
    %v7569 = vshrl.u32 %v7568, 7
    %v7570 = vsub.s32 %v5886, %v7569
    %v7571 = vrot.slane %v4570, %v7570
    %v7572 = vsel %vm5891, %v7571, %v7567
    %v7573 = vlaneseq
    %v7574 = vshrl.u32 %v7573, 7
    %v7575 = vsub.s32 %v5893, %v7574
    %v7576 = vrot.slane %v4573, %v7575
    %v7577 = vsel %vm5898, %v7576, %v7572
    %v7578 = vlaneseq
    %v7579 = vshrl.u32 %v7578, 7
    %v7580 = vsub.s32 %v5900, %v7579
    %v7581 = vrot.slane %v4576, %v7580
    %v7582 = vsel %vm5905, %v7581, %v7577
    %v7583 = vlaneseq
    %v7584 = vshrl.u32 %v7583, 7
    %v7585 = vsub.s32 %v5907, %v7584
    %v7586 = vrot.slane %v4579, %v7585
    %v7587 = vsel %vm5912, %v7586, %v7582
    %v7588 = vlaneseq
    %v7589 = vshrl.u32 %v7588, 7
    %v7590 = vsub.s32 %v5914, %v7589
    %v7591 = vrot.slane %v4582, %v7590
    %v7592 = vsel %vm5919, %v7591, %v7587
    %v7593 = vlaneseq
    %v7594 = vshrl.u32 %v7593, 7
    %v7595 = vsub.s32 %v5921, %v7594
    %v7596 = vrot.slane %v4585, %v7595
    %v7597 = vsel %vm5926, %v7596, %v7592
    %v7598 = vlaneseq
    %v7599 = vshrl.u32 %v7598, 7
    %v7600 = vsub.s32 %v5928, %v7599
    %v7601 = vrot.slane %v4588, %v7600
    %v7602 = vsel %vm5933, %v7601, %v7597
    %v7603 = vlaneseq
    %v7604 = vshrl.u32 %v7603, 7
    %v7605 = vsub.s32 %v5935, %v7604
    %v7606 = vrot.slane %v4591, %v7605
    %v7607 = vsel %vm5940, %v7606, %v7602
    %v7608 = vlaneseq
    %v7609 = vshrl.u32 %v7608, 7
    %v7610 = vsub.s32 %v5942, %v7609
    %v7611 = vrot.slane %v4594, %v7610
    %v7612 = vsel %vm5947, %v7611, %v7607
    %v7613 = vlaneseq
    %v7614 = vshrl.u32 %v7613, 7
    %v7615 = vsub.s32 %v5949, %v7614
    %v7616 = vrot.slane %v4597, %v7615
    %v7617 = vsel %vm5954, %v7616, %v7612
    %v7618 = vlaneseq
    %v7619 = vshrl.u32 %v7618, 7
    %v7620 = vsub.s32 %v5956, %v7619
    %v7621 = vrot.slane %v4600, %v7620
    %v7622 = vsel %vm5961, %v7621, %v7617
    %v7623 = vlaneseq
    %v7624 = vshrl.u32 %v7623, 7
    %v7625 = vsub.s32 %v5963, %v7624
    %v7626 = vrot.slane %v4603, %v7625
    %v7627 = vsel %vm5968, %v7626, %v7622
    %v7628 = vlaneseq
    %v7629 = vshrl.u32 %v7628, 7
    %v7630 = vsub.s32 %v5881, %v7629
    %v7631 = vrot.slane %v4606, %v7630
    %v7632 = vlaneseq
    %v7633 = vshrl.u32 %v7632, 7
    %v7634 = vsub.s32 %v5886, %v7633
    %v7635 = vrot.slane %v4609, %v7634
    %v7636 = vsel %vm5891, %v7635, %v7631
    %v7637 = vlaneseq
    %v7638 = vshrl.u32 %v7637, 7
    %v7639 = vsub.s32 %v5893, %v7638
    %v7640 = vrot.slane %v4612, %v7639
    %v7641 = vsel %vm5898, %v7640, %v7636
    %v7642 = vlaneseq
    %v7643 = vshrl.u32 %v7642, 7
    %v7644 = vsub.s32 %v5900, %v7643
    %v7645 = vrot.slane %v4615, %v7644
    %v7646 = vsel %vm5905, %v7645, %v7641
    %v7647 = vlaneseq
    %v7648 = vshrl.u32 %v7647, 7
    %v7649 = vsub.s32 %v5907, %v7648
    %v7650 = vrot.slane %v4618, %v7649
    %v7651 = vsel %vm5912, %v7650, %v7646
    %v7652 = vlaneseq
    %v7653 = vshrl.u32 %v7652, 7
    %v7654 = vsub.s32 %v5914, %v7653
    %v7655 = vrot.slane %v4621, %v7654
    %v7656 = vsel %vm5919, %v7655, %v7651
    %v7657 = vlaneseq
    %v7658 = vshrl.u32 %v7657, 7
    %v7659 = vsub.s32 %v5921, %v7658
    %v7660 = vrot.slane %v4624, %v7659
    %v7661 = vsel %vm5926, %v7660, %v7656
    %v7662 = vlaneseq
    %v7663 = vshrl.u32 %v7662, 7
    %v7664 = vsub.s32 %v5928, %v7663
    %v7665 = vrot.slane %v4627, %v7664
    %v7666 = vsel %vm5933, %v7665, %v7661
    %v7667 = vlaneseq
    %v7668 = vshrl.u32 %v7667, 7
    %v7669 = vsub.s32 %v5935, %v7668
    %v7670 = vrot.slane %v4630, %v7669
    %v7671 = vsel %vm5940, %v7670, %v7666
    %v7672 = vlaneseq
    %v7673 = vshrl.u32 %v7672, 7
    %v7674 = vsub.s32 %v5942, %v7673
    %v7675 = vrot.slane %v4633, %v7674
    %v7676 = vsel %vm5947, %v7675, %v7671
    %v7677 = vlaneseq
    %v7678 = vshrl.u32 %v7677, 7
    %v7679 = vsub.s32 %v5949, %v7678
    %v7680 = vrot.slane %v4636, %v7679
    %v7681 = vsel %vm5954, %v7680, %v7676
    %v7682 = vlaneseq
    %v7683 = vshrl.u32 %v7682, 7
    %v7684 = vsub.s32 %v5956, %v7683
    %v7685 = vrot.slane %v4639, %v7684
    %v7686 = vsel %vm5961, %v7685, %v7681
    %v7687 = vlaneseq
    %v7688 = vshrl.u32 %v7687, 7
    %v7689 = vsub.s32 %v5963, %v7688
    %v7690 = vrot.slane %v4642, %v7689
    %v7691 = vsel %vm5968, %v7690, %v7686
    %v7692 = vlaneseq
    %v7693 = vshrl.u32 %v7692, 7
    %v7694 = vsub.s32 %v5970, %v7693
    %v7695 = vrot.slane %v4645, %v7694
    %v7696 = vsel %vm5975, %v7695, %v7691
    %v7697 = vlaneseq
    %v7698 = vshrl.u32 %v7697, 7
    %v7699 = vsub.s32 %v5977, %v7698
    %v7700 = vrot.slane %v4648, %v7699
    %v7701 = vsel %vm5982, %v7700, %v7696
    %v7702 = vlaneseq
    %v7703 = vshrl.u32 %v7702, 7
    %v7704 = vsub.s32 %v5984, %v7703
    %v7705 = vrot.slane %v4651, %v7704
    %v7706 = vsel %vm5989, %v7705, %v7701
    %v7707 = vlaneseq
    %v7708 = vshrl.u32 %v7707, 7
    %v7709 = vsub.s32 %v5881, %v7708
    %v7710 = vrot.slane %v4654, %v7709
    %v7711 = vlaneseq
    %v7712 = vshrl.u32 %v7711, 7
    %v7713 = vsub.s32 %v5886, %v7712
    %v7714 = vrot.slane %v4657, %v7713
    %v7715 = vsel %vm5891, %v7714, %v7710
    %v7716 = vlaneseq
    %v7717 = vshrl.u32 %v7716, 7
    %v7718 = vsub.s32 %v5893, %v7717
    %v7719 = vrot.slane %v4660, %v7718
    %v7720 = vsel %vm5898, %v7719, %v7715
    %v7721 = vlaneseq
    %v7722 = vshrl.u32 %v7721, 7
    %v7723 = vsub.s32 %v5900, %v7722
    %v7724 = vrot.slane %v4663, %v7723
    %v7725 = vsel %vm5905, %v7724, %v7720
    %v7726 = vlaneseq
    %v7727 = vshrl.u32 %v7726, 7
    %v7728 = vsub.s32 %v5907, %v7727
    %v7729 = vrot.slane %v4666, %v7728
    %v7730 = vsel %vm5912, %v7729, %v7725
    %v7731 = vlaneseq
    %v7732 = vshrl.u32 %v7731, 7
    %v7733 = vsub.s32 %v5914, %v7732
    %v7734 = vrot.slane %v4669, %v7733
    %v7735 = vsel %vm5919, %v7734, %v7730
    %v7736 = vlaneseq
    %v7737 = vshrl.u32 %v7736, 7
    %v7738 = vsub.s32 %v5921, %v7737
    %v7739 = vrot.slane %v4672, %v7738
    %v7740 = vsel %vm5926, %v7739, %v7735
    %v7741 = vlaneseq
    %v7742 = vshrl.u32 %v7741, 7
    %v7743 = vsub.s32 %v5928, %v7742
    %v7744 = vrot.slane %v4675, %v7743
    %v7745 = vsel %vm5933, %v7744, %v7740
    %v7746 = vlaneseq
    %v7747 = vshrl.u32 %v7746, 7
    %v7748 = vsub.s32 %v5935, %v7747
    %v7749 = vrot.slane %v4678, %v7748
    %v7750 = vsel %vm5940, %v7749, %v7745
    %v7751 = vlaneseq
    %v7752 = vshrl.u32 %v7751, 7
    %v7753 = vsub.s32 %v5942, %v7752
    %v7754 = vrot.slane %v4681, %v7753
    %v7755 = vsel %vm5947, %v7754, %v7750
    %v7756 = vlaneseq
    %v7757 = vshrl.u32 %v7756, 7
    %v7758 = vsub.s32 %v5949, %v7757
    %v7759 = vrot.slane %v4684, %v7758
    %v7760 = vsel %vm5954, %v7759, %v7755
    %v7761 = vlaneseq
    %v7762 = vshrl.u32 %v7761, 7
    %v7763 = vsub.s32 %v5956, %v7762
    %v7764 = vrot.slane %v4687, %v7763
    %v7765 = vsel %vm5961, %v7764, %v7760
    %v7766 = vlaneseq
    %v7767 = vshrl.u32 %v7766, 7
    %v7768 = vsub.s32 %v5963, %v7767
    %v7769 = vrot.slane %v4690, %v7768
    %v7770 = vsel %vm5968, %v7769, %v7765
    %v7771 = vlaneseq
    %v7772 = vshrl.u32 %v7771, 7
    %v7773 = vsub.s32 %v5881, %v7772
    %v7774 = vrot.slane %v4693, %v7773
    %v7775 = vlaneseq
    %v7776 = vshrl.u32 %v7775, 7
    %v7777 = vsub.s32 %v5886, %v7776
    %v7778 = vrot.slane %v4696, %v7777
    %v7779 = vsel %vm5891, %v7778, %v7774
    %v7780 = vlaneseq
    %v7781 = vshrl.u32 %v7780, 7
    %v7782 = vsub.s32 %v5893, %v7781
    %v7783 = vrot.slane %v4699, %v7782
    %v7784 = vsel %vm5898, %v7783, %v7779
    %v7785 = vlaneseq
    %v7786 = vshrl.u32 %v7785, 7
    %v7787 = vsub.s32 %v5900, %v7786
    %v7788 = vrot.slane %v4702, %v7787
    %v7789 = vsel %vm5905, %v7788, %v7784
    %v7790 = vlaneseq
    %v7791 = vshrl.u32 %v7790, 7
    %v7792 = vsub.s32 %v5907, %v7791
    %v7793 = vrot.slane %v4705, %v7792
    %v7794 = vsel %vm5912, %v7793, %v7789
    %v7795 = vlaneseq
    %v7796 = vshrl.u32 %v7795, 7
    %v7797 = vsub.s32 %v5914, %v7796
    %v7798 = vrot.slane %v4708, %v7797
    %v7799 = vsel %vm5919, %v7798, %v7794
    %v7800 = vlaneseq
    %v7801 = vshrl.u32 %v7800, 7
    %v7802 = vsub.s32 %v5921, %v7801
    %v7803 = vrot.slane %v4711, %v7802
    %v7804 = vsel %vm5926, %v7803, %v7799
    %v7805 = vlaneseq
    %v7806 = vshrl.u32 %v7805, 7
    %v7807 = vsub.s32 %v5928, %v7806
    %v7808 = vrot.slane %v4714, %v7807
    %v7809 = vsel %vm5933, %v7808, %v7804
    %v7810 = vlaneseq
    %v7811 = vshrl.u32 %v7810, 7
    %v7812 = vsub.s32 %v5935, %v7811
    %v7813 = vrot.slane %v4717, %v7812
    %v7814 = vsel %vm5940, %v7813, %v7809
    %v7815 = vlaneseq
    %v7816 = vshrl.u32 %v7815, 7
    %v7817 = vsub.s32 %v5942, %v7816
    %v7818 = vrot.slane %v4720, %v7817
    %v7819 = vsel %vm5947, %v7818, %v7814
    %v7820 = vlaneseq
    %v7821 = vshrl.u32 %v7820, 7
    %v7822 = vsub.s32 %v5949, %v7821
    %v7823 = vrot.slane %v4723, %v7822
    %v7824 = vsel %vm5954, %v7823, %v7819
    %v7825 = vlaneseq
    %v7826 = vshrl.u32 %v7825, 7
    %v7827 = vsub.s32 %v5956, %v7826
    %v7828 = vrot.slane %v4726, %v7827
    %v7829 = vsel %vm5961, %v7828, %v7824
    %v7830 = vlaneseq
    %v7831 = vshrl.u32 %v7830, 7
    %v7832 = vsub.s32 %v5963, %v7831
    %v7833 = vrot.slane %v4729, %v7832
    %v7834 = vsel %vm5968, %v7833, %v7829
    %v7835 = vlaneseq
    %v7836 = vshrl.u32 %v7835, 7
    %v7837 = vsub.s32 %v5970, %v7836
    %v7838 = vrot.slane %v4732, %v7837
    %v7839 = vsel %vm5975, %v7838, %v7834
    %v7840 = vlaneseq
    %v7841 = vshrl.u32 %v7840, 7
    %v7842 = vsub.s32 %v5977, %v7841
    %v7843 = vrot.slane %v4735, %v7842
    %v7844 = vsel %vm5982, %v7843, %v7839
    %v7845 = vlaneseq
    %v7846 = vshrl.u32 %v7845, 7
    %v7847 = vsub.s32 %v5984, %v7846
    %v7848 = vrot.slane %v4738, %v7847
    %v7849 = vsel %vm5989, %v7848, %v7844
    %v7850 = vlaneseq
    %v7851 = vshrl.u32 %v7850, 7
    %v7852 = vsub.s32 %v5881, %v7851
    %v7853 = vrot.slane %v4741, %v7852
    %v7854 = vlaneseq
    %v7855 = vshrl.u32 %v7854, 7
    %v7856 = vsub.s32 %v5886, %v7855
    %v7857 = vrot.slane %v4744, %v7856
    %v7858 = vsel %vm5891, %v7857, %v7853
    %v7859 = vlaneseq
    %v7860 = vshrl.u32 %v7859, 7
    %v7861 = vsub.s32 %v5893, %v7860
    %v7862 = vrot.slane %v4747, %v7861
    %v7863 = vsel %vm5898, %v7862, %v7858
    %v7864 = vlaneseq
    %v7865 = vshrl.u32 %v7864, 7
    %v7866 = vsub.s32 %v5900, %v7865
    %v7867 = vrot.slane %v4750, %v7866
    %v7868 = vsel %vm5905, %v7867, %v7863
    %v7869 = vlaneseq
    %v7870 = vshrl.u32 %v7869, 7
    %v7871 = vsub.s32 %v5907, %v7870
    %v7872 = vrot.slane %v4753, %v7871
    %v7873 = vsel %vm5912, %v7872, %v7868
    %v7874 = vlaneseq
    %v7875 = vshrl.u32 %v7874, 7
    %v7876 = vsub.s32 %v5914, %v7875
    %v7877 = vrot.slane %v4756, %v7876
    %v7878 = vsel %vm5919, %v7877, %v7873
    %v7879 = vlaneseq
    %v7880 = vshrl.u32 %v7879, 7
    %v7881 = vsub.s32 %v5921, %v7880
    %v7882 = vrot.slane %v4759, %v7881
    %v7883 = vsel %vm5926, %v7882, %v7878
    %v7884 = vlaneseq
    %v7885 = vshrl.u32 %v7884, 7
    %v7886 = vsub.s32 %v5928, %v7885
    %v7887 = vrot.slane %v4762, %v7886
    %v7888 = vsel %vm5933, %v7887, %v7883
    %v7889 = vlaneseq
    %v7890 = vshrl.u32 %v7889, 7
    %v7891 = vsub.s32 %v5935, %v7890
    %v7892 = vrot.slane %v4765, %v7891
    %v7893 = vsel %vm5940, %v7892, %v7888
    %v7894 = vlaneseq
    %v7895 = vshrl.u32 %v7894, 7
    %v7896 = vsub.s32 %v5942, %v7895
    %v7897 = vrot.slane %v4768, %v7896
    %v7898 = vsel %vm5947, %v7897, %v7893
    %v7899 = vlaneseq
    %v7900 = vshrl.u32 %v7899, 7
    %v7901 = vsub.s32 %v5949, %v7900
    %v7902 = vrot.slane %v4771, %v7901
    %v7903 = vsel %vm5954, %v7902, %v7898
    %v7904 = vlaneseq
    %v7905 = vshrl.u32 %v7904, 7
    %v7906 = vsub.s32 %v5956, %v7905
    %v7907 = vrot.slane %v4774, %v7906
    %v7908 = vsel %vm5961, %v7907, %v7903
    %v7909 = vlaneseq
    %v7910 = vshrl.u32 %v7909, 7
    %v7911 = vsub.s32 %v5963, %v7910
    %v7912 = vrot.slane %v4777, %v7911
    %v7913 = vsel %vm5968, %v7912, %v7908
    %v7914 = vlaneseq
    %v7915 = vshrl.u32 %v7914, 7
    %v7916 = vsub.s32 %v5881, %v7915
    %v7917 = vrot.slane %v4780, %v7916
    %v7918 = vlaneseq
    %v7919 = vshrl.u32 %v7918, 7
    %v7920 = vsub.s32 %v5886, %v7919
    %v7921 = vrot.slane %v4783, %v7920
    %v7922 = vsel %vm5891, %v7921, %v7917
    %v7923 = vlaneseq
    %v7924 = vshrl.u32 %v7923, 7
    %v7925 = vsub.s32 %v5893, %v7924
    %v7926 = vrot.slane %v4786, %v7925
    %v7927 = vsel %vm5898, %v7926, %v7922
    %v7928 = vlaneseq
    %v7929 = vshrl.u32 %v7928, 7
    %v7930 = vsub.s32 %v5900, %v7929
    %v7931 = vrot.slane %v4789, %v7930
    %v7932 = vsel %vm5905, %v7931, %v7927
    %v7933 = vlaneseq
    %v7934 = vshrl.u32 %v7933, 7
    %v7935 = vsub.s32 %v5907, %v7934
    %v7936 = vrot.slane %v4792, %v7935
    %v7937 = vsel %vm5912, %v7936, %v7932
    %v7938 = vlaneseq
    %v7939 = vshrl.u32 %v7938, 7
    %v7940 = vsub.s32 %v5914, %v7939
    %v7941 = vrot.slane %v4795, %v7940
    %v7942 = vsel %vm5919, %v7941, %v7937
    %v7943 = vlaneseq
    %v7944 = vshrl.u32 %v7943, 7
    %v7945 = vsub.s32 %v5921, %v7944
    %v7946 = vrot.slane %v4798, %v7945
    %v7947 = vsel %vm5926, %v7946, %v7942
    %v7948 = vlaneseq
    %v7949 = vshrl.u32 %v7948, 7
    %v7950 = vsub.s32 %v5928, %v7949
    %v7951 = vrot.slane %v4801, %v7950
    %v7952 = vsel %vm5933, %v7951, %v7947
    %v7953 = vlaneseq
    %v7954 = vshrl.u32 %v7953, 7
    %v7955 = vsub.s32 %v5935, %v7954
    %v7956 = vrot.slane %v4804, %v7955
    %v7957 = vsel %vm5940, %v7956, %v7952
    %v7958 = vlaneseq
    %v7959 = vshrl.u32 %v7958, 7
    %v7960 = vsub.s32 %v5942, %v7959
    %v7961 = vrot.slane %v4807, %v7960
    %v7962 = vsel %vm5947, %v7961, %v7957
    %v7963 = vlaneseq
    %v7964 = vshrl.u32 %v7963, 7
    %v7965 = vsub.s32 %v5949, %v7964
    %v7966 = vrot.slane %v4810, %v7965
    %v7967 = vsel %vm5954, %v7966, %v7962
    %v7968 = vlaneseq
    %v7969 = vshrl.u32 %v7968, 7
    %v7970 = vsub.s32 %v5956, %v7969
    %v7971 = vrot.slane %v4813, %v7970
    %v7972 = vsel %vm5961, %v7971, %v7967
    %v7973 = vlaneseq
    %v7974 = vshrl.u32 %v7973, 7
    %v7975 = vsub.s32 %v5963, %v7974
    %v7976 = vrot.slane %v4816, %v7975
    %v7977 = vsel %vm5968, %v7976, %v7972
    %v7978 = vlaneseq
    %v7979 = vshrl.u32 %v7978, 7
    %v7980 = vsub.s32 %v5970, %v7979
    %v7981 = vrot.slane %v4819, %v7980
    %v7982 = vsel %vm5975, %v7981, %v7977
    %v7983 = vlaneseq
    %v7984 = vshrl.u32 %v7983, 7
    %v7985 = vsub.s32 %v5977, %v7984
    %v7986 = vrot.slane %v4822, %v7985
    %v7987 = vsel %vm5982, %v7986, %v7982
    %v7988 = vlaneseq
    %v7989 = vshrl.u32 %v7988, 7
    %v7990 = vsub.s32 %v5984, %v7989
    %v7991 = vrot.slane %v4825, %v7990
    %v7992 = vsel %vm5989, %v7991, %v7987
    %v7993 = vlaneseq
    %v7994 = vshrl.u32 %v7993, 7
    %v7995 = vsub.s32 %v5881, %v7994
    %v7996 = vrot.slane %v4828, %v7995
    %v7997 = vlaneseq
    %v7998 = vshrl.u32 %v7997, 7
    %v7999 = vsub.s32 %v5886, %v7998
    %v8000 = vrot.slane %v4831, %v7999
    %v8001 = vsel %vm5891, %v8000, %v7996
    %v8002 = vlaneseq
    %v8003 = vshrl.u32 %v8002, 7
    %v8004 = vsub.s32 %v5893, %v8003
    %v8005 = vrot.slane %v4834, %v8004
    %v8006 = vsel %vm5898, %v8005, %v8001
    %v8007 = vlaneseq
    %v8008 = vshrl.u32 %v8007, 7
    %v8009 = vsub.s32 %v5900, %v8008
    %v8010 = vrot.slane %v4837, %v8009
    %v8011 = vsel %vm5905, %v8010, %v8006
    %v8012 = vlaneseq
    %v8013 = vshrl.u32 %v8012, 7
    %v8014 = vsub.s32 %v5907, %v8013
    %v8015 = vrot.slane %v4840, %v8014
    %v8016 = vsel %vm5912, %v8015, %v8011
    %v8017 = vlaneseq
    %v8018 = vshrl.u32 %v8017, 7
    %v8019 = vsub.s32 %v5914, %v8018
    %v8020 = vrot.slane %v4843, %v8019
    %v8021 = vsel %vm5919, %v8020, %v8016
    %v8022 = vlaneseq
    %v8023 = vshrl.u32 %v8022, 7
    %v8024 = vsub.s32 %v5921, %v8023
    %v8025 = vrot.slane %v4846, %v8024
    %v8026 = vsel %vm5926, %v8025, %v8021
    %v8027 = vlaneseq
    %v8028 = vshrl.u32 %v8027, 7
    %v8029 = vsub.s32 %v5928, %v8028
    %v8030 = vrot.slane %v4849, %v8029
    %v8031 = vsel %vm5933, %v8030, %v8026
    %v8032 = vlaneseq
    %v8033 = vshrl.u32 %v8032, 7
    %v8034 = vsub.s32 %v5935, %v8033
    %v8035 = vrot.slane %v4852, %v8034
    %v8036 = vsel %vm5940, %v8035, %v8031
    %v8037 = vlaneseq
    %v8038 = vshrl.u32 %v8037, 7
    %v8039 = vsub.s32 %v5942, %v8038
    %v8040 = vrot.slane %v4855, %v8039
    %v8041 = vsel %vm5947, %v8040, %v8036
    %v8042 = vlaneseq
    %v8043 = vshrl.u32 %v8042, 7
    %v8044 = vsub.s32 %v5949, %v8043
    %v8045 = vrot.slane %v4858, %v8044
    %v8046 = vsel %vm5954, %v8045, %v8041
    %v8047 = vlaneseq
    %v8048 = vshrl.u32 %v8047, 7
    %v8049 = vsub.s32 %v5956, %v8048
    %v8050 = vrot.slane %v4861, %v8049
    %v8051 = vsel %vm5961, %v8050, %v8046
    %v8052 = vlaneseq
    %v8053 = vshrl.u32 %v8052, 7
    %v8054 = vsub.s32 %v5963, %v8053
    %v8055 = vrot.slane %v4864, %v8054
    %v8056 = vsel %vm5968, %v8055, %v8051
    %v8057 = vlaneseq
    %v8058 = vshrl.u32 %v8057, 7
    %v8059 = vsub.s32 %v5881, %v8058
    %v8060 = vrot.slane %v4867, %v8059
    %v8061 = vlaneseq
    %v8062 = vshrl.u32 %v8061, 7
    %v8063 = vsub.s32 %v5886, %v8062
    %v8064 = vrot.slane %v4870, %v8063
    %v8065 = vsel %vm5891, %v8064, %v8060
    %v8066 = vlaneseq
    %v8067 = vshrl.u32 %v8066, 7
    %v8068 = vsub.s32 %v5893, %v8067
    %v8069 = vrot.slane %v4873, %v8068
    %v8070 = vsel %vm5898, %v8069, %v8065
    %v8071 = vlaneseq
    %v8072 = vshrl.u32 %v8071, 7
    %v8073 = vsub.s32 %v5900, %v8072
    %v8074 = vrot.slane %v4876, %v8073
    %v8075 = vsel %vm5905, %v8074, %v8070
    %v8076 = vlaneseq
    %v8077 = vshrl.u32 %v8076, 7
    %v8078 = vsub.s32 %v5907, %v8077
    %v8079 = vrot.slane %v4879, %v8078
    %v8080 = vsel %vm5912, %v8079, %v8075
    %v8081 = vlaneseq
    %v8082 = vshrl.u32 %v8081, 7
    %v8083 = vsub.s32 %v5914, %v8082
    %v8084 = vrot.slane %v4882, %v8083
    %v8085 = vsel %vm5919, %v8084, %v8080
    %v8086 = vlaneseq
    %v8087 = vshrl.u32 %v8086, 7
    %v8088 = vsub.s32 %v5921, %v8087
    %v8089 = vrot.slane %v4885, %v8088
    %v8090 = vsel %vm5926, %v8089, %v8085
    %v8091 = vlaneseq
    %v8092 = vshrl.u32 %v8091, 7
    %v8093 = vsub.s32 %v5928, %v8092
    %v8094 = vrot.slane %v4888, %v8093
    %v8095 = vsel %vm5933, %v8094, %v8090
    %v8096 = vlaneseq
    %v8097 = vshrl.u32 %v8096, 7
    %v8098 = vsub.s32 %v5935, %v8097
    %v8099 = vrot.slane %v4891, %v8098
    %v8100 = vsel %vm5940, %v8099, %v8095
    %v8101 = vlaneseq
    %v8102 = vshrl.u32 %v8101, 7
    %v8103 = vsub.s32 %v5942, %v8102
    %v8104 = vrot.slane %v4894, %v8103
    %v8105 = vsel %vm5947, %v8104, %v8100
    %v8106 = vlaneseq
    %v8107 = vshrl.u32 %v8106, 7
    %v8108 = vsub.s32 %v5949, %v8107
    %v8109 = vrot.slane %v4897, %v8108
    %v8110 = vsel %vm5954, %v8109, %v8105
    %v8111 = vlaneseq
    %v8112 = vshrl.u32 %v8111, 7
    %v8113 = vsub.s32 %v5956, %v8112
    %v8114 = vrot.slane %v4900, %v8113
    %v8115 = vsel %vm5961, %v8114, %v8110
    %v8116 = vlaneseq
    %v8117 = vshrl.u32 %v8116, 7
    %v8118 = vsub.s32 %v5963, %v8117
    %v8119 = vrot.slane %v4903, %v8118
    %v8120 = vsel %vm5968, %v8119, %v8115
    %v8121 = vlaneseq
    %v8122 = vshrl.u32 %v8121, 7
    %v8123 = vsub.s32 %v5970, %v8122
    %v8124 = vrot.slane %v4906, %v8123
    %v8125 = vsel %vm5975, %v8124, %v8120
    %v8126 = vlaneseq
    %v8127 = vshrl.u32 %v8126, 7
    %v8128 = vsub.s32 %v5977, %v8127
    %v8129 = vrot.slane %v4909, %v8128
    %v8130 = vsel %vm5982, %v8129, %v8125
    %v8131 = vlaneseq
    %v8132 = vshrl.u32 %v8131, 7
    %v8133 = vsub.s32 %v5984, %v8132
    %v8134 = vrot.slane %v4912, %v8133
    %v8135 = vsel %vm5989, %v8134, %v8130
    %v8136 = vlaneseq
    %v8137 = vshrl.u32 %v8136, 7
    %v8138 = vsub.s32 %v5881, %v8137
    %v8139 = vrot.slane %v4915, %v8138
    %v8140 = vlaneseq
    %v8141 = vshrl.u32 %v8140, 7
    %v8142 = vsub.s32 %v5886, %v8141
    %v8143 = vrot.slane %v4918, %v8142
    %v8144 = vsel %vm5891, %v8143, %v8139
    %v8145 = vlaneseq
    %v8146 = vshrl.u32 %v8145, 7
    %v8147 = vsub.s32 %v5893, %v8146
    %v8148 = vrot.slane %v4921, %v8147
    %v8149 = vsel %vm5898, %v8148, %v8144
    %v8150 = vlaneseq
    %v8151 = vshrl.u32 %v8150, 7
    %v8152 = vsub.s32 %v5900, %v8151
    %v8153 = vrot.slane %v4924, %v8152
    %v8154 = vsel %vm5905, %v8153, %v8149
    %v8155 = vlaneseq
    %v8156 = vshrl.u32 %v8155, 7
    %v8157 = vsub.s32 %v5907, %v8156
    %v8158 = vrot.slane %v4927, %v8157
    %v8159 = vsel %vm5912, %v8158, %v8154
    %v8160 = vlaneseq
    %v8161 = vshrl.u32 %v8160, 7
    %v8162 = vsub.s32 %v5914, %v8161
    %v8163 = vrot.slane %v4930, %v8162
    %v8164 = vsel %vm5919, %v8163, %v8159
    %v8165 = vlaneseq
    %v8166 = vshrl.u32 %v8165, 7
    %v8167 = vsub.s32 %v5921, %v8166
    %v8168 = vrot.slane %v4933, %v8167
    %v8169 = vsel %vm5926, %v8168, %v8164
    %v8170 = vlaneseq
    %v8171 = vshrl.u32 %v8170, 7
    %v8172 = vsub.s32 %v5928, %v8171
    %v8173 = vrot.slane %v4936, %v8172
    %v8174 = vsel %vm5933, %v8173, %v8169
    %v8175 = vlaneseq
    %v8176 = vshrl.u32 %v8175, 7
    %v8177 = vsub.s32 %v5935, %v8176
    %v8178 = vrot.slane %v4939, %v8177
    %v8179 = vsel %vm5940, %v8178, %v8174
    %v8180 = vlaneseq
    %v8181 = vshrl.u32 %v8180, 7
    %v8182 = vsub.s32 %v5942, %v8181
    %v8183 = vrot.slane %v4942, %v8182
    %v8184 = vsel %vm5947, %v8183, %v8179
    %v8185 = vlaneseq
    %v8186 = vshrl.u32 %v8185, 7
    %v8187 = vsub.s32 %v5949, %v8186
    %v8188 = vrot.slane %v4945, %v8187
    %v8189 = vsel %vm5954, %v8188, %v8184
    %v8190 = vlaneseq
    %v8191 = vshrl.u32 %v8190, 7
    %v8192 = vsub.s32 %v5956, %v8191
    %v8193 = vrot.slane %v4948, %v8192
    %v8194 = vsel %vm5961, %v8193, %v8189
    %v8195 = vlaneseq
    %v8196 = vshrl.u32 %v8195, 7
    %v8197 = vsub.s32 %v5963, %v8196
    %v8198 = vrot.slane %v4951, %v8197
    %v8199 = vsel %vm5968, %v8198, %v8194
    %v8200 = vlaneseq
    %v8201 = vshrl.u32 %v8200, 7
    %v8202 = vsub.s32 %v5881, %v8201
    %v8203 = vrot.slane %v4954, %v8202
    %v8204 = vlaneseq
    %v8205 = vshrl.u32 %v8204, 7
    %v8206 = vsub.s32 %v5886, %v8205
    %v8207 = vrot.slane %v4957, %v8206
    %v8208 = vsel %vm5891, %v8207, %v8203
    %v8209 = vlaneseq
    %v8210 = vshrl.u32 %v8209, 7
    %v8211 = vsub.s32 %v5893, %v8210
    %v8212 = vrot.slane %v4960, %v8211
    %v8213 = vsel %vm5898, %v8212, %v8208
    %v8214 = vlaneseq
    %v8215 = vshrl.u32 %v8214, 7
    %v8216 = vsub.s32 %v5900, %v8215
    %v8217 = vrot.slane %v4963, %v8216
    %v8218 = vsel %vm5905, %v8217, %v8213
    %v8219 = vlaneseq
    %v8220 = vshrl.u32 %v8219, 7
    %v8221 = vsub.s32 %v5907, %v8220
    %v8222 = vrot.slane %v4966, %v8221
    %v8223 = vsel %vm5912, %v8222, %v8218
    %v8224 = vlaneseq
    %v8225 = vshrl.u32 %v8224, 7
    %v8226 = vsub.s32 %v5914, %v8225
    %v8227 = vrot.slane %v4969, %v8226
    %v8228 = vsel %vm5919, %v8227, %v8223
    %v8229 = vlaneseq
    %v8230 = vshrl.u32 %v8229, 7
    %v8231 = vsub.s32 %v5921, %v8230
    %v8232 = vrot.slane %v4972, %v8231
    %v8233 = vsel %vm5926, %v8232, %v8228
    %v8234 = vlaneseq
    %v8235 = vshrl.u32 %v8234, 7
    %v8236 = vsub.s32 %v5928, %v8235
    %v8237 = vrot.slane %v4975, %v8236
    %v8238 = vsel %vm5933, %v8237, %v8233
    %v8239 = vlaneseq
    %v8240 = vshrl.u32 %v8239, 7
    %v8241 = vsub.s32 %v5935, %v8240
    %v8242 = vrot.slane %v4978, %v8241
    %v8243 = vsel %vm5940, %v8242, %v8238
    %v8244 = vlaneseq
    %v8245 = vshrl.u32 %v8244, 7
    %v8246 = vsub.s32 %v5942, %v8245
    %v8247 = vrot.slane %v4981, %v8246
    %v8248 = vsel %vm5947, %v8247, %v8243
    %v8249 = vlaneseq
    %v8250 = vshrl.u32 %v8249, 7
    %v8251 = vsub.s32 %v5949, %v8250
    %v8252 = vrot.slane %v4984, %v8251
    %v8253 = vsel %vm5954, %v8252, %v8248
    %v8254 = vlaneseq
    %v8255 = vshrl.u32 %v8254, 7
    %v8256 = vsub.s32 %v5956, %v8255
    %v8257 = vrot.slane %v4987, %v8256
    %v8258 = vsel %vm5961, %v8257, %v8253
    %v8259 = vlaneseq
    %v8260 = vshrl.u32 %v8259, 7
    %v8261 = vsub.s32 %v5963, %v8260
    %v8262 = vrot.slane %v4990, %v8261
    %v8263 = vsel %vm5968, %v8262, %v8258
    %v8264 = vlaneseq
    %v8265 = vshrl.u32 %v8264, 7
    %v8266 = vsub.s32 %v5970, %v8265
    %v8267 = vrot.slane %v4993, %v8266
    %v8268 = vsel %vm5975, %v8267, %v8263
    %v8269 = vlaneseq
    %v8270 = vshrl.u32 %v8269, 7
    %v8271 = vsub.s32 %v5977, %v8270
    %v8272 = vrot.slane %v4996, %v8271
    %v8273 = vsel %vm5982, %v8272, %v8268
    %v8274 = vlaneseq
    %v8275 = vshrl.u32 %v8274, 7
    %v8276 = vsub.s32 %v5984, %v8275
    %v8277 = vrot.slane %v4999, %v8276
    %v8278 = vsel %vm5989, %v8277, %v8273
    %v8279 = vlaneseq
    %v8280 = vshrl.u32 %v8279, 7
    %v8281 = vsub.s32 %v5881, %v8280
    %v8282 = vrot.slane %v5002, %v8281
    %v8283 = vlaneseq
    %v8284 = vshrl.u32 %v8283, 7
    %v8285 = vsub.s32 %v5886, %v8284
    %v8286 = vrot.slane %v5005, %v8285
    %v8287 = vsel %vm5891, %v8286, %v8282
    %v8288 = vlaneseq
    %v8289 = vshrl.u32 %v8288, 7
    %v8290 = vsub.s32 %v5893, %v8289
    %v8291 = vrot.slane %v5008, %v8290
    %v8292 = vsel %vm5898, %v8291, %v8287
    %v8293 = vlaneseq
    %v8294 = vshrl.u32 %v8293, 7
    %v8295 = vsub.s32 %v5900, %v8294
    %v8296 = vrot.slane %v5011, %v8295
    %v8297 = vsel %vm5905, %v8296, %v8292
    %v8298 = vlaneseq
    %v8299 = vshrl.u32 %v8298, 7
    %v8300 = vsub.s32 %v5907, %v8299
    %v8301 = vrot.slane %v5014, %v8300
    %v8302 = vsel %vm5912, %v8301, %v8297
    %v8303 = vlaneseq
    %v8304 = vshrl.u32 %v8303, 7
    %v8305 = vsub.s32 %v5914, %v8304
    %v8306 = vrot.slane %v5017, %v8305
    %v8307 = vsel %vm5919, %v8306, %v8302
    %v8308 = vlaneseq
    %v8309 = vshrl.u32 %v8308, 7
    %v8310 = vsub.s32 %v5921, %v8309
    %v8311 = vrot.slane %v5020, %v8310
    %v8312 = vsel %vm5926, %v8311, %v8307
    %v8313 = vlaneseq
    %v8314 = vshrl.u32 %v8313, 7
    %v8315 = vsub.s32 %v5928, %v8314
    %v8316 = vrot.slane %v5023, %v8315
    %v8317 = vsel %vm5933, %v8316, %v8312
    %v8318 = vlaneseq
    %v8319 = vshrl.u32 %v8318, 7
    %v8320 = vsub.s32 %v5935, %v8319
    %v8321 = vrot.slane %v5026, %v8320
    %v8322 = vsel %vm5940, %v8321, %v8317
    %v8323 = vlaneseq
    %v8324 = vshrl.u32 %v8323, 7
    %v8325 = vsub.s32 %v5942, %v8324
    %v8326 = vrot.slane %v5029, %v8325
    %v8327 = vsel %vm5947, %v8326, %v8322
    %v8328 = vlaneseq
    %v8329 = vshrl.u32 %v8328, 7
    %v8330 = vsub.s32 %v5949, %v8329
    %v8331 = vrot.slane %v5032, %v8330
    %v8332 = vsel %vm5954, %v8331, %v8327
    %v8333 = vlaneseq
    %v8334 = vshrl.u32 %v8333, 7
    %v8335 = vsub.s32 %v5956, %v8334
    %v8336 = vrot.slane %v5035, %v8335
    %v8337 = vsel %vm5961, %v8336, %v8332
    %v8338 = vlaneseq
    %v8339 = vshrl.u32 %v8338, 7
    %v8340 = vsub.s32 %v5963, %v8339
    %v8341 = vrot.slane %v5038, %v8340
    %v8342 = vsel %vm5968, %v8341, %v8337
    %v8343 = vlaneseq
    %v8344 = vshrl.u32 %v8343, 7
    %v8345 = vsub.s32 %v5881, %v8344
    %v8346 = vrot.slane %v5041, %v8345
    %v8347 = vlaneseq
    %v8348 = vshrl.u32 %v8347, 7
    %v8349 = vsub.s32 %v5886, %v8348
    %v8350 = vrot.slane %v5044, %v8349
    %v8351 = vsel %vm5891, %v8350, %v8346
    %v8352 = vlaneseq
    %v8353 = vshrl.u32 %v8352, 7
    %v8354 = vsub.s32 %v5893, %v8353
    %v8355 = vrot.slane %v5047, %v8354
    %v8356 = vsel %vm5898, %v8355, %v8351
    %v8357 = vlaneseq
    %v8358 = vshrl.u32 %v8357, 7
    %v8359 = vsub.s32 %v5900, %v8358
    %v8360 = vrot.slane %v5050, %v8359
    %v8361 = vsel %vm5905, %v8360, %v8356
    %v8362 = vlaneseq
    %v8363 = vshrl.u32 %v8362, 7
    %v8364 = vsub.s32 %v5907, %v8363
    %v8365 = vrot.slane %v5053, %v8364
    %v8366 = vsel %vm5912, %v8365, %v8361
    %v8367 = vlaneseq
    %v8368 = vshrl.u32 %v8367, 7
    %v8369 = vsub.s32 %v5914, %v8368
    %v8370 = vrot.slane %v5056, %v8369
    %v8371 = vsel %vm5919, %v8370, %v8366
    %v8372 = vlaneseq
    %v8373 = vshrl.u32 %v8372, 7
    %v8374 = vsub.s32 %v5921, %v8373
    %v8375 = vrot.slane %v5059, %v8374
    %v8376 = vsel %vm5926, %v8375, %v8371
    %v8377 = vlaneseq
    %v8378 = vshrl.u32 %v8377, 7
    %v8379 = vsub.s32 %v5928, %v8378
    %v8380 = vrot.slane %v5062, %v8379
    %v8381 = vsel %vm5933, %v8380, %v8376
    %v8382 = vlaneseq
    %v8383 = vshrl.u32 %v8382, 7
    %v8384 = vsub.s32 %v5935, %v8383
    %v8385 = vrot.slane %v5065, %v8384
    %v8386 = vsel %vm5940, %v8385, %v8381
    %v8387 = vlaneseq
    %v8388 = vshrl.u32 %v8387, 7
    %v8389 = vsub.s32 %v5942, %v8388
    %v8390 = vrot.slane %v5068, %v8389
    %v8391 = vsel %vm5947, %v8390, %v8386
    %v8392 = vlaneseq
    %v8393 = vshrl.u32 %v8392, 7
    %v8394 = vsub.s32 %v5949, %v8393
    %v8395 = vrot.slane %v5071, %v8394
    %v8396 = vsel %vm5954, %v8395, %v8391
    %v8397 = vlaneseq
    %v8398 = vshrl.u32 %v8397, 7
    %v8399 = vsub.s32 %v5956, %v8398
    %v8400 = vrot.slane %v5074, %v8399
    %v8401 = vsel %vm5961, %v8400, %v8396
    %v8402 = vlaneseq
    %v8403 = vshrl.u32 %v8402, 7
    %v8404 = vsub.s32 %v5963, %v8403
    %v8405 = vrot.slane %v5077, %v8404
    %v8406 = vsel %vm5968, %v8405, %v8401
    %v8407 = vlaneseq
    %v8408 = vshrl.u32 %v8407, 7
    %v8409 = vsub.s32 %v5970, %v8408
    %v8410 = vrot.slane %v5080, %v8409
    %v8411 = vsel %vm5975, %v8410, %v8406
    %v8412 = vlaneseq
    %v8413 = vshrl.u32 %v8412, 7
    %v8414 = vsub.s32 %v5977, %v8413
    %v8415 = vrot.slane %v5083, %v8414
    %v8416 = vsel %vm5982, %v8415, %v8411
    %v8417 = vlaneseq
    %v8418 = vshrl.u32 %v8417, 7
    %v8419 = vsub.s32 %v5984, %v8418
    %v8420 = vrot.slane %v5086, %v8419
    %v8421 = vsel %vm5989, %v8420, %v8416
    %v8422 = vlaneseq
    %v8423 = vshrl.u32 %v8422, 7
    %v8424 = vsub.s32 %v5881, %v8423
    %v8425 = vrot.slane %v5089, %v8424
    %v8426 = vlaneseq
    %v8427 = vshrl.u32 %v8426, 7
    %v8428 = vsub.s32 %v5886, %v8427
    %v8429 = vrot.slane %v5092, %v8428
    %v8430 = vsel %vm5891, %v8429, %v8425
    %v8431 = vlaneseq
    %v8432 = vshrl.u32 %v8431, 7
    %v8433 = vsub.s32 %v5893, %v8432
    %v8434 = vrot.slane %v5095, %v8433
    %v8435 = vsel %vm5898, %v8434, %v8430
    %v8436 = vlaneseq
    %v8437 = vshrl.u32 %v8436, 7
    %v8438 = vsub.s32 %v5900, %v8437
    %v8439 = vrot.slane %v5098, %v8438
    %v8440 = vsel %vm5905, %v8439, %v8435
    %v8441 = vlaneseq
    %v8442 = vshrl.u32 %v8441, 7
    %v8443 = vsub.s32 %v5907, %v8442
    %v8444 = vrot.slane %v5101, %v8443
    %v8445 = vsel %vm5912, %v8444, %v8440
    %v8446 = vlaneseq
    %v8447 = vshrl.u32 %v8446, 7
    %v8448 = vsub.s32 %v5914, %v8447
    %v8449 = vrot.slane %v5104, %v8448
    %v8450 = vsel %vm5919, %v8449, %v8445
    %v8451 = vlaneseq
    %v8452 = vshrl.u32 %v8451, 7
    %v8453 = vsub.s32 %v5921, %v8452
    %v8454 = vrot.slane %v5107, %v8453
    %v8455 = vsel %vm5926, %v8454, %v8450
    %v8456 = vlaneseq
    %v8457 = vshrl.u32 %v8456, 7
    %v8458 = vsub.s32 %v5928, %v8457
    %v8459 = vrot.slane %v5110, %v8458
    %v8460 = vsel %vm5933, %v8459, %v8455
    %v8461 = vlaneseq
    %v8462 = vshrl.u32 %v8461, 7
    %v8463 = vsub.s32 %v5935, %v8462
    %v8464 = vrot.slane %v5113, %v8463
    %v8465 = vsel %vm5940, %v8464, %v8460
    %v8466 = vlaneseq
    %v8467 = vshrl.u32 %v8466, 7
    %v8468 = vsub.s32 %v5942, %v8467
    %v8469 = vrot.slane %v5116, %v8468
    %v8470 = vsel %vm5947, %v8469, %v8465
    %v8471 = vlaneseq
    %v8472 = vshrl.u32 %v8471, 7
    %v8473 = vsub.s32 %v5949, %v8472
    %v8474 = vrot.slane %v5119, %v8473
    %v8475 = vsel %vm5954, %v8474, %v8470
    %v8476 = vlaneseq
    %v8477 = vshrl.u32 %v8476, 7
    %v8478 = vsub.s32 %v5956, %v8477
    %v8479 = vrot.slane %v5122, %v8478
    %v8480 = vsel %vm5961, %v8479, %v8475
    %v8481 = vlaneseq
    %v8482 = vshrl.u32 %v8481, 7
    %v8483 = vsub.s32 %v5963, %v8482
    %v8484 = vrot.slane %v5125, %v8483
    %v8485 = vsel %vm5968, %v8484, %v8480
    %v8486 = vlaneseq
    %v8487 = vshrl.u32 %v8486, 7
    %v8488 = vsub.s32 %v5881, %v8487
    %v8489 = vrot.slane %v5128, %v8488
    %v8490 = vlaneseq
    %v8491 = vshrl.u32 %v8490, 7
    %v8492 = vsub.s32 %v5886, %v8491
    %v8493 = vrot.slane %v5131, %v8492
    %v8494 = vsel %vm5891, %v8493, %v8489
    %v8495 = vlaneseq
    %v8496 = vshrl.u32 %v8495, 7
    %v8497 = vsub.s32 %v5893, %v8496
    %v8498 = vrot.slane %v5134, %v8497
    %v8499 = vsel %vm5898, %v8498, %v8494
    %v8500 = vlaneseq
    %v8501 = vshrl.u32 %v8500, 7
    %v8502 = vsub.s32 %v5900, %v8501
    %v8503 = vrot.slane %v5137, %v8502
    %v8504 = vsel %vm5905, %v8503, %v8499
    %v8505 = vlaneseq
    %v8506 = vshrl.u32 %v8505, 7
    %v8507 = vsub.s32 %v5907, %v8506
    %v8508 = vrot.slane %v5140, %v8507
    %v8509 = vsel %vm5912, %v8508, %v8504
    %v8510 = vlaneseq
    %v8511 = vshrl.u32 %v8510, 7
    %v8512 = vsub.s32 %v5914, %v8511
    %v8513 = vrot.slane %v5143, %v8512
    %v8514 = vsel %vm5919, %v8513, %v8509
    %v8515 = vlaneseq
    %v8516 = vshrl.u32 %v8515, 7
    %v8517 = vsub.s32 %v5921, %v8516
    %v8518 = vrot.slane %v5146, %v8517
    %v8519 = vsel %vm5926, %v8518, %v8514
    %v8520 = vlaneseq
    %v8521 = vshrl.u32 %v8520, 7
    %v8522 = vsub.s32 %v5928, %v8521
    %v8523 = vrot.slane %v5149, %v8522
    %v8524 = vsel %vm5933, %v8523, %v8519
    %v8525 = vlaneseq
    %v8526 = vshrl.u32 %v8525, 7
    %v8527 = vsub.s32 %v5935, %v8526
    %v8528 = vrot.slane %v5152, %v8527
    %v8529 = vsel %vm5940, %v8528, %v8524
    %v8530 = vlaneseq
    %v8531 = vshrl.u32 %v8530, 7
    %v8532 = vsub.s32 %v5942, %v8531
    %v8533 = vrot.slane %v5155, %v8532
    %v8534 = vsel %vm5947, %v8533, %v8529
    %v8535 = vlaneseq
    %v8536 = vshrl.u32 %v8535, 7
    %v8537 = vsub.s32 %v5949, %v8536
    %v8538 = vrot.slane %v5158, %v8537
    %v8539 = vsel %vm5954, %v8538, %v8534
    %v8540 = vlaneseq
    %v8541 = vshrl.u32 %v8540, 7
    %v8542 = vsub.s32 %v5956, %v8541
    %v8543 = vrot.slane %v5161, %v8542
    %v8544 = vsel %vm5961, %v8543, %v8539
    %v8545 = vlaneseq
    %v8546 = vshrl.u32 %v8545, 7
    %v8547 = vsub.s32 %v5963, %v8546
    %v8548 = vrot.slane %v5164, %v8547
    %v8549 = vsel %vm5968, %v8548, %v8544
    %v8550 = vlaneseq
    %v8551 = vshrl.u32 %v8550, 7
    %v8552 = vsub.s32 %v5970, %v8551
    %v8553 = vrot.slane %v5167, %v8552
    %v8554 = vsel %vm5975, %v8553, %v8549
    %v8555 = vlaneseq
    %v8556 = vshrl.u32 %v8555, 7
    %v8557 = vsub.s32 %v5977, %v8556
    %v8558 = vrot.slane %v5170, %v8557
    %v8559 = vsel %vm5982, %v8558, %v8554
    %v8560 = vlaneseq
    %v8561 = vshrl.u32 %v8560, 7
    %v8562 = vsub.s32 %v5984, %v8561
    %v8563 = vrot.slane %v5173, %v8562
    %v8564 = vsel %vm5989, %v8563, %v8559
    %v8565 = vlaneseq
    %v8566 = vshrl.u32 %v8565, 7
    %v8567 = vsub.s32 %v5881, %v8566
    %v8568 = vrot.slane %v5176, %v8567
    %v8569 = vlaneseq
    %v8570 = vshrl.u32 %v8569, 7
    %v8571 = vsub.s32 %v5886, %v8570
    %v8572 = vrot.slane %v5179, %v8571
    %v8573 = vsel %vm5891, %v8572, %v8568
    %v8574 = vlaneseq
    %v8575 = vshrl.u32 %v8574, 7
    %v8576 = vsub.s32 %v5893, %v8575
    %v8577 = vrot.slane %v5182, %v8576
    %v8578 = vsel %vm5898, %v8577, %v8573
    %v8579 = vlaneseq
    %v8580 = vshrl.u32 %v8579, 7
    %v8581 = vsub.s32 %v5900, %v8580
    %v8582 = vrot.slane %v5185, %v8581
    %v8583 = vsel %vm5905, %v8582, %v8578
    %v8584 = vlaneseq
    %v8585 = vshrl.u32 %v8584, 7
    %v8586 = vsub.s32 %v5907, %v8585
    %v8587 = vrot.slane %v5188, %v8586
    %v8588 = vsel %vm5912, %v8587, %v8583
    %v8589 = vlaneseq
    %v8590 = vshrl.u32 %v8589, 7
    %v8591 = vsub.s32 %v5914, %v8590
    %v8592 = vrot.slane %v5191, %v8591
    %v8593 = vsel %vm5919, %v8592, %v8588
    %v8594 = vlaneseq
    %v8595 = vshrl.u32 %v8594, 7
    %v8596 = vsub.s32 %v5921, %v8595
    %v8597 = vrot.slane %v5194, %v8596
    %v8598 = vsel %vm5926, %v8597, %v8593
    %v8599 = vlaneseq
    %v8600 = vshrl.u32 %v8599, 7
    %v8601 = vsub.s32 %v5928, %v8600
    %v8602 = vrot.slane %v5197, %v8601
    %v8603 = vsel %vm5933, %v8602, %v8598
    %v8604 = vlaneseq
    %v8605 = vshrl.u32 %v8604, 7
    %v8606 = vsub.s32 %v5935, %v8605
    %v8607 = vrot.slane %v5200, %v8606
    %v8608 = vsel %vm5940, %v8607, %v8603
    %v8609 = vlaneseq
    %v8610 = vshrl.u32 %v8609, 7
    %v8611 = vsub.s32 %v5942, %v8610
    %v8612 = vrot.slane %v5203, %v8611
    %v8613 = vsel %vm5947, %v8612, %v8608
    %v8614 = vlaneseq
    %v8615 = vshrl.u32 %v8614, 7
    %v8616 = vsub.s32 %v5949, %v8615
    %v8617 = vrot.slane %v5206, %v8616
    %v8618 = vsel %vm5954, %v8617, %v8613
    %v8619 = vlaneseq
    %v8620 = vshrl.u32 %v8619, 7
    %v8621 = vsub.s32 %v5956, %v8620
    %v8622 = vrot.slane %v5209, %v8621
    %v8623 = vsel %vm5961, %v8622, %v8618
    %v8624 = vlaneseq
    %v8625 = vshrl.u32 %v8624, 7
    %v8626 = vsub.s32 %v5963, %v8625
    %v8627 = vrot.slane %v5212, %v8626
    %v8628 = vsel %vm5968, %v8627, %v8623
    %v8629 = vlaneseq
    %v8630 = vshrl.u32 %v8629, 7
    %v8631 = vsub.s32 %v5881, %v8630
    %v8632 = vrot.slane %v5215, %v8631
    %v8633 = vlaneseq
    %v8634 = vshrl.u32 %v8633, 7
    %v8635 = vsub.s32 %v5886, %v8634
    %v8636 = vrot.slane %v5218, %v8635
    %v8637 = vsel %vm5891, %v8636, %v8632
    %v8638 = vlaneseq
    %v8639 = vshrl.u32 %v8638, 7
    %v8640 = vsub.s32 %v5893, %v8639
    %v8641 = vrot.slane %v5221, %v8640
    %v8642 = vsel %vm5898, %v8641, %v8637
    %v8643 = vlaneseq
    %v8644 = vshrl.u32 %v8643, 7
    %v8645 = vsub.s32 %v5900, %v8644
    %v8646 = vrot.slane %v5224, %v8645
    %v8647 = vsel %vm5905, %v8646, %v8642
    %v8648 = vlaneseq
    %v8649 = vshrl.u32 %v8648, 7
    %v8650 = vsub.s32 %v5907, %v8649
    %v8651 = vrot.slane %v5227, %v8650
    %v8652 = vsel %vm5912, %v8651, %v8647
    %v8653 = vlaneseq
    %v8654 = vshrl.u32 %v8653, 7
    %v8655 = vsub.s32 %v5914, %v8654
    %v8656 = vrot.slane %v5230, %v8655
    %v8657 = vsel %vm5919, %v8656, %v8652
    %v8658 = vlaneseq
    %v8659 = vshrl.u32 %v8658, 7
    %v8660 = vsub.s32 %v5921, %v8659
    %v8661 = vrot.slane %v5233, %v8660
    %v8662 = vsel %vm5926, %v8661, %v8657
    %v8663 = vlaneseq
    %v8664 = vshrl.u32 %v8663, 7
    %v8665 = vsub.s32 %v5928, %v8664
    %v8666 = vrot.slane %v5236, %v8665
    %v8667 = vsel %vm5933, %v8666, %v8662
    %v8668 = vlaneseq
    %v8669 = vshrl.u32 %v8668, 7
    %v8670 = vsub.s32 %v5935, %v8669
    %v8671 = vrot.slane %v5239, %v8670
    %v8672 = vsel %vm5940, %v8671, %v8667
    %v8673 = vlaneseq
    %v8674 = vshrl.u32 %v8673, 7
    %v8675 = vsub.s32 %v5942, %v8674
    %v8676 = vrot.slane %v5242, %v8675
    %v8677 = vsel %vm5947, %v8676, %v8672
    %v8678 = vlaneseq
    %v8679 = vshrl.u32 %v8678, 7
    %v8680 = vsub.s32 %v5949, %v8679
    %v8681 = vrot.slane %v5245, %v8680
    %v8682 = vsel %vm5954, %v8681, %v8677
    %v8683 = vlaneseq
    %v8684 = vshrl.u32 %v8683, 7
    %v8685 = vsub.s32 %v5956, %v8684
    %v8686 = vrot.slane %v5248, %v8685
    %v8687 = vsel %vm5961, %v8686, %v8682
    %v8688 = vlaneseq
    %v8689 = vshrl.u32 %v8688, 7
    %v8690 = vsub.s32 %v5963, %v8689
    %v8691 = vrot.slane %v5251, %v8690
    %v8692 = vsel %vm5968, %v8691, %v8687
    %v8693 = vlaneseq
    %v8694 = vshrl.u32 %v8693, 7
    %v8695 = vsub.s32 %v5970, %v8694
    %v8696 = vrot.slane %v5254, %v8695
    %v8697 = vsel %vm5975, %v8696, %v8692
    %v8698 = vlaneseq
    %v8699 = vshrl.u32 %v8698, 7
    %v8700 = vsub.s32 %v5977, %v8699
    %v8701 = vrot.slane %v5257, %v8700
    %v8702 = vsel %vm5982, %v8701, %v8697
    %v8703 = vlaneseq
    %v8704 = vshrl.u32 %v8703, 7
    %v8705 = vsub.s32 %v5984, %v8704
    %v8706 = vrot.slane %v5260, %v8705
    %v8707 = vsel %vm5989, %v8706, %v8702
    %v8708 = vlaneseq
    %v8709 = vshrl.u32 %v8708, 7
    %v8710 = vsub.s32 %v5881, %v8709
    %v8711 = vrot.slane %v5263, %v8710
    %v8712 = vlaneseq
    %v8713 = vshrl.u32 %v8712, 7
    %v8714 = vsub.s32 %v5886, %v8713
    %v8715 = vrot.slane %v5266, %v8714
    %v8716 = vsel %vm5891, %v8715, %v8711
    %v8717 = vlaneseq
    %v8718 = vshrl.u32 %v8717, 7
    %v8719 = vsub.s32 %v5893, %v8718
    %v8720 = vrot.slane %v5269, %v8719
    %v8721 = vsel %vm5898, %v8720, %v8716
    %v8722 = vlaneseq
    %v8723 = vshrl.u32 %v8722, 7
    %v8724 = vsub.s32 %v5900, %v8723
    %v8725 = vrot.slane %v5272, %v8724
    %v8726 = vsel %vm5905, %v8725, %v8721
    %v8727 = vlaneseq
    %v8728 = vshrl.u32 %v8727, 7
    %v8729 = vsub.s32 %v5907, %v8728
    %v8730 = vrot.slane %v5275, %v8729
    %v8731 = vsel %vm5912, %v8730, %v8726
    %v8732 = vlaneseq
    %v8733 = vshrl.u32 %v8732, 7
    %v8734 = vsub.s32 %v5914, %v8733
    %v8735 = vrot.slane %v5278, %v8734
    %v8736 = vsel %vm5919, %v8735, %v8731
    %v8737 = vlaneseq
    %v8738 = vshrl.u32 %v8737, 7
    %v8739 = vsub.s32 %v5921, %v8738
    %v8740 = vrot.slane %v5281, %v8739
    %v8741 = vsel %vm5926, %v8740, %v8736
    %v8742 = vlaneseq
    %v8743 = vshrl.u32 %v8742, 7
    %v8744 = vsub.s32 %v5928, %v8743
    %v8745 = vrot.slane %v5284, %v8744
    %v8746 = vsel %vm5933, %v8745, %v8741
    %v8747 = vlaneseq
    %v8748 = vshrl.u32 %v8747, 7
    %v8749 = vsub.s32 %v5935, %v8748
    %v8750 = vrot.slane %v5287, %v8749
    %v8751 = vsel %vm5940, %v8750, %v8746
    %v8752 = vlaneseq
    %v8753 = vshrl.u32 %v8752, 7
    %v8754 = vsub.s32 %v5942, %v8753
    %v8755 = vrot.slane %v5290, %v8754
    %v8756 = vsel %vm5947, %v8755, %v8751
    %v8757 = vlaneseq
    %v8758 = vshrl.u32 %v8757, 7
    %v8759 = vsub.s32 %v5949, %v8758
    %v8760 = vrot.slane %v5293, %v8759
    %v8761 = vsel %vm5954, %v8760, %v8756
    %v8762 = vlaneseq
    %v8763 = vshrl.u32 %v8762, 7
    %v8764 = vsub.s32 %v5956, %v8763
    %v8765 = vrot.slane %v5296, %v8764
    %v8766 = vsel %vm5961, %v8765, %v8761
    %v8767 = vlaneseq
    %v8768 = vshrl.u32 %v8767, 7
    %v8769 = vsub.s32 %v5963, %v8768
    %v8770 = vrot.slane %v5299, %v8769
    %v8771 = vsel %vm5968, %v8770, %v8766
    %vm8772 = vcmask 1041409
    %v8773 = vsel %vm8772, %v6133, %v5990
    %vm8774 = vcmask 1042434
    %v8775 = vsel %vm8774, %v6276, %v8773
    %vm8776 = vcmask 1043459
    %v8777 = vsel %vm8776, %v6419, %v8775
    %vm8778 = vcmask 1044484
    %v8779 = vsel %vm8778, %v6562, %v8777
    %vm8780 = vcmask 1045509
    %v8781 = vsel %vm8780, %v6705, %v8779
    %vm8782 = vcmask 1046534
    %v8783 = vsel %vm8782, %v6848, %v8781
    %vm8784 = vcmask 1047559
    %v8785 = vsel %vm8784, %v6991, %v8783
    %v8786 = vsel %vm8772, %v6197, %v6054
    %v8787 = vsel %vm8774, %v6340, %v8786
    %v8788 = vsel %vm8776, %v6483, %v8787
    %v8789 = vsel %vm8778, %v6626, %v8788
    %v8790 = vsel %vm8780, %v6769, %v8789
    %v8791 = vsel %vm8782, %v6912, %v8790
    %v8792 = vsel %vm8784, %v7055, %v8791
    %v8793 = vsel %vm8772, %v7277, %v7134
    %v8794 = vsel %vm8772, %v7341, %v7198
    %v8795 = vsel %vm8772, %v7563, %v7420
    %v8796 = vsel %vm8774, %v7706, %v8795
    %v8797 = vsel %vm8776, %v7849, %v8796
    %v8798 = vsel %vm8778, %v7992, %v8797
    %v8799 = vsel %vm8780, %v8135, %v8798
    %v8800 = vsel %vm8782, %v8278, %v8799
    %v8801 = vsel %vm8784, %v8421, %v8800
    %v8802 = vsel %vm8772, %v7627, %v7484
    %v8803 = vsel %vm8774, %v7770, %v8802
    %v8804 = vsel %vm8776, %v7913, %v8803
    %v8805 = vsel %vm8778, %v8056, %v8804
    %v8806 = vsel %vm8780, %v8199, %v8805
    %v8807 = vsel %vm8782, %v8342, %v8806
    %v8808 = vsel %vm8784, %v8485, %v8807
    %v8809 = vsel %vm8772, %v8707, %v8564
    %v8810 = vsel %vm8772, %v8771, %v8628
    %vm8819 = vcmask 850944
    %v8820 = vsel %vm8819, %v8792, 0.0
    %v8821 = vadd.f32 %v8785, %v8820
    %8822 = vadd.xlane.f32.xlu0 %v8821
    %v8823 = vpop.xlane.xlu0 %8822
    %vm8824 = vcmask 1041408
    %v8825 = vsel %vm8824, %v8793, 0.0
    %vm8826 = vcmask 844800
    %v8827 = vsel %vm8826, %v8794, 0.0
    %v8828 = vadd.f32 %v8825, %v8827
    %8829 = vadd.xlane.f32.xlu0 %v8828
    %v8830 = vpop.xlane.xlu0 %8829
    %v8831 = vsel %vm8819, %v8808, 0.0
    %v8832 = vadd.f32 %v8801, %v8831
    %8833 = vadd.xlane.f32.xlu0 %v8832
    %v8834 = vpop.xlane.xlu0 %8833
    %v8835 = vsel %vm8824, %v8809, 0.0
    %v8836 = vsel %vm8826, %v8810, 0.0
    %v8837 = vadd.f32 %v8835, %v8836
    %8838 = vadd.xlane.f32.xlu0 %v8837
    %v8839 = vpop.xlane.xlu0 %8838
    %v8840 = vld [vmem:[%s4] sm:$0x1]
    %v8842 = vlaneseq
    %v8843 = vshrl.u32 %v8842, 7
    %v8844 = vsub.s32 0, %v8843
    %v8845 = vrot.slane %v8840, %v8844
    %8847 = vbcast.lane.b32.xlu0 %v8845, 256
    %v8848 = vpop.permute.xlu0 %8847
    %s8850 = sor.u32 256, 8
    %8851 = vbcast.lane.b32.xlu0 %v8845, %s8850
    %v8852 = vpop.permute.xlu0 %8851
    %v8855 = vadd.f32 %v8823, %v8848
    %v8856 = vadd.f32 %v8830, %v8852
    %v8857 = vadd.f32 %v8834, %v8848
    %v8858 = vadd.f32 %v8839, %v8852
    %8863 = vset.pattern.permute.xlu0 0
    %8864 = vperm.xlu0 %8863, %v8855
    %v8865 = vpop.permute.xlu0 %8864
    %8866 = vset.pattern.permute.xlu0 0
    %8867 = vperm.xlu0 %8866, %v8856
    %v8868 = vpop.permute.xlu0 %8867
    %8869 = vset.pattern.permute.xlu0 0
    %8870 = vperm.xlu0 %8869, %v8857
    %v8871 = vpop.permute.xlu0 %8870
    %8872 = vset.pattern.permute.xlu0 0
    %8873 = vperm.xlu0 %8872, %v8858
    %v8874 = vpop.permute.xlu0 %8873
    %v8875 = vlaneseq
    %v8876 = vshrl.u32 %v8875, 7
    %v8877 = vsub.s32 %v5881, %v8876
    %v8878 = vrot.slane %v8865, %v8877
    %v8879 = vlaneseq
    %v8880 = vshrl.u32 %v8879, 7
    %v8881 = vsub.s32 %v5886, %v8880
    %v8882 = vrot.slane %v8868, %v8881
    %v8883 = vsel %vm5891, %v8882, %v8878
    %v8884 = vlaneseq
    %v8885 = vshrl.u32 %v8884, 7
    %v8886 = vsub.s32 %v5881, %v8885
    %v8887 = vrot.slane %v8871, %v8886
    %v8888 = vlaneseq
    %v8889 = vshrl.u32 %v8888, 7
    %v8890 = vsub.s32 %v5886, %v8889
    %v8891 = vrot.slane %v8874, %v8890
    %v8892 = vsel %vm5891, %v8891, %v8887
    %v8893 = vsel %vm8772, %v8892, %v8883
    %vm8895 = vcmask 74752
    %8896 = vst.msk [vmem:[#allocation2] sm:$0x3] %vm8895, %v8893
    // Predicated region
    $region22: #{seanet_forward.1} parent=1 // pred_check
      _
    $region23: #{seanet_forward.1} parent=1 // pred_check_branch
      %8898 = sbr.rel (0) target = $region25
    $region24: #{seanet_forward.1} parent=1 // pred_region
      %s8900 = ssub.s32 32, 32
      %8901 = vsyncadd [#allocation3], %s8900
      %s8903 = sshll.u32 [#allocation2], 4
      %s8904 = int_to_ptr.vmem [resolvable:$true] %s8903
      %8906 = dma.vmem_to_hbm [thread:$0]  %s8904, 32, %s5, [#allocation3]
    $region25: #{seanet_forward.1} parent=1 // pred_fallthru
      _
    // Predicated region
    $region26: #{seanet_forward.1} parent=1 // pred_check
      _
    $region27: #{seanet_forward.1} parent=1 // pred_check_branch
      %8908 = sbr.rel (0) target = $region29
    $region28: #{seanet_forward.1} parent=1 // pred_region
      %8909 = dma.done [#allocation3], 32
    $region29: #{seanet_forward.1} parent=1 // pred_fallthru
      _
    %8910 = vsyncpa [#allocation3], 1

</llo_original>
